<compile_context>
chip_gen: v7x
topology: tpu7x:2x2x1
jax: 0.10.0
libtpu: 0.0.40
codegen_flags: <defaults>
</compile_context>

<pallas_src>
import functools
import numpy as np
import jax
import jax.numpy as jnp
from jax.experimental import pallas as pl
from jax.experimental.pallas import tpu as pltpu

LEAKY_SLOPE = 0.2


def _pick_tile(dim, tmax, min_blocks=1):
    """Largest multiple-of-128 divisor of `dim` that is <= tmax (and, if
    requested, leaves at least `min_blocks` blocks for megacore sharding).
    Falls back to the full dim when it is not a multiple of 128 (legal per the
    (8,128) BlockSpec rule when block == full array dim)."""
    if dim % 128 != 0:
        return dim
    target = min(tmax, dim)
    if min_blocks > 1 and dim >= min_blocks * 128:
        target = min(target, dim // min_blocks)
    t = max(128, (target // 128) * 128)
    while dim % t != 0:
        t -= 128
    return t


def _make_linear_kernel(act, tk):
    """Fused kernel: tiled matmul accumulating into o_ref over K, epilogue =
    bias add (+ optional LeakyReLU)."""

    def kernel(x_ref, w_ref, b_ref, o_ref):
        k = pl.program_id(1)

        @pl.when(k == 0)
        def _():
            o_ref[...] = jnp.zeros_like(o_ref)

        # x is fully resident in VMEM; slice out the current K chunk.
        ks = pl.multiple_of(k * tk, tk)
        xk = x_ref[:, pl.ds(ks, tk)].astype(jnp.bfloat16)
        o_ref[...] += jnp.dot(xk, w_ref[...], preferred_element_type=jnp.float32)

        @pl.when(k == pl.num_programs(1) - 1)
        def _():
            y = o_ref[...] + b_ref[...]
            if act == "leaky":
                y = jnp.where(y > 0, y, LEAKY_SLOPE * y)
            o_ref[...] = y

    return kernel


def linear_fused(x, w, b, act=None, *, tn_max=1024, tk_max=2048):
    """y = act(x @ w + b) computed with a Pallas kernel.

    x: (B, K) f32   w: (K, N) bf16   b: (N,) f32   act in {None, "leaky"}.
    """
    B, K = x.shape
    K2, N = w.shape
    assert K == K2

    tn = _pick_tile(N, tn_max, min_blocks=2)   # >=2 parallel blocks for v7x megacore
    tk = _pick_tile(K, tk_max)
    assert N % tn == 0 and K % tk == 0

    kernel = _make_linear_kernel(act, tk)

    return pl.pallas_call(
        kernel,
        out_shape=jax.ShapeDtypeStruct((B, N), jnp.float32),
        grid_spec=pltpu.PrefetchScalarGridSpec(
            num_scalar_prefetch=0,
            grid=(N // tn, K // tk),                     # reduction axis (K) last
            in_specs=[
                pl.BlockSpec((B, K), lambda j, k: (0, 0)),    # resident activations
                pl.BlockSpec((tk, tn), lambda j, k: (k, j)),  # bf16 weight tile
                pl.BlockSpec((1, tn), lambda j, k: (0, j)),   # bias tile
            ],
            out_specs=pl.BlockSpec((B, tn), lambda j, k: (0, j)),  # acts as accumulator
        ),
        compiler_params=pltpu.CompilerParams(
            dimension_semantics=("parallel", "arbitrary")
        ),
    )(x, w, b.reshape(1, N))


def init_discriminator_params(key, img_shape):
    """Torch-like init (Uniform(-1/sqrt(fan_in), 1/sqrt(fan_in))) for every
    Linear layer of the Discriminator; weights stored bf16, biases f32."""
    d0 = int(np.prod(img_shape))
    dims = [d0, 2048, 1024, 512, 256, 1]
    params = []
    for i in range(len(dims) - 1):
        fan_in, fan_out = dims[i], dims[i + 1]
        key, kw, kb = jax.random.split(key, 3)
        bound = 1.0 / np.sqrt(fan_in)
        w = jax.random.uniform(kw, (fan_in, fan_out), jnp.float32, -bound, bound)
        b = jax.random.uniform(kb, (fan_out,), jnp.float32, -bound, bound)
        params.append({"w": w.astype(jnp.bfloat16), "b": b})
    return params


def discriminator_forward(params, img):
    B = img.shape[0]
    x = img.reshape(B, -1)                                             # img.view(B, -1)
    x = linear_fused(x, params[0]["w"], params[0]["b"], act="leaky")   # D0 -> 2048, LeakyReLU
    x = linear_fused(x, params[1]["w"], params[1]["b"], act=None)      # 2048 -> 1024
    x = linear_fused(x, params[2]["w"], params[2]["b"], act=None)      # 1024 -> 512
    x = linear_fused(x, params[3]["w"], params[3]["b"], act="leaky")   # 512 -> 256, LeakyReLU
    validity = linear_fused(x, params[4]["w"], params[4]["b"], act=None)  # 256 -> 1
    return validity


if __name__ == "__main__":
    # Small but structurally faithful config:
    #   channels=1, img_width=16, img_height=16 -> 256 input features, batch=8
    img_shape = (1, 16, 16)   # (channels, img_width, img_height)
    batch = 8

    key = jax.random.PRNGKey(0)
    kp, kx = jax.random.split(key)
    params = init_discriminator_params(kp, img_shape)
    img = jax.random.normal(kx, (batch, *img_shape), jnp.float32)

    fwd = jax.jit(discriminator_forward)
    validity = fwd(params, img)
    jax.block_until_ready(validity)

    assert validity.shape == (batch, 1), validity.shape
    assert bool(jnp.all(jnp.isfinite(validity)))
    print("KERNEL_OK")
</pallas_src>

<mosaic_0001>
module attributes {stable_mosaic.version = 11 : i64} {
  func.func @kernel(%arg0: i32, %arg1: i32, %arg2: memref<8x2048xf32, #tpu.memory_space<vmem>>, %arg3: memref<2048x512xbf16, #tpu.memory_space<vmem>>, %arg4: memref<1x512xf32, #tpu.memory_space<vmem>>, %arg5: memref<8x512xf32, #tpu.memory_space<vmem>>) attributes {dimension_semantics = [#tpu.dimension_semantics<parallel>, #tpu.dimension_semantics<arbitrary>], iteration_bounds = array<i64: 2, 1>, scalar_prefetch = 0 : i64, scratch_operands = 0 : i64, tpu.core_type = #tpu.core_type<tc>, window_params = [{pipeline_mode = #tpu.pipeline_mode<synchronous>, transform_indices = @transform_0, window_bounds = array<i64: 8, 2048>}, {transform_indices = @transform_1, window_bounds = array<i64: 2048, 512>}, {transform_indices = @transform_2, window_bounds = array<i64: 1, 512>}, {transform_indices = @transform_3, window_bounds = array<i64: 8, 512>}]} {
    %c0_i32 = arith.constant 0 : i32
    %0 = arith.cmpi eq, %arg1, %c0_i32 : i32
    %1 = arith.extui %0 : i1 to i32
    %c0_i32_0 = arith.constant 0 : i32
    %2 = arith.cmpi ne, %1, %c0_i32_0 : i32
    scf.if %2 {
      %cst_9 = arith.constant 0.000000e+00 : f32
      %16 = vector.broadcast %cst_9 : f32 to vector<8x512xf32>
      %c0_10 = arith.constant 0 : index
      %c0_11 = arith.constant 0 : index
      %17 = vector.load %arg5[%c0_10, %c0_11] : memref<8x512xf32, #tpu.memory_space<vmem>>, vector<8x512xf32>
      tpu.vector_store %arg5[%c0_10, %c0_11], %16 {strides = array<i32>} : memref<8x512xf32, #tpu.memory_space<vmem>>, vector<8x512xf32>,
    } else {
    }
    %c2048_i32 = arith.constant 2048 : i32
    %3 = arith.muli %arg1, %c2048_i32 : i32
    %4 = tpu.assume_multiple %3, 2048 : i32
    %c0 = arith.constant 0 : index
    %5 = arith.index_cast %4 : i32 to index
    %6 = vector.load %arg2[%c0, %5] : memref<8x2048xf32, #tpu.memory_space<vmem>>, vector<8x2048xf32>
    %7 = arith.truncf %6 : vector<8x2048xf32> to vector<8x2048xbf16>
    %c0_1 = arith.constant 0 : index
    %c0_2 = arith.constant 0 : index
    %8 = vector.load %arg5[%c0_1, %c0_2] : memref<8x512xf32, #tpu.memory_space<vmem>>, vector<8x512xf32>
    %c0_3 = arith.constant 0 : index
    %c0_4 = arith.constant 0 : index
    %9 = vector.load %arg3[%c0_3, %c0_4] : memref<2048x512xbf16, #tpu.memory_space<vmem>>, vector<2048x512xbf16>
    %cst = arith.constant dense<0.000000e+00> : vector<8x512xf32>
    %10 = tpu.matmul %7, %9, %cst {dimension_numbers = #tpu.dot_dimension_numbers<[1], [0], [0], [1], [0, 0, 1, 1], [], []>} : vector<8x2048xbf16>, vector<2048x512xbf16>, vector<8x512xf32> -> vector<8x512xf32>
    %11 = arith.addf %8, %10 : vector<8x512xf32>
    %c0_5 = arith.constant 0 : index
    %c0_6 = arith.constant 0 : index
    %12 = vector.load %arg5[%c0_5, %c0_6] : memref<8x512xf32, #tpu.memory_space<vmem>>, vector<8x512xf32>
    tpu.vector_store %arg5[%c0_5, %c0_6], %11 {strides = array<i32>} : memref<8x512xf32, #tpu.memory_space<vmem>>, vector<8x512xf32>,
    %c0_i32_7 = arith.constant 0 : i32
    %13 = arith.cmpi eq, %arg1, %c0_i32_7 : i32
    %14 = arith.extui %13 : i1 to i32
    %c0_i32_8 = arith.constant 0 : i32
    %15 = arith.cmpi ne, %14, %c0_i32_8 : i32
    scf.if %15 {
      %c0_9 = arith.constant 0 : index
      %c0_10 = arith.constant 0 : index
      %16 = vector.load %arg5[%c0_9, %c0_10] : memref<8x512xf32, #tpu.memory_space<vmem>>, vector<8x512xf32>
      %c0_11 = arith.constant 0 : index
      %c0_12 = arith.constant 0 : index
      %17 = vector.load %arg4[%c0_11, %c0_12] : memref<1x512xf32, #tpu.memory_space<vmem>>, vector<1x512xf32>
      %18 = vector.broadcast %17 : vector<1x512xf32> to vector<8x512xf32>
      %19 = arith.addf %16, %18 : vector<8x512xf32>
      %c0_13 = arith.constant 0 : index
      %c0_14 = arith.constant 0 : index
      %20 = vector.load %arg5[%c0_13, %c0_14] : memref<8x512xf32, #tpu.memory_space<vmem>>, vector<8x512xf32>
      tpu.vector_store %arg5[%c0_13, %c0_14], %19 {strides = array<i32>} : memref<8x512xf32, #tpu.memory_space<vmem>>, vector<8x512xf32>,
    } else {
    }
    return
  }
  func.func @transform_0(%arg0: i32, %arg1: i32) -> (i32, i32) {
    %c0_i32 = arith.constant 0 : i32
    %c0_i32_0 = arith.constant 0 : i32
    %c0_i32_1 = arith.constant 0 : i32
    return %c0_i32, %c0_i32_0 : i32, i32
  }
  func.func @transform_1(%arg0: i32, %arg1: i32) -> (i32, i32) {
    %c0_i32 = arith.constant 0 : i32
    return %arg1, %arg0 : i32, i32
  }
  func.func @transform_2(%arg0: i32, %arg1: i32) -> (i32, i32) {
    %c0_i32 = arith.constant 0 : i32
    %c0_i32_0 = arith.constant 0 : i32
    return %c0_i32, %arg0 : i32, i32
  }
  func.func @transform_3(%arg0: i32, %arg1: i32) -> (i32, i32) {
    %c0_i32 = arith.constant 0 : i32
    %c0_i32_0 = arith.constant 0 : i32
    return %c0_i32, %arg0 : i32, i32
  }
}

module attributes {stable_mosaic.version = 11 : i64} {
  func.func @kernel(%arg0: i32, %arg1: i32, %arg2: memref<8x1024xf32, #tpu.memory_space<vmem>>, %arg3: memref<1024x256xbf16, #tpu.memory_space<vmem>>, %arg4: memref<1x256xf32, #tpu.memory_space<vmem>>, %arg5: memref<8x256xf32, #tpu.memory_space<vmem>>) attributes {dimension_semantics = [#tpu.dimension_semantics<parallel>, #tpu.dimension_semantics<arbitrary>], iteration_bounds = array<i64: 2, 1>, scalar_prefetch = 0 : i64, scratch_operands = 0 : i64, tpu.core_type = #tpu.core_type<tc>, window_params = [{pipeline_mode = #tpu.pipeline_mode<synchronous>, transform_indices = @transform_0, window_bounds = array<i64: 8, 1024>}, {transform_indices = @transform_1, window_bounds = array<i64: 1024, 256>}, {transform_indices = @transform_2, window_bounds = array<i64: 1, 256>}, {transform_indices = @transform_3, window_bounds = array<i64: 8, 256>}]} {
    %c0_i32 = arith.constant 0 : i32
    %0 = arith.cmpi eq, %arg1, %c0_i32 : i32
    %1 = arith.extui %0 : i1 to i32
    %c0_i32_0 = arith.constant 0 : i32
    %2 = arith.cmpi ne, %1, %c0_i32_0 : i32
    scf.if %2 {
      %cst_9 = arith.constant 0.000000e+00 : f32
      %16 = vector.broadcast %cst_9 : f32 to vector<8x256xf32>
      %c0_10 = arith.constant 0 : index
      %c0_11 = arith.constant 0 : index
      %17 = vector.load %arg5[%c0_10, %c0_11] : memref<8x256xf32, #tpu.memory_space<vmem>>, vector<8x256xf32>
      tpu.vector_store %arg5[%c0_10, %c0_11], %16 {strides = array<i32>} : memref<8x256xf32, #tpu.memory_space<vmem>>, vector<8x256xf32>,
    } else {
    }
    %c1024_i32 = arith.constant 1024 : i32
    %3 = arith.muli %arg1, %c1024_i32 : i32
    %4 = tpu.assume_multiple %3, 1024 : i32
    %c0 = arith.constant 0 : index
    %5 = arith.index_cast %4 : i32 to index
    %6 = vector.load %arg2[%c0, %5] : memref<8x1024xf32, #tpu.memory_space<vmem>>, vector<8x1024xf32>
    %7 = arith.truncf %6 : vector<8x1024xf32> to vector<8x1024xbf16>
    %c0_1 = arith.constant 0 : index
    %c0_2 = arith.constant 0 : index
    %8 = vector.load %arg5[%c0_1, %c0_2] : memref<8x256xf32, #tpu.memory_space<vmem>>, vector<8x256xf32>
    %c0_3 = arith.constant 0 : index
    %c0_4 = arith.constant 0 : index
    %9 = vector.load %arg3[%c0_3, %c0_4] : memref<1024x256xbf16, #tpu.memory_space<vmem>>, vector<1024x256xbf16>
    %cst = arith.constant dense<0.000000e+00> : vector<8x256xf32>
    %10 = tpu.matmul %7, %9, %cst {dimension_numbers = #tpu.dot_dimension_numbers<[1], [0], [0], [1], [0, 0, 1, 1], [], []>} : vector<8x1024xbf16>, vector<1024x256xbf16>, vector<8x256xf32> -> vector<8x256xf32>
    %11 = arith.addf %8, %10 : vector<8x256xf32>
    %c0_5 = arith.constant 0 : index
    %c0_6 = arith.constant 0 : index
    %12 = vector.load %arg5[%c0_5, %c0_6] : memref<8x256xf32, #tpu.memory_space<vmem>>, vector<8x256xf32>
    tpu.vector_store %arg5[%c0_5, %c0_6], %11 {strides = array<i32>} : memref<8x256xf32, #tpu.memory_space<vmem>>, vector<8x256xf32>,
    %c0_i32_7 = arith.constant 0 : i32
    %13 = arith.cmpi eq, %arg1, %c0_i32_7 : i32
    %14 = arith.extui %13 : i1 to i32
    %c0_i32_8 = arith.constant 0 : i32
    %15 = arith.cmpi ne, %14, %c0_i32_8 : i32
    scf.if %15 {
      %c0_9 = arith.constant 0 : index
      %c0_10 = arith.constant 0 : index
      %16 = vector.load %arg5[%c0_9, %c0_10] : memref<8x256xf32, #tpu.memory_space<vmem>>, vector<8x256xf32>
      %c0_11 = arith.constant 0 : index
      %c0_12 = arith.constant 0 : index
      %17 = vector.load %arg4[%c0_11, %c0_12] : memref<1x256xf32, #tpu.memory_space<vmem>>, vector<1x256xf32>
      %18 = vector.broadcast %17 : vector<1x256xf32> to vector<8x256xf32>
      %19 = arith.addf %16, %18 : vector<8x256xf32>
      %c0_13 = arith.constant 0 : index
      %c0_14 = arith.constant 0 : index
      %20 = vector.load %arg5[%c0_13, %c0_14] : memref<8x256xf32, #tpu.memory_space<vmem>>, vector<8x256xf32>
      tpu.vector_store %arg5[%c0_13, %c0_14], %19 {strides = array<i32>} : memref<8x256xf32, #tpu.memory_space<vmem>>, vector<8x256xf32>,
    } else {
    }
    return
  }
  func.func @transform_0(%arg0: i32, %arg1: i32) -> (i32, i32) {
    %c0_i32 = arith.constant 0 : i32
    %c0_i32_0 = arith.constant 0 : i32
    %c0_i32_1 = arith.constant 0 : i32
    return %c0_i32, %c0_i32_0 : i32, i32
  }
  func.func @transform_1(%arg0: i32, %arg1: i32) -> (i32, i32) {
    %c0_i32 = arith.constant 0 : i32
    return %arg1, %arg0 : i32, i32
  }
  func.func @transform_2(%arg0: i32, %arg1: i32) -> (i32, i32) {
    %c0_i32 = arith.constant 0 : i32
    %c0_i32_0 = arith.constant 0 : i32
    return %c0_i32, %arg0 : i32, i32
  }
  func.func @transform_3(%arg0: i32, %arg1: i32) -> (i32, i32) {
    %c0_i32 = arith.constant 0 : i32
    %c0_i32_0 = arith.constant 0 : i32
    return %c0_i32, %arg0 : i32, i32
  }
}

module attributes {stable_mosaic.version = 11 : i64} {
  func.func @kernel(%arg0: i32, %arg1: i32, %arg2: memref<8x256xf32, #tpu.memory_space<vmem>>, %arg3: memref<256x1024xbf16, #tpu.memory_space<vmem>>, %arg4: memref<1x1024xf32, #tpu.memory_space<vmem>>, %arg5: memref<8x1024xf32, #tpu.memory_space<vmem>>) attributes {dimension_semantics = [#tpu.dimension_semantics<parallel>, #tpu.dimension_semantics<arbitrary>], iteration_bounds = array<i64: 2, 1>, scalar_prefetch = 0 : i64, scratch_operands = 0 : i64, tpu.core_type = #tpu.core_type<tc>, window_params = [{pipeline_mode = #tpu.pipeline_mode<synchronous>, transform_indices = @transform_0, window_bounds = array<i64: 8, 256>}, {transform_indices = @transform_1, window_bounds = array<i64: 256, 1024>}, {transform_indices = @transform_2, window_bounds = array<i64: 1, 1024>}, {transform_indices = @transform_3, window_bounds = array<i64: 8, 1024>}]} {
    %c0_i32 = arith.constant 0 : i32
    %0 = arith.cmpi eq, %arg1, %c0_i32 : i32
    %1 = arith.extui %0 : i1 to i32
    %c0_i32_0 = arith.constant 0 : i32
    %2 = arith.cmpi ne, %1, %c0_i32_0 : i32
    scf.if %2 {
      %cst_9 = arith.constant 0.000000e+00 : f32
      %16 = vector.broadcast %cst_9 : f32 to vector<8x1024xf32>
      %c0_10 = arith.constant 0 : index
      %c0_11 = arith.constant 0 : index
      %17 = vector.load %arg5[%c0_10, %c0_11] : memref<8x1024xf32, #tpu.memory_space<vmem>>, vector<8x1024xf32>
      tpu.vector_store %arg5[%c0_10, %c0_11], %16 {strides = array<i32>} : memref<8x1024xf32, #tpu.memory_space<vmem>>, vector<8x1024xf32>,
    } else {
    }
    %c256_i32 = arith.constant 256 : i32
    %3 = arith.muli %arg1, %c256_i32 : i32
    %4 = tpu.assume_multiple %3, 256 : i32
    %c0 = arith.constant 0 : index
    %5 = arith.index_cast %4 : i32 to index
    %6 = vector.load %arg2[%c0, %5] : memref<8x256xf32, #tpu.memory_space<vmem>>, vector<8x256xf32>
    %7 = arith.truncf %6 : vector<8x256xf32> to vector<8x256xbf16>
    %c0_1 = arith.constant 0 : index
    %c0_2 = arith.constant 0 : index
    %8 = vector.load %arg5[%c0_1, %c0_2] : memref<8x1024xf32, #tpu.memory_space<vmem>>, vector<8x1024xf32>
    %c0_3 = arith.constant 0 : index
    %c0_4 = arith.constant 0 : index
    %9 = vector.load %arg3[%c0_3, %c0_4] : memref<256x1024xbf16, #tpu.memory_space<vmem>>, vector<256x1024xbf16>
    %cst = arith.constant dense<0.000000e+00> : vector<8x1024xf32>
    %10 = tpu.matmul %7, %9, %cst {dimension_numbers = #tpu.dot_dimension_numbers<[1], [0], [0], [1], [0, 0, 1, 1], [], []>} : vector<8x256xbf16>, vector<256x1024xbf16>, vector<8x1024xf32> -> vector<8x1024xf32>
    %11 = arith.addf %8, %10 : vector<8x1024xf32>
    %c0_5 = arith.constant 0 : index
    %c0_6 = arith.constant 0 : index
    %12 = vector.load %arg5[%c0_5, %c0_6] : memref<8x1024xf32, #tpu.memory_space<vmem>>, vector<8x1024xf32>
    tpu.vector_store %arg5[%c0_5, %c0_6], %11 {strides = array<i32>} : memref<8x1024xf32, #tpu.memory_space<vmem>>, vector<8x1024xf32>,
    %c0_i32_7 = arith.constant 0 : i32
    %13 = arith.cmpi eq, %arg1, %c0_i32_7 : i32
    %14 = arith.extui %13 : i1 to i32
    %c0_i32_8 = arith.constant 0 : i32
    %15 = arith.cmpi ne, %14, %c0_i32_8 : i32
    scf.if %15 {
      %c0_9 = arith.constant 0 : index
      %c0_10 = arith.constant 0 : index
      %16 = vector.load %arg5[%c0_9, %c0_10] : memref<8x1024xf32, #tpu.memory_space<vmem>>, vector<8x1024xf32>
      %c0_11 = arith.constant 0 : index
      %c0_12 = arith.constant 0 : index
      %17 = vector.load %arg4[%c0_11, %c0_12] : memref<1x1024xf32, #tpu.memory_space<vmem>>, vector<1x1024xf32>
      %18 = vector.broadcast %17 : vector<1x1024xf32> to vector<8x1024xf32>
      %19 = arith.addf %16, %18 : vector<8x1024xf32>
      %cst_13 = arith.constant 0.000000e+00 : f32
      %20 = vector.broadcast %cst_13 : f32 to vector<8x1024xf32>
      %21 = arith.cmpf ogt, %19, %20 : vector<8x1024xf32>
      %cst_14 = arith.constant 2.000000e-01 : f32
      %22 = vector.broadcast %cst_14 : f32 to vector<8x1024xf32>
      %23 = arith.mulf %22, %19 : vector<8x1024xf32>
      %24 = arith.select %21, %19, %23 : vector<8x1024xi1>, vector<8x1024xf32>
      %c0_15 = arith.constant 0 : index
      %c0_16 = arith.constant 0 : index
      %25 = vector.load %arg5[%c0_15, %c0_16] : memref<8x1024xf32, #tpu.memory_space<vmem>>, vector<8x1024xf32>
      tpu.vector_store %arg5[%c0_15, %c0_16], %24 {strides = array<i32>} : memref<8x1024xf32, #tpu.memory_space<vmem>>, vector<8x1024xf32>,
    } else {
    }
    return
  }
  func.func @transform_0(%arg0: i32, %arg1: i32) -> (i32, i32) {
    %c0_i32 = arith.constant 0 : i32
    %c0_i32_0 = arith.constant 0 : i32
    %c0_i32_1 = arith.constant 0 : i32
    return %c0_i32, %c0_i32_0 : i32, i32
  }
  func.func @transform_1(%arg0: i32, %arg1: i32) -> (i32, i32) {
    %c0_i32 = arith.constant 0 : i32
    return %arg1, %arg0 : i32, i32
  }
  func.func @transform_2(%arg0: i32, %arg1: i32) -> (i32, i32) {
    %c0_i32 = arith.constant 0 : i32
    %c0_i32_0 = arith.constant 0 : i32
    return %c0_i32, %arg0 : i32, i32
  }
  func.func @transform_3(%arg0: i32, %arg1: i32) -> (i32, i32) {
    %c0_i32 = arith.constant 0 : i32
    %c0_i32_0 = arith.constant 0 : i32
    return %c0_i32, %arg0 : i32, i32
  }
}

module attributes {stable_mosaic.version = 11 : i64} {
  func.func @kernel(%arg0: i32, %arg1: i32, %arg2: memref<8x512xf32, #tpu.memory_space<vmem>>, %arg3: memref<512x128xbf16, #tpu.memory_space<vmem>>, %arg4: memref<1x128xf32, #tpu.memory_space<vmem>>, %arg5: memref<8x128xf32, #tpu.memory_space<vmem>>) attributes {dimension_semantics = [#tpu.dimension_semantics<parallel>, #tpu.dimension_semantics<arbitrary>], iteration_bounds = array<i64: 2, 1>, scalar_prefetch = 0 : i64, scratch_operands = 0 : i64, tpu.core_type = #tpu.core_type<tc>, window_params = [{pipeline_mode = #tpu.pipeline_mode<synchronous>, transform_indices = @transform_0, window_bounds = array<i64: 8, 512>}, {transform_indices = @transform_1, window_bounds = array<i64: 512, 128>}, {transform_indices = @transform_2, window_bounds = array<i64: 1, 128>}, {transform_indices = @transform_3, window_bounds = array<i64: 8, 128>}]} {
    %c0_i32 = arith.constant 0 : i32
    %0 = arith.cmpi eq, %arg1, %c0_i32 : i32
    %1 = arith.extui %0 : i1 to i32
    %c0_i32_0 = arith.constant 0 : i32
    %2 = arith.cmpi ne, %1, %c0_i32_0 : i32
    scf.if %2 {
      %cst_9 = arith.constant 0.000000e+00 : f32
      %16 = vector.broadcast %cst_9 : f32 to vector<8x128xf32>
      %c0_10 = arith.constant 0 : index
      %c0_11 = arith.constant 0 : index
      %17 = vector.load %arg5[%c0_10, %c0_11] : memref<8x128xf32, #tpu.memory_space<vmem>>, vector<8x128xf32>
      tpu.vector_store %arg5[%c0_10, %c0_11], %16 {strides = array<i32>} : memref<8x128xf32, #tpu.memory_space<vmem>>, vector<8x128xf32>,
    } else {
    }
    %c512_i32 = arith.constant 512 : i32
    %3 = arith.muli %arg1, %c512_i32 : i32
    %4 = tpu.assume_multiple %3, 512 : i32
    %c0 = arith.constant 0 : index
    %5 = arith.index_cast %4 : i32 to index
    %6 = vector.load %arg2[%c0, %5] : memref<8x512xf32, #tpu.memory_space<vmem>>, vector<8x512xf32>
    %7 = arith.truncf %6 : vector<8x512xf32> to vector<8x512xbf16>
    %c0_1 = arith.constant 0 : index
    %c0_2 = arith.constant 0 : index
    %8 = vector.load %arg5[%c0_1, %c0_2] : memref<8x128xf32, #tpu.memory_space<vmem>>, vector<8x128xf32>
    %c0_3 = arith.constant 0 : index
    %c0_4 = arith.constant 0 : index
    %9 = vector.load %arg3[%c0_3, %c0_4] : memref<512x128xbf16, #tpu.memory_space<vmem>>, vector<512x128xbf16>
    %cst = arith.constant dense<0.000000e+00> : vector<8x128xf32>
    %10 = tpu.matmul %7, %9, %cst {dimension_numbers = #tpu.dot_dimension_numbers<[1], [0], [0], [1], [0, 0, 1, 1], [], []>} : vector<8x512xbf16>, vector<512x128xbf16>, vector<8x128xf32> -> vector<8x128xf32>
    %11 = arith.addf %8, %10 : vector<8x128xf32>
    %c0_5 = arith.constant 0 : index
    %c0_6 = arith.constant 0 : index
    %12 = vector.load %arg5[%c0_5, %c0_6] : memref<8x128xf32, #tpu.memory_space<vmem>>, vector<8x128xf32>
    tpu.vector_store %arg5[%c0_5, %c0_6], %11 {strides = array<i32>} : memref<8x128xf32, #tpu.memory_space<vmem>>, vector<8x128xf32>,
    %c0_i32_7 = arith.constant 0 : i32
    %13 = arith.cmpi eq, %arg1, %c0_i32_7 : i32
    %14 = arith.extui %13 : i1 to i32
    %c0_i32_8 = arith.constant 0 : i32
    %15 = arith.cmpi ne, %14, %c0_i32_8 : i32
    scf.if %15 {
      %c0_9 = arith.constant 0 : index
      %c0_10 = arith.constant 0 : index
      %16 = vector.load %arg5[%c0_9, %c0_10] : memref<8x128xf32, #tpu.memory_space<vmem>>, vector<8x128xf32>
      %c0_11 = arith.constant 0 : index
      %c0_12 = arith.constant 0 : index
      %17 = vector.load %arg4[%c0_11, %c0_12] : memref<1x128xf32, #tpu.memory_space<vmem>>, vector<1x128xf32>
      %18 = vector.broadcast %17 : vector<1x128xf32> to vector<8x128xf32>
      %19 = arith.addf %16, %18 : vector<8x128xf32>
      %cst_13 = arith.constant 0.000000e+00 : f32
      %20 = vector.broadcast %cst_13 : f32 to vector<8x128xf32>
      %21 = arith.cmpf ogt, %19, %20 : vector<8x128xf32>
      %cst_14 = arith.constant 2.000000e-01 : f32
      %22 = vector.broadcast %cst_14 : f32 to vector<8x128xf32>
      %23 = arith.mulf %22, %19 : vector<8x128xf32>
      %24 = arith.select %21, %19, %23 : vector<8x128xi1>, vector<8x128xf32>
      %c0_15 = arith.constant 0 : index
      %c0_16 = arith.constant 0 : index
      %25 = vector.load %arg5[%c0_15, %c0_16] : memref<8x128xf32, #tpu.memory_space<vmem>>, vector<8x128xf32>
      tpu.vector_store %arg5[%c0_15, %c0_16], %24 {strides = array<i32>} : memref<8x128xf32, #tpu.memory_space<vmem>>, vector<8x128xf32>,
    } else {
    }
    return
  }
  func.func @transform_0(%arg0: i32, %arg1: i32) -> (i32, i32) {
    %c0_i32 = arith.constant 0 : i32
    %c0_i32_0 = arith.constant 0 : i32
    %c0_i32_1 = arith.constant 0 : i32
    return %c0_i32, %c0_i32_0 : i32, i32
  }
  func.func @transform_1(%arg0: i32, %arg1: i32) -> (i32, i32) {
    %c0_i32 = arith.constant 0 : i32
    return %arg1, %arg0 : i32, i32
  }
  func.func @transform_2(%arg0: i32, %arg1: i32) -> (i32, i32) {
    %c0_i32 = arith.constant 0 : i32
    %c0_i32_0 = arith.constant 0 : i32
    return %c0_i32, %arg0 : i32, i32
  }
  func.func @transform_3(%arg0: i32, %arg1: i32) -> (i32, i32) {
    %c0_i32 = arith.constant 0 : i32
    %c0_i32_0 = arith.constant 0 : i32
    return %c0_i32, %arg0 : i32, i32
  }
}

module attributes {stable_mosaic.version = 11 : i64} {
  func.func @kernel(%arg0: i32, %arg1: i32, %arg2: memref<8x256xf32, #tpu.memory_space<vmem>>, %arg3: memref<256x1xbf16, #tpu.memory_space<vmem>>, %arg4: memref<1x1xf32, #tpu.memory_space<vmem>>, %arg5: memref<8x1xf32, #tpu.memory_space<vmem>>) attributes {dimension_semantics = [#tpu.dimension_semantics<parallel>, #tpu.dimension_semantics<arbitrary>], iteration_bounds = array<i64: 1, 1>, scalar_prefetch = 0 : i64, scratch_operands = 0 : i64, tpu.core_type = #tpu.core_type<tc>, window_params = [{pipeline_mode = #tpu.pipeline_mode<synchronous>, transform_indices = @transform_0, window_bounds = array<i64: 8, 256>}, {transform_indices = @transform_1, window_bounds = array<i64: 256, 1>}, {transform_indices = @transform_2, window_bounds = array<i64: 1, 1>}, {transform_indices = @transform_3, window_bounds = array<i64: 8, 1>}]} {
    %c0_i32 = arith.constant 0 : i32
    %0 = arith.cmpi eq, %arg1, %c0_i32 : i32
    %1 = arith.extui %0 : i1 to i32
    %c0_i32_0 = arith.constant 0 : i32
    %2 = arith.cmpi ne, %1, %c0_i32_0 : i32
    scf.if %2 {
      %cst_9 = arith.constant 0.000000e+00 : f32
      %16 = vector.broadcast %cst_9 : f32 to vector<8x1xf32>
      %c0_10 = arith.constant 0 : index
      %c0_11 = arith.constant 0 : index
      %17 = vector.load %arg5[%c0_10, %c0_11] : memref<8x1xf32, #tpu.memory_space<vmem>>, vector<8x1xf32>
      tpu.vector_store %arg5[%c0_10, %c0_11], %16 {strides = array<i32>} : memref<8x1xf32, #tpu.memory_space<vmem>>, vector<8x1xf32>,
    } else {
    }
    %c256_i32 = arith.constant 256 : i32
    %3 = arith.muli %arg1, %c256_i32 : i32
    %4 = tpu.assume_multiple %3, 256 : i32
    %c0 = arith.constant 0 : index
    %5 = arith.index_cast %4 : i32 to index
    %6 = vector.load %arg2[%c0, %5] : memref<8x256xf32, #tpu.memory_space<vmem>>, vector<8x256xf32>
    %7 = arith.truncf %6 : vector<8x256xf32> to vector<8x256xbf16>
    %c0_1 = arith.constant 0 : index
    %c0_2 = arith.constant 0 : index
    %8 = vector.load %arg5[%c0_1, %c0_2] : memref<8x1xf32, #tpu.memory_space<vmem>>, vector<8x1xf32>
    %c0_3 = arith.constant 0 : index
    %c0_4 = arith.constant 0 : index
    %9 = vector.load %arg3[%c0_3, %c0_4] : memref<256x1xbf16, #tpu.memory_space<vmem>>, vector<256x1xbf16>
    %cst = arith.constant dense<0.000000e+00> : vector<8x1xf32>
    %10 = tpu.matmul %7, %9, %cst {dimension_numbers = #tpu.dot_dimension_numbers<[1], [0], [0], [1], [0, 0, 1, 1], [], []>} : vector<8x256xbf16>, vector<256x1xbf16>, vector<8x1xf32> -> vector<8x1xf32>
    %11 = arith.addf %8, %10 : vector<8x1xf32>
    %c0_5 = arith.constant 0 : index
    %c0_6 = arith.constant 0 : index
    %12 = vector.load %arg5[%c0_5, %c0_6] : memref<8x1xf32, #tpu.memory_space<vmem>>, vector<8x1xf32>
    tpu.vector_store %arg5[%c0_5, %c0_6], %11 {strides = array<i32>} : memref<8x1xf32, #tpu.memory_space<vmem>>, vector<8x1xf32>,
    %c0_i32_7 = arith.constant 0 : i32
    %13 = arith.cmpi eq, %arg1, %c0_i32_7 : i32
    %14 = arith.extui %13 : i1 to i32
    %c0_i32_8 = arith.constant 0 : i32
    %15 = arith.cmpi ne, %14, %c0_i32_8 : i32
    scf.if %15 {
      %c0_9 = arith.constant 0 : index
      %c0_10 = arith.constant 0 : index
      %16 = vector.load %arg5[%c0_9, %c0_10] : memref<8x1xf32, #tpu.memory_space<vmem>>, vector<8x1xf32>
      %c0_11 = arith.constant 0 : index
      %c0_12 = arith.constant 0 : index
      %17 = vector.load %arg4[%c0_11, %c0_12] : memref<1x1xf32, #tpu.memory_space<vmem>>, vector<1x1xf32>
      %18 = vector.broadcast %17 : vector<1x1xf32> to vector<8x1xf32>
      %19 = arith.addf %16, %18 : vector<8x1xf32>
      %c0_13 = arith.constant 0 : index
      %c0_14 = arith.constant 0 : index
      %20 = vector.load %arg5[%c0_13, %c0_14] : memref<8x1xf32, #tpu.memory_space<vmem>>, vector<8x1xf32>
      tpu.vector_store %arg5[%c0_13, %c0_14], %19 {strides = array<i32>} : memref<8x1xf32, #tpu.memory_space<vmem>>, vector<8x1xf32>,
    } else {
    }
    return
  }
  func.func @transform_0(%arg0: i32, %arg1: i32) -> (i32, i32) {
    %c0_i32 = arith.constant 0 : i32
    %c0_i32_0 = arith.constant 0 : i32
    %c0_i32_1 = arith.constant 0 : i32
    return %c0_i32, %c0_i32_0 : i32, i32
  }
  func.func @transform_1(%arg0: i32, %arg1: i32) -> (i32, i32) {
    %c0_i32 = arith.constant 0 : i32
    return %arg1, %arg0 : i32, i32
  }
  func.func @transform_2(%arg0: i32, %arg1: i32) -> (i32, i32) {
    %c0_i32 = arith.constant 0 : i32
    %c0_i32_0 = arith.constant 0 : i32
    return %c0_i32, %arg0 : i32, i32
  }
  func.func @transform_3(%arg0: i32, %arg1: i32) -> (i32, i32) {
    %c0_i32 = arith.constant 0 : i32
    %c0_i32_0 = arith.constant 0 : i32
    return %c0_i32, %arg0 : i32, i32
  }
}

</mosaic_0001>

<llo_original>
// kernel: discriminator_forward.7
$region0: #{discriminator_forward.7}
  #allocation0 [shape = 'u32[]', space=smem, size = 0x4, offset = 0x4, fixed_abs, tag = 'smem constant byte address 0x4 - core index']
  #allocation1 [shape = 'u32[144,128]{1,0:T(1,128)}', space=vmem, size = 0x12000, scoped, tag = 'internal scratch']
  %s0 = inlined_call_operand.vmem [shape: f32[8,1024], index: 0, kind: input, shape index: {}]
  %s1 = inlined_call_operand.vmem [shape: bf16[1024,512], index: 1, kind: input, shape index: {}]
  %s2 = inlined_call_operand.vmem [shape: f32[1,512], index: 2, kind: input, shape index: {}]
  %s3 = inlined_call_operand.vmem [shape: f32[8,512], index: 3, kind: output, shape index: {}]
  %s4 = sld [smem:[#allocation0]]
  $region91: #{discriminator_forward.7} parent=0
    _
  %s6 = ssub.s32 1, %s4
  %s7 = scalar_select 0, %s6, %s4
  $region1: #{discriminator_forward.7} parent=0
    #allocation2 [shape = 'u8[1048576]{0}', space=vmem, size = 0x100000, scoped, tag = 'input window, operand 1']
    loop: start=0, step=1, limit=4
    $region2: #{discriminator_forward.7} parent=1 // loop_pre_header
      _
    $region3: #{discriminator_forward.7} parent=1 // loop_header
      %s9 = sphi 0, %s13
      %p10 = scmp.ge.s32.totalorder %s9, 4
      %s16 = sphi 0, %s28
      %s17 = sphi 0, %s24
      %s18 = sphi 0, %s16
      %s19 = sphi 0, %s17
      %s20 = sphi 0, %s18
      %s21 = sphi 0, %s19
      %s29 = sphi 0, %s29
      %s31 = sphi 0, %s29
      %s32 = sphi 0, %s31
      %s46 = sphi 0, %s32
      %s54 = sphi 0, %s56
      %s57 = sphi 0, %s54
      %s58 = sphi 0, %s57
      %s74 = sphi 0, %s58
      %s80 = sphi 0, %s82
      %s83 = sphi 0, %s80
      %s84 = sphi 0, %s83
      %s100 = sphi 0, %s84
      %s106 = sphi 0, %s108
      %s109 = sphi 0, %s106
      %s110 = sphi 0, %s109
      %s126 = sphi 0, %s110
    $region4: #{discriminator_forward.7} parent=1 // loop_header_branch
      %12 = sbr.rel (%p10) target = $region8
    $region5: #{discriminator_forward.7} parent=1 // loop_body
      %s14 = ssub.s32 %s9, 1
      %s15 = ssub.s32 %s9, 2
      %s22 = sadd.s32 1, %s17
      %p23 = scmp.ge.s32.totalorder %s22, 1
      %s24 = scalar_select %p23, 0, %s22
      %s25 = sadd.s32 1, %s16
      %s26 = scalar_select %p23, %s25, %s16
      %p27 = scmp.ge.s32.totalorder %s26, 2
      %s28 = scalar_select %p27, 0, %s26
      %s30 = sadd.s32 %s29, 1
      %p33 = scmp.eq.s32.totalorder %s9, 1
      %p34 = scmp.ne.s32.totalorder %s29, %s31
      %p35 = scmp.eq.s32.totalorder %s9, 0
      %p36 = por %p34, %p35
      %p37 = scmp.ne.s32.totalorder %s29, %s31
      %p38 = scmp.eq.s32.totalorder %s14, 1
      %p39 = por %p37, %p38
      %p40 = scmp.ne.s32.totalorder %s31, %s32
      %p41 = scmp.eq.s32.totalorder %s14, 0
      %p42 = por %p40, %p41
      %p43 = scmp.ne.s32.totalorder %s31, %s32
      %p44 = scmp.eq.s32.totalorder %s15, 1
      %p45 = por %p43, %p44
      %p47 = scmp.ne.s32.totalorder %s32, %s46
      %p48 = scmp.eq.s32.totalorder %s15, 0
      %p49 = por %p47, %p48
      %s50 = ssub.s32 %s17, %s24
      %s51 = ssub.s32 %s16, %s28
      %s52 = sor.u32 %s50, %s51
      %p53 = scmp.eq.s32.totalorder %s52, 0
      %s55 = sadd.s32 %s54, 1
      %s56 = scalar_select %p53, %s54, %s55
      %p59 = pneg %p53
      %p60 = scmp.eq.s32.totalorder %s9, 1
      %p61 = por %p59, %p60
      %p62 = scmp.ne.s32.totalorder %s54, %s57
      %p63 = scmp.eq.s32.totalorder %s9, 0
      %p64 = por %p62, %p63
      %p65 = scmp.ne.s32.totalorder %s54, %s57
      %p66 = scmp.eq.s32.totalorder %s14, 1
      %p67 = por %p65, %p66
      %p68 = scmp.ne.s32.totalorder %s57, %s58
      %p69 = scmp.eq.s32.totalorder %s14, 0
      %p70 = por %p68, %p69
      %p71 = scmp.ne.s32.totalorder %s57, %s58
      %p72 = scmp.eq.s32.totalorder %s15, 1
      %p73 = por %p71, %p72
      %p75 = scmp.ne.s32.totalorder %s58, %s74
      %p76 = scmp.eq.s32.totalorder %s15, 0
      %p77 = por %p75, %p76
      %s78 = ssub.s32 %s16, %s28
      %p79 = scmp.eq.s32.totalorder %s78, 0
      %s81 = sadd.s32 %s80, 1
      %s82 = scalar_select %p79, %s80, %s81
      %p85 = pneg %p79
      %p86 = scmp.eq.s32.totalorder %s9, 1
      %p87 = por %p85, %p86
      %p88 = scmp.ne.s32.totalorder %s80, %s83
      %p89 = scmp.eq.s32.totalorder %s9, 0
      %p90 = por %p88, %p89
      %p91 = scmp.ne.s32.totalorder %s80, %s83
      %p92 = scmp.eq.s32.totalorder %s14, 1
      %p93 = por %p91, %p92
      %p94 = scmp.ne.s32.totalorder %s83, %s84
      %p95 = scmp.eq.s32.totalorder %s14, 0
      %p96 = por %p94, %p95
      %p97 = scmp.ne.s32.totalorder %s83, %s84
      %p98 = scmp.eq.s32.totalorder %s15, 1
      %p99 = por %p97, %p98
      %p101 = scmp.ne.s32.totalorder %s84, %s100
      %p102 = scmp.eq.s32.totalorder %s15, 0
      %p103 = por %p101, %p102
      %s104 = ssub.s32 %s16, %s28
      %p105 = scmp.eq.s32.totalorder %s104, 0
      %s107 = sadd.s32 %s106, 1
      %s108 = scalar_select %p105, %s106, %s107
      %p111 = pneg %p105
      %p112 = scmp.eq.s32.totalorder %s9, 1
      %p113 = por %p111, %p112
      %p114 = scmp.ne.s32.totalorder %s106, %s109
      %p115 = scmp.eq.s32.totalorder %s9, 0
      %p116 = por %p114, %p115
      %p117 = scmp.ne.s32.totalorder %s106, %s109
      %p118 = scmp.eq.s32.totalorder %s14, 1
      %p119 = por %p117, %p118
      %p120 = scmp.ne.s32.totalorder %s109, %s110
      %p121 = scmp.eq.s32.totalorder %s14, 0
      %p122 = por %p120, %p121
      %p123 = scmp.ne.s32.totalorder %s109, %s110
      %p124 = scmp.eq.s32.totalorder %s15, 1
      %p125 = por %p123, %p124
      %p127 = scmp.ne.s32.totalorder %s110, %s126
      %p128 = scmp.eq.s32.totalorder %s15, 0
      %p129 = por %p127, %p128
      %p130 = scmp.le.s32.totalorder 1, %s9
      %p131 = scmp.lt.s32.totalorder %s9, 3
      %p132 = pnand %p130, %p131
      %p133 = pneg %p132
      // Predicated region
      $region9: #{discriminator_forward.7} parent=5 // pred_check
        _
      $region10: #{discriminator_forward.7} parent=5 // pred_check_branch
        %135 = sbr.rel (%p132) target = $region12
      $region11: #{discriminator_forward.7} parent=5 // pred_region
        %s136 = ssub.s32 %s9, 1
        // Predicated region
        $region13: #{discriminator_forward.7} parent=11 // pred_check
          %p137 = pneg %p42
        $region14: #{discriminator_forward.7} parent=11 // pred_check_branch
          %139 = sbr.rel (%p137) target = $region16
        $region15: #{discriminator_forward.7} parent=11 // pred_region
          _
        $region16: #{discriminator_forward.7} parent=11 // pred_fallthru
          _
      $region12: #{discriminator_forward.7} parent=5 // pred_fallthru
        _
      %p140 = scmp.lt.s32.totalorder %s9, 2
      // Predicated region
      $region17: #{discriminator_forward.7} parent=5 // pred_check
        %p141 = pneg %p140
      $region18: #{discriminator_forward.7} parent=5 // pred_check_branch
        %143 = sbr.rel (%p141) target = $region20
      $region19: #{discriminator_forward.7} parent=5 // pred_region
        // Predicated region
        $region21: #{discriminator_forward.7} parent=19 // pred_check
          %p144 = pneg %p64
        $region22: #{discriminator_forward.7} parent=19 // pred_check_branch
          %146 = sbr.rel (%p144) target = $region24
        $region23: #{discriminator_forward.7} parent=19 // pred_region
          %s147 = sand.u32 %s54, 1
          %s148 = sand.u32 %s54, 1
          %s149 = smul.addr %s148, 1024
          %s150 = scalar_lea.vmem [#allocation2], %s149
          %s151 = smul.u32 128, %s17
          %s152 = smul.u32 2, %s16
          %s153 = smul.addr %s151, 4
          %s154 = sadd.s32 %s152, %s153
          %s155 = smul.addr %s154, 4
          %s156 = scalar_lea.vmem %s1, %s155
          // Predicated region
          $region25: #{discriminator_forward.7} parent=23 // pred_check
            _
          $region26: #{discriminator_forward.7} parent=23 // pred_check_branch
            %158 = sbr.rel (0) target = $region28
          $region27: #{discriminator_forward.7} parent=23 // pred_region
            // Predicated region
            $region29: #{discriminator_forward.7} parent=27 // pred_check
              _
            $region30: #{discriminator_forward.7} parent=27 // pred_check_branch
              %160 = sbr.rel (0) target = $region32
            $region31: #{discriminator_forward.7} parent=27 // pred_region
              // Predicated region
              $region44: #{discriminator_forward.7} parent=31 // pred_check
                _
              $region45: #{discriminator_forward.7} parent=31 // pred_check_branch
                %429 = sbr.rel (0) target = $region47
              $region46: #{discriminator_forward.7} parent=31 // pred_region
                loop: start=0, step=1, limit=1
                $region48: #{discriminator_forward.7} parent=46 // loop_pre_header
                  _
                $region49: #{discriminator_forward.7} parent=46 // loop_header
                  %s431 = sphi 0, %s435
                  %p432 = scmp.ge.s32.totalorder %s431, 1
                  %s436 = sphi %s156, %s156
                  %s437 = sphi %s150, %s150
                $region50: #{discriminator_forward.7} parent=46 // loop_header_branch
                  %434 = sbr.rel (%p432) target = $region54
                $region51: #{discriminator_forward.7} parent=46 // loop_body
                  %v438 = vld [vmem:[%s436] sm:$0xff]
                  %439 = vst [vmem:[%s437] sm:$0xff] %v438
                  %v440 = vld [vmem:[%s436 + $0x10] sm:$0xff]
                  %441 = vst [vmem:[%s437 + $0x8] sm:$0xff] %v440
                  %v442 = vld [vmem:[%s436 + $0x20] sm:$0xff]
                  %443 = vst [vmem:[%s437 + $0x10] sm:$0xff] %v442
                  %v444 = vld [vmem:[%s436 + $0x30] sm:$0xff]
                  %445 = vst [vmem:[%s437 + $0x18] sm:$0xff] %v444
                  %v446 = vld [vmem:[%s436 + $0x40] sm:$0xff]
                  %447 = vst [vmem:[%s437 + $0x20] sm:$0xff] %v446
                  %v448 = vld [vmem:[%s436 + $0x50] sm:$0xff]
                  %449 = vst [vmem:[%s437 + $0x28] sm:$0xff] %v448
                  %v450 = vld [vmem:[%s436 + $0x60] sm:$0xff]
                  %451 = vst [vmem:[%s437 + $0x30] sm:$0xff] %v450
                  %v452 = vld [vmem:[%s436 + $0x70] sm:$0xff]
                  %453 = vst [vmem:[%s437 + $0x38] sm:$0xff] %v452
                  %v454 = vld [vmem:[%s436 + $0x80] sm:$0xff]
                  %455 = vst [vmem:[%s437 + $0x40] sm:$0xff] %v454
                  %v456 = vld [vmem:[%s436 + $0x90] sm:$0xff]
                  %457 = vst [vmem:[%s437 + $0x48] sm:$0xff] %v456
                  %v458 = vld [vmem:[%s436 + $0xa0] sm:$0xff]
                  %459 = vst [vmem:[%s437 + $0x50] sm:$0xff] %v458
                  %v460 = vld [vmem:[%s436 + $0xb0] sm:$0xff]
                  %461 = vst [vmem:[%s437 + $0x58] sm:$0xff] %v460
                  %v462 = vld [vmem:[%s436 + $0xc0] sm:$0xff]
                  %463 = vst [vmem:[%s437 + $0x60] sm:$0xff] %v462
                  %v464 = vld [vmem:[%s436 + $0xd0] sm:$0xff]
                  %465 = vst [vmem:[%s437 + $0x68] sm:$0xff] %v464
                  %v466 = vld [vmem:[%s436 + $0xe0] sm:$0xff]
                  %467 = vst [vmem:[%s437 + $0x70] sm:$0xff] %v466
                  %v468 = vld [vmem:[%s436 + $0xf0] sm:$0xff]
                  %469 = vst [vmem:[%s437 + $0x78] sm:$0xff] %v468
                  %v470 = vld [vmem:[%s436 + $0x100] sm:$0xff]
                  %471 = vst [vmem:[%s437 + $0x80] sm:$0xff] %v470
                  %v472 = vld [vmem:[%s436 + $0x110] sm:$0xff]
                  %473 = vst [vmem:[%s437 + $0x88] sm:$0xff] %v472
                  %v474 = vld [vmem:[%s436 + $0x120] sm:$0xff]
                  %475 = vst [vmem:[%s437 + $0x90] sm:$0xff] %v474
                  %v476 = vld [vmem:[%s436 + $0x130] sm:$0xff]
                  %477 = vst [vmem:[%s437 + $0x98] sm:$0xff] %v476
                  %v478 = vld [vmem:[%s436 + $0x140] sm:$0xff]
                  %479 = vst [vmem:[%s437 + $0xa0] sm:$0xff] %v478
                  %v480 = vld [vmem:[%s436 + $0x150] sm:$0xff]
                  %481 = vst [vmem:[%s437 + $0xa8] sm:$0xff] %v480
                  %v482 = vld [vmem:[%s436 + $0x160] sm:$0xff]
                  %483 = vst [vmem:[%s437 + $0xb0] sm:$0xff] %v482
                  %v484 = vld [vmem:[%s436 + $0x170] sm:$0xff]
                  %485 = vst [vmem:[%s437 + $0xb8] sm:$0xff] %v484
                  %v486 = vld [vmem:[%s436 + $0x180] sm:$0xff]
                  %487 = vst [vmem:[%s437 + $0xc0] sm:$0xff] %v486
                  %v488 = vld [vmem:[%s436 + $0x190] sm:$0xff]
                  %489 = vst [vmem:[%s437 + $0xc8] sm:$0xff] %v488
                  %v490 = vld [vmem:[%s436 + $0x1a0] sm:$0xff]
                  %491 = vst [vmem:[%s437 + $0xd0] sm:$0xff] %v490
                  %v492 = vld [vmem:[%s436 + $0x1b0] sm:$0xff]
                  %493 = vst [vmem:[%s437 + $0xd8] sm:$0xff] %v492
                  %v494 = vld [vmem:[%s436 + $0x1c0] sm:$0xff]
                  %495 = vst [vmem:[%s437 + $0xe0] sm:$0xff] %v494
                  %v496 = vld [vmem:[%s436 + $0x1d0] sm:$0xff]
                  %497 = vst [vmem:[%s437 + $0xe8] sm:$0xff] %v496
                  %v498 = vld [vmem:[%s436 + $0x1e0] sm:$0xff]
                  %499 = vst [vmem:[%s437 + $0xf0] sm:$0xff] %v498
                  %v500 = vld [vmem:[%s436 + $0x1f0] sm:$0xff]
                  %501 = vst [vmem:[%s437 + $0xf8] sm:$0xff] %v500
                  %v502 = vld [vmem:[%s436 + $0x200] sm:$0xff]
                  %503 = vst [vmem:[%s437 + $0x100] sm:$0xff] %v502
                  %v504 = vld [vmem:[%s436 + $0x210] sm:$0xff]
                  %505 = vst [vmem:[%s437 + $0x108] sm:$0xff] %v504
                  %v506 = vld [vmem:[%s436 + $0x220] sm:$0xff]
                  %507 = vst [vmem:[%s437 + $0x110] sm:$0xff] %v506
                  %v508 = vld [vmem:[%s436 + $0x230] sm:$0xff]
                  %509 = vst [vmem:[%s437 + $0x118] sm:$0xff] %v508
                  %v510 = vld [vmem:[%s436 + $0x240] sm:$0xff]
                  %511 = vst [vmem:[%s437 + $0x120] sm:$0xff] %v510
                  %v512 = vld [vmem:[%s436 + $0x250] sm:$0xff]
                  %513 = vst [vmem:[%s437 + $0x128] sm:$0xff] %v512
                  %v514 = vld [vmem:[%s436 + $0x260] sm:$0xff]
                  %515 = vst [vmem:[%s437 + $0x130] sm:$0xff] %v514
                  %v516 = vld [vmem:[%s436 + $0x270] sm:$0xff]
                  %517 = vst [vmem:[%s437 + $0x138] sm:$0xff] %v516
                  %v518 = vld [vmem:[%s436 + $0x280] sm:$0xff]
                  %519 = vst [vmem:[%s437 + $0x140] sm:$0xff] %v518
                  %v520 = vld [vmem:[%s436 + $0x290] sm:$0xff]
                  %521 = vst [vmem:[%s437 + $0x148] sm:$0xff] %v520
                  %v522 = vld [vmem:[%s436 + $0x2a0] sm:$0xff]
                  %523 = vst [vmem:[%s437 + $0x150] sm:$0xff] %v522
                  %v524 = vld [vmem:[%s436 + $0x2b0] sm:$0xff]
                  %525 = vst [vmem:[%s437 + $0x158] sm:$0xff] %v524
                  %v526 = vld [vmem:[%s436 + $0x2c0] sm:$0xff]
                  %527 = vst [vmem:[%s437 + $0x160] sm:$0xff] %v526
                  %v528 = vld [vmem:[%s436 + $0x2d0] sm:$0xff]
                  %529 = vst [vmem:[%s437 + $0x168] sm:$0xff] %v528
                  %v530 = vld [vmem:[%s436 + $0x2e0] sm:$0xff]
                  %531 = vst [vmem:[%s437 + $0x170] sm:$0xff] %v530
                  %v532 = vld [vmem:[%s436 + $0x2f0] sm:$0xff]
                  %533 = vst [vmem:[%s437 + $0x178] sm:$0xff] %v532
                  %v534 = vld [vmem:[%s436 + $0x300] sm:$0xff]
                  %535 = vst [vmem:[%s437 + $0x180] sm:$0xff] %v534
                  %v536 = vld [vmem:[%s436 + $0x310] sm:$0xff]
                  %537 = vst [vmem:[%s437 + $0x188] sm:$0xff] %v536
                  %v538 = vld [vmem:[%s436 + $0x320] sm:$0xff]
                  %539 = vst [vmem:[%s437 + $0x190] sm:$0xff] %v538
                  %v540 = vld [vmem:[%s436 + $0x330] sm:$0xff]
                  %541 = vst [vmem:[%s437 + $0x198] sm:$0xff] %v540
                  %v542 = vld [vmem:[%s436 + $0x340] sm:$0xff]
                  %543 = vst [vmem:[%s437 + $0x1a0] sm:$0xff] %v542
                  %v544 = vld [vmem:[%s436 + $0x350] sm:$0xff]
                  %545 = vst [vmem:[%s437 + $0x1a8] sm:$0xff] %v544
                  %v546 = vld [vmem:[%s436 + $0x360] sm:$0xff]
                  %547 = vst [vmem:[%s437 + $0x1b0] sm:$0xff] %v546
                  %v548 = vld [vmem:[%s436 + $0x370] sm:$0xff]
                  %549 = vst [vmem:[%s437 + $0x1b8] sm:$0xff] %v548
                  %v550 = vld [vmem:[%s436 + $0x380] sm:$0xff]
                  %551 = vst [vmem:[%s437 + $0x1c0] sm:$0xff] %v550
                  %v552 = vld [vmem:[%s436 + $0x390] sm:$0xff]
                  %553 = vst [vmem:[%s437 + $0x1c8] sm:$0xff] %v552
                  %v554 = vld [vmem:[%s436 + $0x3a0] sm:$0xff]
                  %555 = vst [vmem:[%s437 + $0x1d0] sm:$0xff] %v554
                  %v556 = vld [vmem:[%s436 + $0x3b0] sm:$0xff]
                  %557 = vst [vmem:[%s437 + $0x1d8] sm:$0xff] %v556
                  %v558 = vld [vmem:[%s436 + $0x3c0] sm:$0xff]
                  %559 = vst [vmem:[%s437 + $0x1e0] sm:$0xff] %v558
                  %v560 = vld [vmem:[%s436 + $0x3d0] sm:$0xff]
                  %561 = vst [vmem:[%s437 + $0x1e8] sm:$0xff] %v560
                  %v562 = vld [vmem:[%s436 + $0x3e0] sm:$0xff]
                  %563 = vst [vmem:[%s437 + $0x1f0] sm:$0xff] %v562
                  %v564 = vld [vmem:[%s436 + $0x3f0] sm:$0xff]
                  %565 = vst [vmem:[%s437 + $0x1f8] sm:$0xff] %v564
                  %v566 = vld [vmem:[%s436 + $0x400] sm:$0xff]
                  %567 = vst [vmem:[%s437 + $0x200] sm:$0xff] %v566
                  %v568 = vld [vmem:[%s436 + $0x410] sm:$0xff]
                  %569 = vst [vmem:[%s437 + $0x208] sm:$0xff] %v568
                  %v570 = vld [vmem:[%s436 + $0x420] sm:$0xff]
                  %571 = vst [vmem:[%s437 + $0x210] sm:$0xff] %v570
                  %v572 = vld [vmem:[%s436 + $0x430] sm:$0xff]
                  %573 = vst [vmem:[%s437 + $0x218] sm:$0xff] %v572
                  %v574 = vld [vmem:[%s436 + $0x440] sm:$0xff]
                  %575 = vst [vmem:[%s437 + $0x220] sm:$0xff] %v574
                  %v576 = vld [vmem:[%s436 + $0x450] sm:$0xff]
                  %577 = vst [vmem:[%s437 + $0x228] sm:$0xff] %v576
                  %v578 = vld [vmem:[%s436 + $0x460] sm:$0xff]
                  %579 = vst [vmem:[%s437 + $0x230] sm:$0xff] %v578
                  %v580 = vld [vmem:[%s436 + $0x470] sm:$0xff]
                  %581 = vst [vmem:[%s437 + $0x238] sm:$0xff] %v580
                  %v582 = vld [vmem:[%s436 + $0x480] sm:$0xff]
                  %583 = vst [vmem:[%s437 + $0x240] sm:$0xff] %v582
                  %v584 = vld [vmem:[%s436 + $0x490] sm:$0xff]
                  %585 = vst [vmem:[%s437 + $0x248] sm:$0xff] %v584
                  %v586 = vld [vmem:[%s436 + $0x4a0] sm:$0xff]
                  %587 = vst [vmem:[%s437 + $0x250] sm:$0xff] %v586
                  %v588 = vld [vmem:[%s436 + $0x4b0] sm:$0xff]
                  %589 = vst [vmem:[%s437 + $0x258] sm:$0xff] %v588
                  %v590 = vld [vmem:[%s436 + $0x4c0] sm:$0xff]
                  %591 = vst [vmem:[%s437 + $0x260] sm:$0xff] %v590
                  %v592 = vld [vmem:[%s436 + $0x4d0] sm:$0xff]
                  %593 = vst [vmem:[%s437 + $0x268] sm:$0xff] %v592
                  %v594 = vld [vmem:[%s436 + $0x4e0] sm:$0xff]
                  %595 = vst [vmem:[%s437 + $0x270] sm:$0xff] %v594
                  %v596 = vld [vmem:[%s436 + $0x4f0] sm:$0xff]
                  %597 = vst [vmem:[%s437 + $0x278] sm:$0xff] %v596
                  %v598 = vld [vmem:[%s436 + $0x500] sm:$0xff]
                  %599 = vst [vmem:[%s437 + $0x280] sm:$0xff] %v598
                  %v600 = vld [vmem:[%s436 + $0x510] sm:$0xff]
                  %601 = vst [vmem:[%s437 + $0x288] sm:$0xff] %v600
                  %v602 = vld [vmem:[%s436 + $0x520] sm:$0xff]
                  %603 = vst [vmem:[%s437 + $0x290] sm:$0xff] %v602
                  %v604 = vld [vmem:[%s436 + $0x530] sm:$0xff]
                  %605 = vst [vmem:[%s437 + $0x298] sm:$0xff] %v604
                  %v606 = vld [vmem:[%s436 + $0x540] sm:$0xff]
                  %607 = vst [vmem:[%s437 + $0x2a0] sm:$0xff] %v606
                  %v608 = vld [vmem:[%s436 + $0x550] sm:$0xff]
                  %609 = vst [vmem:[%s437 + $0x2a8] sm:$0xff] %v608
                  %v610 = vld [vmem:[%s436 + $0x560] sm:$0xff]
                  %611 = vst [vmem:[%s437 + $0x2b0] sm:$0xff] %v610
                  %v612 = vld [vmem:[%s436 + $0x570] sm:$0xff]
                  %613 = vst [vmem:[%s437 + $0x2b8] sm:$0xff] %v612
                  %v614 = vld [vmem:[%s436 + $0x580] sm:$0xff]
                  %615 = vst [vmem:[%s437 + $0x2c0] sm:$0xff] %v614
                  %v616 = vld [vmem:[%s436 + $0x590] sm:$0xff]
                  %617 = vst [vmem:[%s437 + $0x2c8] sm:$0xff] %v616
                  %v618 = vld [vmem:[%s436 + $0x5a0] sm:$0xff]
                  %619 = vst [vmem:[%s437 + $0x2d0] sm:$0xff] %v618
                  %v620 = vld [vmem:[%s436 + $0x5b0] sm:$0xff]
                  %621 = vst [vmem:[%s437 + $0x2d8] sm:$0xff] %v620
                  %v622 = vld [vmem:[%s436 + $0x5c0] sm:$0xff]
                  %623 = vst [vmem:[%s437 + $0x2e0] sm:$0xff] %v622
                  %v624 = vld [vmem:[%s436 + $0x5d0] sm:$0xff]
                  %625 = vst [vmem:[%s437 + $0x2e8] sm:$0xff] %v624
                  %v626 = vld [vmem:[%s436 + $0x5e0] sm:$0xff]
                  %627 = vst [vmem:[%s437 + $0x2f0] sm:$0xff] %v626
                  %v628 = vld [vmem:[%s436 + $0x5f0] sm:$0xff]
                  %629 = vst [vmem:[%s437 + $0x2f8] sm:$0xff] %v628
                  %v630 = vld [vmem:[%s436 + $0x600] sm:$0xff]
                  %631 = vst [vmem:[%s437 + $0x300] sm:$0xff] %v630
                  %v632 = vld [vmem:[%s436 + $0x610] sm:$0xff]
                  %633 = vst [vmem:[%s437 + $0x308] sm:$0xff] %v632
                  %v634 = vld [vmem:[%s436 + $0x620] sm:$0xff]
                  %635 = vst [vmem:[%s437 + $0x310] sm:$0xff] %v634
                  %v636 = vld [vmem:[%s436 + $0x630] sm:$0xff]
                  %637 = vst [vmem:[%s437 + $0x318] sm:$0xff] %v636
                  %v638 = vld [vmem:[%s436 + $0x640] sm:$0xff]
                  %639 = vst [vmem:[%s437 + $0x320] sm:$0xff] %v638
                  %v640 = vld [vmem:[%s436 + $0x650] sm:$0xff]
                  %641 = vst [vmem:[%s437 + $0x328] sm:$0xff] %v640
                  %v642 = vld [vmem:[%s436 + $0x660] sm:$0xff]
                  %643 = vst [vmem:[%s437 + $0x330] sm:$0xff] %v642
                  %v644 = vld [vmem:[%s436 + $0x670] sm:$0xff]
                  %645 = vst [vmem:[%s437 + $0x338] sm:$0xff] %v644
                  %v646 = vld [vmem:[%s436 + $0x680] sm:$0xff]
                  %647 = vst [vmem:[%s437 + $0x340] sm:$0xff] %v646
                  %v648 = vld [vmem:[%s436 + $0x690] sm:$0xff]
                  %649 = vst [vmem:[%s437 + $0x348] sm:$0xff] %v648
                  %v650 = vld [vmem:[%s436 + $0x6a0] sm:$0xff]
                  %651 = vst [vmem:[%s437 + $0x350] sm:$0xff] %v650
                  %v652 = vld [vmem:[%s436 + $0x6b0] sm:$0xff]
                  %653 = vst [vmem:[%s437 + $0x358] sm:$0xff] %v652
                  %v654 = vld [vmem:[%s436 + $0x6c0] sm:$0xff]
                  %655 = vst [vmem:[%s437 + $0x360] sm:$0xff] %v654
                  %v656 = vld [vmem:[%s436 + $0x6d0] sm:$0xff]
                  %657 = vst [vmem:[%s437 + $0x368] sm:$0xff] %v656
                  %v658 = vld [vmem:[%s436 + $0x6e0] sm:$0xff]
                  %659 = vst [vmem:[%s437 + $0x370] sm:$0xff] %v658
                  %v660 = vld [vmem:[%s436 + $0x6f0] sm:$0xff]
                  %661 = vst [vmem:[%s437 + $0x378] sm:$0xff] %v660
                  %v662 = vld [vmem:[%s436 + $0x700] sm:$0xff]
                  %663 = vst [vmem:[%s437 + $0x380] sm:$0xff] %v662
                  %v664 = vld [vmem:[%s436 + $0x710] sm:$0xff]
                  %665 = vst [vmem:[%s437 + $0x388] sm:$0xff] %v664
                  %v666 = vld [vmem:[%s436 + $0x720] sm:$0xff]
                  %667 = vst [vmem:[%s437 + $0x390] sm:$0xff] %v666
                  %v668 = vld [vmem:[%s436 + $0x730] sm:$0xff]
                  %669 = vst [vmem:[%s437 + $0x398] sm:$0xff] %v668
                  %v670 = vld [vmem:[%s436 + $0x740] sm:$0xff]
                  %671 = vst [vmem:[%s437 + $0x3a0] sm:$0xff] %v670
                  %v672 = vld [vmem:[%s436 + $0x750] sm:$0xff]
                  %673 = vst [vmem:[%s437 + $0x3a8] sm:$0xff] %v672
                  %v674 = vld [vmem:[%s436 + $0x760] sm:$0xff]
                  %675 = vst [vmem:[%s437 + $0x3b0] sm:$0xff] %v674
                  %v676 = vld [vmem:[%s436 + $0x770] sm:$0xff]
                  %677 = vst [vmem:[%s437 + $0x3b8] sm:$0xff] %v676
                  %v678 = vld [vmem:[%s436 + $0x780] sm:$0xff]
                  %679 = vst [vmem:[%s437 + $0x3c0] sm:$0xff] %v678
                  %v680 = vld [vmem:[%s436 + $0x790] sm:$0xff]
                  %681 = vst [vmem:[%s437 + $0x3c8] sm:$0xff] %v680
                  %v682 = vld [vmem:[%s436 + $0x7a0] sm:$0xff]
                  %683 = vst [vmem:[%s437 + $0x3d0] sm:$0xff] %v682
                  %v684 = vld [vmem:[%s436 + $0x7b0] sm:$0xff]
                  %685 = vst [vmem:[%s437 + $0x3d8] sm:$0xff] %v684
                  %v686 = vld [vmem:[%s436 + $0x7c0] sm:$0xff]
                  %687 = vst [vmem:[%s437 + $0x3e0] sm:$0xff] %v686
                  %v688 = vld [vmem:[%s436 + $0x7d0] sm:$0xff]
                  %689 = vst [vmem:[%s437 + $0x3e8] sm:$0xff] %v688
                  %v690 = vld [vmem:[%s436 + $0x7e0] sm:$0xff]
                  %691 = vst [vmem:[%s437 + $0x3f0] sm:$0xff] %v690
                  %v692 = vld [vmem:[%s436 + $0x7f0] sm:$0xff]
                  %693 = vst [vmem:[%s437 + $0x3f8] sm:$0xff] %v692
                $region52: #{discriminator_forward.7} parent=46 // loop_footer
                  %s435 = sadd.s32 1, %s431
                $region53: #{discriminator_forward.7} parent=46 // loop_footer_branch
                  %430 = sbr.rel target = $region49
                $region54: #{discriminator_forward.7} parent=46 // loop_exit
                  _
              $region47: #{discriminator_forward.7} parent=31 // pred_fallthru
                _
              // Predicated region
              $region55: #{discriminator_forward.7} parent=31 // pred_check
                _
              $region56: #{discriminator_forward.7} parent=31 // pred_check_branch
                %695 = sbr.rel target = $region58
              $region57: #{discriminator_forward.7} parent=31 // pred_region
                _
              $region58: #{discriminator_forward.7} parent=31 // pred_fallthru
                _
            $region32: #{discriminator_forward.7} parent=27 // pred_fallthru
              _
            // Predicated region
            $region33: #{discriminator_forward.7} parent=27 // pred_check
              _
            $region34: #{discriminator_forward.7} parent=27 // pred_check_branch
              %162 = sbr.rel target = $region36
            $region35: #{discriminator_forward.7} parent=27 // pred_region
              loop: start=0, step=1, limit=1
              $region37: #{discriminator_forward.7} parent=35 // loop_pre_header
                _
              $region38: #{discriminator_forward.7} parent=35 // loop_header
                %s165 = sphi 0, %s169
                %p166 = scmp.ge.s32.totalorder %s165, 1
                %s170 = sphi %s156, %s156
                %s171 = sphi %s150, %s150
              $region39: #{discriminator_forward.7} parent=35 // loop_header_branch
                %168 = sbr.rel (%p166) target = $region43
              $region40: #{discriminator_forward.7} parent=35 // loop_body
                %v172 = vld [vmem:[%s170] sm:$0xff]
                %173 = vst [vmem:[%s171] sm:$0xff] %v172
                %v174 = vld [vmem:[%s170 + $0x10] sm:$0xff]
                %175 = vst [vmem:[%s171 + $0x8] sm:$0xff] %v174
                %v176 = vld [vmem:[%s170 + $0x20] sm:$0xff]
                %177 = vst [vmem:[%s171 + $0x10] sm:$0xff] %v176
                %v178 = vld [vmem:[%s170 + $0x30] sm:$0xff]
                %179 = vst [vmem:[%s171 + $0x18] sm:$0xff] %v178
                %v180 = vld [vmem:[%s170 + $0x40] sm:$0xff]
                %181 = vst [vmem:[%s171 + $0x20] sm:$0xff] %v180
                %v182 = vld [vmem:[%s170 + $0x50] sm:$0xff]
                %183 = vst [vmem:[%s171 + $0x28] sm:$0xff] %v182
                %v184 = vld [vmem:[%s170 + $0x60] sm:$0xff]
                %185 = vst [vmem:[%s171 + $0x30] sm:$0xff] %v184
                %v186 = vld [vmem:[%s170 + $0x70] sm:$0xff]
                %187 = vst [vmem:[%s171 + $0x38] sm:$0xff] %v186
                %v188 = vld [vmem:[%s170 + $0x80] sm:$0xff]
                %189 = vst [vmem:[%s171 + $0x40] sm:$0xff] %v188
                %v190 = vld [vmem:[%s170 + $0x90] sm:$0xff]
                %191 = vst [vmem:[%s171 + $0x48] sm:$0xff] %v190
                %v192 = vld [vmem:[%s170 + $0xa0] sm:$0xff]
                %193 = vst [vmem:[%s171 + $0x50] sm:$0xff] %v192
                %v194 = vld [vmem:[%s170 + $0xb0] sm:$0xff]
                %195 = vst [vmem:[%s171 + $0x58] sm:$0xff] %v194
                %v196 = vld [vmem:[%s170 + $0xc0] sm:$0xff]
                %197 = vst [vmem:[%s171 + $0x60] sm:$0xff] %v196
                %v198 = vld [vmem:[%s170 + $0xd0] sm:$0xff]
                %199 = vst [vmem:[%s171 + $0x68] sm:$0xff] %v198
                %v200 = vld [vmem:[%s170 + $0xe0] sm:$0xff]
                %201 = vst [vmem:[%s171 + $0x70] sm:$0xff] %v200
                %v202 = vld [vmem:[%s170 + $0xf0] sm:$0xff]
                %203 = vst [vmem:[%s171 + $0x78] sm:$0xff] %v202
                %v204 = vld [vmem:[%s170 + $0x100] sm:$0xff]
                %205 = vst [vmem:[%s171 + $0x80] sm:$0xff] %v204
                %v206 = vld [vmem:[%s170 + $0x110] sm:$0xff]
                %207 = vst [vmem:[%s171 + $0x88] sm:$0xff] %v206
                %v208 = vld [vmem:[%s170 + $0x120] sm:$0xff]
                %209 = vst [vmem:[%s171 + $0x90] sm:$0xff] %v208
                %v210 = vld [vmem:[%s170 + $0x130] sm:$0xff]
                %211 = vst [vmem:[%s171 + $0x98] sm:$0xff] %v210
                %v212 = vld [vmem:[%s170 + $0x140] sm:$0xff]
                %213 = vst [vmem:[%s171 + $0xa0] sm:$0xff] %v212
                %v214 = vld [vmem:[%s170 + $0x150] sm:$0xff]
                %215 = vst [vmem:[%s171 + $0xa8] sm:$0xff] %v214
                %v216 = vld [vmem:[%s170 + $0x160] sm:$0xff]
                %217 = vst [vmem:[%s171 + $0xb0] sm:$0xff] %v216
                %v218 = vld [vmem:[%s170 + $0x170] sm:$0xff]
                %219 = vst [vmem:[%s171 + $0xb8] sm:$0xff] %v218
                %v220 = vld [vmem:[%s170 + $0x180] sm:$0xff]
                %221 = vst [vmem:[%s171 + $0xc0] sm:$0xff] %v220
                %v222 = vld [vmem:[%s170 + $0x190] sm:$0xff]
                %223 = vst [vmem:[%s171 + $0xc8] sm:$0xff] %v222
                %v224 = vld [vmem:[%s170 + $0x1a0] sm:$0xff]
                %225 = vst [vmem:[%s171 + $0xd0] sm:$0xff] %v224
                %v226 = vld [vmem:[%s170 + $0x1b0] sm:$0xff]
                %227 = vst [vmem:[%s171 + $0xd8] sm:$0xff] %v226
                %v228 = vld [vmem:[%s170 + $0x1c0] sm:$0xff]
                %229 = vst [vmem:[%s171 + $0xe0] sm:$0xff] %v228
                %v230 = vld [vmem:[%s170 + $0x1d0] sm:$0xff]
                %231 = vst [vmem:[%s171 + $0xe8] sm:$0xff] %v230
                %v232 = vld [vmem:[%s170 + $0x1e0] sm:$0xff]
                %233 = vst [vmem:[%s171 + $0xf0] sm:$0xff] %v232
                %v234 = vld [vmem:[%s170 + $0x1f0] sm:$0xff]
                %235 = vst [vmem:[%s171 + $0xf8] sm:$0xff] %v234
                %v236 = vld [vmem:[%s170 + $0x200] sm:$0xff]
                %237 = vst [vmem:[%s171 + $0x100] sm:$0xff] %v236
                %v238 = vld [vmem:[%s170 + $0x210] sm:$0xff]
                %239 = vst [vmem:[%s171 + $0x108] sm:$0xff] %v238
                %v240 = vld [vmem:[%s170 + $0x220] sm:$0xff]
                %241 = vst [vmem:[%s171 + $0x110] sm:$0xff] %v240
                %v242 = vld [vmem:[%s170 + $0x230] sm:$0xff]
                %243 = vst [vmem:[%s171 + $0x118] sm:$0xff] %v242
                %v244 = vld [vmem:[%s170 + $0x240] sm:$0xff]
                %245 = vst [vmem:[%s171 + $0x120] sm:$0xff] %v244
                %v246 = vld [vmem:[%s170 + $0x250] sm:$0xff]
                %247 = vst [vmem:[%s171 + $0x128] sm:$0xff] %v246
                %v248 = vld [vmem:[%s170 + $0x260] sm:$0xff]
                %249 = vst [vmem:[%s171 + $0x130] sm:$0xff] %v248
                %v250 = vld [vmem:[%s170 + $0x270] sm:$0xff]
                %251 = vst [vmem:[%s171 + $0x138] sm:$0xff] %v250
                %v252 = vld [vmem:[%s170 + $0x280] sm:$0xff]
                %253 = vst [vmem:[%s171 + $0x140] sm:$0xff] %v252
                %v254 = vld [vmem:[%s170 + $0x290] sm:$0xff]
                %255 = vst [vmem:[%s171 + $0x148] sm:$0xff] %v254
                %v256 = vld [vmem:[%s170 + $0x2a0] sm:$0xff]
                %257 = vst [vmem:[%s171 + $0x150] sm:$0xff] %v256
                %v258 = vld [vmem:[%s170 + $0x2b0] sm:$0xff]
                %259 = vst [vmem:[%s171 + $0x158] sm:$0xff] %v258
                %v260 = vld [vmem:[%s170 + $0x2c0] sm:$0xff]
                %261 = vst [vmem:[%s171 + $0x160] sm:$0xff] %v260
                %v262 = vld [vmem:[%s170 + $0x2d0] sm:$0xff]
                %263 = vst [vmem:[%s171 + $0x168] sm:$0xff] %v262
                %v264 = vld [vmem:[%s170 + $0x2e0] sm:$0xff]
                %265 = vst [vmem:[%s171 + $0x170] sm:$0xff] %v264
                %v266 = vld [vmem:[%s170 + $0x2f0] sm:$0xff]
                %267 = vst [vmem:[%s171 + $0x178] sm:$0xff] %v266
                %v268 = vld [vmem:[%s170 + $0x300] sm:$0xff]
                %269 = vst [vmem:[%s171 + $0x180] sm:$0xff] %v268
                %v270 = vld [vmem:[%s170 + $0x310] sm:$0xff]
                %271 = vst [vmem:[%s171 + $0x188] sm:$0xff] %v270
                %v272 = vld [vmem:[%s170 + $0x320] sm:$0xff]
                %273 = vst [vmem:[%s171 + $0x190] sm:$0xff] %v272
                %v274 = vld [vmem:[%s170 + $0x330] sm:$0xff]
                %275 = vst [vmem:[%s171 + $0x198] sm:$0xff] %v274
                %v276 = vld [vmem:[%s170 + $0x340] sm:$0xff]
                %277 = vst [vmem:[%s171 + $0x1a0] sm:$0xff] %v276
                %v278 = vld [vmem:[%s170 + $0x350] sm:$0xff]
                %279 = vst [vmem:[%s171 + $0x1a8] sm:$0xff] %v278
                %v280 = vld [vmem:[%s170 + $0x360] sm:$0xff]
                %281 = vst [vmem:[%s171 + $0x1b0] sm:$0xff] %v280
                %v282 = vld [vmem:[%s170 + $0x370] sm:$0xff]
                %283 = vst [vmem:[%s171 + $0x1b8] sm:$0xff] %v282
                %v284 = vld [vmem:[%s170 + $0x380] sm:$0xff]
                %285 = vst [vmem:[%s171 + $0x1c0] sm:$0xff] %v284
                %v286 = vld [vmem:[%s170 + $0x390] sm:$0xff]
                %287 = vst [vmem:[%s171 + $0x1c8] sm:$0xff] %v286
                %v288 = vld [vmem:[%s170 + $0x3a0] sm:$0xff]
                %289 = vst [vmem:[%s171 + $0x1d0] sm:$0xff] %v288
                %v290 = vld [vmem:[%s170 + $0x3b0] sm:$0xff]
                %291 = vst [vmem:[%s171 + $0x1d8] sm:$0xff] %v290
                %v292 = vld [vmem:[%s170 + $0x3c0] sm:$0xff]
                %293 = vst [vmem:[%s171 + $0x1e0] sm:$0xff] %v292
                %v294 = vld [vmem:[%s170 + $0x3d0] sm:$0xff]
                %295 = vst [vmem:[%s171 + $0x1e8] sm:$0xff] %v294
                %v296 = vld [vmem:[%s170 + $0x3e0] sm:$0xff]
                %297 = vst [vmem:[%s171 + $0x1f0] sm:$0xff] %v296
                %v298 = vld [vmem:[%s170 + $0x3f0] sm:$0xff]
                %299 = vst [vmem:[%s171 + $0x1f8] sm:$0xff] %v298
                %v300 = vld [vmem:[%s170 + $0x400] sm:$0xff]
                %301 = vst [vmem:[%s171 + $0x200] sm:$0xff] %v300
                %v302 = vld [vmem:[%s170 + $0x410] sm:$0xff]
                %303 = vst [vmem:[%s171 + $0x208] sm:$0xff] %v302
                %v304 = vld [vmem:[%s170 + $0x420] sm:$0xff]
                %305 = vst [vmem:[%s171 + $0x210] sm:$0xff] %v304
                %v306 = vld [vmem:[%s170 + $0x430] sm:$0xff]
                %307 = vst [vmem:[%s171 + $0x218] sm:$0xff] %v306
                %v308 = vld [vmem:[%s170 + $0x440] sm:$0xff]
                %309 = vst [vmem:[%s171 + $0x220] sm:$0xff] %v308
                %v310 = vld [vmem:[%s170 + $0x450] sm:$0xff]
                %311 = vst [vmem:[%s171 + $0x228] sm:$0xff] %v310
                %v312 = vld [vmem:[%s170 + $0x460] sm:$0xff]
                %313 = vst [vmem:[%s171 + $0x230] sm:$0xff] %v312
                %v314 = vld [vmem:[%s170 + $0x470] sm:$0xff]
                %315 = vst [vmem:[%s171 + $0x238] sm:$0xff] %v314
                %v316 = vld [vmem:[%s170 + $0x480] sm:$0xff]
                %317 = vst [vmem:[%s171 + $0x240] sm:$0xff] %v316
                %v318 = vld [vmem:[%s170 + $0x490] sm:$0xff]
                %319 = vst [vmem:[%s171 + $0x248] sm:$0xff] %v318
                %v320 = vld [vmem:[%s170 + $0x4a0] sm:$0xff]
                %321 = vst [vmem:[%s171 + $0x250] sm:$0xff] %v320
                %v322 = vld [vmem:[%s170 + $0x4b0] sm:$0xff]
                %323 = vst [vmem:[%s171 + $0x258] sm:$0xff] %v322
                %v324 = vld [vmem:[%s170 + $0x4c0] sm:$0xff]
                %325 = vst [vmem:[%s171 + $0x260] sm:$0xff] %v324
                %v326 = vld [vmem:[%s170 + $0x4d0] sm:$0xff]
                %327 = vst [vmem:[%s171 + $0x268] sm:$0xff] %v326
                %v328 = vld [vmem:[%s170 + $0x4e0] sm:$0xff]
                %329 = vst [vmem:[%s171 + $0x270] sm:$0xff] %v328
                %v330 = vld [vmem:[%s170 + $0x4f0] sm:$0xff]
                %331 = vst [vmem:[%s171 + $0x278] sm:$0xff] %v330
                %v332 = vld [vmem:[%s170 + $0x500] sm:$0xff]
                %333 = vst [vmem:[%s171 + $0x280] sm:$0xff] %v332
                %v334 = vld [vmem:[%s170 + $0x510] sm:$0xff]
                %335 = vst [vmem:[%s171 + $0x288] sm:$0xff] %v334
                %v336 = vld [vmem:[%s170 + $0x520] sm:$0xff]
                %337 = vst [vmem:[%s171 + $0x290] sm:$0xff] %v336
                %v338 = vld [vmem:[%s170 + $0x530] sm:$0xff]
                %339 = vst [vmem:[%s171 + $0x298] sm:$0xff] %v338
                %v340 = vld [vmem:[%s170 + $0x540] sm:$0xff]
                %341 = vst [vmem:[%s171 + $0x2a0] sm:$0xff] %v340
                %v342 = vld [vmem:[%s170 + $0x550] sm:$0xff]
                %343 = vst [vmem:[%s171 + $0x2a8] sm:$0xff] %v342
                %v344 = vld [vmem:[%s170 + $0x560] sm:$0xff]
                %345 = vst [vmem:[%s171 + $0x2b0] sm:$0xff] %v344
                %v346 = vld [vmem:[%s170 + $0x570] sm:$0xff]
                %347 = vst [vmem:[%s171 + $0x2b8] sm:$0xff] %v346
                %v348 = vld [vmem:[%s170 + $0x580] sm:$0xff]
                %349 = vst [vmem:[%s171 + $0x2c0] sm:$0xff] %v348
                %v350 = vld [vmem:[%s170 + $0x590] sm:$0xff]
                %351 = vst [vmem:[%s171 + $0x2c8] sm:$0xff] %v350
                %v352 = vld [vmem:[%s170 + $0x5a0] sm:$0xff]
                %353 = vst [vmem:[%s171 + $0x2d0] sm:$0xff] %v352
                %v354 = vld [vmem:[%s170 + $0x5b0] sm:$0xff]
                %355 = vst [vmem:[%s171 + $0x2d8] sm:$0xff] %v354
                %v356 = vld [vmem:[%s170 + $0x5c0] sm:$0xff]
                %357 = vst [vmem:[%s171 + $0x2e0] sm:$0xff] %v356
                %v358 = vld [vmem:[%s170 + $0x5d0] sm:$0xff]
                %359 = vst [vmem:[%s171 + $0x2e8] sm:$0xff] %v358
                %v360 = vld [vmem:[%s170 + $0x5e0] sm:$0xff]
                %361 = vst [vmem:[%s171 + $0x2f0] sm:$0xff] %v360
                %v362 = vld [vmem:[%s170 + $0x5f0] sm:$0xff]
                %363 = vst [vmem:[%s171 + $0x2f8] sm:$0xff] %v362
                %v364 = vld [vmem:[%s170 + $0x600] sm:$0xff]
                %365 = vst [vmem:[%s171 + $0x300] sm:$0xff] %v364
                %v366 = vld [vmem:[%s170 + $0x610] sm:$0xff]
                %367 = vst [vmem:[%s171 + $0x308] sm:$0xff] %v366
                %v368 = vld [vmem:[%s170 + $0x620] sm:$0xff]
                %369 = vst [vmem:[%s171 + $0x310] sm:$0xff] %v368
                %v370 = vld [vmem:[%s170 + $0x630] sm:$0xff]
                %371 = vst [vmem:[%s171 + $0x318] sm:$0xff] %v370
                %v372 = vld [vmem:[%s170 + $0x640] sm:$0xff]
                %373 = vst [vmem:[%s171 + $0x320] sm:$0xff] %v372
                %v374 = vld [vmem:[%s170 + $0x650] sm:$0xff]
                %375 = vst [vmem:[%s171 + $0x328] sm:$0xff] %v374
                %v376 = vld [vmem:[%s170 + $0x660] sm:$0xff]
                %377 = vst [vmem:[%s171 + $0x330] sm:$0xff] %v376
                %v378 = vld [vmem:[%s170 + $0x670] sm:$0xff]
                %379 = vst [vmem:[%s171 + $0x338] sm:$0xff] %v378
                %v380 = vld [vmem:[%s170 + $0x680] sm:$0xff]
                %381 = vst [vmem:[%s171 + $0x340] sm:$0xff] %v380
                %v382 = vld [vmem:[%s170 + $0x690] sm:$0xff]
                %383 = vst [vmem:[%s171 + $0x348] sm:$0xff] %v382
                %v384 = vld [vmem:[%s170 + $0x6a0] sm:$0xff]
                %385 = vst [vmem:[%s171 + $0x350] sm:$0xff] %v384
                %v386 = vld [vmem:[%s170 + $0x6b0] sm:$0xff]
                %387 = vst [vmem:[%s171 + $0x358] sm:$0xff] %v386
                %v388 = vld [vmem:[%s170 + $0x6c0] sm:$0xff]
                %389 = vst [vmem:[%s171 + $0x360] sm:$0xff] %v388
                %v390 = vld [vmem:[%s170 + $0x6d0] sm:$0xff]
                %391 = vst [vmem:[%s171 + $0x368] sm:$0xff] %v390
                %v392 = vld [vmem:[%s170 + $0x6e0] sm:$0xff]
                %393 = vst [vmem:[%s171 + $0x370] sm:$0xff] %v392
                %v394 = vld [vmem:[%s170 + $0x6f0] sm:$0xff]
                %395 = vst [vmem:[%s171 + $0x378] sm:$0xff] %v394
                %v396 = vld [vmem:[%s170 + $0x700] sm:$0xff]
                %397 = vst [vmem:[%s171 + $0x380] sm:$0xff] %v396
                %v398 = vld [vmem:[%s170 + $0x710] sm:$0xff]
                %399 = vst [vmem:[%s171 + $0x388] sm:$0xff] %v398
                %v400 = vld [vmem:[%s170 + $0x720] sm:$0xff]
                %401 = vst [vmem:[%s171 + $0x390] sm:$0xff] %v400
                %v402 = vld [vmem:[%s170 + $0x730] sm:$0xff]
                %403 = vst [vmem:[%s171 + $0x398] sm:$0xff] %v402
                %v404 = vld [vmem:[%s170 + $0x740] sm:$0xff]
                %405 = vst [vmem:[%s171 + $0x3a0] sm:$0xff] %v404
                %v406 = vld [vmem:[%s170 + $0x750] sm:$0xff]
                %407 = vst [vmem:[%s171 + $0x3a8] sm:$0xff] %v406
                %v408 = vld [vmem:[%s170 + $0x760] sm:$0xff]
                %409 = vst [vmem:[%s171 + $0x3b0] sm:$0xff] %v408
                %v410 = vld [vmem:[%s170 + $0x770] sm:$0xff]
                %411 = vst [vmem:[%s171 + $0x3b8] sm:$0xff] %v410
                %v412 = vld [vmem:[%s170 + $0x780] sm:$0xff]
                %413 = vst [vmem:[%s171 + $0x3c0] sm:$0xff] %v412
                %v414 = vld [vmem:[%s170 + $0x790] sm:$0xff]
                %415 = vst [vmem:[%s171 + $0x3c8] sm:$0xff] %v414
                %v416 = vld [vmem:[%s170 + $0x7a0] sm:$0xff]
                %417 = vst [vmem:[%s171 + $0x3d0] sm:$0xff] %v416
                %v418 = vld [vmem:[%s170 + $0x7b0] sm:$0xff]
                %419 = vst [vmem:[%s171 + $0x3d8] sm:$0xff] %v418
                %v420 = vld [vmem:[%s170 + $0x7c0] sm:$0xff]
                %421 = vst [vmem:[%s171 + $0x3e0] sm:$0xff] %v420
                %v422 = vld [vmem:[%s170 + $0x7d0] sm:$0xff]
                %423 = vst [vmem:[%s171 + $0x3e8] sm:$0xff] %v422
                %v424 = vld [vmem:[%s170 + $0x7e0] sm:$0xff]
                %425 = vst [vmem:[%s171 + $0x3f0] sm:$0xff] %v424
                %v426 = vld [vmem:[%s170 + $0x7f0] sm:$0xff]
                %427 = vst [vmem:[%s171 + $0x3f8] sm:$0xff] %v426
              $region41: #{discriminator_forward.7} parent=35 // loop_footer
                %s169 = sadd.s32 1, %s165
              $region42: #{discriminator_forward.7} parent=35 // loop_footer_branch
                %164 = sbr.rel target = $region38
              $region43: #{discriminator_forward.7} parent=35 // loop_exit
                _
            $region36: #{discriminator_forward.7} parent=27 // pred_fallthru
              _
          $region28: #{discriminator_forward.7} parent=23 // pred_fallthru
            _
          %696 = vnop
        $region24: #{discriminator_forward.7} parent=19 // pred_fallthru
          _
        // Predicated region
        $region59: #{discriminator_forward.7} parent=19 // pred_check
          %p697 = pneg %p90
        $region60: #{discriminator_forward.7} parent=19 // pred_check_branch
          %699 = sbr.rel (%p697) target = $region62
        $region61: #{discriminator_forward.7} parent=19 // pred_region
          %s700 = smul.u32 2, %s16
          %p701 = scmp.lt.s32.totalorder %s700, 3
          %s702 = scalar_select %p701, %s700, 3
          %s703 = scalar_lea.vmem %s2, %s702
          %s704 = smul.u32 2, %s16
        $region62: #{discriminator_forward.7} parent=19 // pred_fallthru
          _
      $region20: #{discriminator_forward.7} parent=5 // pred_fallthru
        _
      %p705 = scmp.le.s32.totalorder 1, %s9
      %p706 = scmp.lt.s32.totalorder %s9, 3
      %p707 = pnand %p705, %p706
      %p708 = pneg %p707
      // Predicated region
      $region63: #{discriminator_forward.7} parent=5 // pred_check
        _
      $region64: #{discriminator_forward.7} parent=5 // pred_check_branch
        %710 = sbr.rel (%p707) target = $region66
      $region65: #{discriminator_forward.7} parent=5 // pred_region
        %s711 = ssub.s32 %s9, 1
        %s712 = sand.u32 %s57, 1
        %s713 = sand.u32 %s57, 1
        %s714 = smul.addr %s713, 1024
        %s715 = scalar_lea.vmem [#allocation2], %s714
        // Predicated region
        $region67: #{discriminator_forward.7} parent=65 // pred_check
          %p716 = pneg %p70
        $region68: #{discriminator_forward.7} parent=65 // pred_check_branch
          %718 = sbr.rel (%p716) target = $region70
        $region69: #{discriminator_forward.7} parent=65 // pred_region
          _
        $region70: #{discriminator_forward.7} parent=65 // pred_fallthru
          _
        %p719 = pneg %p42
        %p720 = pneg %p39
        %s721 = sand.u32 %s57, 1
        %s722 = sand.u32 %s57, 1
        %s723 = smul.addr %s722, 1024
        %s724 = scalar_lea.vmem [#allocation2], %s723
        %p725 = pneg %p70
        %p726 = pneg %p67
        %s727 = smul.u32 2, %s18
        %p728 = scmp.lt.s32.totalorder %s727, 3
        %s729 = scalar_select %p728, %s727, 3
        %s730 = scalar_lea.vmem %s2, %s729
        %p731 = pneg %p96
        %p732 = pneg %p93
        %p733 = pneg %p122
        %p734 = pneg %p119
        %s735 = smul.u32 2, %s18
        %p736 = scmp.lt.s32.totalorder %s735, 3
        %s737 = scalar_select %p736, %s735, 3
        %s738 = smul.addr %s737, 8
        %s739 = scalar_lea.vmem %s3, %s738
        %s740 = smul.u32 128, %s19
        %s741 = smul.u32 2, %s18
        %s742 = smul.u32 2, %s18
        %p743 = scmp.lt.s32.totalorder %s742, 3
        %s744 = scalar_select %p743, %s742, 3
        %s745 = scalar_lea.vmem %s2, %s744
        %s746 = smul.u32 2, %s18
        %s747 = smul.u32 2, %s18
        %p748 = scmp.lt.s32.totalorder %s747, 3
        %s749 = scalar_select %p748, %s747, 3
        %s750 = smul.addr %s749, 8
        %s751 = scalar_lea.vmem %s3, %s750
        %s752 = smul.u32 2, %s18
        %p753 = scmp.eq.s32.totalorder %s19, 0
        // Predicated region
        $region71: #{discriminator_forward.7} parent=65 // pred_check
          %p754 = pneg %p753
        $region72: #{discriminator_forward.7} parent=65 // pred_check_branch
          %756 = sbr.rel (%p754) target = $region74
        $region73: #{discriminator_forward.7} parent=65 // pred_region
          %757 = vst [vmem:[%s751] sm:$0xff] 0.0
          %758 = vst [vmem:[%s751 + $0x8] sm:$0xff] 0.0
        $region74: #{discriminator_forward.7} parent=65 // pred_fallthru
          _
        %s759 = smul.u32 %s19, 1024
        %s760 = sshra.s32 %s759, 7
        %s761 = sand.u32 %s759, 127
        %s762 = smul.addr %s760, 8
        %s763 = scalar_lea.vmem %s0, %s762
        %v764 = vld [vmem:[%s763] sm:$0xff]
        %v765 = vld [vmem:[%s763 + $0x8] sm:$0xff]
        %v766 = vld [vmem:[%s763 + $0x10] sm:$0xff]
        %v767 = vld [vmem:[%s763 + $0x18] sm:$0xff]
        %v768 = vld [vmem:[%s763 + $0x20] sm:$0xff]
        %v769 = vld [vmem:[%s763 + $0x28] sm:$0xff]
        %v770 = vld [vmem:[%s763 + $0x30] sm:$0xff]
        %v771 = vld [vmem:[%s763 + $0x38] sm:$0xff]
        %v772 = vpack.c.bf16 %v764, %v764
        %v773 = vpack.c.bf16 %v765, %v765
        %v774 = vpack.c.bf16 %v766, %v766
        %v775 = vpack.c.bf16 %v767, %v767
        %v776 = vpack.c.bf16 %v768, %v768
        %v777 = vpack.c.bf16 %v769, %v769
        %v778 = vpack.c.bf16 %v770, %v770
        %v779 = vpack.c.bf16 %v771, %v771
        %v780 = vld [vmem:[%s751] sm:$0xff]
        %v781 = vld [vmem:[%s751 + $0x8] sm:$0xff]
        %v782 = vld [vmem:[%s715] sm:$0xff]
        %v783 = vld [vmem:[%s715 + $0x8] sm:$0xff]
        %v784 = vld [vmem:[%s715 + $0x10] sm:$0xff]
        %v785 = vld [vmem:[%s715 + $0x18] sm:$0xff]
        %v786 = vld [vmem:[%s715 + $0x20] sm:$0xff]
        %v787 = vld [vmem:[%s715 + $0x28] sm:$0xff]
        %v788 = vld [vmem:[%s715 + $0x30] sm:$0xff]
        %v789 = vld [vmem:[%s715 + $0x38] sm:$0xff]
        %v790 = vld [vmem:[%s715 + $0x40] sm:$0xff]
        %v791 = vld [vmem:[%s715 + $0x48] sm:$0xff]
        %v792 = vld [vmem:[%s715 + $0x50] sm:$0xff]
        %v793 = vld [vmem:[%s715 + $0x58] sm:$0xff]
        %v794 = vld [vmem:[%s715 + $0x60] sm:$0xff]
        %v795 = vld [vmem:[%s715 + $0x68] sm:$0xff]
        %v796 = vld [vmem:[%s715 + $0x70] sm:$0xff]
        %v797 = vld [vmem:[%s715 + $0x78] sm:$0xff]
        %v798 = vld [vmem:[%s715 + $0x80] sm:$0xff]
        %v799 = vld [vmem:[%s715 + $0x88] sm:$0xff]
        %v800 = vld [vmem:[%s715 + $0x90] sm:$0xff]
        %v801 = vld [vmem:[%s715 + $0x98] sm:$0xff]
        %v802 = vld [vmem:[%s715 + $0xa0] sm:$0xff]
        %v803 = vld [vmem:[%s715 + $0xa8] sm:$0xff]
        %v804 = vld [vmem:[%s715 + $0xb0] sm:$0xff]
        %v805 = vld [vmem:[%s715 + $0xb8] sm:$0xff]
        %v806 = vld [vmem:[%s715 + $0xc0] sm:$0xff]
        %v807 = vld [vmem:[%s715 + $0xc8] sm:$0xff]
        %v808 = vld [vmem:[%s715 + $0xd0] sm:$0xff]
        %v809 = vld [vmem:[%s715 + $0xd8] sm:$0xff]
        %v810 = vld [vmem:[%s715 + $0xe0] sm:$0xff]
        %v811 = vld [vmem:[%s715 + $0xe8] sm:$0xff]
        %v812 = vld [vmem:[%s715 + $0xf0] sm:$0xff]
        %v813 = vld [vmem:[%s715 + $0xf8] sm:$0xff]
        %v814 = vld [vmem:[%s715 + $0x100] sm:$0xff]
        %v815 = vld [vmem:[%s715 + $0x108] sm:$0xff]
        %v816 = vld [vmem:[%s715 + $0x110] sm:$0xff]
        %v817 = vld [vmem:[%s715 + $0x118] sm:$0xff]
        %v818 = vld [vmem:[%s715 + $0x120] sm:$0xff]
        %v819 = vld [vmem:[%s715 + $0x128] sm:$0xff]
        %v820 = vld [vmem:[%s715 + $0x130] sm:$0xff]
        %v821 = vld [vmem:[%s715 + $0x138] sm:$0xff]
        %v822 = vld [vmem:[%s715 + $0x140] sm:$0xff]
        %v823 = vld [vmem:[%s715 + $0x148] sm:$0xff]
        %v824 = vld [vmem:[%s715 + $0x150] sm:$0xff]
        %v825 = vld [vmem:[%s715 + $0x158] sm:$0xff]
        %v826 = vld [vmem:[%s715 + $0x160] sm:$0xff]
        %v827 = vld [vmem:[%s715 + $0x168] sm:$0xff]
        %v828 = vld [vmem:[%s715 + $0x170] sm:$0xff]
        %v829 = vld [vmem:[%s715 + $0x178] sm:$0xff]
        %v830 = vld [vmem:[%s715 + $0x180] sm:$0xff]
        %v831 = vld [vmem:[%s715 + $0x188] sm:$0xff]
        %v832 = vld [vmem:[%s715 + $0x190] sm:$0xff]
        %v833 = vld [vmem:[%s715 + $0x198] sm:$0xff]
        %v834 = vld [vmem:[%s715 + $0x1a0] sm:$0xff]
        %v835 = vld [vmem:[%s715 + $0x1a8] sm:$0xff]
        %v836 = vld [vmem:[%s715 + $0x1b0] sm:$0xff]
        %v837 = vld [vmem:[%s715 + $0x1b8] sm:$0xff]
        %v838 = vld [vmem:[%s715 + $0x1c0] sm:$0xff]
        %v839 = vld [vmem:[%s715 + $0x1c8] sm:$0xff]
        %v840 = vld [vmem:[%s715 + $0x1d0] sm:$0xff]
        %v841 = vld [vmem:[%s715 + $0x1d8] sm:$0xff]
        %v842 = vld [vmem:[%s715 + $0x1e0] sm:$0xff]
        %v843 = vld [vmem:[%s715 + $0x1e8] sm:$0xff]
        %v844 = vld [vmem:[%s715 + $0x1f0] sm:$0xff]
        %v845 = vld [vmem:[%s715 + $0x1f8] sm:$0xff]
        %v846 = vld [vmem:[%s715 + $0x200] sm:$0xff]
        %v847 = vld [vmem:[%s715 + $0x208] sm:$0xff]
        %v848 = vld [vmem:[%s715 + $0x210] sm:$0xff]
        %v849 = vld [vmem:[%s715 + $0x218] sm:$0xff]
        %v850 = vld [vmem:[%s715 + $0x220] sm:$0xff]
        %v851 = vld [vmem:[%s715 + $0x228] sm:$0xff]
        %v852 = vld [vmem:[%s715 + $0x230] sm:$0xff]
        %v853 = vld [vmem:[%s715 + $0x238] sm:$0xff]
        %v854 = vld [vmem:[%s715 + $0x240] sm:$0xff]
        %v855 = vld [vmem:[%s715 + $0x248] sm:$0xff]
        %v856 = vld [vmem:[%s715 + $0x250] sm:$0xff]
        %v857 = vld [vmem:[%s715 + $0x258] sm:$0xff]
        %v858 = vld [vmem:[%s715 + $0x260] sm:$0xff]
        %v859 = vld [vmem:[%s715 + $0x268] sm:$0xff]
        %v860 = vld [vmem:[%s715 + $0x270] sm:$0xff]
        %v861 = vld [vmem:[%s715 + $0x278] sm:$0xff]
        %v862 = vld [vmem:[%s715 + $0x280] sm:$0xff]
        %v863 = vld [vmem:[%s715 + $0x288] sm:$0xff]
        %v864 = vld [vmem:[%s715 + $0x290] sm:$0xff]
        %v865 = vld [vmem:[%s715 + $0x298] sm:$0xff]
        %v866 = vld [vmem:[%s715 + $0x2a0] sm:$0xff]
        %v867 = vld [vmem:[%s715 + $0x2a8] sm:$0xff]
        %v868 = vld [vmem:[%s715 + $0x2b0] sm:$0xff]
        %v869 = vld [vmem:[%s715 + $0x2b8] sm:$0xff]
        %v870 = vld [vmem:[%s715 + $0x2c0] sm:$0xff]
        %v871 = vld [vmem:[%s715 + $0x2c8] sm:$0xff]
        %v872 = vld [vmem:[%s715 + $0x2d0] sm:$0xff]
        %v873 = vld [vmem:[%s715 + $0x2d8] sm:$0xff]
        %v874 = vld [vmem:[%s715 + $0x2e0] sm:$0xff]
        %v875 = vld [vmem:[%s715 + $0x2e8] sm:$0xff]
        %v876 = vld [vmem:[%s715 + $0x2f0] sm:$0xff]
        %v877 = vld [vmem:[%s715 + $0x2f8] sm:$0xff]
        %v878 = vld [vmem:[%s715 + $0x300] sm:$0xff]
        %v879 = vld [vmem:[%s715 + $0x308] sm:$0xff]
        %v880 = vld [vmem:[%s715 + $0x310] sm:$0xff]
        %v881 = vld [vmem:[%s715 + $0x318] sm:$0xff]
        %v882 = vld [vmem:[%s715 + $0x320] sm:$0xff]
        %v883 = vld [vmem:[%s715 + $0x328] sm:$0xff]
        %v884 = vld [vmem:[%s715 + $0x330] sm:$0xff]
        %v885 = vld [vmem:[%s715 + $0x338] sm:$0xff]
        %v886 = vld [vmem:[%s715 + $0x340] sm:$0xff]
        %v887 = vld [vmem:[%s715 + $0x348] sm:$0xff]
        %v888 = vld [vmem:[%s715 + $0x350] sm:$0xff]
        %v889 = vld [vmem:[%s715 + $0x358] sm:$0xff]
        %v890 = vld [vmem:[%s715 + $0x360] sm:$0xff]
        %v891 = vld [vmem:[%s715 + $0x368] sm:$0xff]
        %v892 = vld [vmem:[%s715 + $0x370] sm:$0xff]
        %v893 = vld [vmem:[%s715 + $0x378] sm:$0xff]
        %v894 = vld [vmem:[%s715 + $0x380] sm:$0xff]
        %v895 = vld [vmem:[%s715 + $0x388] sm:$0xff]
        %v896 = vld [vmem:[%s715 + $0x390] sm:$0xff]
        %v897 = vld [vmem:[%s715 + $0x398] sm:$0xff]
        %v898 = vld [vmem:[%s715 + $0x3a0] sm:$0xff]
        %v899 = vld [vmem:[%s715 + $0x3a8] sm:$0xff]
        %v900 = vld [vmem:[%s715 + $0x3b0] sm:$0xff]
        %v901 = vld [vmem:[%s715 + $0x3b8] sm:$0xff]
        %v902 = vld [vmem:[%s715 + $0x3c0] sm:$0xff]
        %v903 = vld [vmem:[%s715 + $0x3c8] sm:$0xff]
        %v904 = vld [vmem:[%s715 + $0x3d0] sm:$0xff]
        %v905 = vld [vmem:[%s715 + $0x3d8] sm:$0xff]
        %v906 = vld [vmem:[%s715 + $0x3e0] sm:$0xff]
        %v907 = vld [vmem:[%s715 + $0x3e8] sm:$0xff]
        %v908 = vld [vmem:[%s715 + $0x3f0] sm:$0xff]
        %v909 = vld [vmem:[%s715 + $0x3f8] sm:$0xff]
        %v1038 = vunpack.c.l.b16 %v782
        %v1039 = vunpack.c.h.b16 %v782
        %v1040 = vunpack.c.l.b16 %v783
        %v1041 = vunpack.c.h.b16 %v783
        %v1042 = vunpack.c.l.b16 %v784
        %v1043 = vunpack.c.h.b16 %v784
        %v1044 = vunpack.c.l.b16 %v785
        %v1045 = vunpack.c.h.b16 %v785
        %v1046 = vunpack.c.l.b16 %v786
        %v1047 = vunpack.c.h.b16 %v786
        %v1048 = vunpack.c.l.b16 %v787
        %v1049 = vunpack.c.h.b16 %v787
        %v1050 = vunpack.c.l.b16 %v788
        %v1051 = vunpack.c.h.b16 %v788
        %v1052 = vunpack.c.l.b16 %v789
        %v1053 = vunpack.c.h.b16 %v789
        %v1054 = vunpack.c.l.b16 %v790
        %v1055 = vunpack.c.h.b16 %v790
        %v1056 = vunpack.c.l.b16 %v791
        %v1057 = vunpack.c.h.b16 %v791
        %v1058 = vunpack.c.l.b16 %v792
        %v1059 = vunpack.c.h.b16 %v792
        %v1060 = vunpack.c.l.b16 %v793
        %v1061 = vunpack.c.h.b16 %v793
        %v1062 = vunpack.c.l.b16 %v794
        %v1063 = vunpack.c.h.b16 %v794
        %v1064 = vunpack.c.l.b16 %v795
        %v1065 = vunpack.c.h.b16 %v795
        %v1066 = vunpack.c.l.b16 %v796
        %v1067 = vunpack.c.h.b16 %v796
        %v1068 = vunpack.c.l.b16 %v797
        %v1069 = vunpack.c.h.b16 %v797
        %v1070 = vunpack.c.l.b16 %v798
        %v1071 = vunpack.c.h.b16 %v798
        %v1072 = vunpack.c.l.b16 %v799
        %v1073 = vunpack.c.h.b16 %v799
        %v1074 = vunpack.c.l.b16 %v800
        %v1075 = vunpack.c.h.b16 %v800
        %v1076 = vunpack.c.l.b16 %v801
        %v1077 = vunpack.c.h.b16 %v801
        %v1078 = vunpack.c.l.b16 %v802
        %v1079 = vunpack.c.h.b16 %v802
        %v1080 = vunpack.c.l.b16 %v803
        %v1081 = vunpack.c.h.b16 %v803
        %v1082 = vunpack.c.l.b16 %v804
        %v1083 = vunpack.c.h.b16 %v804
        %v1084 = vunpack.c.l.b16 %v805
        %v1085 = vunpack.c.h.b16 %v805
        %v1086 = vunpack.c.l.b16 %v806
        %v1087 = vunpack.c.h.b16 %v806
        %v1088 = vunpack.c.l.b16 %v807
        %v1089 = vunpack.c.h.b16 %v807
        %v1090 = vunpack.c.l.b16 %v808
        %v1091 = vunpack.c.h.b16 %v808
        %v1092 = vunpack.c.l.b16 %v809
        %v1093 = vunpack.c.h.b16 %v809
        %v1094 = vunpack.c.l.b16 %v810
        %v1095 = vunpack.c.h.b16 %v810
        %v1096 = vunpack.c.l.b16 %v811
        %v1097 = vunpack.c.h.b16 %v811
        %v1098 = vunpack.c.l.b16 %v812
        %v1099 = vunpack.c.h.b16 %v812
        %v1100 = vunpack.c.l.b16 %v813
        %v1101 = vunpack.c.h.b16 %v813
        %v1102 = vunpack.c.l.b16 %v814
        %v1103 = vunpack.c.h.b16 %v814
        %v1104 = vunpack.c.l.b16 %v815
        %v1105 = vunpack.c.h.b16 %v815
        %v1106 = vunpack.c.l.b16 %v816
        %v1107 = vunpack.c.h.b16 %v816
        %v1108 = vunpack.c.l.b16 %v817
        %v1109 = vunpack.c.h.b16 %v817
        %v1110 = vunpack.c.l.b16 %v818
        %v1111 = vunpack.c.h.b16 %v818
        %v1112 = vunpack.c.l.b16 %v819
        %v1113 = vunpack.c.h.b16 %v819
        %v1114 = vunpack.c.l.b16 %v820
        %v1115 = vunpack.c.h.b16 %v820
        %v1116 = vunpack.c.l.b16 %v821
        %v1117 = vunpack.c.h.b16 %v821
        %v1118 = vunpack.c.l.b16 %v822
        %v1119 = vunpack.c.h.b16 %v822
        %v1120 = vunpack.c.l.b16 %v823
        %v1121 = vunpack.c.h.b16 %v823
        %v1122 = vunpack.c.l.b16 %v824
        %v1123 = vunpack.c.h.b16 %v824
        %v1124 = vunpack.c.l.b16 %v825
        %v1125 = vunpack.c.h.b16 %v825
        %v1126 = vunpack.c.l.b16 %v826
        %v1127 = vunpack.c.h.b16 %v826
        %v1128 = vunpack.c.l.b16 %v827
        %v1129 = vunpack.c.h.b16 %v827
        %v1130 = vunpack.c.l.b16 %v828
        %v1131 = vunpack.c.h.b16 %v828
        %v1132 = vunpack.c.l.b16 %v829
        %v1133 = vunpack.c.h.b16 %v829
        %v1134 = vunpack.c.l.b16 %v830
        %v1135 = vunpack.c.h.b16 %v830
        %v1136 = vunpack.c.l.b16 %v831
        %v1137 = vunpack.c.h.b16 %v831
        %v1138 = vunpack.c.l.b16 %v832
        %v1139 = vunpack.c.h.b16 %v832
        %v1140 = vunpack.c.l.b16 %v833
        %v1141 = vunpack.c.h.b16 %v833
        %v1142 = vunpack.c.l.b16 %v834
        %v1143 = vunpack.c.h.b16 %v834
        %v1144 = vunpack.c.l.b16 %v835
        %v1145 = vunpack.c.h.b16 %v835
        %v1146 = vunpack.c.l.b16 %v836
        %v1147 = vunpack.c.h.b16 %v836
        %v1148 = vunpack.c.l.b16 %v837
        %v1149 = vunpack.c.h.b16 %v837
        %v1150 = vunpack.c.l.b16 %v838
        %v1151 = vunpack.c.h.b16 %v838
        %v1152 = vunpack.c.l.b16 %v839
        %v1153 = vunpack.c.h.b16 %v839
        %v1154 = vunpack.c.l.b16 %v840
        %v1155 = vunpack.c.h.b16 %v840
        %v1156 = vunpack.c.l.b16 %v841
        %v1157 = vunpack.c.h.b16 %v841
        %v1158 = vunpack.c.l.b16 %v842
        %v1159 = vunpack.c.h.b16 %v842
        %v1160 = vunpack.c.l.b16 %v843
        %v1161 = vunpack.c.h.b16 %v843
        %v1162 = vunpack.c.l.b16 %v844
        %v1163 = vunpack.c.h.b16 %v844
        %v1164 = vunpack.c.l.b16 %v845
        %v1165 = vunpack.c.h.b16 %v845
        %v1166 = vunpack.c.l.b16 %v846
        %v1167 = vunpack.c.h.b16 %v846
        %v1168 = vunpack.c.l.b16 %v847
        %v1169 = vunpack.c.h.b16 %v847
        %v1170 = vunpack.c.l.b16 %v848
        %v1171 = vunpack.c.h.b16 %v848
        %v1172 = vunpack.c.l.b16 %v849
        %v1173 = vunpack.c.h.b16 %v849
        %v1174 = vunpack.c.l.b16 %v850
        %v1175 = vunpack.c.h.b16 %v850
        %v1176 = vunpack.c.l.b16 %v851
        %v1177 = vunpack.c.h.b16 %v851
        %v1178 = vunpack.c.l.b16 %v852
        %v1179 = vunpack.c.h.b16 %v852
        %v1180 = vunpack.c.l.b16 %v853
        %v1181 = vunpack.c.h.b16 %v853
        %v1182 = vunpack.c.l.b16 %v854
        %v1183 = vunpack.c.h.b16 %v854
        %v1184 = vunpack.c.l.b16 %v855
        %v1185 = vunpack.c.h.b16 %v855
        %v1186 = vunpack.c.l.b16 %v856
        %v1187 = vunpack.c.h.b16 %v856
        %v1188 = vunpack.c.l.b16 %v857
        %v1189 = vunpack.c.h.b16 %v857
        %v1190 = vunpack.c.l.b16 %v858
        %v1191 = vunpack.c.h.b16 %v858
        %v1192 = vunpack.c.l.b16 %v859
        %v1193 = vunpack.c.h.b16 %v859
        %v1194 = vunpack.c.l.b16 %v860
        %v1195 = vunpack.c.h.b16 %v860
        %v1196 = vunpack.c.l.b16 %v861
        %v1197 = vunpack.c.h.b16 %v861
        %v1198 = vunpack.c.l.b16 %v862
        %v1199 = vunpack.c.h.b16 %v862
        %v1200 = vunpack.c.l.b16 %v863
        %v1201 = vunpack.c.h.b16 %v863
        %v1202 = vunpack.c.l.b16 %v864
        %v1203 = vunpack.c.h.b16 %v864
        %v1204 = vunpack.c.l.b16 %v865
        %v1205 = vunpack.c.h.b16 %v865
        %v1206 = vunpack.c.l.b16 %v866
        %v1207 = vunpack.c.h.b16 %v866
        %v1208 = vunpack.c.l.b16 %v867
        %v1209 = vunpack.c.h.b16 %v867
        %v1210 = vunpack.c.l.b16 %v868
        %v1211 = vunpack.c.h.b16 %v868
        %v1212 = vunpack.c.l.b16 %v869
        %v1213 = vunpack.c.h.b16 %v869
        %v1214 = vunpack.c.l.b16 %v870
        %v1215 = vunpack.c.h.b16 %v870
        %v1216 = vunpack.c.l.b16 %v871
        %v1217 = vunpack.c.h.b16 %v871
        %v1218 = vunpack.c.l.b16 %v872
        %v1219 = vunpack.c.h.b16 %v872
        %v1220 = vunpack.c.l.b16 %v873
        %v1221 = vunpack.c.h.b16 %v873
        %v1222 = vunpack.c.l.b16 %v874
        %v1223 = vunpack.c.h.b16 %v874
        %v1224 = vunpack.c.l.b16 %v875
        %v1225 = vunpack.c.h.b16 %v875
        %v1226 = vunpack.c.l.b16 %v876
        %v1227 = vunpack.c.h.b16 %v876
        %v1228 = vunpack.c.l.b16 %v877
        %v1229 = vunpack.c.h.b16 %v877
        %v1230 = vunpack.c.l.b16 %v878
        %v1231 = vunpack.c.h.b16 %v878
        %v1232 = vunpack.c.l.b16 %v879
        %v1233 = vunpack.c.h.b16 %v879
        %v1234 = vunpack.c.l.b16 %v880
        %v1235 = vunpack.c.h.b16 %v880
        %v1236 = vunpack.c.l.b16 %v881
        %v1237 = vunpack.c.h.b16 %v881
        %v1238 = vunpack.c.l.b16 %v882
        %v1239 = vunpack.c.h.b16 %v882
        %v1240 = vunpack.c.l.b16 %v883
        %v1241 = vunpack.c.h.b16 %v883
        %v1242 = vunpack.c.l.b16 %v884
        %v1243 = vunpack.c.h.b16 %v884
        %v1244 = vunpack.c.l.b16 %v885
        %v1245 = vunpack.c.h.b16 %v885
        %v1246 = vunpack.c.l.b16 %v886
        %v1247 = vunpack.c.h.b16 %v886
        %v1248 = vunpack.c.l.b16 %v887
        %v1249 = vunpack.c.h.b16 %v887
        %v1250 = vunpack.c.l.b16 %v888
        %v1251 = vunpack.c.h.b16 %v888
        %v1252 = vunpack.c.l.b16 %v889
        %v1253 = vunpack.c.h.b16 %v889
        %v1254 = vunpack.c.l.b16 %v890
        %v1255 = vunpack.c.h.b16 %v890
        %v1256 = vunpack.c.l.b16 %v891
        %v1257 = vunpack.c.h.b16 %v891
        %v1258 = vunpack.c.l.b16 %v892
        %v1259 = vunpack.c.h.b16 %v892
        %v1260 = vunpack.c.l.b16 %v893
        %v1261 = vunpack.c.h.b16 %v893
        %v1262 = vunpack.c.l.b16 %v894
        %v1263 = vunpack.c.h.b16 %v894
        %v1264 = vunpack.c.l.b16 %v895
        %v1265 = vunpack.c.h.b16 %v895
        %v1266 = vunpack.c.l.b16 %v896
        %v1267 = vunpack.c.h.b16 %v896
        %v1268 = vunpack.c.l.b16 %v897
        %v1269 = vunpack.c.h.b16 %v897
        %v1270 = vunpack.c.l.b16 %v898
        %v1271 = vunpack.c.h.b16 %v898
        %v1272 = vunpack.c.l.b16 %v899
        %v1273 = vunpack.c.h.b16 %v899
        %v1274 = vunpack.c.l.b16 %v900
        %v1275 = vunpack.c.h.b16 %v900
        %v1276 = vunpack.c.l.b16 %v901
        %v1277 = vunpack.c.h.b16 %v901
        %v1278 = vunpack.c.l.b16 %v902
        %v1279 = vunpack.c.h.b16 %v902
        %v1280 = vunpack.c.l.b16 %v903
        %v1281 = vunpack.c.h.b16 %v903
        %v1282 = vunpack.c.l.b16 %v904
        %v1283 = vunpack.c.h.b16 %v904
        %v1284 = vunpack.c.l.b16 %v905
        %v1285 = vunpack.c.h.b16 %v905
        %v1286 = vunpack.c.l.b16 %v906
        %v1287 = vunpack.c.h.b16 %v906
        %v1288 = vunpack.c.l.b16 %v907
        %v1289 = vunpack.c.h.b16 %v907
        %v1290 = vunpack.c.l.b16 %v908
        %v1291 = vunpack.c.h.b16 %v908
        %v1292 = vunpack.c.l.b16 %v909
        %v1293 = vunpack.c.h.b16 %v909
        %v1294 = vpack.c.b16 %v1040, %v1038
        %v1295 = vpack.c.b16 %v1041, %v1039
        %v1296 = vpack.c.b16 %v1044, %v1042
        %v1297 = vpack.c.b16 %v1045, %v1043
        %v1298 = vpack.c.b16 %v1048, %v1046
        %v1299 = vpack.c.b16 %v1049, %v1047
        %v1300 = vpack.c.b16 %v1052, %v1050
        %v1301 = vpack.c.b16 %v1053, %v1051
        %v1302 = vpack.c.b16 %v1056, %v1054
        %v1303 = vpack.c.b16 %v1057, %v1055
        %v1304 = vpack.c.b16 %v1060, %v1058
        %v1305 = vpack.c.b16 %v1061, %v1059
        %v1306 = vpack.c.b16 %v1064, %v1062
        %v1307 = vpack.c.b16 %v1065, %v1063
        %v1308 = vpack.c.b16 %v1068, %v1066
        %v1309 = vpack.c.b16 %v1069, %v1067
        %v1310 = vpack.c.b16 %v1072, %v1070
        %v1311 = vpack.c.b16 %v1073, %v1071
        %v1312 = vpack.c.b16 %v1076, %v1074
        %v1313 = vpack.c.b16 %v1077, %v1075
        %v1314 = vpack.c.b16 %v1080, %v1078
        %v1315 = vpack.c.b16 %v1081, %v1079
        %v1316 = vpack.c.b16 %v1084, %v1082
        %v1317 = vpack.c.b16 %v1085, %v1083
        %v1318 = vpack.c.b16 %v1088, %v1086
        %v1319 = vpack.c.b16 %v1089, %v1087
        %v1320 = vpack.c.b16 %v1092, %v1090
        %v1321 = vpack.c.b16 %v1093, %v1091
        %v1322 = vpack.c.b16 %v1096, %v1094
        %v1323 = vpack.c.b16 %v1097, %v1095
        %v1324 = vpack.c.b16 %v1100, %v1098
        %v1325 = vpack.c.b16 %v1101, %v1099
        %v1326 = vpack.c.b16 %v1104, %v1102
        %v1327 = vpack.c.b16 %v1105, %v1103
        %v1328 = vpack.c.b16 %v1108, %v1106
        %v1329 = vpack.c.b16 %v1109, %v1107
        %v1330 = vpack.c.b16 %v1112, %v1110
        %v1331 = vpack.c.b16 %v1113, %v1111
        %v1332 = vpack.c.b16 %v1116, %v1114
        %v1333 = vpack.c.b16 %v1117, %v1115
        %v1334 = vpack.c.b16 %v1120, %v1118
        %v1335 = vpack.c.b16 %v1121, %v1119
        %v1336 = vpack.c.b16 %v1124, %v1122
        %v1337 = vpack.c.b16 %v1125, %v1123
        %v1338 = vpack.c.b16 %v1128, %v1126
        %v1339 = vpack.c.b16 %v1129, %v1127
        %v1340 = vpack.c.b16 %v1132, %v1130
        %v1341 = vpack.c.b16 %v1133, %v1131
        %v1342 = vpack.c.b16 %v1136, %v1134
        %v1343 = vpack.c.b16 %v1137, %v1135
        %v1344 = vpack.c.b16 %v1140, %v1138
        %v1345 = vpack.c.b16 %v1141, %v1139
        %v1346 = vpack.c.b16 %v1144, %v1142
        %v1347 = vpack.c.b16 %v1145, %v1143
        %v1348 = vpack.c.b16 %v1148, %v1146
        %v1349 = vpack.c.b16 %v1149, %v1147
        %v1350 = vpack.c.b16 %v1152, %v1150
        %v1351 = vpack.c.b16 %v1153, %v1151
        %v1352 = vpack.c.b16 %v1156, %v1154
        %v1353 = vpack.c.b16 %v1157, %v1155
        %v1354 = vpack.c.b16 %v1160, %v1158
        %v1355 = vpack.c.b16 %v1161, %v1159
        %v1356 = vpack.c.b16 %v1164, %v1162
        %v1357 = vpack.c.b16 %v1165, %v1163
        %v1358 = vpack.c.b16 %v1168, %v1166
        %v1359 = vpack.c.b16 %v1169, %v1167
        %v1360 = vpack.c.b16 %v1172, %v1170
        %v1361 = vpack.c.b16 %v1173, %v1171
        %v1362 = vpack.c.b16 %v1176, %v1174
        %v1363 = vpack.c.b16 %v1177, %v1175
        %v1364 = vpack.c.b16 %v1180, %v1178
        %v1365 = vpack.c.b16 %v1181, %v1179
        %v1366 = vpack.c.b16 %v1184, %v1182
        %v1367 = vpack.c.b16 %v1185, %v1183
        %v1368 = vpack.c.b16 %v1188, %v1186
        %v1369 = vpack.c.b16 %v1189, %v1187
        %v1370 = vpack.c.b16 %v1192, %v1190
        %v1371 = vpack.c.b16 %v1193, %v1191
        %v1372 = vpack.c.b16 %v1196, %v1194
        %v1373 = vpack.c.b16 %v1197, %v1195
        %v1374 = vpack.c.b16 %v1200, %v1198
        %v1375 = vpack.c.b16 %v1201, %v1199
        %v1376 = vpack.c.b16 %v1204, %v1202
        %v1377 = vpack.c.b16 %v1205, %v1203
        %v1378 = vpack.c.b16 %v1208, %v1206
        %v1379 = vpack.c.b16 %v1209, %v1207
        %v1380 = vpack.c.b16 %v1212, %v1210
        %v1381 = vpack.c.b16 %v1213, %v1211
        %v1382 = vpack.c.b16 %v1216, %v1214
        %v1383 = vpack.c.b16 %v1217, %v1215
        %v1384 = vpack.c.b16 %v1220, %v1218
        %v1385 = vpack.c.b16 %v1221, %v1219
        %v1386 = vpack.c.b16 %v1224, %v1222
        %v1387 = vpack.c.b16 %v1225, %v1223
        %v1388 = vpack.c.b16 %v1228, %v1226
        %v1389 = vpack.c.b16 %v1229, %v1227
        %v1390 = vpack.c.b16 %v1232, %v1230
        %v1391 = vpack.c.b16 %v1233, %v1231
        %v1392 = vpack.c.b16 %v1236, %v1234
        %v1393 = vpack.c.b16 %v1237, %v1235
        %v1394 = vpack.c.b16 %v1240, %v1238
        %v1395 = vpack.c.b16 %v1241, %v1239
        %v1396 = vpack.c.b16 %v1244, %v1242
        %v1397 = vpack.c.b16 %v1245, %v1243
        %v1398 = vpack.c.b16 %v1248, %v1246
        %v1399 = vpack.c.b16 %v1249, %v1247
        %v1400 = vpack.c.b16 %v1252, %v1250
        %v1401 = vpack.c.b16 %v1253, %v1251
        %v1402 = vpack.c.b16 %v1256, %v1254
        %v1403 = vpack.c.b16 %v1257, %v1255
        %v1404 = vpack.c.b16 %v1260, %v1258
        %v1405 = vpack.c.b16 %v1261, %v1259
        %v1406 = vpack.c.b16 %v1264, %v1262
        %v1407 = vpack.c.b16 %v1265, %v1263
        %v1408 = vpack.c.b16 %v1268, %v1266
        %v1409 = vpack.c.b16 %v1269, %v1267
        %v1410 = vpack.c.b16 %v1272, %v1270
        %v1411 = vpack.c.b16 %v1273, %v1271
        %v1412 = vpack.c.b16 %v1276, %v1274
        %v1413 = vpack.c.b16 %v1277, %v1275
        %v1414 = vpack.c.b16 %v1280, %v1278
        %v1415 = vpack.c.b16 %v1281, %v1279
        %v1416 = vpack.c.b16 %v1284, %v1282
        %v1417 = vpack.c.b16 %v1285, %v1283
        %v1418 = vpack.c.b16 %v1288, %v1286
        %v1419 = vpack.c.b16 %v1289, %v1287
        %v1420 = vpack.c.b16 %v1292, %v1290
        %v1421 = vpack.c.b16 %v1293, %v1291
        %1550 = vmatprep.subr.bf16.mxu0 %v1295
        %1551 = vmatpush1.bf16.msra.mxu0 %v1294
        %1552 = vmatprep.subr.bf16.mxu0 %v1297
        %1553 = vmatpush1.bf16.msra.mxu0 %v1296
        %1554 = vmatprep.subr.bf16.mxu0 %v1299
        %1555 = vmatpush1.bf16.msra.mxu0 %v1298
        %1556 = vmatprep.subr.bf16.mxu0 %v1301
        %1557 = vmatpush1.bf16.msra.mxu0 %v1300
        %1558 = vmatprep.subr.bf16.mxu0 %v1303
        %1559 = vmatpush1.bf16.msra.mxu0 %v1302
        %1560 = vmatprep.subr.bf16.mxu0 %v1305
        %1561 = vmatpush1.bf16.msra.mxu0 %v1304
        %1562 = vmatprep.subr.bf16.mxu0 %v1307
        %1563 = vmatpush1.bf16.msra.mxu0 %v1306
        %1564 = vmatprep.subr.bf16.mxu0 %v1309
        %1565 = vmatpush1.bf16.msra.mxu0 %v1308
        %1566 = vmatprep.subr.bf16.mxu0 %v1311
        %1567 = vmatpush1.bf16.msra.mxu0 %v1310
        %1568 = vmatprep.subr.bf16.mxu0 %v1313
        %1569 = vmatpush1.bf16.msra.mxu0 %v1312
        %1570 = vmatprep.subr.bf16.mxu0 %v1315
        %1571 = vmatpush1.bf16.msra.mxu0 %v1314
        %1572 = vmatprep.subr.bf16.mxu0 %v1317
        %1573 = vmatpush1.bf16.msra.mxu0 %v1316
        %1574 = vmatprep.subr.bf16.mxu0 %v1319
        %1575 = vmatpush1.bf16.msra.mxu0 %v1318
        %1576 = vmatprep.subr.bf16.mxu0 %v1321
        %1577 = vmatpush1.bf16.msra.mxu0 %v1320
        %1578 = vmatprep.subr.bf16.mxu0 %v1323
        %1579 = vmatpush1.bf16.msra.mxu0 %v1322
        %1580 = vmatprep.subr.bf16.mxu0 %v1325
        %1581 = vmatpush1.bf16.msra.mxu0 %v1324
        %1582 = vmatprep.mubr.bf16.mxu0 %v773
        %1583 = vmatmul.mubr.bf16.gmra.mrb[0].mxu0 %v772
        %v1584 = vpop.f32.mrb[0].mxu0
        %v1585 = vadd.f32 0.0, %v1584
        %v1586 = vpop.f32.mrb[0].mxu0
        %v1587 = vadd.f32 0.0, %v1586
        %v1588 = vpop.f32.mrb[0].mxu0
        %v1589 = vpop.f32.mrb[0].mxu0
        %1590 = vdwg.mxu0
        %1591 = vmatprep.subr.bf16.mxu0 %v1327
        %1592 = vmatpush1.bf16.msra.mxu0 %v1326
        %1593 = vmatprep.subr.bf16.mxu0 %v1329
        %1594 = vmatpush1.bf16.msra.mxu0 %v1328
        %1595 = vmatprep.subr.bf16.mxu0 %v1331
        %1596 = vmatpush1.bf16.msra.mxu0 %v1330
        %1597 = vmatprep.subr.bf16.mxu0 %v1333
        %1598 = vmatpush1.bf16.msra.mxu0 %v1332
        %1599 = vmatprep.subr.bf16.mxu0 %v1335
        %1600 = vmatpush1.bf16.msra.mxu0 %v1334
        %1601 = vmatprep.subr.bf16.mxu0 %v1337
        %1602 = vmatpush1.bf16.msra.mxu0 %v1336
        %1603 = vmatprep.subr.bf16.mxu0 %v1339
        %1604 = vmatpush1.bf16.msra.mxu0 %v1338
        %1605 = vmatprep.subr.bf16.mxu0 %v1341
        %1606 = vmatpush1.bf16.msra.mxu0 %v1340
        %1607 = vmatprep.subr.bf16.mxu0 %v1343
        %1608 = vmatpush1.bf16.msra.mxu0 %v1342
        %1609 = vmatprep.subr.bf16.mxu0 %v1345
        %1610 = vmatpush1.bf16.msra.mxu0 %v1344
        %1611 = vmatprep.subr.bf16.mxu0 %v1347
        %1612 = vmatpush1.bf16.msra.mxu0 %v1346
        %1613 = vmatprep.subr.bf16.mxu0 %v1349
        %1614 = vmatpush1.bf16.msra.mxu0 %v1348
        %1615 = vmatprep.subr.bf16.mxu0 %v1351
        %1616 = vmatpush1.bf16.msra.mxu0 %v1350
        %1617 = vmatprep.subr.bf16.mxu0 %v1353
        %1618 = vmatpush1.bf16.msra.mxu0 %v1352
        %1619 = vmatprep.subr.bf16.mxu0 %v1355
        %1620 = vmatpush1.bf16.msra.mxu0 %v1354
        %1621 = vmatprep.subr.bf16.mxu0 %v1357
        %1622 = vmatpush1.bf16.msra.mxu0 %v1356
        %1623 = vmatprep.mubr.bf16.mxu0 %v775
        %1624 = vmatmul.mubr.bf16.gmra.mrb[0].mxu0 %v774
        %v1625 = vpop.f32.mrb[0].mxu0
        %v1626 = vadd.f32 %v1585, %v1625
        %v1627 = vpop.f32.mrb[0].mxu0
        %v1628 = vadd.f32 %v1587, %v1627
        %v1629 = vpop.f32.mrb[0].mxu0
        %v1630 = vpop.f32.mrb[0].mxu0
        %1631 = vdwg.mxu0
        %1632 = vmatprep.subr.bf16.mxu0 %v1359
        %1633 = vmatpush1.bf16.msra.mxu0 %v1358
        %1634 = vmatprep.subr.bf16.mxu0 %v1361
        %1635 = vmatpush1.bf16.msra.mxu0 %v1360
        %1636 = vmatprep.subr.bf16.mxu0 %v1363
        %1637 = vmatpush1.bf16.msra.mxu0 %v1362
        %1638 = vmatprep.subr.bf16.mxu0 %v1365
        %1639 = vmatpush1.bf16.msra.mxu0 %v1364
        %1640 = vmatprep.subr.bf16.mxu0 %v1367
        %1641 = vmatpush1.bf16.msra.mxu0 %v1366
        %1642 = vmatprep.subr.bf16.mxu0 %v1369
        %1643 = vmatpush1.bf16.msra.mxu0 %v1368
        %1644 = vmatprep.subr.bf16.mxu0 %v1371
        %1645 = vmatpush1.bf16.msra.mxu0 %v1370
        %1646 = vmatprep.subr.bf16.mxu0 %v1373
        %1647 = vmatpush1.bf16.msra.mxu0 %v1372
        %1648 = vmatprep.subr.bf16.mxu0 %v1375
        %1649 = vmatpush1.bf16.msra.mxu0 %v1374
        %1650 = vmatprep.subr.bf16.mxu0 %v1377
        %1651 = vmatpush1.bf16.msra.mxu0 %v1376
        %1652 = vmatprep.subr.bf16.mxu0 %v1379
        %1653 = vmatpush1.bf16.msra.mxu0 %v1378
        %1654 = vmatprep.subr.bf16.mxu0 %v1381
        %1655 = vmatpush1.bf16.msra.mxu0 %v1380
        %1656 = vmatprep.subr.bf16.mxu0 %v1383
        %1657 = vmatpush1.bf16.msra.mxu0 %v1382
        %1658 = vmatprep.subr.bf16.mxu0 %v1385
        %1659 = vmatpush1.bf16.msra.mxu0 %v1384
        %1660 = vmatprep.subr.bf16.mxu0 %v1387
        %1661 = vmatpush1.bf16.msra.mxu0 %v1386
        %1662 = vmatprep.subr.bf16.mxu0 %v1389
        %1663 = vmatpush1.bf16.msra.mxu0 %v1388
        %1664 = vmatprep.mubr.bf16.mxu0 %v777
        %1665 = vmatmul.mubr.bf16.gmra.mrb[0].mxu0 %v776
        %v1666 = vpop.f32.mrb[0].mxu0
        %v1667 = vadd.f32 %v1626, %v1666
        %v1668 = vpop.f32.mrb[0].mxu0
        %v1669 = vadd.f32 %v1628, %v1668
        %v1670 = vpop.f32.mrb[0].mxu0
        %v1671 = vpop.f32.mrb[0].mxu0
        %1672 = vdwg.mxu0
        %1673 = vmatprep.subr.bf16.mxu0 %v1391
        %1674 = vmatpush1.bf16.msra.mxu0 %v1390
        %1675 = vmatprep.subr.bf16.mxu0 %v1393
        %1676 = vmatpush1.bf16.msra.mxu0 %v1392
        %1677 = vmatprep.subr.bf16.mxu0 %v1395
        %1678 = vmatpush1.bf16.msra.mxu0 %v1394
        %1679 = vmatprep.subr.bf16.mxu0 %v1397
        %1680 = vmatpush1.bf16.msra.mxu0 %v1396
        %1681 = vmatprep.subr.bf16.mxu0 %v1399
        %1682 = vmatpush1.bf16.msra.mxu0 %v1398
        %1683 = vmatprep.subr.bf16.mxu0 %v1401
        %1684 = vmatpush1.bf16.msra.mxu0 %v1400
        %1685 = vmatprep.subr.bf16.mxu0 %v1403
        %1686 = vmatpush1.bf16.msra.mxu0 %v1402
        %1687 = vmatprep.subr.bf16.mxu0 %v1405
        %1688 = vmatpush1.bf16.msra.mxu0 %v1404
        %1689 = vmatprep.subr.bf16.mxu0 %v1407
        %1690 = vmatpush1.bf16.msra.mxu0 %v1406
        %1691 = vmatprep.subr.bf16.mxu0 %v1409
        %1692 = vmatpush1.bf16.msra.mxu0 %v1408
        %1693 = vmatprep.subr.bf16.mxu0 %v1411
        %1694 = vmatpush1.bf16.msra.mxu0 %v1410
        %1695 = vmatprep.subr.bf16.mxu0 %v1413
        %1696 = vmatpush1.bf16.msra.mxu0 %v1412
        %1697 = vmatprep.subr.bf16.mxu0 %v1415
        %1698 = vmatpush1.bf16.msra.mxu0 %v1414
        %1699 = vmatprep.subr.bf16.mxu0 %v1417
        %1700 = vmatpush1.bf16.msra.mxu0 %v1416
        %1701 = vmatprep.subr.bf16.mxu0 %v1419
        %1702 = vmatpush1.bf16.msra.mxu0 %v1418
        %1703 = vmatprep.subr.bf16.mxu0 %v1421
        %1704 = vmatpush1.bf16.msra.mxu0 %v1420
        %1705 = vmatprep.mubr.bf16.mxu0 %v779
        %1706 = vmatmul.mubr.bf16.gmra.mrb[0].mxu0 %v778
        %v1707 = vpop.f32.mrb[0].mxu0
        %v1708 = vadd.f32 %v1667, %v1707
        %v1709 = vpop.f32.mrb[0].mxu0
        %v1710 = vadd.f32 %v1669, %v1709
        %v1711 = vpop.f32.mrb[0].mxu0
        %v1712 = vpop.f32.mrb[0].mxu0
        %1713 = vdwg.mxu0
        %v1714 = vadd.f32 %v780, %v1708
        %v1715 = vadd.f32 %v781, %v1710
        %1716 = vst [vmem:[%s751] sm:$0xff] %v1714
        %1717 = vst [vmem:[%s751 + $0x8] sm:$0xff] %v1715
        // Predicated region
        $region75: #{discriminator_forward.7} parent=65 // pred_check
          %p1718 = pneg %p753
        $region76: #{discriminator_forward.7} parent=65 // pred_check_branch
          %1720 = sbr.rel (%p1718) target = $region78
        $region77: #{discriminator_forward.7} parent=65 // pred_region
          %v1721 = vld [vmem:[%s751] sm:$0xff]
          %v1722 = vld [vmem:[%s751 + $0x8] sm:$0xff]
          %v1723 = vld [vmem:[%s745] sm:$0x3]
          %v1725 = vlaneseq
          %v1726 = vshrl.u32 %v1725, 7
          %v1727 = vsub.s32 0, %v1726
          %v1728 = vrot.slane %v1723, %v1727
          %v1729 = vlaneseq
          %v1730 = vshrl.u32 %v1729, 7
          %v1731 = vsub.s32 1, %v1730
          %v1732 = vrot.slane %v1723, %v1731
          %v1735 = vadd.f32 %v1721, %v1728
          %v1736 = vadd.f32 %v1722, %v1732
          %1737 = vst [vmem:[%s751] sm:$0xff] %v1735
          %1738 = vst [vmem:[%s751 + $0x8] sm:$0xff] %v1736
        $region78: #{discriminator_forward.7} parent=65 // pred_fallthru
          _
        %s1739 = smul.u32 2, %s18
        %p1740 = scmp.lt.s32.totalorder %s1739, 3
        %s1741 = scalar_select %p1740, %s1739, 3
        %s1742 = smul.addr %s1741, 8
        %s1743 = scalar_lea.vmem %s3, %s1742
        // Predicated region
        $region79: #{discriminator_forward.7} parent=65 // pred_check
          %p1744 = pneg %p119
        $region80: #{discriminator_forward.7} parent=65 // pred_check_branch
          %1746 = sbr.rel (%p1744) target = $region82
        $region81: #{discriminator_forward.7} parent=65 // pred_region
          %s1747 = smul.u32 2, %s18
        $region82: #{discriminator_forward.7} parent=65 // pred_fallthru
          _
      $region66: #{discriminator_forward.7} parent=5 // pred_fallthru
        _
      %p1748 = scmp.le.s32.totalorder 2, %s9
      // Predicated region
      $region83: #{discriminator_forward.7} parent=5 // pred_check
        %p1749 = pneg %p1748
      $region84: #{discriminator_forward.7} parent=5 // pred_check_branch
        %1751 = sbr.rel (%p1749) target = $region86
      $region85: #{discriminator_forward.7} parent=5 // pred_region
        %s1752 = ssub.s32 %s9, 2
        // Predicated region
        $region87: #{discriminator_forward.7} parent=85 // pred_check
          %p1753 = pneg %p125
        $region88: #{discriminator_forward.7} parent=85 // pred_check_branch
          %1755 = sbr.rel (%p1753) target = $region90
        $region89: #{discriminator_forward.7} parent=85 // pred_region
          %s1756 = smul.u32 2, %s20
          %p1757 = scmp.lt.s32.totalorder %s1756, 3
          %s1758 = scalar_select %p1757, %s1756, 3
          %s1759 = smul.addr %s1758, 8
          %s1760 = scalar_lea.vmem %s3, %s1759
        $region90: #{discriminator_forward.7} parent=85 // pred_fallthru
          _
      $region86: #{discriminator_forward.7} parent=5 // pred_fallthru
        _
    $region6: #{discriminator_forward.7} parent=1 // loop_footer
      %s13 = sadd.s32 1, %s9
    $region7: #{discriminator_forward.7} parent=1 // loop_footer_branch
      %8 = sbr.rel target = $region3
    $region8: #{discriminator_forward.7} parent=1 // loop_exit
      _

// kernel: discriminator_forward.5
$region0: #{discriminator_forward.5}
  #allocation0 [shape = 'u32[]', space=smem, size = 0x4, offset = 0x4, fixed_abs, tag = 'smem constant byte address 0x4 - core index']
  #allocation1 [shape = 'u32[144,128]{1,0:T(1,128)}', space=vmem, size = 0x12000, scoped, tag = 'internal scratch']
  %s0 = inlined_call_operand.vmem [shape: f32[8,256], index: 0, kind: input, shape index: {}]
  %s1 = inlined_call_operand.hbm [shape: bf16[256,2048], index: 1, kind: input, shape index: {}]
  %s2 = inlined_call_operand.hbm [shape: f32[1,2048], index: 2, kind: input, shape index: {}]
  %s3 = inlined_call_operand.vmem [shape: f32[8,2048], index: 3, kind: output, shape index: {}]
  %s4 = sld [smem:[#allocation0]]
  $region61: #{discriminator_forward.5} parent=0
    _
  %s6 = ssub.s32 1, %s4
  %s7 = scalar_select 0, %s6, %s4
  $region1: #{discriminator_forward.5} parent=0
    #allocation2 [shape = 'u8[1048576]{0}', space=vmem, size = 0x100000, scoped, tag = 'input window, operand 1']
    #allocation3 [shape = 's32[2]{0}', space=sflag, size = 0x8, scoped, tag = 'scoped memory for discriminator_forward.5']
    #allocation4 [shape = 'u8[8192]{0}', space=vmem, size = 0x2000, scoped, tag = 'input window, operand 2']
    #allocation5 [shape = 's32[2]{0}', space=sflag, size = 0x8, scoped, tag = 'scoped memory for discriminator_forward.5']
    %8 = vsyncpa [#allocation3], 0
    %s9 = scalar_lea.sflag [#allocation3], 1
    %10 = vsyncpa %s9, 0
    %11 = vsyncpa [#allocation5], 0
    %s12 = scalar_lea.sflag [#allocation5], 1
    %13 = vsyncpa %s12, 0
    loop: start=0, step=1, limit=4
    $region2: #{discriminator_forward.5} parent=1 // loop_pre_header
      _
    $region3: #{discriminator_forward.5} parent=1 // loop_header
      %s15 = sphi 0, %s19
      %p16 = scmp.ge.s32.totalorder %s15, 4
      %s22 = sphi 0, %s34
      %s23 = sphi 0, %s30
      %s24 = sphi 0, %s22
      %s25 = sphi 0, %s23
      %s26 = sphi 0, %s24
      %s27 = sphi 0, %s25
      %s35 = sphi 0, %s35
      %s37 = sphi 0, %s35
      %s38 = sphi 0, %s37
      %s52 = sphi 0, %s38
      %s60 = sphi 0, %s62
      %s63 = sphi 0, %s60
      %s64 = sphi 0, %s63
      %s80 = sphi 0, %s64
      %s86 = sphi 0, %s88
      %s89 = sphi 0, %s86
      %s90 = sphi 0, %s89
      %s106 = sphi 0, %s90
      %s112 = sphi 0, %s114
      %s115 = sphi 0, %s112
      %s116 = sphi 0, %s115
      %s132 = sphi 0, %s116
    $region4: #{discriminator_forward.5} parent=1 // loop_header_branch
      %18 = sbr.rel (%p16) target = $region8
    $region5: #{discriminator_forward.5} parent=1 // loop_body
      %s20 = ssub.s32 %s15, 1
      %s21 = ssub.s32 %s15, 2
      %s28 = sadd.s32 1, %s23
      %p29 = scmp.ge.s32.totalorder %s28, 1
      %s30 = scalar_select %p29, 0, %s28
      %s31 = sadd.s32 1, %s22
      %s32 = scalar_select %p29, %s31, %s22
      %p33 = scmp.ge.s32.totalorder %s32, 2
      %s34 = scalar_select %p33, 0, %s32
      %s36 = sadd.s32 %s35, 1
      %p39 = scmp.eq.s32.totalorder %s15, 1
      %p40 = scmp.ne.s32.totalorder %s35, %s37
      %p41 = scmp.eq.s32.totalorder %s15, 0
      %p42 = por %p40, %p41
      %p43 = scmp.ne.s32.totalorder %s35, %s37
      %p44 = scmp.eq.s32.totalorder %s20, 1
      %p45 = por %p43, %p44
      %p46 = scmp.ne.s32.totalorder %s37, %s38
      %p47 = scmp.eq.s32.totalorder %s20, 0
      %p48 = por %p46, %p47
      %p49 = scmp.ne.s32.totalorder %s37, %s38
      %p50 = scmp.eq.s32.totalorder %s21, 1
      %p51 = por %p49, %p50
      %p53 = scmp.ne.s32.totalorder %s38, %s52
      %p54 = scmp.eq.s32.totalorder %s21, 0
      %p55 = por %p53, %p54
      %s56 = ssub.s32 %s23, %s30
      %s57 = ssub.s32 %s22, %s34
      %s58 = sor.u32 %s56, %s57
      %p59 = scmp.eq.s32.totalorder %s58, 0
      %s61 = sadd.s32 %s60, 1
      %s62 = scalar_select %p59, %s60, %s61
      %p65 = pneg %p59
      %p66 = scmp.eq.s32.totalorder %s15, 1
      %p67 = por %p65, %p66
      %p68 = scmp.ne.s32.totalorder %s60, %s63
      %p69 = scmp.eq.s32.totalorder %s15, 0
      %p70 = por %p68, %p69
      %p71 = scmp.ne.s32.totalorder %s60, %s63
      %p72 = scmp.eq.s32.totalorder %s20, 1
      %p73 = por %p71, %p72
      %p74 = scmp.ne.s32.totalorder %s63, %s64
      %p75 = scmp.eq.s32.totalorder %s20, 0
      %p76 = por %p74, %p75
      %p77 = scmp.ne.s32.totalorder %s63, %s64
      %p78 = scmp.eq.s32.totalorder %s21, 1
      %p79 = por %p77, %p78
      %p81 = scmp.ne.s32.totalorder %s64, %s80
      %p82 = scmp.eq.s32.totalorder %s21, 0
      %p83 = por %p81, %p82
      %s84 = ssub.s32 %s22, %s34
      %p85 = scmp.eq.s32.totalorder %s84, 0
      %s87 = sadd.s32 %s86, 1
      %s88 = scalar_select %p85, %s86, %s87
      %p91 = pneg %p85
      %p92 = scmp.eq.s32.totalorder %s15, 1
      %p93 = por %p91, %p92
      %p94 = scmp.ne.s32.totalorder %s86, %s89
      %p95 = scmp.eq.s32.totalorder %s15, 0
      %p96 = por %p94, %p95
      %p97 = scmp.ne.s32.totalorder %s86, %s89
      %p98 = scmp.eq.s32.totalorder %s20, 1
      %p99 = por %p97, %p98
      %p100 = scmp.ne.s32.totalorder %s89, %s90
      %p101 = scmp.eq.s32.totalorder %s20, 0
      %p102 = por %p100, %p101
      %p103 = scmp.ne.s32.totalorder %s89, %s90
      %p104 = scmp.eq.s32.totalorder %s21, 1
      %p105 = por %p103, %p104
      %p107 = scmp.ne.s32.totalorder %s90, %s106
      %p108 = scmp.eq.s32.totalorder %s21, 0
      %p109 = por %p107, %p108
      %s110 = ssub.s32 %s22, %s34
      %p111 = scmp.eq.s32.totalorder %s110, 0
      %s113 = sadd.s32 %s112, 1
      %s114 = scalar_select %p111, %s112, %s113
      %p117 = pneg %p111
      %p118 = scmp.eq.s32.totalorder %s15, 1
      %p119 = por %p117, %p118
      %p120 = scmp.ne.s32.totalorder %s112, %s115
      %p121 = scmp.eq.s32.totalorder %s15, 0
      %p122 = por %p120, %p121
      %p123 = scmp.ne.s32.totalorder %s112, %s115
      %p124 = scmp.eq.s32.totalorder %s20, 1
      %p125 = por %p123, %p124
      %p126 = scmp.ne.s32.totalorder %s115, %s116
      %p127 = scmp.eq.s32.totalorder %s20, 0
      %p128 = por %p126, %p127
      %p129 = scmp.ne.s32.totalorder %s115, %s116
      %p130 = scmp.eq.s32.totalorder %s21, 1
      %p131 = por %p129, %p130
      %p133 = scmp.ne.s32.totalorder %s116, %s132
      %p134 = scmp.eq.s32.totalorder %s21, 0
      %p135 = por %p133, %p134
      %p136 = scmp.le.s32.totalorder 1, %s15
      %p137 = scmp.lt.s32.totalorder %s15, 3
      %p138 = pnand %p136, %p137
      %p139 = pneg %p138
      // Predicated region
      $region9: #{discriminator_forward.5} parent=5 // pred_check
        _
      $region10: #{discriminator_forward.5} parent=5 // pred_check_branch
        %141 = sbr.rel (%p138) target = $region12
      $region11: #{discriminator_forward.5} parent=5 // pred_region
        %s142 = ssub.s32 %s15, 1
        // Predicated region
        $region13: #{discriminator_forward.5} parent=11 // pred_check
          %p143 = pneg %p48
        $region14: #{discriminator_forward.5} parent=11 // pred_check_branch
          %145 = sbr.rel (%p143) target = $region16
        $region15: #{discriminator_forward.5} parent=11 // pred_region
          _
        $region16: #{discriminator_forward.5} parent=11 // pred_fallthru
          _
      $region12: #{discriminator_forward.5} parent=5 // pred_fallthru
        _
      %p146 = scmp.lt.s32.totalorder %s15, 2
      // Predicated region
      $region17: #{discriminator_forward.5} parent=5 // pred_check
        %p147 = pneg %p146
      $region18: #{discriminator_forward.5} parent=5 // pred_check_branch
        %149 = sbr.rel (%p147) target = $region20
      $region19: #{discriminator_forward.5} parent=5 // pred_region
        // Predicated region
        $region21: #{discriminator_forward.5} parent=19 // pred_check
          %p150 = pneg %p70
        $region22: #{discriminator_forward.5} parent=19 // pred_check_branch
          %152 = sbr.rel (%p150) target = $region24
        $region23: #{discriminator_forward.5} parent=19 // pred_region
          %s153 = sand.u32 %s60, 1
          %s154 = scalar_lea.sflag [#allocation3], %s153
          %s155 = sand.u32 %s60, 1
          %s156 = smul.addr %s155, 1024
          %s157 = scalar_lea.vmem [#allocation2], %s156
          %s158 = smul.u32 32, %s23
          %s159 = smul.u32 8, %s22
          %s161 = ssub.s32 16384, 16384
          %162 = vsyncadd %s154, %s161
          %s163 = smul.addr %s158, 16
          %s164 = sadd.s32 %s159, %s163
          %s165 = smul.addr %s164, 64
          %s166 = scalar_lea.hbm %s1, %s165
          %s167 = sshll.u32 %s157, 4
          %s168 = int_to_ptr.vmem [resolvable:$true] %s167
          %173 = dma.hbm_to_vmem [thread:$0]  %s166, 16384, %s168, %s154, 1024, 512, 32
        $region24: #{discriminator_forward.5} parent=19 // pred_fallthru
          _
        // Predicated region
        $region25: #{discriminator_forward.5} parent=19 // pred_check
          %p174 = pneg %p96
        $region26: #{discriminator_forward.5} parent=19 // pred_check_branch
          %176 = sbr.rel (%p174) target = $region28
        $region27: #{discriminator_forward.5} parent=19 // pred_region
          %s177 = sand.u32 %s86, 1
          %s178 = scalar_lea.sflag [#allocation5], %s177
          %s179 = sand.u32 %s86, 1
          %s180 = smul.addr %s179, 8
          %s181 = scalar_lea.vmem [#allocation4], %s180
          %s182 = smul.u32 8, %s22
          %s184 = ssub.s32 128, 128
          %185 = vsyncadd %s178, %s184
          %s186 = smul.addr %s182, 16
          %s187 = scalar_lea.hbm %s2, %s186
          %s189 = sshll.u32 %s181, 4
          %s190 = int_to_ptr.vmem [resolvable:$true] %s189
          %192 = dma.hbm_to_vmem [thread:$0]  %s187, 128, %s190, %s178
        $region28: #{discriminator_forward.5} parent=19 // pred_fallthru
          _
      $region20: #{discriminator_forward.5} parent=5 // pred_fallthru
        _
      %p193 = scmp.le.s32.totalorder 1, %s15
      %p194 = scmp.lt.s32.totalorder %s15, 3
      %p195 = pnand %p193, %p194
      %p196 = pneg %p195
      // Predicated region
      $region29: #{discriminator_forward.5} parent=5 // pred_check
        _
      $region30: #{discriminator_forward.5} parent=5 // pred_check_branch
        %198 = sbr.rel (%p195) target = $region32
      $region31: #{discriminator_forward.5} parent=5 // pred_region
        %s199 = ssub.s32 %s15, 1
        %s200 = sand.u32 %s63, 1
        %s201 = scalar_lea.sflag [#allocation3], %s200
        %s202 = sand.u32 %s63, 1
        %s203 = smul.addr %s202, 1024
        %s204 = scalar_lea.vmem [#allocation2], %s203
        // Predicated region
        $region33: #{discriminator_forward.5} parent=31 // pred_check
          %p205 = pneg %p76
        $region34: #{discriminator_forward.5} parent=31 // pred_check_branch
          %207 = sbr.rel (%p205) target = $region36
        $region35: #{discriminator_forward.5} parent=31 // pred_region
          %208 = dma.done %s201, 16384
        $region36: #{discriminator_forward.5} parent=31 // pred_fallthru
          _
        %s209 = sand.u32 %s89, 1
        %s210 = scalar_lea.sflag [#allocation5], %s209
        %s211 = sand.u32 %s89, 1
        %s212 = smul.addr %s211, 8
        %s213 = scalar_lea.vmem [#allocation4], %s212
        // Predicated region
        $region37: #{discriminator_forward.5} parent=31 // pred_check
          %p214 = pneg %p102
        $region38: #{discriminator_forward.5} parent=31 // pred_check_branch
          %216 = sbr.rel (%p214) target = $region40
        $region39: #{discriminator_forward.5} parent=31 // pred_region
          %217 = dma.done %s210, 128
        $region40: #{discriminator_forward.5} parent=31 // pred_fallthru
          _
        %p218 = pneg %p48
        %p219 = pneg %p45
        %s220 = sand.u32 %s63, 1
        %s221 = scalar_lea.sflag [#allocation3], %s220
        %s222 = sand.u32 %s63, 1
        %s223 = smul.addr %s222, 1024
        %s224 = scalar_lea.vmem [#allocation2], %s223
        %p225 = pneg %p76
        %p226 = pneg %p73
        %s227 = sand.u32 %s89, 1
        %s228 = scalar_lea.sflag [#allocation5], %s227
        %s229 = sand.u32 %s89, 1
        %s230 = smul.addr %s229, 8
        %s231 = scalar_lea.vmem [#allocation4], %s230
        %p232 = pneg %p102
        %p233 = pneg %p99
        %p234 = pneg %p128
        %p235 = pneg %p125
        %s236 = smul.u32 8, %s24
        %p237 = scmp.lt.s32.totalorder %s236, 15
        %s238 = scalar_select %p237, %s236, 15
        %s239 = smul.addr %s238, 8
        %s240 = scalar_lea.vmem %s3, %s239
        %s241 = smul.u32 32, %s25
        %s242 = smul.u32 8, %s24
        %s243 = smul.u32 8, %s24
        %s244 = smul.u32 8, %s24
        %p245 = scmp.lt.s32.totalorder %s244, 15
        %s246 = scalar_select %p245, %s244, 15
        %s247 = smul.addr %s246, 8
        %s248 = scalar_lea.vmem %s3, %s247
        %s249 = smul.u32 8, %s24
        %p250 = scmp.eq.s32.totalorder %s25, 0
        // Predicated region
        $region41: #{discriminator_forward.5} parent=31 // pred_check
          %p251 = pneg %p250
        $region42: #{discriminator_forward.5} parent=31 // pred_check_branch
          %253 = sbr.rel (%p251) target = $region44
        $region43: #{discriminator_forward.5} parent=31 // pred_region
          %254 = vst [vmem:[%s248] sm:$0xff] 0.0
          %255 = vst [vmem:[%s248 + $0x8] sm:$0xff] 0.0
          %256 = vst [vmem:[%s248 + $0x10] sm:$0xff] 0.0
          %257 = vst [vmem:[%s248 + $0x18] sm:$0xff] 0.0
          %258 = vst [vmem:[%s248 + $0x20] sm:$0xff] 0.0
          %259 = vst [vmem:[%s248 + $0x28] sm:$0xff] 0.0
          %260 = vst [vmem:[%s248 + $0x30] sm:$0xff] 0.0
          %261 = vst [vmem:[%s248 + $0x38] sm:$0xff] 0.0
        $region44: #{discriminator_forward.5} parent=31 // pred_fallthru
          _
        %s262 = smul.u32 %s25, 256
        %s263 = sshra.s32 %s262, 7
        %s264 = sand.u32 %s262, 127
        %s265 = smul.addr %s263, 8
        %s266 = scalar_lea.vmem %s0, %s265
        %v267 = vld [vmem:[%s266] sm:$0xff]
        %v268 = vld [vmem:[%s266 + $0x8] sm:$0xff]
        %v269 = vpack.c.bf16 %v267, %v267
        %v270 = vpack.c.bf16 %v268, %v268
        %v271 = vld [vmem:[%s248] sm:$0xff]
        %v272 = vld [vmem:[%s248 + $0x8] sm:$0xff]
        %v273 = vld [vmem:[%s248 + $0x10] sm:$0xff]
        %v274 = vld [vmem:[%s248 + $0x18] sm:$0xff]
        %v275 = vld [vmem:[%s248 + $0x20] sm:$0xff]
        %v276 = vld [vmem:[%s248 + $0x28] sm:$0xff]
        %v277 = vld [vmem:[%s248 + $0x30] sm:$0xff]
        %v278 = vld [vmem:[%s248 + $0x38] sm:$0xff]
        %v279 = vld [vmem:[%s204] sm:$0xff]
        %v280 = vld [vmem:[%s204 + $0x8] sm:$0xff]
        %v281 = vld [vmem:[%s204 + $0x10] sm:$0xff]
        %v282 = vld [vmem:[%s204 + $0x18] sm:$0xff]
        %v283 = vld [vmem:[%s204 + $0x20] sm:$0xff]
        %v284 = vld [vmem:[%s204 + $0x28] sm:$0xff]
        %v285 = vld [vmem:[%s204 + $0x30] sm:$0xff]
        %v286 = vld [vmem:[%s204 + $0x38] sm:$0xff]
        %v287 = vld [vmem:[%s204 + $0x40] sm:$0xff]
        %v288 = vld [vmem:[%s204 + $0x48] sm:$0xff]
        %v289 = vld [vmem:[%s204 + $0x50] sm:$0xff]
        %v290 = vld [vmem:[%s204 + $0x58] sm:$0xff]
        %v291 = vld [vmem:[%s204 + $0x60] sm:$0xff]
        %v292 = vld [vmem:[%s204 + $0x68] sm:$0xff]
        %v293 = vld [vmem:[%s204 + $0x70] sm:$0xff]
        %v294 = vld [vmem:[%s204 + $0x78] sm:$0xff]
        %v295 = vld [vmem:[%s204 + $0x80] sm:$0xff]
        %v296 = vld [vmem:[%s204 + $0x88] sm:$0xff]
        %v297 = vld [vmem:[%s204 + $0x90] sm:$0xff]
        %v298 = vld [vmem:[%s204 + $0x98] sm:$0xff]
        %v299 = vld [vmem:[%s204 + $0xa0] sm:$0xff]
        %v300 = vld [vmem:[%s204 + $0xa8] sm:$0xff]
        %v301 = vld [vmem:[%s204 + $0xb0] sm:$0xff]
        %v302 = vld [vmem:[%s204 + $0xb8] sm:$0xff]
        %v303 = vld [vmem:[%s204 + $0xc0] sm:$0xff]
        %v304 = vld [vmem:[%s204 + $0xc8] sm:$0xff]
        %v305 = vld [vmem:[%s204 + $0xd0] sm:$0xff]
        %v306 = vld [vmem:[%s204 + $0xd8] sm:$0xff]
        %v307 = vld [vmem:[%s204 + $0xe0] sm:$0xff]
        %v308 = vld [vmem:[%s204 + $0xe8] sm:$0xff]
        %v309 = vld [vmem:[%s204 + $0xf0] sm:$0xff]
        %v310 = vld [vmem:[%s204 + $0xf8] sm:$0xff]
        %v311 = vld [vmem:[%s204 + $0x100] sm:$0xff]
        %v312 = vld [vmem:[%s204 + $0x108] sm:$0xff]
        %v313 = vld [vmem:[%s204 + $0x110] sm:$0xff]
        %v314 = vld [vmem:[%s204 + $0x118] sm:$0xff]
        %v315 = vld [vmem:[%s204 + $0x120] sm:$0xff]
        %v316 = vld [vmem:[%s204 + $0x128] sm:$0xff]
        %v317 = vld [vmem:[%s204 + $0x130] sm:$0xff]
        %v318 = vld [vmem:[%s204 + $0x138] sm:$0xff]
        %v319 = vld [vmem:[%s204 + $0x140] sm:$0xff]
        %v320 = vld [vmem:[%s204 + $0x148] sm:$0xff]
        %v321 = vld [vmem:[%s204 + $0x150] sm:$0xff]
        %v322 = vld [vmem:[%s204 + $0x158] sm:$0xff]
        %v323 = vld [vmem:[%s204 + $0x160] sm:$0xff]
        %v324 = vld [vmem:[%s204 + $0x168] sm:$0xff]
        %v325 = vld [vmem:[%s204 + $0x170] sm:$0xff]
        %v326 = vld [vmem:[%s204 + $0x178] sm:$0xff]
        %v327 = vld [vmem:[%s204 + $0x180] sm:$0xff]
        %v328 = vld [vmem:[%s204 + $0x188] sm:$0xff]
        %v329 = vld [vmem:[%s204 + $0x190] sm:$0xff]
        %v330 = vld [vmem:[%s204 + $0x198] sm:$0xff]
        %v331 = vld [vmem:[%s204 + $0x1a0] sm:$0xff]
        %v332 = vld [vmem:[%s204 + $0x1a8] sm:$0xff]
        %v333 = vld [vmem:[%s204 + $0x1b0] sm:$0xff]
        %v334 = vld [vmem:[%s204 + $0x1b8] sm:$0xff]
        %v335 = vld [vmem:[%s204 + $0x1c0] sm:$0xff]
        %v336 = vld [vmem:[%s204 + $0x1c8] sm:$0xff]
        %v337 = vld [vmem:[%s204 + $0x1d0] sm:$0xff]
        %v338 = vld [vmem:[%s204 + $0x1d8] sm:$0xff]
        %v339 = vld [vmem:[%s204 + $0x1e0] sm:$0xff]
        %v340 = vld [vmem:[%s204 + $0x1e8] sm:$0xff]
        %v341 = vld [vmem:[%s204 + $0x1f0] sm:$0xff]
        %v342 = vld [vmem:[%s204 + $0x1f8] sm:$0xff]
        %v343 = vld [vmem:[%s204 + $0x200] sm:$0xff]
        %v344 = vld [vmem:[%s204 + $0x208] sm:$0xff]
        %v345 = vld [vmem:[%s204 + $0x210] sm:$0xff]
        %v346 = vld [vmem:[%s204 + $0x218] sm:$0xff]
        %v347 = vld [vmem:[%s204 + $0x220] sm:$0xff]
        %v348 = vld [vmem:[%s204 + $0x228] sm:$0xff]
        %v349 = vld [vmem:[%s204 + $0x230] sm:$0xff]
        %v350 = vld [vmem:[%s204 + $0x238] sm:$0xff]
        %v351 = vld [vmem:[%s204 + $0x240] sm:$0xff]
        %v352 = vld [vmem:[%s204 + $0x248] sm:$0xff]
        %v353 = vld [vmem:[%s204 + $0x250] sm:$0xff]
        %v354 = vld [vmem:[%s204 + $0x258] sm:$0xff]
        %v355 = vld [vmem:[%s204 + $0x260] sm:$0xff]
        %v356 = vld [vmem:[%s204 + $0x268] sm:$0xff]
        %v357 = vld [vmem:[%s204 + $0x270] sm:$0xff]
        %v358 = vld [vmem:[%s204 + $0x278] sm:$0xff]
        %v359 = vld [vmem:[%s204 + $0x280] sm:$0xff]
        %v360 = vld [vmem:[%s204 + $0x288] sm:$0xff]
        %v361 = vld [vmem:[%s204 + $0x290] sm:$0xff]
        %v362 = vld [vmem:[%s204 + $0x298] sm:$0xff]
        %v363 = vld [vmem:[%s204 + $0x2a0] sm:$0xff]
        %v364 = vld [vmem:[%s204 + $0x2a8] sm:$0xff]
        %v365 = vld [vmem:[%s204 + $0x2b0] sm:$0xff]
        %v366 = vld [vmem:[%s204 + $0x2b8] sm:$0xff]
        %v367 = vld [vmem:[%s204 + $0x2c0] sm:$0xff]
        %v368 = vld [vmem:[%s204 + $0x2c8] sm:$0xff]
        %v369 = vld [vmem:[%s204 + $0x2d0] sm:$0xff]
        %v370 = vld [vmem:[%s204 + $0x2d8] sm:$0xff]
        %v371 = vld [vmem:[%s204 + $0x2e0] sm:$0xff]
        %v372 = vld [vmem:[%s204 + $0x2e8] sm:$0xff]
        %v373 = vld [vmem:[%s204 + $0x2f0] sm:$0xff]
        %v374 = vld [vmem:[%s204 + $0x2f8] sm:$0xff]
        %v375 = vld [vmem:[%s204 + $0x300] sm:$0xff]
        %v376 = vld [vmem:[%s204 + $0x308] sm:$0xff]
        %v377 = vld [vmem:[%s204 + $0x310] sm:$0xff]
        %v378 = vld [vmem:[%s204 + $0x318] sm:$0xff]
        %v379 = vld [vmem:[%s204 + $0x320] sm:$0xff]
        %v380 = vld [vmem:[%s204 + $0x328] sm:$0xff]
        %v381 = vld [vmem:[%s204 + $0x330] sm:$0xff]
        %v382 = vld [vmem:[%s204 + $0x338] sm:$0xff]
        %v383 = vld [vmem:[%s204 + $0x340] sm:$0xff]
        %v384 = vld [vmem:[%s204 + $0x348] sm:$0xff]
        %v385 = vld [vmem:[%s204 + $0x350] sm:$0xff]
        %v386 = vld [vmem:[%s204 + $0x358] sm:$0xff]
        %v387 = vld [vmem:[%s204 + $0x360] sm:$0xff]
        %v388 = vld [vmem:[%s204 + $0x368] sm:$0xff]
        %v389 = vld [vmem:[%s204 + $0x370] sm:$0xff]
        %v390 = vld [vmem:[%s204 + $0x378] sm:$0xff]
        %v391 = vld [vmem:[%s204 + $0x380] sm:$0xff]
        %v392 = vld [vmem:[%s204 + $0x388] sm:$0xff]
        %v393 = vld [vmem:[%s204 + $0x390] sm:$0xff]
        %v394 = vld [vmem:[%s204 + $0x398] sm:$0xff]
        %v395 = vld [vmem:[%s204 + $0x3a0] sm:$0xff]
        %v396 = vld [vmem:[%s204 + $0x3a8] sm:$0xff]
        %v397 = vld [vmem:[%s204 + $0x3b0] sm:$0xff]
        %v398 = vld [vmem:[%s204 + $0x3b8] sm:$0xff]
        %v399 = vld [vmem:[%s204 + $0x3c0] sm:$0xff]
        %v400 = vld [vmem:[%s204 + $0x3c8] sm:$0xff]
        %v401 = vld [vmem:[%s204 + $0x3d0] sm:$0xff]
        %v402 = vld [vmem:[%s204 + $0x3d8] sm:$0xff]
        %v403 = vld [vmem:[%s204 + $0x3e0] sm:$0xff]
        %v404 = vld [vmem:[%s204 + $0x3e8] sm:$0xff]
        %v405 = vld [vmem:[%s204 + $0x3f0] sm:$0xff]
        %v406 = vld [vmem:[%s204 + $0x3f8] sm:$0xff]
        %v535 = vunpack.c.l.b16 %v279
        %v536 = vunpack.c.h.b16 %v279
        %v537 = vunpack.c.l.b16 %v280
        %v538 = vunpack.c.h.b16 %v280
        %v539 = vunpack.c.l.b16 %v281
        %v540 = vunpack.c.h.b16 %v281
        %v541 = vunpack.c.l.b16 %v282
        %v542 = vunpack.c.h.b16 %v282
        %v543 = vunpack.c.l.b16 %v283
        %v544 = vunpack.c.h.b16 %v283
        %v545 = vunpack.c.l.b16 %v284
        %v546 = vunpack.c.h.b16 %v284
        %v547 = vunpack.c.l.b16 %v285
        %v548 = vunpack.c.h.b16 %v285
        %v549 = vunpack.c.l.b16 %v286
        %v550 = vunpack.c.h.b16 %v286
        %v551 = vunpack.c.l.b16 %v287
        %v552 = vunpack.c.h.b16 %v287
        %v553 = vunpack.c.l.b16 %v288
        %v554 = vunpack.c.h.b16 %v288
        %v555 = vunpack.c.l.b16 %v289
        %v556 = vunpack.c.h.b16 %v289
        %v557 = vunpack.c.l.b16 %v290
        %v558 = vunpack.c.h.b16 %v290
        %v559 = vunpack.c.l.b16 %v291
        %v560 = vunpack.c.h.b16 %v291
        %v561 = vunpack.c.l.b16 %v292
        %v562 = vunpack.c.h.b16 %v292
        %v563 = vunpack.c.l.b16 %v293
        %v564 = vunpack.c.h.b16 %v293
        %v565 = vunpack.c.l.b16 %v294
        %v566 = vunpack.c.h.b16 %v294
        %v567 = vunpack.c.l.b16 %v295
        %v568 = vunpack.c.h.b16 %v295
        %v569 = vunpack.c.l.b16 %v296
        %v570 = vunpack.c.h.b16 %v296
        %v571 = vunpack.c.l.b16 %v297
        %v572 = vunpack.c.h.b16 %v297
        %v573 = vunpack.c.l.b16 %v298
        %v574 = vunpack.c.h.b16 %v298
        %v575 = vunpack.c.l.b16 %v299
        %v576 = vunpack.c.h.b16 %v299
        %v577 = vunpack.c.l.b16 %v300
        %v578 = vunpack.c.h.b16 %v300
        %v579 = vunpack.c.l.b16 %v301
        %v580 = vunpack.c.h.b16 %v301
        %v581 = vunpack.c.l.b16 %v302
        %v582 = vunpack.c.h.b16 %v302
        %v583 = vunpack.c.l.b16 %v303
        %v584 = vunpack.c.h.b16 %v303
        %v585 = vunpack.c.l.b16 %v304
        %v586 = vunpack.c.h.b16 %v304
        %v587 = vunpack.c.l.b16 %v305
        %v588 = vunpack.c.h.b16 %v305
        %v589 = vunpack.c.l.b16 %v306
        %v590 = vunpack.c.h.b16 %v306
        %v591 = vunpack.c.l.b16 %v307
        %v592 = vunpack.c.h.b16 %v307
        %v593 = vunpack.c.l.b16 %v308
        %v594 = vunpack.c.h.b16 %v308
        %v595 = vunpack.c.l.b16 %v309
        %v596 = vunpack.c.h.b16 %v309
        %v597 = vunpack.c.l.b16 %v310
        %v598 = vunpack.c.h.b16 %v310
        %v599 = vunpack.c.l.b16 %v311
        %v600 = vunpack.c.h.b16 %v311
        %v601 = vunpack.c.l.b16 %v312
        %v602 = vunpack.c.h.b16 %v312
        %v603 = vunpack.c.l.b16 %v313
        %v604 = vunpack.c.h.b16 %v313
        %v605 = vunpack.c.l.b16 %v314
        %v606 = vunpack.c.h.b16 %v314
        %v607 = vunpack.c.l.b16 %v315
        %v608 = vunpack.c.h.b16 %v315
        %v609 = vunpack.c.l.b16 %v316
        %v610 = vunpack.c.h.b16 %v316
        %v611 = vunpack.c.l.b16 %v317
        %v612 = vunpack.c.h.b16 %v317
        %v613 = vunpack.c.l.b16 %v318
        %v614 = vunpack.c.h.b16 %v318
        %v615 = vunpack.c.l.b16 %v319
        %v616 = vunpack.c.h.b16 %v319
        %v617 = vunpack.c.l.b16 %v320
        %v618 = vunpack.c.h.b16 %v320
        %v619 = vunpack.c.l.b16 %v321
        %v620 = vunpack.c.h.b16 %v321
        %v621 = vunpack.c.l.b16 %v322
        %v622 = vunpack.c.h.b16 %v322
        %v623 = vunpack.c.l.b16 %v323
        %v624 = vunpack.c.h.b16 %v323
        %v625 = vunpack.c.l.b16 %v324
        %v626 = vunpack.c.h.b16 %v324
        %v627 = vunpack.c.l.b16 %v325
        %v628 = vunpack.c.h.b16 %v325
        %v629 = vunpack.c.l.b16 %v326
        %v630 = vunpack.c.h.b16 %v326
        %v631 = vunpack.c.l.b16 %v327
        %v632 = vunpack.c.h.b16 %v327
        %v633 = vunpack.c.l.b16 %v328
        %v634 = vunpack.c.h.b16 %v328
        %v635 = vunpack.c.l.b16 %v329
        %v636 = vunpack.c.h.b16 %v329
        %v637 = vunpack.c.l.b16 %v330
        %v638 = vunpack.c.h.b16 %v330
        %v639 = vunpack.c.l.b16 %v331
        %v640 = vunpack.c.h.b16 %v331
        %v641 = vunpack.c.l.b16 %v332
        %v642 = vunpack.c.h.b16 %v332
        %v643 = vunpack.c.l.b16 %v333
        %v644 = vunpack.c.h.b16 %v333
        %v645 = vunpack.c.l.b16 %v334
        %v646 = vunpack.c.h.b16 %v334
        %v647 = vunpack.c.l.b16 %v335
        %v648 = vunpack.c.h.b16 %v335
        %v649 = vunpack.c.l.b16 %v336
        %v650 = vunpack.c.h.b16 %v336
        %v651 = vunpack.c.l.b16 %v337
        %v652 = vunpack.c.h.b16 %v337
        %v653 = vunpack.c.l.b16 %v338
        %v654 = vunpack.c.h.b16 %v338
        %v655 = vunpack.c.l.b16 %v339
        %v656 = vunpack.c.h.b16 %v339
        %v657 = vunpack.c.l.b16 %v340
        %v658 = vunpack.c.h.b16 %v340
        %v659 = vunpack.c.l.b16 %v341
        %v660 = vunpack.c.h.b16 %v341
        %v661 = vunpack.c.l.b16 %v342
        %v662 = vunpack.c.h.b16 %v342
        %v663 = vunpack.c.l.b16 %v343
        %v664 = vunpack.c.h.b16 %v343
        %v665 = vunpack.c.l.b16 %v344
        %v666 = vunpack.c.h.b16 %v344
        %v667 = vunpack.c.l.b16 %v345
        %v668 = vunpack.c.h.b16 %v345
        %v669 = vunpack.c.l.b16 %v346
        %v670 = vunpack.c.h.b16 %v346
        %v671 = vunpack.c.l.b16 %v347
        %v672 = vunpack.c.h.b16 %v347
        %v673 = vunpack.c.l.b16 %v348
        %v674 = vunpack.c.h.b16 %v348
        %v675 = vunpack.c.l.b16 %v349
        %v676 = vunpack.c.h.b16 %v349
        %v677 = vunpack.c.l.b16 %v350
        %v678 = vunpack.c.h.b16 %v350
        %v679 = vunpack.c.l.b16 %v351
        %v680 = vunpack.c.h.b16 %v351
        %v681 = vunpack.c.l.b16 %v352
        %v682 = vunpack.c.h.b16 %v352
        %v683 = vunpack.c.l.b16 %v353
        %v684 = vunpack.c.h.b16 %v353
        %v685 = vunpack.c.l.b16 %v354
        %v686 = vunpack.c.h.b16 %v354
        %v687 = vunpack.c.l.b16 %v355
        %v688 = vunpack.c.h.b16 %v355
        %v689 = vunpack.c.l.b16 %v356
        %v690 = vunpack.c.h.b16 %v356
        %v691 = vunpack.c.l.b16 %v357
        %v692 = vunpack.c.h.b16 %v357
        %v693 = vunpack.c.l.b16 %v358
        %v694 = vunpack.c.h.b16 %v358
        %v695 = vunpack.c.l.b16 %v359
        %v696 = vunpack.c.h.b16 %v359
        %v697 = vunpack.c.l.b16 %v360
        %v698 = vunpack.c.h.b16 %v360
        %v699 = vunpack.c.l.b16 %v361
        %v700 = vunpack.c.h.b16 %v361
        %v701 = vunpack.c.l.b16 %v362
        %v702 = vunpack.c.h.b16 %v362
        %v703 = vunpack.c.l.b16 %v363
        %v704 = vunpack.c.h.b16 %v363
        %v705 = vunpack.c.l.b16 %v364
        %v706 = vunpack.c.h.b16 %v364
        %v707 = vunpack.c.l.b16 %v365
        %v708 = vunpack.c.h.b16 %v365
        %v709 = vunpack.c.l.b16 %v366
        %v710 = vunpack.c.h.b16 %v366
        %v711 = vunpack.c.l.b16 %v367
        %v712 = vunpack.c.h.b16 %v367
        %v713 = vunpack.c.l.b16 %v368
        %v714 = vunpack.c.h.b16 %v368
        %v715 = vunpack.c.l.b16 %v369
        %v716 = vunpack.c.h.b16 %v369
        %v717 = vunpack.c.l.b16 %v370
        %v718 = vunpack.c.h.b16 %v370
        %v719 = vunpack.c.l.b16 %v371
        %v720 = vunpack.c.h.b16 %v371
        %v721 = vunpack.c.l.b16 %v372
        %v722 = vunpack.c.h.b16 %v372
        %v723 = vunpack.c.l.b16 %v373
        %v724 = vunpack.c.h.b16 %v373
        %v725 = vunpack.c.l.b16 %v374
        %v726 = vunpack.c.h.b16 %v374
        %v727 = vunpack.c.l.b16 %v375
        %v728 = vunpack.c.h.b16 %v375
        %v729 = vunpack.c.l.b16 %v376
        %v730 = vunpack.c.h.b16 %v376
        %v731 = vunpack.c.l.b16 %v377
        %v732 = vunpack.c.h.b16 %v377
        %v733 = vunpack.c.l.b16 %v378
        %v734 = vunpack.c.h.b16 %v378
        %v735 = vunpack.c.l.b16 %v379
        %v736 = vunpack.c.h.b16 %v379
        %v737 = vunpack.c.l.b16 %v380
        %v738 = vunpack.c.h.b16 %v380
        %v739 = vunpack.c.l.b16 %v381
        %v740 = vunpack.c.h.b16 %v381
        %v741 = vunpack.c.l.b16 %v382
        %v742 = vunpack.c.h.b16 %v382
        %v743 = vunpack.c.l.b16 %v383
        %v744 = vunpack.c.h.b16 %v383
        %v745 = vunpack.c.l.b16 %v384
        %v746 = vunpack.c.h.b16 %v384
        %v747 = vunpack.c.l.b16 %v385
        %v748 = vunpack.c.h.b16 %v385
        %v749 = vunpack.c.l.b16 %v386
        %v750 = vunpack.c.h.b16 %v386
        %v751 = vunpack.c.l.b16 %v387
        %v752 = vunpack.c.h.b16 %v387
        %v753 = vunpack.c.l.b16 %v388
        %v754 = vunpack.c.h.b16 %v388
        %v755 = vunpack.c.l.b16 %v389
        %v756 = vunpack.c.h.b16 %v389
        %v757 = vunpack.c.l.b16 %v390
        %v758 = vunpack.c.h.b16 %v390
        %v759 = vunpack.c.l.b16 %v391
        %v760 = vunpack.c.h.b16 %v391
        %v761 = vunpack.c.l.b16 %v392
        %v762 = vunpack.c.h.b16 %v392
        %v763 = vunpack.c.l.b16 %v393
        %v764 = vunpack.c.h.b16 %v393
        %v765 = vunpack.c.l.b16 %v394
        %v766 = vunpack.c.h.b16 %v394
        %v767 = vunpack.c.l.b16 %v395
        %v768 = vunpack.c.h.b16 %v395
        %v769 = vunpack.c.l.b16 %v396
        %v770 = vunpack.c.h.b16 %v396
        %v771 = vunpack.c.l.b16 %v397
        %v772 = vunpack.c.h.b16 %v397
        %v773 = vunpack.c.l.b16 %v398
        %v774 = vunpack.c.h.b16 %v398
        %v775 = vunpack.c.l.b16 %v399
        %v776 = vunpack.c.h.b16 %v399
        %v777 = vunpack.c.l.b16 %v400
        %v778 = vunpack.c.h.b16 %v400
        %v779 = vunpack.c.l.b16 %v401
        %v780 = vunpack.c.h.b16 %v401
        %v781 = vunpack.c.l.b16 %v402
        %v782 = vunpack.c.h.b16 %v402
        %v783 = vunpack.c.l.b16 %v403
        %v784 = vunpack.c.h.b16 %v403
        %v785 = vunpack.c.l.b16 %v404
        %v786 = vunpack.c.h.b16 %v404
        %v787 = vunpack.c.l.b16 %v405
        %v788 = vunpack.c.h.b16 %v405
        %v789 = vunpack.c.l.b16 %v406
        %v790 = vunpack.c.h.b16 %v406
        %v791 = vpack.c.b16 %v543, %v535
        %v792 = vpack.c.b16 %v544, %v536
        %v793 = vpack.c.b16 %v545, %v537
        %v794 = vpack.c.b16 %v546, %v538
        %v795 = vpack.c.b16 %v547, %v539
        %v796 = vpack.c.b16 %v548, %v540
        %v797 = vpack.c.b16 %v549, %v541
        %v798 = vpack.c.b16 %v550, %v542
        %v799 = vpack.c.b16 %v559, %v551
        %v800 = vpack.c.b16 %v560, %v552
        %v801 = vpack.c.b16 %v561, %v553
        %v802 = vpack.c.b16 %v562, %v554
        %v803 = vpack.c.b16 %v563, %v555
        %v804 = vpack.c.b16 %v564, %v556
        %v805 = vpack.c.b16 %v565, %v557
        %v806 = vpack.c.b16 %v566, %v558
        %v807 = vpack.c.b16 %v575, %v567
        %v808 = vpack.c.b16 %v576, %v568
        %v809 = vpack.c.b16 %v577, %v569
        %v810 = vpack.c.b16 %v578, %v570
        %v811 = vpack.c.b16 %v579, %v571
        %v812 = vpack.c.b16 %v580, %v572
        %v813 = vpack.c.b16 %v581, %v573
        %v814 = vpack.c.b16 %v582, %v574
        %v815 = vpack.c.b16 %v591, %v583
        %v816 = vpack.c.b16 %v592, %v584
        %v817 = vpack.c.b16 %v593, %v585
        %v818 = vpack.c.b16 %v594, %v586
        %v819 = vpack.c.b16 %v595, %v587
        %v820 = vpack.c.b16 %v596, %v588
        %v821 = vpack.c.b16 %v597, %v589
        %v822 = vpack.c.b16 %v598, %v590
        %v823 = vpack.c.b16 %v607, %v599
        %v824 = vpack.c.b16 %v608, %v600
        %v825 = vpack.c.b16 %v609, %v601
        %v826 = vpack.c.b16 %v610, %v602
        %v827 = vpack.c.b16 %v611, %v603
        %v828 = vpack.c.b16 %v612, %v604
        %v829 = vpack.c.b16 %v613, %v605
        %v830 = vpack.c.b16 %v614, %v606
        %v831 = vpack.c.b16 %v623, %v615
        %v832 = vpack.c.b16 %v624, %v616
        %v833 = vpack.c.b16 %v625, %v617
        %v834 = vpack.c.b16 %v626, %v618
        %v835 = vpack.c.b16 %v627, %v619
        %v836 = vpack.c.b16 %v628, %v620
        %v837 = vpack.c.b16 %v629, %v621
        %v838 = vpack.c.b16 %v630, %v622
        %v839 = vpack.c.b16 %v639, %v631
        %v840 = vpack.c.b16 %v640, %v632
        %v841 = vpack.c.b16 %v641, %v633
        %v842 = vpack.c.b16 %v642, %v634
        %v843 = vpack.c.b16 %v643, %v635
        %v844 = vpack.c.b16 %v644, %v636
        %v845 = vpack.c.b16 %v645, %v637
        %v846 = vpack.c.b16 %v646, %v638
        %v847 = vpack.c.b16 %v655, %v647
        %v848 = vpack.c.b16 %v656, %v648
        %v849 = vpack.c.b16 %v657, %v649
        %v850 = vpack.c.b16 %v658, %v650
        %v851 = vpack.c.b16 %v659, %v651
        %v852 = vpack.c.b16 %v660, %v652
        %v853 = vpack.c.b16 %v661, %v653
        %v854 = vpack.c.b16 %v662, %v654
        %v855 = vpack.c.b16 %v671, %v663
        %v856 = vpack.c.b16 %v672, %v664
        %v857 = vpack.c.b16 %v673, %v665
        %v858 = vpack.c.b16 %v674, %v666
        %v859 = vpack.c.b16 %v675, %v667
        %v860 = vpack.c.b16 %v676, %v668
        %v861 = vpack.c.b16 %v677, %v669
        %v862 = vpack.c.b16 %v678, %v670
        %v863 = vpack.c.b16 %v687, %v679
        %v864 = vpack.c.b16 %v688, %v680
        %v865 = vpack.c.b16 %v689, %v681
        %v866 = vpack.c.b16 %v690, %v682
        %v867 = vpack.c.b16 %v691, %v683
        %v868 = vpack.c.b16 %v692, %v684
        %v869 = vpack.c.b16 %v693, %v685
        %v870 = vpack.c.b16 %v694, %v686
        %v871 = vpack.c.b16 %v703, %v695
        %v872 = vpack.c.b16 %v704, %v696
        %v873 = vpack.c.b16 %v705, %v697
        %v874 = vpack.c.b16 %v706, %v698
        %v875 = vpack.c.b16 %v707, %v699
        %v876 = vpack.c.b16 %v708, %v700
        %v877 = vpack.c.b16 %v709, %v701
        %v878 = vpack.c.b16 %v710, %v702
        %v879 = vpack.c.b16 %v719, %v711
        %v880 = vpack.c.b16 %v720, %v712
        %v881 = vpack.c.b16 %v721, %v713
        %v882 = vpack.c.b16 %v722, %v714
        %v883 = vpack.c.b16 %v723, %v715
        %v884 = vpack.c.b16 %v724, %v716
        %v885 = vpack.c.b16 %v725, %v717
        %v886 = vpack.c.b16 %v726, %v718
        %v887 = vpack.c.b16 %v735, %v727
        %v888 = vpack.c.b16 %v736, %v728
        %v889 = vpack.c.b16 %v737, %v729
        %v890 = vpack.c.b16 %v738, %v730
        %v891 = vpack.c.b16 %v739, %v731
        %v892 = vpack.c.b16 %v740, %v732
        %v893 = vpack.c.b16 %v741, %v733
        %v894 = vpack.c.b16 %v742, %v734
        %v895 = vpack.c.b16 %v751, %v743
        %v896 = vpack.c.b16 %v752, %v744
        %v897 = vpack.c.b16 %v753, %v745
        %v898 = vpack.c.b16 %v754, %v746
        %v899 = vpack.c.b16 %v755, %v747
        %v900 = vpack.c.b16 %v756, %v748
        %v901 = vpack.c.b16 %v757, %v749
        %v902 = vpack.c.b16 %v758, %v750
        %v903 = vpack.c.b16 %v767, %v759
        %v904 = vpack.c.b16 %v768, %v760
        %v905 = vpack.c.b16 %v769, %v761
        %v906 = vpack.c.b16 %v770, %v762
        %v907 = vpack.c.b16 %v771, %v763
        %v908 = vpack.c.b16 %v772, %v764
        %v909 = vpack.c.b16 %v773, %v765
        %v910 = vpack.c.b16 %v774, %v766
        %v911 = vpack.c.b16 %v783, %v775
        %v912 = vpack.c.b16 %v784, %v776
        %v913 = vpack.c.b16 %v785, %v777
        %v914 = vpack.c.b16 %v786, %v778
        %v915 = vpack.c.b16 %v787, %v779
        %v916 = vpack.c.b16 %v788, %v780
        %v917 = vpack.c.b16 %v789, %v781
        %v918 = vpack.c.b16 %v790, %v782
        %1047 = vmatprep.subr.bf16.mxu0 %v792
        %1048 = vmatpush1.bf16.msra.mxu0 %v791
        %1049 = vmatprep.subr.bf16.mxu0 %v800
        %1050 = vmatpush1.bf16.msra.mxu0 %v799
        %1051 = vmatprep.subr.bf16.mxu0 %v808
        %1052 = vmatpush1.bf16.msra.mxu0 %v807
        %1053 = vmatprep.subr.bf16.mxu0 %v816
        %1054 = vmatpush1.bf16.msra.mxu0 %v815
        %1055 = vmatprep.subr.bf16.mxu0 %v824
        %1056 = vmatpush1.bf16.msra.mxu0 %v823
        %1057 = vmatprep.subr.bf16.mxu0 %v832
        %1058 = vmatpush1.bf16.msra.mxu0 %v831
        %1059 = vmatprep.subr.bf16.mxu0 %v840
        %1060 = vmatpush1.bf16.msra.mxu0 %v839
        %1061 = vmatprep.subr.bf16.mxu0 %v848
        %1062 = vmatpush1.bf16.msra.mxu0 %v847
        %1063 = vmatprep.subr.bf16.mxu0 %v856
        %1064 = vmatpush1.bf16.msra.mxu0 %v855
        %1065 = vmatprep.subr.bf16.mxu0 %v864
        %1066 = vmatpush1.bf16.msra.mxu0 %v863
        %1067 = vmatprep.subr.bf16.mxu0 %v872
        %1068 = vmatpush1.bf16.msra.mxu0 %v871
        %1069 = vmatprep.subr.bf16.mxu0 %v880
        %1070 = vmatpush1.bf16.msra.mxu0 %v879
        %1071 = vmatprep.subr.bf16.mxu0 %v888
        %1072 = vmatpush1.bf16.msra.mxu0 %v887
        %1073 = vmatprep.subr.bf16.mxu0 %v896
        %1074 = vmatpush1.bf16.msra.mxu0 %v895
        %1075 = vmatprep.subr.bf16.mxu0 %v904
        %1076 = vmatpush1.bf16.msra.mxu0 %v903
        %1077 = vmatprep.subr.bf16.mxu0 %v912
        %1078 = vmatpush1.bf16.msra.mxu0 %v911
        %1079 = vmatprep.mubr.bf16.mxu0 %v270
        %1080 = vmatmul.mubr.bf16.gmra.mrb[0].mxu0 %v269
        %v1081 = vpop.f32.mrb[0].mxu0
        %v1082 = vadd.f32 0.0, %v1081
        %v1083 = vpop.f32.mrb[0].mxu0
        %v1084 = vadd.f32 0.0, %v1083
        %v1085 = vpop.f32.mrb[0].mxu0
        %v1086 = vpop.f32.mrb[0].mxu0
        %1087 = vdwg.mxu0
        %1088 = vmatprep.subr.bf16.mxu0 %v794
        %1089 = vmatpush1.bf16.msra.mxu0 %v793
        %1090 = vmatprep.subr.bf16.mxu0 %v802
        %1091 = vmatpush1.bf16.msra.mxu0 %v801
        %1092 = vmatprep.subr.bf16.mxu0 %v810
        %1093 = vmatpush1.bf16.msra.mxu0 %v809
        %1094 = vmatprep.subr.bf16.mxu0 %v818
        %1095 = vmatpush1.bf16.msra.mxu0 %v817
        %1096 = vmatprep.subr.bf16.mxu0 %v826
        %1097 = vmatpush1.bf16.msra.mxu0 %v825
        %1098 = vmatprep.subr.bf16.mxu0 %v834
        %1099 = vmatpush1.bf16.msra.mxu0 %v833
        %1100 = vmatprep.subr.bf16.mxu0 %v842
        %1101 = vmatpush1.bf16.msra.mxu0 %v841
        %1102 = vmatprep.subr.bf16.mxu0 %v850
        %1103 = vmatpush1.bf16.msra.mxu0 %v849
        %1104 = vmatprep.subr.bf16.mxu0 %v858
        %1105 = vmatpush1.bf16.msra.mxu0 %v857
        %1106 = vmatprep.subr.bf16.mxu0 %v866
        %1107 = vmatpush1.bf16.msra.mxu0 %v865
        %1108 = vmatprep.subr.bf16.mxu0 %v874
        %1109 = vmatpush1.bf16.msra.mxu0 %v873
        %1110 = vmatprep.subr.bf16.mxu0 %v882
        %1111 = vmatpush1.bf16.msra.mxu0 %v881
        %1112 = vmatprep.subr.bf16.mxu0 %v890
        %1113 = vmatpush1.bf16.msra.mxu0 %v889
        %1114 = vmatprep.subr.bf16.mxu0 %v898
        %1115 = vmatpush1.bf16.msra.mxu0 %v897
        %1116 = vmatprep.subr.bf16.mxu0 %v906
        %1117 = vmatpush1.bf16.msra.mxu0 %v905
        %1118 = vmatprep.subr.bf16.mxu0 %v914
        %1119 = vmatpush1.bf16.msra.mxu0 %v913
        %1120 = vmatprep.mubr.bf16.mxu0 %v270
        %1121 = vmatmul.mubr.bf16.gmra.mrb[0].mxu0 %v269
        %v1122 = vpop.f32.mrb[0].mxu0
        %v1123 = vadd.f32 0.0, %v1122
        %v1124 = vpop.f32.mrb[0].mxu0
        %v1125 = vadd.f32 0.0, %v1124
        %v1126 = vpop.f32.mrb[0].mxu0
        %v1127 = vpop.f32.mrb[0].mxu0
        %1128 = vdwg.mxu0
        %1129 = vmatprep.subr.bf16.mxu0 %v796
        %1130 = vmatpush1.bf16.msra.mxu0 %v795
        %1131 = vmatprep.subr.bf16.mxu0 %v804
        %1132 = vmatpush1.bf16.msra.mxu0 %v803
        %1133 = vmatprep.subr.bf16.mxu0 %v812
        %1134 = vmatpush1.bf16.msra.mxu0 %v811
        %1135 = vmatprep.subr.bf16.mxu0 %v820
        %1136 = vmatpush1.bf16.msra.mxu0 %v819
        %1137 = vmatprep.subr.bf16.mxu0 %v828
        %1138 = vmatpush1.bf16.msra.mxu0 %v827
        %1139 = vmatprep.subr.bf16.mxu0 %v836
        %1140 = vmatpush1.bf16.msra.mxu0 %v835
        %1141 = vmatprep.subr.bf16.mxu0 %v844
        %1142 = vmatpush1.bf16.msra.mxu0 %v843
        %1143 = vmatprep.subr.bf16.mxu0 %v852
        %1144 = vmatpush1.bf16.msra.mxu0 %v851
        %1145 = vmatprep.subr.bf16.mxu0 %v860
        %1146 = vmatpush1.bf16.msra.mxu0 %v859
        %1147 = vmatprep.subr.bf16.mxu0 %v868
        %1148 = vmatpush1.bf16.msra.mxu0 %v867
        %1149 = vmatprep.subr.bf16.mxu0 %v876
        %1150 = vmatpush1.bf16.msra.mxu0 %v875
        %1151 = vmatprep.subr.bf16.mxu0 %v884
        %1152 = vmatpush1.bf16.msra.mxu0 %v883
        %1153 = vmatprep.subr.bf16.mxu0 %v892
        %1154 = vmatpush1.bf16.msra.mxu0 %v891
        %1155 = vmatprep.subr.bf16.mxu0 %v900
        %1156 = vmatpush1.bf16.msra.mxu0 %v899
        %1157 = vmatprep.subr.bf16.mxu0 %v908
        %1158 = vmatpush1.bf16.msra.mxu0 %v907
        %1159 = vmatprep.subr.bf16.mxu0 %v916
        %1160 = vmatpush1.bf16.msra.mxu0 %v915
        %1161 = vmatprep.mubr.bf16.mxu0 %v270
        %1162 = vmatmul.mubr.bf16.gmra.mrb[0].mxu0 %v269
        %v1163 = vpop.f32.mrb[0].mxu0
        %v1164 = vadd.f32 0.0, %v1163
        %v1165 = vpop.f32.mrb[0].mxu0
        %v1166 = vadd.f32 0.0, %v1165
        %v1167 = vpop.f32.mrb[0].mxu0
        %v1168 = vpop.f32.mrb[0].mxu0
        %1169 = vdwg.mxu0
        %1170 = vmatprep.subr.bf16.mxu0 %v798
        %1171 = vmatpush1.bf16.msra.mxu0 %v797
        %1172 = vmatprep.subr.bf16.mxu0 %v806
        %1173 = vmatpush1.bf16.msra.mxu0 %v805
        %1174 = vmatprep.subr.bf16.mxu0 %v814
        %1175 = vmatpush1.bf16.msra.mxu0 %v813
        %1176 = vmatprep.subr.bf16.mxu0 %v822
        %1177 = vmatpush1.bf16.msra.mxu0 %v821
        %1178 = vmatprep.subr.bf16.mxu0 %v830
        %1179 = vmatpush1.bf16.msra.mxu0 %v829
        %1180 = vmatprep.subr.bf16.mxu0 %v838
        %1181 = vmatpush1.bf16.msra.mxu0 %v837
        %1182 = vmatprep.subr.bf16.mxu0 %v846
        %1183 = vmatpush1.bf16.msra.mxu0 %v845
        %1184 = vmatprep.subr.bf16.mxu0 %v854
        %1185 = vmatpush1.bf16.msra.mxu0 %v853
        %1186 = vmatprep.subr.bf16.mxu0 %v862
        %1187 = vmatpush1.bf16.msra.mxu0 %v861
        %1188 = vmatprep.subr.bf16.mxu0 %v870
        %1189 = vmatpush1.bf16.msra.mxu0 %v869
        %1190 = vmatprep.subr.bf16.mxu0 %v878
        %1191 = vmatpush1.bf16.msra.mxu0 %v877
        %1192 = vmatprep.subr.bf16.mxu0 %v886
        %1193 = vmatpush1.bf16.msra.mxu0 %v885
        %1194 = vmatprep.subr.bf16.mxu0 %v894
        %1195 = vmatpush1.bf16.msra.mxu0 %v893
        %1196 = vmatprep.subr.bf16.mxu0 %v902
        %1197 = vmatpush1.bf16.msra.mxu0 %v901
        %1198 = vmatprep.subr.bf16.mxu0 %v910
        %1199 = vmatpush1.bf16.msra.mxu0 %v909
        %1200 = vmatprep.subr.bf16.mxu0 %v918
        %1201 = vmatpush1.bf16.msra.mxu0 %v917
        %1202 = vmatprep.mubr.bf16.mxu0 %v270
        %1203 = vmatmul.mubr.bf16.gmra.mrb[0].mxu0 %v269
        %v1204 = vpop.f32.mrb[0].mxu0
        %v1205 = vadd.f32 0.0, %v1204
        %v1206 = vpop.f32.mrb[0].mxu0
        %v1207 = vadd.f32 0.0, %v1206
        %v1208 = vpop.f32.mrb[0].mxu0
        %v1209 = vpop.f32.mrb[0].mxu0
        %1210 = vdwg.mxu0
        %v1211 = vadd.f32 %v271, %v1082
        %v1212 = vadd.f32 %v272, %v1084
        %v1213 = vadd.f32 %v273, %v1123
        %v1214 = vadd.f32 %v274, %v1125
        %v1215 = vadd.f32 %v275, %v1164
        %v1216 = vadd.f32 %v276, %v1166
        %v1217 = vadd.f32 %v277, %v1205
        %v1218 = vadd.f32 %v278, %v1207
        %1219 = vst [vmem:[%s248] sm:$0xff] %v1211
        %1220 = vst [vmem:[%s248 + $0x8] sm:$0xff] %v1212
        %1221 = vst [vmem:[%s248 + $0x10] sm:$0xff] %v1213
        %1222 = vst [vmem:[%s248 + $0x18] sm:$0xff] %v1214
        %1223 = vst [vmem:[%s248 + $0x20] sm:$0xff] %v1215
        %1224 = vst [vmem:[%s248 + $0x28] sm:$0xff] %v1216
        %1225 = vst [vmem:[%s248 + $0x30] sm:$0xff] %v1217
        %1226 = vst [vmem:[%s248 + $0x38] sm:$0xff] %v1218
        // Predicated region
        $region45: #{discriminator_forward.5} parent=31 // pred_check
          %p1227 = pneg %p250
        $region46: #{discriminator_forward.5} parent=31 // pred_check_branch
          %1229 = sbr.rel (%p1227) target = $region48
        $region47: #{discriminator_forward.5} parent=31 // pred_region
          %v1230 = vld [vmem:[%s248] sm:$0xff]
          %v1231 = vld [vmem:[%s248 + $0x8] sm:$0xff]
          %v1232 = vld [vmem:[%s248 + $0x10] sm:$0xff]
          %v1233 = vld [vmem:[%s248 + $0x18] sm:$0xff]
          %v1234 = vld [vmem:[%s248 + $0x20] sm:$0xff]
          %v1235 = vld [vmem:[%s248 + $0x28] sm:$0xff]
          %v1236 = vld [vmem:[%s248 + $0x30] sm:$0xff]
          %v1237 = vld [vmem:[%s248 + $0x38] sm:$0xff]
          %v1238 = vld [vmem:[%s213] sm:$0xff]
          %v1240 = vlaneseq
          %v1241 = vshrl.u32 %v1240, 7
          %v1242 = vsub.s32 0, %v1241
          %v1243 = vrot.slane %v1238, %v1242
          %v1244 = vlaneseq
          %v1245 = vshrl.u32 %v1244, 7
          %v1246 = vsub.s32 1, %v1245
          %v1247 = vrot.slane %v1238, %v1246
          %v1248 = vlaneseq
          %v1249 = vshrl.u32 %v1248, 7
          %v1250 = vsub.s32 2, %v1249
          %v1251 = vrot.slane %v1238, %v1250
          %v1252 = vlaneseq
          %v1253 = vshrl.u32 %v1252, 7
          %v1254 = vsub.s32 3, %v1253
          %v1255 = vrot.slane %v1238, %v1254
          %v1256 = vlaneseq
          %v1257 = vshrl.u32 %v1256, 7
          %v1258 = vsub.s32 4, %v1257
          %v1259 = vrot.slane %v1238, %v1258
          %v1260 = vlaneseq
          %v1261 = vshrl.u32 %v1260, 7
          %v1262 = vsub.s32 5, %v1261
          %v1263 = vrot.slane %v1238, %v1262
          %v1264 = vlaneseq
          %v1265 = vshrl.u32 %v1264, 7
          %v1266 = vsub.s32 6, %v1265
          %v1267 = vrot.slane %v1238, %v1266
          %v1268 = vlaneseq
          %v1269 = vshrl.u32 %v1268, 7
          %v1270 = vsub.s32 7, %v1269
          %v1271 = vrot.slane %v1238, %v1270
          %v1280 = vadd.f32 %v1230, %v1243
          %v1281 = vadd.f32 %v1231, %v1247
          %v1282 = vadd.f32 %v1232, %v1251
          %v1283 = vadd.f32 %v1233, %v1255
          %v1284 = vadd.f32 %v1234, %v1259
          %v1285 = vadd.f32 %v1235, %v1263
          %v1286 = vadd.f32 %v1236, %v1267
          %v1287 = vadd.f32 %v1237, %v1271
          %vm1288 = vcmp.gt.f32.partialorder %v1280, 0.0
          %vm1289 = vcmp.gt.f32.partialorder %v1281, 0.0
          %vm1290 = vcmp.gt.f32.partialorder %v1282, 0.0
          %vm1291 = vcmp.gt.f32.partialorder %v1283, 0.0
          %vm1292 = vcmp.gt.f32.partialorder %v1284, 0.0
          %vm1293 = vcmp.gt.f32.partialorder %v1285, 0.0
          %vm1294 = vcmp.gt.f32.partialorder %v1286, 0.0
          %vm1295 = vcmp.gt.f32.partialorder %v1287, 0.0
          %v1296 = vmul.f32 %v1280, 0.2
          %v1297 = vmul.f32 %v1281, 0.2
          %v1298 = vmul.f32 %v1282, 0.2
          %v1299 = vmul.f32 %v1283, 0.2
          %v1300 = vmul.f32 %v1284, 0.2
          %v1301 = vmul.f32 %v1285, 0.2
          %v1302 = vmul.f32 %v1286, 0.2
          %v1303 = vmul.f32 %v1287, 0.2
          %v1304 = vsel %vm1288, %v1280, %v1296
          %v1305 = vsel %vm1289, %v1281, %v1297
          %v1306 = vsel %vm1290, %v1282, %v1298
          %v1307 = vsel %vm1291, %v1283, %v1299
          %v1308 = vsel %vm1292, %v1284, %v1300
          %v1309 = vsel %vm1293, %v1285, %v1301
          %v1310 = vsel %vm1294, %v1286, %v1302
          %v1311 = vsel %vm1295, %v1287, %v1303
          %1312 = vst [vmem:[%s248] sm:$0xff] %v1304
          %1313 = vst [vmem:[%s248 + $0x8] sm:$0xff] %v1305
          %1314 = vst [vmem:[%s248 + $0x10] sm:$0xff] %v1306
          %1315 = vst [vmem:[%s248 + $0x18] sm:$0xff] %v1307
          %1316 = vst [vmem:[%s248 + $0x20] sm:$0xff] %v1308
          %1317 = vst [vmem:[%s248 + $0x28] sm:$0xff] %v1309
          %1318 = vst [vmem:[%s248 + $0x30] sm:$0xff] %v1310
          %1319 = vst [vmem:[%s248 + $0x38] sm:$0xff] %v1311
        $region48: #{discriminator_forward.5} parent=31 // pred_fallthru
          _
        %s1320 = smul.u32 8, %s24
        %p1321 = scmp.lt.s32.totalorder %s1320, 15
        %s1322 = scalar_select %p1321, %s1320, 15
        %s1323 = smul.addr %s1322, 8
        %s1324 = scalar_lea.vmem %s3, %s1323
        // Predicated region
        $region49: #{discriminator_forward.5} parent=31 // pred_check
          %p1325 = pneg %p125
        $region50: #{discriminator_forward.5} parent=31 // pred_check_branch
          %1327 = sbr.rel (%p1325) target = $region52
        $region51: #{discriminator_forward.5} parent=31 // pred_region
          %s1328 = smul.u32 8, %s24
        $region52: #{discriminator_forward.5} parent=31 // pred_fallthru
          _
      $region32: #{discriminator_forward.5} parent=5 // pred_fallthru
        _
      %p1329 = scmp.le.s32.totalorder 2, %s15
      // Predicated region
      $region53: #{discriminator_forward.5} parent=5 // pred_check
        %p1330 = pneg %p1329
      $region54: #{discriminator_forward.5} parent=5 // pred_check_branch
        %1332 = sbr.rel (%p1330) target = $region56
      $region55: #{discriminator_forward.5} parent=5 // pred_region
        %s1333 = ssub.s32 %s15, 2
        // Predicated region
        $region57: #{discriminator_forward.5} parent=55 // pred_check
          %p1334 = pneg %p131
        $region58: #{discriminator_forward.5} parent=55 // pred_check_branch
          %1336 = sbr.rel (%p1334) target = $region60
        $region59: #{discriminator_forward.5} parent=55 // pred_region
          %s1337 = smul.u32 8, %s26
          %p1338 = scmp.lt.s32.totalorder %s1337, 15
          %s1339 = scalar_select %p1338, %s1337, 15
          %s1340 = smul.addr %s1339, 8
          %s1341 = scalar_lea.vmem %s3, %s1340
        $region60: #{discriminator_forward.5} parent=55 // pred_fallthru
          _
      $region56: #{discriminator_forward.5} parent=5 // pred_fallthru
        _
    $region6: #{discriminator_forward.5} parent=1 // loop_footer
      %s19 = sadd.s32 1, %s15
    $region7: #{discriminator_forward.5} parent=1 // loop_footer_branch
      %14 = sbr.rel target = $region3
    $region8: #{discriminator_forward.5} parent=1 // loop_exit
      _
    %1342 = vsyncpa [#allocation3], 1
    %s1343 = scalar_lea.sflag [#allocation3], 1
    %1344 = vsyncpa %s1343, 1
    %1345 = vsyncpa [#allocation5], 1
    %s1346 = scalar_lea.sflag [#allocation5], 1
    %1347 = vsyncpa %s1346, 1

// kernel: discriminator_forward.8
$region0: #{discriminator_forward.8}
  #allocation0 [shape = 'u32[]', space=smem, size = 0x4, offset = 0x4, fixed_abs, tag = 'smem constant byte address 0x4 - core index']
  #allocation1 [shape = 'u32[144,128]{1,0:T(1,128)}', space=vmem, size = 0x12000, scoped, tag = 'internal scratch']
  %s0 = inlined_call_operand.vmem [shape: f32[8,512], index: 0, kind: input, shape index: {}]
  %s1 = inlined_call_operand.vmem [shape: bf16[512,256], index: 1, kind: input, shape index: {}]
  %s2 = inlined_call_operand.vmem [shape: f32[1,256], index: 2, kind: input, shape index: {}]
  %s3 = inlined_call_operand.vmem [shape: f32[8,256], index: 3, kind: output, shape index: {}]
  %s4 = sld [smem:[#allocation0]]
  $region94: #{discriminator_forward.8} parent=0
    _
  %s6 = ssub.s32 1, %s4
  %s7 = scalar_select 0, %s6, %s4
  $region1: #{discriminator_forward.8} parent=0
    #allocation2 [shape = 'u8[262144]{0}', space=vmem, size = 0x40000, scoped, tag = 'input window, operand 1']
    loop: start=0, step=1, limit=4
    $region2: #{discriminator_forward.8} parent=1 // loop_pre_header
      _
    $region3: #{discriminator_forward.8} parent=1 // loop_header
      %s9 = sphi 0, %s13
      %p10 = scmp.ge.s32.totalorder %s9, 4
      %s16 = sphi 0, %s28
      %s17 = sphi 0, %s24
      %s18 = sphi 0, %s16
      %s19 = sphi 0, %s17
      %s20 = sphi 0, %s18
      %s21 = sphi 0, %s19
      %s29 = sphi 0, %s29
      %s31 = sphi 0, %s29
      %s32 = sphi 0, %s31
      %s46 = sphi 0, %s32
      %s54 = sphi 0, %s56
      %s57 = sphi 0, %s54
      %s58 = sphi 0, %s57
      %s74 = sphi 0, %s58
      %s80 = sphi 0, %s82
      %s83 = sphi 0, %s80
      %s84 = sphi 0, %s83
      %s100 = sphi 0, %s84
      %s106 = sphi 0, %s108
      %s109 = sphi 0, %s106
      %s110 = sphi 0, %s109
      %s126 = sphi 0, %s110
    $region4: #{discriminator_forward.8} parent=1 // loop_header_branch
      %12 = sbr.rel (%p10) target = $region8
    $region5: #{discriminator_forward.8} parent=1 // loop_body
      %s14 = ssub.s32 %s9, 1
      %s15 = ssub.s32 %s9, 2
      %s22 = sadd.s32 1, %s17
      %p23 = scmp.ge.s32.totalorder %s22, 1
      %s24 = scalar_select %p23, 0, %s22
      %s25 = sadd.s32 1, %s16
      %s26 = scalar_select %p23, %s25, %s16
      %p27 = scmp.ge.s32.totalorder %s26, 2
      %s28 = scalar_select %p27, 0, %s26
      %s30 = sadd.s32 %s29, 1
      %p33 = scmp.eq.s32.totalorder %s9, 1
      %p34 = scmp.ne.s32.totalorder %s29, %s31
      %p35 = scmp.eq.s32.totalorder %s9, 0
      %p36 = por %p34, %p35
      %p37 = scmp.ne.s32.totalorder %s29, %s31
      %p38 = scmp.eq.s32.totalorder %s14, 1
      %p39 = por %p37, %p38
      %p40 = scmp.ne.s32.totalorder %s31, %s32
      %p41 = scmp.eq.s32.totalorder %s14, 0
      %p42 = por %p40, %p41
      %p43 = scmp.ne.s32.totalorder %s31, %s32
      %p44 = scmp.eq.s32.totalorder %s15, 1
      %p45 = por %p43, %p44
      %p47 = scmp.ne.s32.totalorder %s32, %s46
      %p48 = scmp.eq.s32.totalorder %s15, 0
      %p49 = por %p47, %p48
      %s50 = ssub.s32 %s17, %s24
      %s51 = ssub.s32 %s16, %s28
      %s52 = sor.u32 %s50, %s51
      %p53 = scmp.eq.s32.totalorder %s52, 0
      %s55 = sadd.s32 %s54, 1
      %s56 = scalar_select %p53, %s54, %s55
      %p59 = pneg %p53
      %p60 = scmp.eq.s32.totalorder %s9, 1
      %p61 = por %p59, %p60
      %p62 = scmp.ne.s32.totalorder %s54, %s57
      %p63 = scmp.eq.s32.totalorder %s9, 0
      %p64 = por %p62, %p63
      %p65 = scmp.ne.s32.totalorder %s54, %s57
      %p66 = scmp.eq.s32.totalorder %s14, 1
      %p67 = por %p65, %p66
      %p68 = scmp.ne.s32.totalorder %s57, %s58
      %p69 = scmp.eq.s32.totalorder %s14, 0
      %p70 = por %p68, %p69
      %p71 = scmp.ne.s32.totalorder %s57, %s58
      %p72 = scmp.eq.s32.totalorder %s15, 1
      %p73 = por %p71, %p72
      %p75 = scmp.ne.s32.totalorder %s58, %s74
      %p76 = scmp.eq.s32.totalorder %s15, 0
      %p77 = por %p75, %p76
      %s78 = ssub.s32 %s16, %s28
      %p79 = scmp.eq.s32.totalorder %s78, 0
      %s81 = sadd.s32 %s80, 1
      %s82 = scalar_select %p79, %s80, %s81
      %p85 = pneg %p79
      %p86 = scmp.eq.s32.totalorder %s9, 1
      %p87 = por %p85, %p86
      %p88 = scmp.ne.s32.totalorder %s80, %s83
      %p89 = scmp.eq.s32.totalorder %s9, 0
      %p90 = por %p88, %p89
      %p91 = scmp.ne.s32.totalorder %s80, %s83
      %p92 = scmp.eq.s32.totalorder %s14, 1
      %p93 = por %p91, %p92
      %p94 = scmp.ne.s32.totalorder %s83, %s84
      %p95 = scmp.eq.s32.totalorder %s14, 0
      %p96 = por %p94, %p95
      %p97 = scmp.ne.s32.totalorder %s83, %s84
      %p98 = scmp.eq.s32.totalorder %s15, 1
      %p99 = por %p97, %p98
      %p101 = scmp.ne.s32.totalorder %s84, %s100
      %p102 = scmp.eq.s32.totalorder %s15, 0
      %p103 = por %p101, %p102
      %s104 = ssub.s32 %s16, %s28
      %p105 = scmp.eq.s32.totalorder %s104, 0
      %s107 = sadd.s32 %s106, 1
      %s108 = scalar_select %p105, %s106, %s107
      %p111 = pneg %p105
      %p112 = scmp.eq.s32.totalorder %s9, 1
      %p113 = por %p111, %p112
      %p114 = scmp.ne.s32.totalorder %s106, %s109
      %p115 = scmp.eq.s32.totalorder %s9, 0
      %p116 = por %p114, %p115
      %p117 = scmp.ne.s32.totalorder %s106, %s109
      %p118 = scmp.eq.s32.totalorder %s14, 1
      %p119 = por %p117, %p118
      %p120 = scmp.ne.s32.totalorder %s109, %s110
      %p121 = scmp.eq.s32.totalorder %s14, 0
      %p122 = por %p120, %p121
      %p123 = scmp.ne.s32.totalorder %s109, %s110
      %p124 = scmp.eq.s32.totalorder %s15, 1
      %p125 = por %p123, %p124
      %p127 = scmp.ne.s32.totalorder %s110, %s126
      %p128 = scmp.eq.s32.totalorder %s15, 0
      %p129 = por %p127, %p128
      %p130 = scmp.le.s32.totalorder 1, %s9
      %p131 = scmp.lt.s32.totalorder %s9, 3
      %p132 = pnand %p130, %p131
      %p133 = pneg %p132
      // Predicated region
      $region9: #{discriminator_forward.8} parent=5 // pred_check
        _
      $region10: #{discriminator_forward.8} parent=5 // pred_check_branch
        %135 = sbr.rel (%p132) target = $region12
      $region11: #{discriminator_forward.8} parent=5 // pred_region
        %s136 = ssub.s32 %s9, 1
        // Predicated region
        $region13: #{discriminator_forward.8} parent=11 // pred_check
          %p137 = pneg %p42
        $region14: #{discriminator_forward.8} parent=11 // pred_check_branch
          %139 = sbr.rel (%p137) target = $region16
        $region15: #{discriminator_forward.8} parent=11 // pred_region
          _
        $region16: #{discriminator_forward.8} parent=11 // pred_fallthru
          _
      $region12: #{discriminator_forward.8} parent=5 // pred_fallthru
        _
      %p140 = scmp.lt.s32.totalorder %s9, 2
      // Predicated region
      $region17: #{discriminator_forward.8} parent=5 // pred_check
        %p141 = pneg %p140
      $region18: #{discriminator_forward.8} parent=5 // pred_check_branch
        %143 = sbr.rel (%p141) target = $region20
      $region19: #{discriminator_forward.8} parent=5 // pred_region
        // Predicated region
        $region21: #{discriminator_forward.8} parent=19 // pred_check
          %p144 = pneg %p64
        $region22: #{discriminator_forward.8} parent=19 // pred_check_branch
          %146 = sbr.rel (%p144) target = $region24
        $region23: #{discriminator_forward.8} parent=19 // pred_region
          %s147 = sand.u32 %s54, 1
          %s148 = sand.u32 %s54, 1
          %s149 = smul.addr %s148, 256
          %s150 = scalar_lea.vmem [#allocation2], %s149
          %s151 = smul.u32 64, %s17
          %s152 = smul.addr %s151, 2
          %s153 = sadd.s32 %s16, %s152
          %s154 = smul.addr %s153, 4
          %s155 = scalar_lea.vmem %s1, %s154
          // Predicated region
          $region25: #{discriminator_forward.8} parent=23 // pred_check
            _
          $region26: #{discriminator_forward.8} parent=23 // pred_check_branch
            %157 = sbr.rel (0) target = $region28
          $region27: #{discriminator_forward.8} parent=23 // pred_region
            // Predicated region
            $region29: #{discriminator_forward.8} parent=27 // pred_check
              _
            $region30: #{discriminator_forward.8} parent=27 // pred_check_branch
              %159 = sbr.rel target = $region32
            $region31: #{discriminator_forward.8} parent=27 // pred_region
              // Predicated region
              $region44: #{discriminator_forward.8} parent=31 // pred_check
                _
              $region45: #{discriminator_forward.8} parent=31 // pred_check_branch
                %300 = sbr.rel (0) target = $region47
              $region46: #{discriminator_forward.8} parent=31 // pred_region
                loop: start=0, step=1, limit=1
                $region48: #{discriminator_forward.8} parent=46 // loop_pre_header
                  _
                $region49: #{discriminator_forward.8} parent=46 // loop_header
                  %s302 = sphi 0, %s306
                  %p303 = scmp.ge.s32.totalorder %s302, 1
                  %s307 = sphi %s155, %s155
                  %s308 = sphi %s150, %s150
                $region50: #{discriminator_forward.8} parent=46 // loop_header_branch
                  %305 = sbr.rel (%p303) target = $region54
                $region51: #{discriminator_forward.8} parent=46 // loop_body
                  _
                $region52: #{discriminator_forward.8} parent=46 // loop_footer
                  %s306 = sadd.s32 1, %s302
                $region53: #{discriminator_forward.8} parent=46 // loop_footer_branch
                  %301 = sbr.rel target = $region49
                $region54: #{discriminator_forward.8} parent=46 // loop_exit
                  _
                loop: start=0, step=1, limit=1
                $region55: #{discriminator_forward.8} parent=46 // loop_pre_header
                  _
                $region56: #{discriminator_forward.8} parent=46 // loop_header
                  %s311 = sphi 0, %s315
                  %p312 = scmp.ge.s32.totalorder %s311, 1
                  %s316 = sphi %s155, %s155
                  %s317 = sphi %s150, %s150
                $region57: #{discriminator_forward.8} parent=46 // loop_header_branch
                  %314 = sbr.rel (%p312) target = $region61
                $region58: #{discriminator_forward.8} parent=46 // loop_body
                  %v318 = vld [vmem:[%s316] sm:$0xf]
                  %319 = vst [vmem:[%s317] sm:$0xf] %v318
                  %v320 = vld [vmem:[%s316 + $0x8] sm:$0xf]
                  %321 = vst [vmem:[%s317 + $0x4] sm:$0xf] %v320
                  %v322 = vld [vmem:[%s316 + $0x10] sm:$0xf]
                  %323 = vst [vmem:[%s317 + $0x8] sm:$0xf] %v322
                  %v324 = vld [vmem:[%s316 + $0x18] sm:$0xf]
                  %325 = vst [vmem:[%s317 + $0xc] sm:$0xf] %v324
                  %v326 = vld [vmem:[%s316 + $0x20] sm:$0xf]
                  %327 = vst [vmem:[%s317 + $0x10] sm:$0xf] %v326
                  %v328 = vld [vmem:[%s316 + $0x28] sm:$0xf]
                  %329 = vst [vmem:[%s317 + $0x14] sm:$0xf] %v328
                  %v330 = vld [vmem:[%s316 + $0x30] sm:$0xf]
                  %331 = vst [vmem:[%s317 + $0x18] sm:$0xf] %v330
                  %v332 = vld [vmem:[%s316 + $0x38] sm:$0xf]
                  %333 = vst [vmem:[%s317 + $0x1c] sm:$0xf] %v332
                  %v334 = vld [vmem:[%s316 + $0x40] sm:$0xf]
                  %335 = vst [vmem:[%s317 + $0x20] sm:$0xf] %v334
                  %v336 = vld [vmem:[%s316 + $0x48] sm:$0xf]
                  %337 = vst [vmem:[%s317 + $0x24] sm:$0xf] %v336
                  %v338 = vld [vmem:[%s316 + $0x50] sm:$0xf]
                  %339 = vst [vmem:[%s317 + $0x28] sm:$0xf] %v338
                  %v340 = vld [vmem:[%s316 + $0x58] sm:$0xf]
                  %341 = vst [vmem:[%s317 + $0x2c] sm:$0xf] %v340
                  %v342 = vld [vmem:[%s316 + $0x60] sm:$0xf]
                  %343 = vst [vmem:[%s317 + $0x30] sm:$0xf] %v342
                  %v344 = vld [vmem:[%s316 + $0x68] sm:$0xf]
                  %345 = vst [vmem:[%s317 + $0x34] sm:$0xf] %v344
                  %v346 = vld [vmem:[%s316 + $0x70] sm:$0xf]
                  %347 = vst [vmem:[%s317 + $0x38] sm:$0xf] %v346
                  %v348 = vld [vmem:[%s316 + $0x78] sm:$0xf]
                  %349 = vst [vmem:[%s317 + $0x3c] sm:$0xf] %v348
                  %v350 = vld [vmem:[%s316 + $0x80] sm:$0xf]
                  %351 = vst [vmem:[%s317 + $0x40] sm:$0xf] %v350
                  %v352 = vld [vmem:[%s316 + $0x88] sm:$0xf]
                  %353 = vst [vmem:[%s317 + $0x44] sm:$0xf] %v352
                  %v354 = vld [vmem:[%s316 + $0x90] sm:$0xf]
                  %355 = vst [vmem:[%s317 + $0x48] sm:$0xf] %v354
                  %v356 = vld [vmem:[%s316 + $0x98] sm:$0xf]
                  %357 = vst [vmem:[%s317 + $0x4c] sm:$0xf] %v356
                  %v358 = vld [vmem:[%s316 + $0xa0] sm:$0xf]
                  %359 = vst [vmem:[%s317 + $0x50] sm:$0xf] %v358
                  %v360 = vld [vmem:[%s316 + $0xa8] sm:$0xf]
                  %361 = vst [vmem:[%s317 + $0x54] sm:$0xf] %v360
                  %v362 = vld [vmem:[%s316 + $0xb0] sm:$0xf]
                  %363 = vst [vmem:[%s317 + $0x58] sm:$0xf] %v362
                  %v364 = vld [vmem:[%s316 + $0xb8] sm:$0xf]
                  %365 = vst [vmem:[%s317 + $0x5c] sm:$0xf] %v364
                  %v366 = vld [vmem:[%s316 + $0xc0] sm:$0xf]
                  %367 = vst [vmem:[%s317 + $0x60] sm:$0xf] %v366
                  %v368 = vld [vmem:[%s316 + $0xc8] sm:$0xf]
                  %369 = vst [vmem:[%s317 + $0x64] sm:$0xf] %v368
                  %v370 = vld [vmem:[%s316 + $0xd0] sm:$0xf]
                  %371 = vst [vmem:[%s317 + $0x68] sm:$0xf] %v370
                  %v372 = vld [vmem:[%s316 + $0xd8] sm:$0xf]
                  %373 = vst [vmem:[%s317 + $0x6c] sm:$0xf] %v372
                  %v374 = vld [vmem:[%s316 + $0xe0] sm:$0xf]
                  %375 = vst [vmem:[%s317 + $0x70] sm:$0xf] %v374
                  %v376 = vld [vmem:[%s316 + $0xe8] sm:$0xf]
                  %377 = vst [vmem:[%s317 + $0x74] sm:$0xf] %v376
                  %v378 = vld [vmem:[%s316 + $0xf0] sm:$0xf]
                  %379 = vst [vmem:[%s317 + $0x78] sm:$0xf] %v378
                  %v380 = vld [vmem:[%s316 + $0xf8] sm:$0xf]
                  %381 = vst [vmem:[%s317 + $0x7c] sm:$0xf] %v380
                  %v382 = vld [vmem:[%s316 + $0x100] sm:$0xf]
                  %383 = vst [vmem:[%s317 + $0x80] sm:$0xf] %v382
                  %v384 = vld [vmem:[%s316 + $0x108] sm:$0xf]
                  %385 = vst [vmem:[%s317 + $0x84] sm:$0xf] %v384
                  %v386 = vld [vmem:[%s316 + $0x110] sm:$0xf]
                  %387 = vst [vmem:[%s317 + $0x88] sm:$0xf] %v386
                  %v388 = vld [vmem:[%s316 + $0x118] sm:$0xf]
                  %389 = vst [vmem:[%s317 + $0x8c] sm:$0xf] %v388
                  %v390 = vld [vmem:[%s316 + $0x120] sm:$0xf]
                  %391 = vst [vmem:[%s317 + $0x90] sm:$0xf] %v390
                  %v392 = vld [vmem:[%s316 + $0x128] sm:$0xf]
                  %393 = vst [vmem:[%s317 + $0x94] sm:$0xf] %v392
                  %v394 = vld [vmem:[%s316 + $0x130] sm:$0xf]
                  %395 = vst [vmem:[%s317 + $0x98] sm:$0xf] %v394
                  %v396 = vld [vmem:[%s316 + $0x138] sm:$0xf]
                  %397 = vst [vmem:[%s317 + $0x9c] sm:$0xf] %v396
                  %v398 = vld [vmem:[%s316 + $0x140] sm:$0xf]
                  %399 = vst [vmem:[%s317 + $0xa0] sm:$0xf] %v398
                  %v400 = vld [vmem:[%s316 + $0x148] sm:$0xf]
                  %401 = vst [vmem:[%s317 + $0xa4] sm:$0xf] %v400
                  %v402 = vld [vmem:[%s316 + $0x150] sm:$0xf]
                  %403 = vst [vmem:[%s317 + $0xa8] sm:$0xf] %v402
                  %v404 = vld [vmem:[%s316 + $0x158] sm:$0xf]
                  %405 = vst [vmem:[%s317 + $0xac] sm:$0xf] %v404
                  %v406 = vld [vmem:[%s316 + $0x160] sm:$0xf]
                  %407 = vst [vmem:[%s317 + $0xb0] sm:$0xf] %v406
                  %v408 = vld [vmem:[%s316 + $0x168] sm:$0xf]
                  %409 = vst [vmem:[%s317 + $0xb4] sm:$0xf] %v408
                  %v410 = vld [vmem:[%s316 + $0x170] sm:$0xf]
                  %411 = vst [vmem:[%s317 + $0xb8] sm:$0xf] %v410
                  %v412 = vld [vmem:[%s316 + $0x178] sm:$0xf]
                  %413 = vst [vmem:[%s317 + $0xbc] sm:$0xf] %v412
                  %v414 = vld [vmem:[%s316 + $0x180] sm:$0xf]
                  %415 = vst [vmem:[%s317 + $0xc0] sm:$0xf] %v414
                  %v416 = vld [vmem:[%s316 + $0x188] sm:$0xf]
                  %417 = vst [vmem:[%s317 + $0xc4] sm:$0xf] %v416
                  %v418 = vld [vmem:[%s316 + $0x190] sm:$0xf]
                  %419 = vst [vmem:[%s317 + $0xc8] sm:$0xf] %v418
                  %v420 = vld [vmem:[%s316 + $0x198] sm:$0xf]
                  %421 = vst [vmem:[%s317 + $0xcc] sm:$0xf] %v420
                  %v422 = vld [vmem:[%s316 + $0x1a0] sm:$0xf]
                  %423 = vst [vmem:[%s317 + $0xd0] sm:$0xf] %v422
                  %v424 = vld [vmem:[%s316 + $0x1a8] sm:$0xf]
                  %425 = vst [vmem:[%s317 + $0xd4] sm:$0xf] %v424
                  %v426 = vld [vmem:[%s316 + $0x1b0] sm:$0xf]
                  %427 = vst [vmem:[%s317 + $0xd8] sm:$0xf] %v426
                  %v428 = vld [vmem:[%s316 + $0x1b8] sm:$0xf]
                  %429 = vst [vmem:[%s317 + $0xdc] sm:$0xf] %v428
                  %v430 = vld [vmem:[%s316 + $0x1c0] sm:$0xf]
                  %431 = vst [vmem:[%s317 + $0xe0] sm:$0xf] %v430
                  %v432 = vld [vmem:[%s316 + $0x1c8] sm:$0xf]
                  %433 = vst [vmem:[%s317 + $0xe4] sm:$0xf] %v432
                  %v434 = vld [vmem:[%s316 + $0x1d0] sm:$0xf]
                  %435 = vst [vmem:[%s317 + $0xe8] sm:$0xf] %v434
                  %v436 = vld [vmem:[%s316 + $0x1d8] sm:$0xf]
                  %437 = vst [vmem:[%s317 + $0xec] sm:$0xf] %v436
                  %v438 = vld [vmem:[%s316 + $0x1e0] sm:$0xf]
                  %439 = vst [vmem:[%s317 + $0xf0] sm:$0xf] %v438
                  %v440 = vld [vmem:[%s316 + $0x1e8] sm:$0xf]
                  %441 = vst [vmem:[%s317 + $0xf4] sm:$0xf] %v440
                  %v442 = vld [vmem:[%s316 + $0x1f0] sm:$0xf]
                  %443 = vst [vmem:[%s317 + $0xf8] sm:$0xf] %v442
                  %v444 = vld [vmem:[%s316 + $0x1f8] sm:$0xf]
                  %445 = vst [vmem:[%s317 + $0xfc] sm:$0xf] %v444
                $region59: #{discriminator_forward.8} parent=46 // loop_footer
                  %s315 = sadd.s32 1, %s311
                $region60: #{discriminator_forward.8} parent=46 // loop_footer_branch
                  %310 = sbr.rel target = $region56
                $region61: #{discriminator_forward.8} parent=46 // loop_exit
                  _
              $region47: #{discriminator_forward.8} parent=31 // pred_fallthru
                _
            $region32: #{discriminator_forward.8} parent=27 // pred_fallthru
              _
            // Predicated region
            $region33: #{discriminator_forward.8} parent=27 // pred_check
              _
            $region34: #{discriminator_forward.8} parent=27 // pred_check_branch
              %161 = sbr.rel (0) target = $region36
            $region35: #{discriminator_forward.8} parent=27 // pred_region
              loop: start=0, step=1, limit=1
              $region37: #{discriminator_forward.8} parent=35 // loop_pre_header
                _
              $region38: #{discriminator_forward.8} parent=35 // loop_header
                %s164 = sphi 0, %s168
                %p165 = scmp.ge.s32.totalorder %s164, 1
                %s169 = sphi %s155, %s155
                %s170 = sphi %s150, %s150
              $region39: #{discriminator_forward.8} parent=35 // loop_header_branch
                %167 = sbr.rel (%p165) target = $region43
              $region40: #{discriminator_forward.8} parent=35 // loop_body
                %v171 = vld [vmem:[%s169] sm:$0xf]
                %172 = vst [vmem:[%s170] sm:$0xf] %v171
                %v173 = vld [vmem:[%s169 + $0x8] sm:$0xf]
                %174 = vst [vmem:[%s170 + $0x4] sm:$0xf] %v173
                %v175 = vld [vmem:[%s169 + $0x10] sm:$0xf]
                %176 = vst [vmem:[%s170 + $0x8] sm:$0xf] %v175
                %v177 = vld [vmem:[%s169 + $0x18] sm:$0xf]
                %178 = vst [vmem:[%s170 + $0xc] sm:$0xf] %v177
                %v179 = vld [vmem:[%s169 + $0x20] sm:$0xf]
                %180 = vst [vmem:[%s170 + $0x10] sm:$0xf] %v179
                %v181 = vld [vmem:[%s169 + $0x28] sm:$0xf]
                %182 = vst [vmem:[%s170 + $0x14] sm:$0xf] %v181
                %v183 = vld [vmem:[%s169 + $0x30] sm:$0xf]
                %184 = vst [vmem:[%s170 + $0x18] sm:$0xf] %v183
                %v185 = vld [vmem:[%s169 + $0x38] sm:$0xf]
                %186 = vst [vmem:[%s170 + $0x1c] sm:$0xf] %v185
                %v187 = vld [vmem:[%s169 + $0x40] sm:$0xf]
                %188 = vst [vmem:[%s170 + $0x20] sm:$0xf] %v187
                %v189 = vld [vmem:[%s169 + $0x48] sm:$0xf]
                %190 = vst [vmem:[%s170 + $0x24] sm:$0xf] %v189
                %v191 = vld [vmem:[%s169 + $0x50] sm:$0xf]
                %192 = vst [vmem:[%s170 + $0x28] sm:$0xf] %v191
                %v193 = vld [vmem:[%s169 + $0x58] sm:$0xf]
                %194 = vst [vmem:[%s170 + $0x2c] sm:$0xf] %v193
                %v195 = vld [vmem:[%s169 + $0x60] sm:$0xf]
                %196 = vst [vmem:[%s170 + $0x30] sm:$0xf] %v195
                %v197 = vld [vmem:[%s169 + $0x68] sm:$0xf]
                %198 = vst [vmem:[%s170 + $0x34] sm:$0xf] %v197
                %v199 = vld [vmem:[%s169 + $0x70] sm:$0xf]
                %200 = vst [vmem:[%s170 + $0x38] sm:$0xf] %v199
                %v201 = vld [vmem:[%s169 + $0x78] sm:$0xf]
                %202 = vst [vmem:[%s170 + $0x3c] sm:$0xf] %v201
                %v203 = vld [vmem:[%s169 + $0x80] sm:$0xf]
                %204 = vst [vmem:[%s170 + $0x40] sm:$0xf] %v203
                %v205 = vld [vmem:[%s169 + $0x88] sm:$0xf]
                %206 = vst [vmem:[%s170 + $0x44] sm:$0xf] %v205
                %v207 = vld [vmem:[%s169 + $0x90] sm:$0xf]
                %208 = vst [vmem:[%s170 + $0x48] sm:$0xf] %v207
                %v209 = vld [vmem:[%s169 + $0x98] sm:$0xf]
                %210 = vst [vmem:[%s170 + $0x4c] sm:$0xf] %v209
                %v211 = vld [vmem:[%s169 + $0xa0] sm:$0xf]
                %212 = vst [vmem:[%s170 + $0x50] sm:$0xf] %v211
                %v213 = vld [vmem:[%s169 + $0xa8] sm:$0xf]
                %214 = vst [vmem:[%s170 + $0x54] sm:$0xf] %v213
                %v215 = vld [vmem:[%s169 + $0xb0] sm:$0xf]
                %216 = vst [vmem:[%s170 + $0x58] sm:$0xf] %v215
                %v217 = vld [vmem:[%s169 + $0xb8] sm:$0xf]
                %218 = vst [vmem:[%s170 + $0x5c] sm:$0xf] %v217
                %v219 = vld [vmem:[%s169 + $0xc0] sm:$0xf]
                %220 = vst [vmem:[%s170 + $0x60] sm:$0xf] %v219
                %v221 = vld [vmem:[%s169 + $0xc8] sm:$0xf]
                %222 = vst [vmem:[%s170 + $0x64] sm:$0xf] %v221
                %v223 = vld [vmem:[%s169 + $0xd0] sm:$0xf]
                %224 = vst [vmem:[%s170 + $0x68] sm:$0xf] %v223
                %v225 = vld [vmem:[%s169 + $0xd8] sm:$0xf]
                %226 = vst [vmem:[%s170 + $0x6c] sm:$0xf] %v225
                %v227 = vld [vmem:[%s169 + $0xe0] sm:$0xf]
                %228 = vst [vmem:[%s170 + $0x70] sm:$0xf] %v227
                %v229 = vld [vmem:[%s169 + $0xe8] sm:$0xf]
                %230 = vst [vmem:[%s170 + $0x74] sm:$0xf] %v229
                %v231 = vld [vmem:[%s169 + $0xf0] sm:$0xf]
                %232 = vst [vmem:[%s170 + $0x78] sm:$0xf] %v231
                %v233 = vld [vmem:[%s169 + $0xf8] sm:$0xf]
                %234 = vst [vmem:[%s170 + $0x7c] sm:$0xf] %v233
                %v235 = vld [vmem:[%s169 + $0x100] sm:$0xf]
                %236 = vst [vmem:[%s170 + $0x80] sm:$0xf] %v235
                %v237 = vld [vmem:[%s169 + $0x108] sm:$0xf]
                %238 = vst [vmem:[%s170 + $0x84] sm:$0xf] %v237
                %v239 = vld [vmem:[%s169 + $0x110] sm:$0xf]
                %240 = vst [vmem:[%s170 + $0x88] sm:$0xf] %v239
                %v241 = vld [vmem:[%s169 + $0x118] sm:$0xf]
                %242 = vst [vmem:[%s170 + $0x8c] sm:$0xf] %v241
                %v243 = vld [vmem:[%s169 + $0x120] sm:$0xf]
                %244 = vst [vmem:[%s170 + $0x90] sm:$0xf] %v243
                %v245 = vld [vmem:[%s169 + $0x128] sm:$0xf]
                %246 = vst [vmem:[%s170 + $0x94] sm:$0xf] %v245
                %v247 = vld [vmem:[%s169 + $0x130] sm:$0xf]
                %248 = vst [vmem:[%s170 + $0x98] sm:$0xf] %v247
                %v249 = vld [vmem:[%s169 + $0x138] sm:$0xf]
                %250 = vst [vmem:[%s170 + $0x9c] sm:$0xf] %v249
                %v251 = vld [vmem:[%s169 + $0x140] sm:$0xf]
                %252 = vst [vmem:[%s170 + $0xa0] sm:$0xf] %v251
                %v253 = vld [vmem:[%s169 + $0x148] sm:$0xf]
                %254 = vst [vmem:[%s170 + $0xa4] sm:$0xf] %v253
                %v255 = vld [vmem:[%s169 + $0x150] sm:$0xf]
                %256 = vst [vmem:[%s170 + $0xa8] sm:$0xf] %v255
                %v257 = vld [vmem:[%s169 + $0x158] sm:$0xf]
                %258 = vst [vmem:[%s170 + $0xac] sm:$0xf] %v257
                %v259 = vld [vmem:[%s169 + $0x160] sm:$0xf]
                %260 = vst [vmem:[%s170 + $0xb0] sm:$0xf] %v259
                %v261 = vld [vmem:[%s169 + $0x168] sm:$0xf]
                %262 = vst [vmem:[%s170 + $0xb4] sm:$0xf] %v261
                %v263 = vld [vmem:[%s169 + $0x170] sm:$0xf]
                %264 = vst [vmem:[%s170 + $0xb8] sm:$0xf] %v263
                %v265 = vld [vmem:[%s169 + $0x178] sm:$0xf]
                %266 = vst [vmem:[%s170 + $0xbc] sm:$0xf] %v265
                %v267 = vld [vmem:[%s169 + $0x180] sm:$0xf]
                %268 = vst [vmem:[%s170 + $0xc0] sm:$0xf] %v267
                %v269 = vld [vmem:[%s169 + $0x188] sm:$0xf]
                %270 = vst [vmem:[%s170 + $0xc4] sm:$0xf] %v269
                %v271 = vld [vmem:[%s169 + $0x190] sm:$0xf]
                %272 = vst [vmem:[%s170 + $0xc8] sm:$0xf] %v271
                %v273 = vld [vmem:[%s169 + $0x198] sm:$0xf]
                %274 = vst [vmem:[%s170 + $0xcc] sm:$0xf] %v273
                %v275 = vld [vmem:[%s169 + $0x1a0] sm:$0xf]
                %276 = vst [vmem:[%s170 + $0xd0] sm:$0xf] %v275
                %v277 = vld [vmem:[%s169 + $0x1a8] sm:$0xf]
                %278 = vst [vmem:[%s170 + $0xd4] sm:$0xf] %v277
                %v279 = vld [vmem:[%s169 + $0x1b0] sm:$0xf]
                %280 = vst [vmem:[%s170 + $0xd8] sm:$0xf] %v279
                %v281 = vld [vmem:[%s169 + $0x1b8] sm:$0xf]
                %282 = vst [vmem:[%s170 + $0xdc] sm:$0xf] %v281
                %v283 = vld [vmem:[%s169 + $0x1c0] sm:$0xf]
                %284 = vst [vmem:[%s170 + $0xe0] sm:$0xf] %v283
                %v285 = vld [vmem:[%s169 + $0x1c8] sm:$0xf]
                %286 = vst [vmem:[%s170 + $0xe4] sm:$0xf] %v285
                %v287 = vld [vmem:[%s169 + $0x1d0] sm:$0xf]
                %288 = vst [vmem:[%s170 + $0xe8] sm:$0xf] %v287
                %v289 = vld [vmem:[%s169 + $0x1d8] sm:$0xf]
                %290 = vst [vmem:[%s170 + $0xec] sm:$0xf] %v289
                %v291 = vld [vmem:[%s169 + $0x1e0] sm:$0xf]
                %292 = vst [vmem:[%s170 + $0xf0] sm:$0xf] %v291
                %v293 = vld [vmem:[%s169 + $0x1e8] sm:$0xf]
                %294 = vst [vmem:[%s170 + $0xf4] sm:$0xf] %v293
                %v295 = vld [vmem:[%s169 + $0x1f0] sm:$0xf]
                %296 = vst [vmem:[%s170 + $0xf8] sm:$0xf] %v295
                %v297 = vld [vmem:[%s169 + $0x1f8] sm:$0xf]
                %298 = vst [vmem:[%s170 + $0xfc] sm:$0xf] %v297
              $region41: #{discriminator_forward.8} parent=35 // loop_footer
                %s168 = sadd.s32 1, %s164
              $region42: #{discriminator_forward.8} parent=35 // loop_footer_branch
                %163 = sbr.rel target = $region38
              $region43: #{discriminator_forward.8} parent=35 // loop_exit
                _
            $region36: #{discriminator_forward.8} parent=27 // pred_fallthru
              _
          $region28: #{discriminator_forward.8} parent=23 // pred_fallthru
            _
          %446 = vnop
        $region24: #{discriminator_forward.8} parent=19 // pred_fallthru
          _
        // Predicated region
        $region62: #{discriminator_forward.8} parent=19 // pred_check
          %p447 = pneg %p90
        $region63: #{discriminator_forward.8} parent=19 // pred_check_branch
          %449 = sbr.rel (%p447) target = $region65
        $region64: #{discriminator_forward.8} parent=19 // pred_region
          %p450 = scmp.lt.s32.totalorder %s16, 1
          %s451 = scalar_select %p450, %s16, 1
          %s452 = scalar_lea.vmem %s2, %s451
        $region65: #{discriminator_forward.8} parent=19 // pred_fallthru
          _
      $region20: #{discriminator_forward.8} parent=5 // pred_fallthru
        _
      %p453 = scmp.le.s32.totalorder 1, %s9
      %p454 = scmp.lt.s32.totalorder %s9, 3
      %p455 = pnand %p453, %p454
      %p456 = pneg %p455
      // Predicated region
      $region66: #{discriminator_forward.8} parent=5 // pred_check
        _
      $region67: #{discriminator_forward.8} parent=5 // pred_check_branch
        %458 = sbr.rel (%p455) target = $region69
      $region68: #{discriminator_forward.8} parent=5 // pred_region
        %s459 = ssub.s32 %s9, 1
        %s460 = sand.u32 %s57, 1
        %s461 = sand.u32 %s57, 1
        %s462 = smul.addr %s461, 256
        %s463 = scalar_lea.vmem [#allocation2], %s462
        // Predicated region
        $region70: #{discriminator_forward.8} parent=68 // pred_check
          %p464 = pneg %p70
        $region71: #{discriminator_forward.8} parent=68 // pred_check_branch
          %466 = sbr.rel (%p464) target = $region73
        $region72: #{discriminator_forward.8} parent=68 // pred_region
          _
        $region73: #{discriminator_forward.8} parent=68 // pred_fallthru
          _
        %p467 = pneg %p42
        %p468 = pneg %p39
        %s469 = sand.u32 %s57, 1
        %s470 = sand.u32 %s57, 1
        %s471 = smul.addr %s470, 256
        %s472 = scalar_lea.vmem [#allocation2], %s471
        %p473 = pneg %p70
        %p474 = pneg %p67
        %p475 = scmp.lt.s32.totalorder %s18, 1
        %s476 = scalar_select %p475, %s18, 1
        %s477 = scalar_lea.vmem %s2, %s476
        %p478 = pneg %p96
        %p479 = pneg %p93
        %p480 = pneg %p122
        %p481 = pneg %p119
        %p482 = scmp.lt.s32.totalorder %s18, 1
        %s483 = scalar_select %p482, %s18, 1
        %s484 = smul.addr %s483, 8
        %s485 = scalar_lea.vmem %s3, %s484
        %s486 = smul.u32 64, %s19
        %p487 = scmp.lt.s32.totalorder %s18, 1
        %s488 = scalar_select %p487, %s18, 1
        %s489 = scalar_lea.vmem %s2, %s488
        %p490 = scmp.lt.s32.totalorder %s18, 1
        %s491 = scalar_select %p490, %s18, 1
        %s492 = smul.addr %s491, 8
        %s493 = scalar_lea.vmem %s3, %s492
        %p495 = scmp.eq.s32.totalorder %s19, 0
        // Predicated region
        $region74: #{discriminator_forward.8} parent=68 // pred_check
          %p496 = pneg %p495
        $region75: #{discriminator_forward.8} parent=68 // pred_check_branch
          %498 = sbr.rel (%p496) target = $region77
        $region76: #{discriminator_forward.8} parent=68 // pred_region
          %499 = vst [vmem:[%s493] sm:$0xff] 0.0
        $region77: #{discriminator_forward.8} parent=68 // pred_fallthru
          _
        %s500 = smul.u32 %s19, 512
        %s501 = sshra.s32 %s500, 7
        %s502 = sand.u32 %s500, 127
        %s503 = smul.addr %s501, 8
        %s504 = scalar_lea.vmem %s0, %s503
        %v505 = vld [vmem:[%s504] sm:$0xff]
        %v506 = vld [vmem:[%s504 + $0x8] sm:$0xff]
        %v507 = vld [vmem:[%s504 + $0x10] sm:$0xff]
        %v508 = vld [vmem:[%s504 + $0x18] sm:$0xff]
        %v509 = vpack.c.bf16 %v505, %v505
        %v510 = vpack.c.bf16 %v506, %v506
        %v511 = vpack.c.bf16 %v507, %v507
        %v512 = vpack.c.bf16 %v508, %v508
        %v513 = vld [vmem:[%s493] sm:$0xff]
        %v514 = vld [vmem:[%s463] sm:$0xf]
        %v515 = vld [vmem:[%s463 + $0x4] sm:$0xf]
        %v516 = vld [vmem:[%s463 + $0x8] sm:$0xf]
        %v517 = vld [vmem:[%s463 + $0xc] sm:$0xf]
        %v518 = vld [vmem:[%s463 + $0x10] sm:$0xf]
        %v519 = vld [vmem:[%s463 + $0x14] sm:$0xf]
        %v520 = vld [vmem:[%s463 + $0x18] sm:$0xf]
        %v521 = vld [vmem:[%s463 + $0x1c] sm:$0xf]
        %v522 = vld [vmem:[%s463 + $0x20] sm:$0xf]
        %v523 = vld [vmem:[%s463 + $0x24] sm:$0xf]
        %v524 = vld [vmem:[%s463 + $0x28] sm:$0xf]
        %v525 = vld [vmem:[%s463 + $0x2c] sm:$0xf]
        %v526 = vld [vmem:[%s463 + $0x30] sm:$0xf]
        %v527 = vld [vmem:[%s463 + $0x34] sm:$0xf]
        %v528 = vld [vmem:[%s463 + $0x38] sm:$0xf]
        %v529 = vld [vmem:[%s463 + $0x3c] sm:$0xf]
        %v530 = vld [vmem:[%s463 + $0x40] sm:$0xf]
        %v531 = vld [vmem:[%s463 + $0x44] sm:$0xf]
        %v532 = vld [vmem:[%s463 + $0x48] sm:$0xf]
        %v533 = vld [vmem:[%s463 + $0x4c] sm:$0xf]
        %v534 = vld [vmem:[%s463 + $0x50] sm:$0xf]
        %v535 = vld [vmem:[%s463 + $0x54] sm:$0xf]
        %v536 = vld [vmem:[%s463 + $0x58] sm:$0xf]
        %v537 = vld [vmem:[%s463 + $0x5c] sm:$0xf]
        %v538 = vld [vmem:[%s463 + $0x60] sm:$0xf]
        %v539 = vld [vmem:[%s463 + $0x64] sm:$0xf]
        %v540 = vld [vmem:[%s463 + $0x68] sm:$0xf]
        %v541 = vld [vmem:[%s463 + $0x6c] sm:$0xf]
        %v542 = vld [vmem:[%s463 + $0x70] sm:$0xf]
        %v543 = vld [vmem:[%s463 + $0x74] sm:$0xf]
        %v544 = vld [vmem:[%s463 + $0x78] sm:$0xf]
        %v545 = vld [vmem:[%s463 + $0x7c] sm:$0xf]
        %v546 = vld [vmem:[%s463 + $0x80] sm:$0xf]
        %v547 = vld [vmem:[%s463 + $0x84] sm:$0xf]
        %v548 = vld [vmem:[%s463 + $0x88] sm:$0xf]
        %v549 = vld [vmem:[%s463 + $0x8c] sm:$0xf]
        %v550 = vld [vmem:[%s463 + $0x90] sm:$0xf]
        %v551 = vld [vmem:[%s463 + $0x94] sm:$0xf]
        %v552 = vld [vmem:[%s463 + $0x98] sm:$0xf]
        %v553 = vld [vmem:[%s463 + $0x9c] sm:$0xf]
        %v554 = vld [vmem:[%s463 + $0xa0] sm:$0xf]
        %v555 = vld [vmem:[%s463 + $0xa4] sm:$0xf]
        %v556 = vld [vmem:[%s463 + $0xa8] sm:$0xf]
        %v557 = vld [vmem:[%s463 + $0xac] sm:$0xf]
        %v558 = vld [vmem:[%s463 + $0xb0] sm:$0xf]
        %v559 = vld [vmem:[%s463 + $0xb4] sm:$0xf]
        %v560 = vld [vmem:[%s463 + $0xb8] sm:$0xf]
        %v561 = vld [vmem:[%s463 + $0xbc] sm:$0xf]
        %v562 = vld [vmem:[%s463 + $0xc0] sm:$0xf]
        %v563 = vld [vmem:[%s463 + $0xc4] sm:$0xf]
        %v564 = vld [vmem:[%s463 + $0xc8] sm:$0xf]
        %v565 = vld [vmem:[%s463 + $0xcc] sm:$0xf]
        %v566 = vld [vmem:[%s463 + $0xd0] sm:$0xf]
        %v567 = vld [vmem:[%s463 + $0xd4] sm:$0xf]
        %v568 = vld [vmem:[%s463 + $0xd8] sm:$0xf]
        %v569 = vld [vmem:[%s463 + $0xdc] sm:$0xf]
        %v570 = vld [vmem:[%s463 + $0xe0] sm:$0xf]
        %v571 = vld [vmem:[%s463 + $0xe4] sm:$0xf]
        %v572 = vld [vmem:[%s463 + $0xe8] sm:$0xf]
        %v573 = vld [vmem:[%s463 + $0xec] sm:$0xf]
        %v574 = vld [vmem:[%s463 + $0xf0] sm:$0xf]
        %v575 = vld [vmem:[%s463 + $0xf4] sm:$0xf]
        %v576 = vld [vmem:[%s463 + $0xf8] sm:$0xf]
        %v577 = vld [vmem:[%s463 + $0xfc] sm:$0xf]
        %v642 = vunpack.c.l.b16 %v514
        %v643 = vunpack.c.l.b16 %v515
        %v644 = vunpack.c.l.b16 %v516
        %v645 = vunpack.c.l.b16 %v517
        %v646 = vunpack.c.l.b16 %v518
        %v647 = vunpack.c.l.b16 %v519
        %v648 = vunpack.c.l.b16 %v520
        %v649 = vunpack.c.l.b16 %v521
        %v650 = vunpack.c.l.b16 %v522
        %v651 = vunpack.c.l.b16 %v523
        %v652 = vunpack.c.l.b16 %v524
        %v653 = vunpack.c.l.b16 %v525
        %v654 = vunpack.c.l.b16 %v526
        %v655 = vunpack.c.l.b16 %v527
        %v656 = vunpack.c.l.b16 %v528
        %v657 = vunpack.c.l.b16 %v529
        %v658 = vunpack.c.l.b16 %v530
        %v659 = vunpack.c.l.b16 %v531
        %v660 = vunpack.c.l.b16 %v532
        %v661 = vunpack.c.l.b16 %v533
        %v662 = vunpack.c.l.b16 %v534
        %v663 = vunpack.c.l.b16 %v535
        %v664 = vunpack.c.l.b16 %v536
        %v665 = vunpack.c.l.b16 %v537
        %v666 = vunpack.c.l.b16 %v538
        %v667 = vunpack.c.l.b16 %v539
        %v668 = vunpack.c.l.b16 %v540
        %v669 = vunpack.c.l.b16 %v541
        %v670 = vunpack.c.l.b16 %v542
        %v671 = vunpack.c.l.b16 %v543
        %v672 = vunpack.c.l.b16 %v544
        %v673 = vunpack.c.l.b16 %v545
        %v674 = vunpack.c.l.b16 %v546
        %v675 = vunpack.c.l.b16 %v547
        %v676 = vunpack.c.l.b16 %v548
        %v677 = vunpack.c.l.b16 %v549
        %v678 = vunpack.c.l.b16 %v550
        %v679 = vunpack.c.l.b16 %v551
        %v680 = vunpack.c.l.b16 %v552
        %v681 = vunpack.c.l.b16 %v553
        %v682 = vunpack.c.l.b16 %v554
        %v683 = vunpack.c.l.b16 %v555
        %v684 = vunpack.c.l.b16 %v556
        %v685 = vunpack.c.l.b16 %v557
        %v686 = vunpack.c.l.b16 %v558
        %v687 = vunpack.c.l.b16 %v559
        %v688 = vunpack.c.l.b16 %v560
        %v689 = vunpack.c.l.b16 %v561
        %v690 = vunpack.c.l.b16 %v562
        %v691 = vunpack.c.l.b16 %v563
        %v692 = vunpack.c.l.b16 %v564
        %v693 = vunpack.c.l.b16 %v565
        %v694 = vunpack.c.l.b16 %v566
        %v695 = vunpack.c.l.b16 %v567
        %v696 = vunpack.c.l.b16 %v568
        %v697 = vunpack.c.l.b16 %v569
        %v698 = vunpack.c.l.b16 %v570
        %v699 = vunpack.c.l.b16 %v571
        %v700 = vunpack.c.l.b16 %v572
        %v701 = vunpack.c.l.b16 %v573
        %v702 = vunpack.c.l.b16 %v574
        %v703 = vunpack.c.l.b16 %v575
        %v704 = vunpack.c.l.b16 %v576
        %v705 = vunpack.c.l.b16 %v577
        %v706 = vpack.c.b16 %v643, %v642
        %v707 = vpack.c.b16 %v645, %v644
        %v708 = vpack.c.b16 %v647, %v646
        %v709 = vpack.c.b16 %v649, %v648
        %v710 = vpack.c.b16 %v651, %v650
        %v711 = vpack.c.b16 %v653, %v652
        %v712 = vpack.c.b16 %v655, %v654
        %v713 = vpack.c.b16 %v657, %v656
        %v714 = vpack.c.b16 %v659, %v658
        %v715 = vpack.c.b16 %v661, %v660
        %v716 = vpack.c.b16 %v663, %v662
        %v717 = vpack.c.b16 %v665, %v664
        %v718 = vpack.c.b16 %v667, %v666
        %v719 = vpack.c.b16 %v669, %v668
        %v720 = vpack.c.b16 %v671, %v670
        %v721 = vpack.c.b16 %v673, %v672
        %v722 = vpack.c.b16 %v675, %v674
        %v723 = vpack.c.b16 %v677, %v676
        %v724 = vpack.c.b16 %v679, %v678
        %v725 = vpack.c.b16 %v681, %v680
        %v726 = vpack.c.b16 %v683, %v682
        %v727 = vpack.c.b16 %v685, %v684
        %v728 = vpack.c.b16 %v687, %v686
        %v729 = vpack.c.b16 %v689, %v688
        %v730 = vpack.c.b16 %v691, %v690
        %v731 = vpack.c.b16 %v693, %v692
        %v732 = vpack.c.b16 %v695, %v694
        %v733 = vpack.c.b16 %v697, %v696
        %v734 = vpack.c.b16 %v699, %v698
        %v735 = vpack.c.b16 %v701, %v700
        %v736 = vpack.c.b16 %v703, %v702
        %v737 = vpack.c.b16 %v705, %v704
        %770 = vmatprep.subr.bf16.mxu0 0
        %771 = vmatpush1.bf16.msra.mxu0 %v706
        %772 = vmatprep.subr.bf16.mxu0 0
        %773 = vmatpush1.bf16.msra.mxu0 %v707
        %774 = vmatprep.subr.bf16.mxu0 0
        %775 = vmatpush1.bf16.msra.mxu0 %v708
        %776 = vmatprep.subr.bf16.mxu0 0
        %777 = vmatpush1.bf16.msra.mxu0 %v709
        %778 = vmatprep.subr.bf16.mxu0 0
        %779 = vmatpush1.bf16.msra.mxu0 %v710
        %780 = vmatprep.subr.bf16.mxu0 0
        %781 = vmatpush1.bf16.msra.mxu0 %v711
        %782 = vmatprep.subr.bf16.mxu0 0
        %783 = vmatpush1.bf16.msra.mxu0 %v712
        %784 = vmatprep.subr.bf16.mxu0 0
        %785 = vmatpush1.bf16.msra.mxu0 %v713
        %786 = vmatprep.subr.bf16.mxu0 0
        %787 = vmatpush1.bf16.msra.mxu0 %v714
        %788 = vmatprep.subr.bf16.mxu0 0
        %789 = vmatpush1.bf16.msra.mxu0 %v715
        %790 = vmatprep.subr.bf16.mxu0 0
        %791 = vmatpush1.bf16.msra.mxu0 %v716
        %792 = vmatprep.subr.bf16.mxu0 0
        %793 = vmatpush1.bf16.msra.mxu0 %v717
        %794 = vmatprep.subr.bf16.mxu0 0
        %795 = vmatpush1.bf16.msra.mxu0 %v718
        %796 = vmatprep.subr.bf16.mxu0 0
        %797 = vmatpush1.bf16.msra.mxu0 %v719
        %798 = vmatprep.subr.bf16.mxu0 0
        %799 = vmatpush1.bf16.msra.mxu0 %v720
        %800 = vmatprep.subr.bf16.mxu0 0
        %801 = vmatpush1.bf16.msra.mxu0 %v721
        %802 = vmatprep.mubr.bf16.mxu0 %v510
        %803 = vmatmul.mubr.bf16.gmra.mrb[0].mxu0 %v509
        %v804 = vpop.f32.mrb[0].mxu0
        %v805 = vadd.f32 0.0, %v804
        %v806 = vpop.f32.mrb[0].mxu0
        %v807 = vpop.f32.mrb[0].mxu0
        %v808 = vpop.f32.mrb[0].mxu0
        %809 = vdwg.mxu0
        %810 = vmatprep.subr.bf16.mxu0 0
        %811 = vmatpush1.bf16.msra.mxu0 %v722
        %812 = vmatprep.subr.bf16.mxu0 0
        %813 = vmatpush1.bf16.msra.mxu0 %v723
        %814 = vmatprep.subr.bf16.mxu0 0
        %815 = vmatpush1.bf16.msra.mxu0 %v724
        %816 = vmatprep.subr.bf16.mxu0 0
        %817 = vmatpush1.bf16.msra.mxu0 %v725
        %818 = vmatprep.subr.bf16.mxu0 0
        %819 = vmatpush1.bf16.msra.mxu0 %v726
        %820 = vmatprep.subr.bf16.mxu0 0
        %821 = vmatpush1.bf16.msra.mxu0 %v727
        %822 = vmatprep.subr.bf16.mxu0 0
        %823 = vmatpush1.bf16.msra.mxu0 %v728
        %824 = vmatprep.subr.bf16.mxu0 0
        %825 = vmatpush1.bf16.msra.mxu0 %v729
        %826 = vmatprep.subr.bf16.mxu0 0
        %827 = vmatpush1.bf16.msra.mxu0 %v730
        %828 = vmatprep.subr.bf16.mxu0 0
        %829 = vmatpush1.bf16.msra.mxu0 %v731
        %830 = vmatprep.subr.bf16.mxu0 0
        %831 = vmatpush1.bf16.msra.mxu0 %v732
        %832 = vmatprep.subr.bf16.mxu0 0
        %833 = vmatpush1.bf16.msra.mxu0 %v733
        %834 = vmatprep.subr.bf16.mxu0 0
        %835 = vmatpush1.bf16.msra.mxu0 %v734
        %836 = vmatprep.subr.bf16.mxu0 0
        %837 = vmatpush1.bf16.msra.mxu0 %v735
        %838 = vmatprep.subr.bf16.mxu0 0
        %839 = vmatpush1.bf16.msra.mxu0 %v736
        %840 = vmatprep.subr.bf16.mxu0 0
        %841 = vmatpush1.bf16.msra.mxu0 %v737
        %842 = vmatprep.mubr.bf16.mxu0 %v512
        %843 = vmatmul.mubr.bf16.gmra.mrb[0].mxu0 %v511
        %v844 = vpop.f32.mrb[0].mxu0
        %v845 = vadd.f32 %v805, %v844
        %v846 = vpop.f32.mrb[0].mxu0
        %v847 = vpop.f32.mrb[0].mxu0
        %v848 = vpop.f32.mrb[0].mxu0
        %849 = vdwg.mxu0
        %v850 = vadd.f32 %v513, %v845
        %851 = vst [vmem:[%s493] sm:$0xff] %v850
        // Predicated region
        $region78: #{discriminator_forward.8} parent=68 // pred_check
          %p852 = pneg %p495
        $region79: #{discriminator_forward.8} parent=68 // pred_check_branch
          %854 = sbr.rel (%p852) target = $region81
        $region80: #{discriminator_forward.8} parent=68 // pred_region
          %v855 = vld [vmem:[%s493] sm:$0xff]
          %v856 = vld [vmem:[%s489] sm:$0x1]
          %v858 = vlaneseq
          %v859 = vshrl.u32 %v858, 7
          %v860 = vsub.s32 0, %v859
          %v861 = vrot.slane %v856, %v860
          %v863 = vadd.f32 %v855, %v861
          %vm864 = vcmp.gt.f32.partialorder %v863, 0.0
          %v865 = vmul.f32 %v863, 0.2
          %v866 = vsel %vm864, %v863, %v865
          %867 = vst [vmem:[%s493] sm:$0xff] %v866
        $region81: #{discriminator_forward.8} parent=68 // pred_fallthru
          _
        %p868 = scmp.lt.s32.totalorder %s18, 1
        %s869 = scalar_select %p868, %s18, 1
        %s870 = smul.addr %s869, 8
        %s871 = scalar_lea.vmem %s3, %s870
        // Predicated region
        $region82: #{discriminator_forward.8} parent=68 // pred_check
          %p872 = pneg %p119
        $region83: #{discriminator_forward.8} parent=68 // pred_check_branch
          %874 = sbr.rel (%p872) target = $region85
        $region84: #{discriminator_forward.8} parent=68 // pred_region
          _
        $region85: #{discriminator_forward.8} parent=68 // pred_fallthru
          _
      $region69: #{discriminator_forward.8} parent=5 // pred_fallthru
        _
      %p875 = scmp.le.s32.totalorder 2, %s9
      // Predicated region
      $region86: #{discriminator_forward.8} parent=5 // pred_check
        %p876 = pneg %p875
      $region87: #{discriminator_forward.8} parent=5 // pred_check_branch
        %878 = sbr.rel (%p876) target = $region89
      $region88: #{discriminator_forward.8} parent=5 // pred_region
        %s879 = ssub.s32 %s9, 2
        // Predicated region
        $region90: #{discriminator_forward.8} parent=88 // pred_check
          %p880 = pneg %p125
        $region91: #{discriminator_forward.8} parent=88 // pred_check_branch
          %882 = sbr.rel (%p880) target = $region93
        $region92: #{discriminator_forward.8} parent=88 // pred_region
          %p883 = scmp.lt.s32.totalorder %s20, 1
          %s884 = scalar_select %p883, %s20, 1
          %s885 = smul.addr %s884, 8
          %s886 = scalar_lea.vmem %s3, %s885
        $region93: #{discriminator_forward.8} parent=88 // pred_fallthru
          _
      $region89: #{discriminator_forward.8} parent=5 // pred_fallthru
        _
    $region6: #{discriminator_forward.8} parent=1 // loop_footer
      %s13 = sadd.s32 1, %s9
    $region7: #{discriminator_forward.8} parent=1 // loop_footer_branch
      %8 = sbr.rel target = $region3
    $region8: #{discriminator_forward.8} parent=1 // loop_exit
      _

// kernel: discriminator_forward.6
$region0: #{discriminator_forward.6}
  #allocation0 [shape = 'u32[]', space=smem, size = 0x4, offset = 0x4, fixed_abs, tag = 'smem constant byte address 0x4 - core index']
  #allocation1 [shape = 'u32[144,128]{1,0:T(1,128)}', space=vmem, size = 0x12000, scoped, tag = 'internal scratch']
  %s0 = inlined_call_operand.vmem [shape: f32[8,2048], index: 0, kind: input, shape index: {}]
  %s1 = inlined_call_operand.hbm [shape: bf16[2048,1024], index: 1, kind: input, shape index: {}]
  %s2 = inlined_call_operand.hbm [shape: f32[1,1024], index: 2, kind: input, shape index: {}]
  %s3 = inlined_call_operand.vmem [shape: f32[8,1024], index: 3, kind: output, shape index: {}]
  %s4 = sld [smem:[#allocation0]]
  $region61: #{discriminator_forward.6} parent=0
    _
  %s6 = ssub.s32 1, %s4
  %s7 = scalar_select 0, %s6, %s4
  $region1: #{discriminator_forward.6} parent=0
    #allocation2 [shape = 'u8[4194304]{0}', space=vmem, size = 0x400000, scoped, tag = 'input window, operand 1']
    #allocation3 [shape = 's32[2]{0}', space=sflag, size = 0x8, scoped, tag = 'scoped memory for discriminator_forward.6']
    #allocation4 [shape = 'u8[4096]{0}', space=vmem, size = 0x1000, scoped, tag = 'input window, operand 2']
    #allocation5 [shape = 's32[2]{0}', space=sflag, size = 0x8, scoped, tag = 'scoped memory for discriminator_forward.6']
    %8 = vsyncpa [#allocation3], 0
    %s9 = scalar_lea.sflag [#allocation3], 1
    %10 = vsyncpa %s9, 0
    %11 = vsyncpa [#allocation5], 0
    %s12 = scalar_lea.sflag [#allocation5], 1
    %13 = vsyncpa %s12, 0
    loop: start=0, step=1, limit=4
    $region2: #{discriminator_forward.6} parent=1 // loop_pre_header
      _
    $region3: #{discriminator_forward.6} parent=1 // loop_header
      %s15 = sphi 0, %s19
      %p16 = scmp.ge.s32.totalorder %s15, 4
      %s22 = sphi 0, %s34
      %s23 = sphi 0, %s30
      %s24 = sphi 0, %s22
      %s25 = sphi 0, %s23
      %s26 = sphi 0, %s24
      %s27 = sphi 0, %s25
      %s35 = sphi 0, %s35
      %s37 = sphi 0, %s35
      %s38 = sphi 0, %s37
      %s52 = sphi 0, %s38
      %s60 = sphi 0, %s62
      %s63 = sphi 0, %s60
      %s64 = sphi 0, %s63
      %s80 = sphi 0, %s64
      %s86 = sphi 0, %s88
      %s89 = sphi 0, %s86
      %s90 = sphi 0, %s89
      %s106 = sphi 0, %s90
      %s112 = sphi 0, %s114
      %s115 = sphi 0, %s112
      %s116 = sphi 0, %s115
      %s132 = sphi 0, %s116
    $region4: #{discriminator_forward.6} parent=1 // loop_header_branch
      %18 = sbr.rel (%p16) target = $region8
    $region5: #{discriminator_forward.6} parent=1 // loop_body
      %s20 = ssub.s32 %s15, 1
      %s21 = ssub.s32 %s15, 2
      %s28 = sadd.s32 1, %s23
      %p29 = scmp.ge.s32.totalorder %s28, 1
      %s30 = scalar_select %p29, 0, %s28
      %s31 = sadd.s32 1, %s22
      %s32 = scalar_select %p29, %s31, %s22
      %p33 = scmp.ge.s32.totalorder %s32, 2
      %s34 = scalar_select %p33, 0, %s32
      %s36 = sadd.s32 %s35, 1
      %p39 = scmp.eq.s32.totalorder %s15, 1
      %p40 = scmp.ne.s32.totalorder %s35, %s37
      %p41 = scmp.eq.s32.totalorder %s15, 0
      %p42 = por %p40, %p41
      %p43 = scmp.ne.s32.totalorder %s35, %s37
      %p44 = scmp.eq.s32.totalorder %s20, 1
      %p45 = por %p43, %p44
      %p46 = scmp.ne.s32.totalorder %s37, %s38
      %p47 = scmp.eq.s32.totalorder %s20, 0
      %p48 = por %p46, %p47
      %p49 = scmp.ne.s32.totalorder %s37, %s38
      %p50 = scmp.eq.s32.totalorder %s21, 1
      %p51 = por %p49, %p50
      %p53 = scmp.ne.s32.totalorder %s38, %s52
      %p54 = scmp.eq.s32.totalorder %s21, 0
      %p55 = por %p53, %p54
      %s56 = ssub.s32 %s23, %s30
      %s57 = ssub.s32 %s22, %s34
      %s58 = sor.u32 %s56, %s57
      %p59 = scmp.eq.s32.totalorder %s58, 0
      %s61 = sadd.s32 %s60, 1
      %s62 = scalar_select %p59, %s60, %s61
      %p65 = pneg %p59
      %p66 = scmp.eq.s32.totalorder %s15, 1
      %p67 = por %p65, %p66
      %p68 = scmp.ne.s32.totalorder %s60, %s63
      %p69 = scmp.eq.s32.totalorder %s15, 0
      %p70 = por %p68, %p69
      %p71 = scmp.ne.s32.totalorder %s60, %s63
      %p72 = scmp.eq.s32.totalorder %s20, 1
      %p73 = por %p71, %p72
      %p74 = scmp.ne.s32.totalorder %s63, %s64
      %p75 = scmp.eq.s32.totalorder %s20, 0
      %p76 = por %p74, %p75
      %p77 = scmp.ne.s32.totalorder %s63, %s64
      %p78 = scmp.eq.s32.totalorder %s21, 1
      %p79 = por %p77, %p78
      %p81 = scmp.ne.s32.totalorder %s64, %s80
      %p82 = scmp.eq.s32.totalorder %s21, 0
      %p83 = por %p81, %p82
      %s84 = ssub.s32 %s22, %s34
      %p85 = scmp.eq.s32.totalorder %s84, 0
      %s87 = sadd.s32 %s86, 1
      %s88 = scalar_select %p85, %s86, %s87
      %p91 = pneg %p85
      %p92 = scmp.eq.s32.totalorder %s15, 1
      %p93 = por %p91, %p92
      %p94 = scmp.ne.s32.totalorder %s86, %s89
      %p95 = scmp.eq.s32.totalorder %s15, 0
      %p96 = por %p94, %p95
      %p97 = scmp.ne.s32.totalorder %s86, %s89
      %p98 = scmp.eq.s32.totalorder %s20, 1
      %p99 = por %p97, %p98
      %p100 = scmp.ne.s32.totalorder %s89, %s90
      %p101 = scmp.eq.s32.totalorder %s20, 0
      %p102 = por %p100, %p101
      %p103 = scmp.ne.s32.totalorder %s89, %s90
      %p104 = scmp.eq.s32.totalorder %s21, 1
      %p105 = por %p103, %p104
      %p107 = scmp.ne.s32.totalorder %s90, %s106
      %p108 = scmp.eq.s32.totalorder %s21, 0
      %p109 = por %p107, %p108
      %s110 = ssub.s32 %s22, %s34
      %p111 = scmp.eq.s32.totalorder %s110, 0
      %s113 = sadd.s32 %s112, 1
      %s114 = scalar_select %p111, %s112, %s113
      %p117 = pneg %p111
      %p118 = scmp.eq.s32.totalorder %s15, 1
      %p119 = por %p117, %p118
      %p120 = scmp.ne.s32.totalorder %s112, %s115
      %p121 = scmp.eq.s32.totalorder %s15, 0
      %p122 = por %p120, %p121
      %p123 = scmp.ne.s32.totalorder %s112, %s115
      %p124 = scmp.eq.s32.totalorder %s20, 1
      %p125 = por %p123, %p124
      %p126 = scmp.ne.s32.totalorder %s115, %s116
      %p127 = scmp.eq.s32.totalorder %s20, 0
      %p128 = por %p126, %p127
      %p129 = scmp.ne.s32.totalorder %s115, %s116
      %p130 = scmp.eq.s32.totalorder %s21, 1
      %p131 = por %p129, %p130
      %p133 = scmp.ne.s32.totalorder %s116, %s132
      %p134 = scmp.eq.s32.totalorder %s21, 0
      %p135 = por %p133, %p134
      %p136 = scmp.le.s32.totalorder 1, %s15
      %p137 = scmp.lt.s32.totalorder %s15, 3
      %p138 = pnand %p136, %p137
      %p139 = pneg %p138
      // Predicated region
      $region9: #{discriminator_forward.6} parent=5 // pred_check
        _
      $region10: #{discriminator_forward.6} parent=5 // pred_check_branch
        %141 = sbr.rel (%p138) target = $region12
      $region11: #{discriminator_forward.6} parent=5 // pred_region
        %s142 = ssub.s32 %s15, 1
        // Predicated region
        $region13: #{discriminator_forward.6} parent=11 // pred_check
          %p143 = pneg %p48
        $region14: #{discriminator_forward.6} parent=11 // pred_check_branch
          %145 = sbr.rel (%p143) target = $region16
        $region15: #{discriminator_forward.6} parent=11 // pred_region
          _
        $region16: #{discriminator_forward.6} parent=11 // pred_fallthru
          _
      $region12: #{discriminator_forward.6} parent=5 // pred_fallthru
        _
      %p146 = scmp.lt.s32.totalorder %s15, 2
      // Predicated region
      $region17: #{discriminator_forward.6} parent=5 // pred_check
        %p147 = pneg %p146
      $region18: #{discriminator_forward.6} parent=5 // pred_check_branch
        %149 = sbr.rel (%p147) target = $region20
      $region19: #{discriminator_forward.6} parent=5 // pred_region
        // Predicated region
        $region21: #{discriminator_forward.6} parent=19 // pred_check
          %p150 = pneg %p70
        $region22: #{discriminator_forward.6} parent=19 // pred_check_branch
          %152 = sbr.rel (%p150) target = $region24
        $region23: #{discriminator_forward.6} parent=19 // pred_region
          %s153 = sand.u32 %s60, 1
          %s154 = scalar_lea.sflag [#allocation3], %s153
          %s155 = sand.u32 %s60, 1
          %s156 = smul.addr %s155, 4096
          %s157 = scalar_lea.vmem [#allocation2], %s156
          %s158 = smul.u32 256, %s23
          %s159 = smul.u32 4, %s22
          %s161 = ssub.s32 65536, 65536
          %162 = vsyncadd %s154, %s161
          %s163 = smul.addr %s158, 8
          %s164 = sadd.s32 %s159, %s163
          %s165 = smul.addr %s164, 64
          %s166 = scalar_lea.hbm %s1, %s165
          %s167 = sshll.u32 %s157, 4
          %s168 = int_to_ptr.vmem [resolvable:$true] %s167
          %173 = dma.hbm_to_vmem [thread:$0]  %s166, 65536, %s168, %s154, 512, 256, 16
        $region24: #{discriminator_forward.6} parent=19 // pred_fallthru
          _
        // Predicated region
        $region25: #{discriminator_forward.6} parent=19 // pred_check
          %p174 = pneg %p96
        $region26: #{discriminator_forward.6} parent=19 // pred_check_branch
          %176 = sbr.rel (%p174) target = $region28
        $region27: #{discriminator_forward.6} parent=19 // pred_region
          %s177 = sand.u32 %s86, 1
          %s178 = scalar_lea.sflag [#allocation5], %s177
          %s179 = sand.u32 %s86, 1
          %s180 = smul.addr %s179, 4
          %s181 = scalar_lea.vmem [#allocation4], %s180
          %s182 = smul.u32 4, %s22
          %s184 = ssub.s32 64, 64
          %185 = vsyncadd %s178, %s184
          %s186 = smul.addr %s182, 16
          %s187 = scalar_lea.hbm %s2, %s186
          %s189 = sshll.u32 %s181, 4
          %s190 = int_to_ptr.vmem [resolvable:$true] %s189
          %192 = dma.hbm_to_vmem [thread:$0]  %s187, 64, %s190, %s178
        $region28: #{discriminator_forward.6} parent=19 // pred_fallthru
          _
      $region20: #{discriminator_forward.6} parent=5 // pred_fallthru
        _
      %p193 = scmp.le.s32.totalorder 1, %s15
      %p194 = scmp.lt.s32.totalorder %s15, 3
      %p195 = pnand %p193, %p194
      %p196 = pneg %p195
      // Predicated region
      $region29: #{discriminator_forward.6} parent=5 // pred_check
        _
      $region30: #{discriminator_forward.6} parent=5 // pred_check_branch
        %198 = sbr.rel (%p195) target = $region32
      $region31: #{discriminator_forward.6} parent=5 // pred_region
        %s199 = ssub.s32 %s15, 1
        %s200 = sand.u32 %s63, 1
        %s201 = scalar_lea.sflag [#allocation3], %s200
        %s202 = sand.u32 %s63, 1
        %s203 = smul.addr %s202, 4096
        %s204 = scalar_lea.vmem [#allocation2], %s203
        // Predicated region
        $region33: #{discriminator_forward.6} parent=31 // pred_check
          %p205 = pneg %p76
        $region34: #{discriminator_forward.6} parent=31 // pred_check_branch
          %207 = sbr.rel (%p205) target = $region36
        $region35: #{discriminator_forward.6} parent=31 // pred_region
          %208 = dma.done %s201, 65536
        $region36: #{discriminator_forward.6} parent=31 // pred_fallthru
          _
        %s209 = sand.u32 %s89, 1
        %s210 = scalar_lea.sflag [#allocation5], %s209
        %s211 = sand.u32 %s89, 1
        %s212 = smul.addr %s211, 4
        %s213 = scalar_lea.vmem [#allocation4], %s212
        // Predicated region
        $region37: #{discriminator_forward.6} parent=31 // pred_check
          %p214 = pneg %p102
        $region38: #{discriminator_forward.6} parent=31 // pred_check_branch
          %216 = sbr.rel (%p214) target = $region40
        $region39: #{discriminator_forward.6} parent=31 // pred_region
          %217 = dma.done %s210, 64
        $region40: #{discriminator_forward.6} parent=31 // pred_fallthru
          _
        %p218 = pneg %p48
        %p219 = pneg %p45
        %s220 = sand.u32 %s63, 1
        %s221 = scalar_lea.sflag [#allocation3], %s220
        %s222 = sand.u32 %s63, 1
        %s223 = smul.addr %s222, 4096
        %s224 = scalar_lea.vmem [#allocation2], %s223
        %p225 = pneg %p76
        %p226 = pneg %p73
        %s227 = sand.u32 %s89, 1
        %s228 = scalar_lea.sflag [#allocation5], %s227
        %s229 = sand.u32 %s89, 1
        %s230 = smul.addr %s229, 4
        %s231 = scalar_lea.vmem [#allocation4], %s230
        %p232 = pneg %p102
        %p233 = pneg %p99
        %p234 = pneg %p128
        %p235 = pneg %p125
        %s236 = smul.u32 4, %s24
        %p237 = scmp.lt.s32.totalorder %s236, 7
        %s238 = scalar_select %p237, %s236, 7
        %s239 = smul.addr %s238, 8
        %s240 = scalar_lea.vmem %s3, %s239
        %s241 = smul.u32 256, %s25
        %s242 = smul.u32 4, %s24
        %s243 = smul.u32 4, %s24
        %s244 = smul.u32 4, %s24
        %p245 = scmp.lt.s32.totalorder %s244, 7
        %s246 = scalar_select %p245, %s244, 7
        %s247 = smul.addr %s246, 8
        %s248 = scalar_lea.vmem %s3, %s247
        %s249 = smul.u32 4, %s24
        %p250 = scmp.eq.s32.totalorder %s25, 0
        // Predicated region
        $region41: #{discriminator_forward.6} parent=31 // pred_check
          %p251 = pneg %p250
        $region42: #{discriminator_forward.6} parent=31 // pred_check_branch
          %253 = sbr.rel (%p251) target = $region44
        $region43: #{discriminator_forward.6} parent=31 // pred_region
          %254 = vst [vmem:[%s248] sm:$0xff] 0.0
          %255 = vst [vmem:[%s248 + $0x8] sm:$0xff] 0.0
          %256 = vst [vmem:[%s248 + $0x10] sm:$0xff] 0.0
          %257 = vst [vmem:[%s248 + $0x18] sm:$0xff] 0.0
        $region44: #{discriminator_forward.6} parent=31 // pred_fallthru
          _
        %s258 = smul.u32 %s25, 2048
        %s259 = sshra.s32 %s258, 7
        %s260 = sand.u32 %s258, 127
        %s261 = smul.addr %s259, 8
        %s262 = scalar_lea.vmem %s0, %s261
        %v263 = vld [vmem:[%s262] sm:$0xff]
        %v264 = vld [vmem:[%s262 + $0x8] sm:$0xff]
        %v265 = vld [vmem:[%s262 + $0x10] sm:$0xff]
        %v266 = vld [vmem:[%s262 + $0x18] sm:$0xff]
        %v267 = vld [vmem:[%s262 + $0x20] sm:$0xff]
        %v268 = vld [vmem:[%s262 + $0x28] sm:$0xff]
        %v269 = vld [vmem:[%s262 + $0x30] sm:$0xff]
        %v270 = vld [vmem:[%s262 + $0x38] sm:$0xff]
        %v271 = vld [vmem:[%s262 + $0x40] sm:$0xff]
        %v272 = vld [vmem:[%s262 + $0x48] sm:$0xff]
        %v273 = vld [vmem:[%s262 + $0x50] sm:$0xff]
        %v274 = vld [vmem:[%s262 + $0x58] sm:$0xff]
        %v275 = vld [vmem:[%s262 + $0x60] sm:$0xff]
        %v276 = vld [vmem:[%s262 + $0x68] sm:$0xff]
        %v277 = vld [vmem:[%s262 + $0x70] sm:$0xff]
        %v278 = vld [vmem:[%s262 + $0x78] sm:$0xff]
        %v279 = vpack.c.bf16 %v263, %v263
        %v280 = vpack.c.bf16 %v264, %v264
        %v281 = vpack.c.bf16 %v265, %v265
        %v282 = vpack.c.bf16 %v266, %v266
        %v283 = vpack.c.bf16 %v267, %v267
        %v284 = vpack.c.bf16 %v268, %v268
        %v285 = vpack.c.bf16 %v269, %v269
        %v286 = vpack.c.bf16 %v270, %v270
        %v287 = vpack.c.bf16 %v271, %v271
        %v288 = vpack.c.bf16 %v272, %v272
        %v289 = vpack.c.bf16 %v273, %v273
        %v290 = vpack.c.bf16 %v274, %v274
        %v291 = vpack.c.bf16 %v275, %v275
        %v292 = vpack.c.bf16 %v276, %v276
        %v293 = vpack.c.bf16 %v277, %v277
        %v294 = vpack.c.bf16 %v278, %v278
        %v295 = vld [vmem:[%s248] sm:$0xff]
        %v296 = vld [vmem:[%s248 + $0x8] sm:$0xff]
        %v297 = vld [vmem:[%s248 + $0x10] sm:$0xff]
        %v298 = vld [vmem:[%s248 + $0x18] sm:$0xff]
        %v299 = vld [vmem:[%s204] sm:$0xff]
        %v300 = vld [vmem:[%s204 + $0x8] sm:$0xff]
        %v301 = vld [vmem:[%s204 + $0x10] sm:$0xff]
        %v302 = vld [vmem:[%s204 + $0x18] sm:$0xff]
        %v303 = vld [vmem:[%s204 + $0x20] sm:$0xff]
        %v304 = vld [vmem:[%s204 + $0x28] sm:$0xff]
        %v305 = vld [vmem:[%s204 + $0x30] sm:$0xff]
        %v306 = vld [vmem:[%s204 + $0x38] sm:$0xff]
        %v307 = vld [vmem:[%s204 + $0x40] sm:$0xff]
        %v308 = vld [vmem:[%s204 + $0x48] sm:$0xff]
        %v309 = vld [vmem:[%s204 + $0x50] sm:$0xff]
        %v310 = vld [vmem:[%s204 + $0x58] sm:$0xff]
        %v311 = vld [vmem:[%s204 + $0x60] sm:$0xff]
        %v312 = vld [vmem:[%s204 + $0x68] sm:$0xff]
        %v313 = vld [vmem:[%s204 + $0x70] sm:$0xff]
        %v314 = vld [vmem:[%s204 + $0x78] sm:$0xff]
        %v315 = vld [vmem:[%s204 + $0x80] sm:$0xff]
        %v316 = vld [vmem:[%s204 + $0x88] sm:$0xff]
        %v317 = vld [vmem:[%s204 + $0x90] sm:$0xff]
        %v318 = vld [vmem:[%s204 + $0x98] sm:$0xff]
        %v319 = vld [vmem:[%s204 + $0xa0] sm:$0xff]
        %v320 = vld [vmem:[%s204 + $0xa8] sm:$0xff]
        %v321 = vld [vmem:[%s204 + $0xb0] sm:$0xff]
        %v322 = vld [vmem:[%s204 + $0xb8] sm:$0xff]
        %v323 = vld [vmem:[%s204 + $0xc0] sm:$0xff]
        %v324 = vld [vmem:[%s204 + $0xc8] sm:$0xff]
        %v325 = vld [vmem:[%s204 + $0xd0] sm:$0xff]
        %v326 = vld [vmem:[%s204 + $0xd8] sm:$0xff]
        %v327 = vld [vmem:[%s204 + $0xe0] sm:$0xff]
        %v328 = vld [vmem:[%s204 + $0xe8] sm:$0xff]
        %v329 = vld [vmem:[%s204 + $0xf0] sm:$0xff]
        %v330 = vld [vmem:[%s204 + $0xf8] sm:$0xff]
        %v331 = vld [vmem:[%s204 + $0x100] sm:$0xff]
        %v332 = vld [vmem:[%s204 + $0x108] sm:$0xff]
        %v333 = vld [vmem:[%s204 + $0x110] sm:$0xff]
        %v334 = vld [vmem:[%s204 + $0x118] sm:$0xff]
        %v335 = vld [vmem:[%s204 + $0x120] sm:$0xff]
        %v336 = vld [vmem:[%s204 + $0x128] sm:$0xff]
        %v337 = vld [vmem:[%s204 + $0x130] sm:$0xff]
        %v338 = vld [vmem:[%s204 + $0x138] sm:$0xff]
        %v339 = vld [vmem:[%s204 + $0x140] sm:$0xff]
        %v340 = vld [vmem:[%s204 + $0x148] sm:$0xff]
        %v341 = vld [vmem:[%s204 + $0x150] sm:$0xff]
        %v342 = vld [vmem:[%s204 + $0x158] sm:$0xff]
        %v343 = vld [vmem:[%s204 + $0x160] sm:$0xff]
        %v344 = vld [vmem:[%s204 + $0x168] sm:$0xff]
        %v345 = vld [vmem:[%s204 + $0x170] sm:$0xff]
        %v346 = vld [vmem:[%s204 + $0x178] sm:$0xff]
        %v347 = vld [vmem:[%s204 + $0x180] sm:$0xff]
        %v348 = vld [vmem:[%s204 + $0x188] sm:$0xff]
        %v349 = vld [vmem:[%s204 + $0x190] sm:$0xff]
        %v350 = vld [vmem:[%s204 + $0x198] sm:$0xff]
        %v351 = vld [vmem:[%s204 + $0x1a0] sm:$0xff]
        %v352 = vld [vmem:[%s204 + $0x1a8] sm:$0xff]
        %v353 = vld [vmem:[%s204 + $0x1b0] sm:$0xff]
        %v354 = vld [vmem:[%s204 + $0x1b8] sm:$0xff]
        %v355 = vld [vmem:[%s204 + $0x1c0] sm:$0xff]
        %v356 = vld [vmem:[%s204 + $0x1c8] sm:$0xff]
        %v357 = vld [vmem:[%s204 + $0x1d0] sm:$0xff]
        %v358 = vld [vmem:[%s204 + $0x1d8] sm:$0xff]
        %v359 = vld [vmem:[%s204 + $0x1e0] sm:$0xff]
        %v360 = vld [vmem:[%s204 + $0x1e8] sm:$0xff]
        %v361 = vld [vmem:[%s204 + $0x1f0] sm:$0xff]
        %v362 = vld [vmem:[%s204 + $0x1f8] sm:$0xff]
        %v363 = vld [vmem:[%s204 + $0x200] sm:$0xff]
        %v364 = vld [vmem:[%s204 + $0x208] sm:$0xff]
        %v365 = vld [vmem:[%s204 + $0x210] sm:$0xff]
        %v366 = vld [vmem:[%s204 + $0x218] sm:$0xff]
        %v367 = vld [vmem:[%s204 + $0x220] sm:$0xff]
        %v368 = vld [vmem:[%s204 + $0x228] sm:$0xff]
        %v369 = vld [vmem:[%s204 + $0x230] sm:$0xff]
        %v370 = vld [vmem:[%s204 + $0x238] sm:$0xff]
        %v371 = vld [vmem:[%s204 + $0x240] sm:$0xff]
        %v372 = vld [vmem:[%s204 + $0x248] sm:$0xff]
        %v373 = vld [vmem:[%s204 + $0x250] sm:$0xff]
        %v374 = vld [vmem:[%s204 + $0x258] sm:$0xff]
        %v375 = vld [vmem:[%s204 + $0x260] sm:$0xff]
        %v376 = vld [vmem:[%s204 + $0x268] sm:$0xff]
        %v377 = vld [vmem:[%s204 + $0x270] sm:$0xff]
        %v378 = vld [vmem:[%s204 + $0x278] sm:$0xff]
        %v379 = vld [vmem:[%s204 + $0x280] sm:$0xff]
        %v380 = vld [vmem:[%s204 + $0x288] sm:$0xff]
        %v381 = vld [vmem:[%s204 + $0x290] sm:$0xff]
        %v382 = vld [vmem:[%s204 + $0x298] sm:$0xff]
        %v383 = vld [vmem:[%s204 + $0x2a0] sm:$0xff]
        %v384 = vld [vmem:[%s204 + $0x2a8] sm:$0xff]
        %v385 = vld [vmem:[%s204 + $0x2b0] sm:$0xff]
        %v386 = vld [vmem:[%s204 + $0x2b8] sm:$0xff]
        %v387 = vld [vmem:[%s204 + $0x2c0] sm:$0xff]
        %v388 = vld [vmem:[%s204 + $0x2c8] sm:$0xff]
        %v389 = vld [vmem:[%s204 + $0x2d0] sm:$0xff]
        %v390 = vld [vmem:[%s204 + $0x2d8] sm:$0xff]
        %v391 = vld [vmem:[%s204 + $0x2e0] sm:$0xff]
        %v392 = vld [vmem:[%s204 + $0x2e8] sm:$0xff]
        %v393 = vld [vmem:[%s204 + $0x2f0] sm:$0xff]
        %v394 = vld [vmem:[%s204 + $0x2f8] sm:$0xff]
        %v395 = vld [vmem:[%s204 + $0x300] sm:$0xff]
        %v396 = vld [vmem:[%s204 + $0x308] sm:$0xff]
        %v397 = vld [vmem:[%s204 + $0x310] sm:$0xff]
        %v398 = vld [vmem:[%s204 + $0x318] sm:$0xff]
        %v399 = vld [vmem:[%s204 + $0x320] sm:$0xff]
        %v400 = vld [vmem:[%s204 + $0x328] sm:$0xff]
        %v401 = vld [vmem:[%s204 + $0x330] sm:$0xff]
        %v402 = vld [vmem:[%s204 + $0x338] sm:$0xff]
        %v403 = vld [vmem:[%s204 + $0x340] sm:$0xff]
        %v404 = vld [vmem:[%s204 + $0x348] sm:$0xff]
        %v405 = vld [vmem:[%s204 + $0x350] sm:$0xff]
        %v406 = vld [vmem:[%s204 + $0x358] sm:$0xff]
        %v407 = vld [vmem:[%s204 + $0x360] sm:$0xff]
        %v408 = vld [vmem:[%s204 + $0x368] sm:$0xff]
        %v409 = vld [vmem:[%s204 + $0x370] sm:$0xff]
        %v410 = vld [vmem:[%s204 + $0x378] sm:$0xff]
        %v411 = vld [vmem:[%s204 + $0x380] sm:$0xff]
        %v412 = vld [vmem:[%s204 + $0x388] sm:$0xff]
        %v413 = vld [vmem:[%s204 + $0x390] sm:$0xff]
        %v414 = vld [vmem:[%s204 + $0x398] sm:$0xff]
        %v415 = vld [vmem:[%s204 + $0x3a0] sm:$0xff]
        %v416 = vld [vmem:[%s204 + $0x3a8] sm:$0xff]
        %v417 = vld [vmem:[%s204 + $0x3b0] sm:$0xff]
        %v418 = vld [vmem:[%s204 + $0x3b8] sm:$0xff]
        %v419 = vld [vmem:[%s204 + $0x3c0] sm:$0xff]
        %v420 = vld [vmem:[%s204 + $0x3c8] sm:$0xff]
        %v421 = vld [vmem:[%s204 + $0x3d0] sm:$0xff]
        %v422 = vld [vmem:[%s204 + $0x3d8] sm:$0xff]
        %v423 = vld [vmem:[%s204 + $0x3e0] sm:$0xff]
        %v424 = vld [vmem:[%s204 + $0x3e8] sm:$0xff]
        %v425 = vld [vmem:[%s204 + $0x3f0] sm:$0xff]
        %v426 = vld [vmem:[%s204 + $0x3f8] sm:$0xff]
        %v427 = vld [vmem:[%s204 + $0x400] sm:$0xff]
        %v428 = vld [vmem:[%s204 + $0x408] sm:$0xff]
        %v429 = vld [vmem:[%s204 + $0x410] sm:$0xff]
        %v430 = vld [vmem:[%s204 + $0x418] sm:$0xff]
        %v431 = vld [vmem:[%s204 + $0x420] sm:$0xff]
        %v432 = vld [vmem:[%s204 + $0x428] sm:$0xff]
        %v433 = vld [vmem:[%s204 + $0x430] sm:$0xff]
        %v434 = vld [vmem:[%s204 + $0x438] sm:$0xff]
        %v435 = vld [vmem:[%s204 + $0x440] sm:$0xff]
        %v436 = vld [vmem:[%s204 + $0x448] sm:$0xff]
        %v437 = vld [vmem:[%s204 + $0x450] sm:$0xff]
        %v438 = vld [vmem:[%s204 + $0x458] sm:$0xff]
        %v439 = vld [vmem:[%s204 + $0x460] sm:$0xff]
        %v440 = vld [vmem:[%s204 + $0x468] sm:$0xff]
        %v441 = vld [vmem:[%s204 + $0x470] sm:$0xff]
        %v442 = vld [vmem:[%s204 + $0x478] sm:$0xff]
        %v443 = vld [vmem:[%s204 + $0x480] sm:$0xff]
        %v444 = vld [vmem:[%s204 + $0x488] sm:$0xff]
        %v445 = vld [vmem:[%s204 + $0x490] sm:$0xff]
        %v446 = vld [vmem:[%s204 + $0x498] sm:$0xff]
        %v447 = vld [vmem:[%s204 + $0x4a0] sm:$0xff]
        %v448 = vld [vmem:[%s204 + $0x4a8] sm:$0xff]
        %v449 = vld [vmem:[%s204 + $0x4b0] sm:$0xff]
        %v450 = vld [vmem:[%s204 + $0x4b8] sm:$0xff]
        %v451 = vld [vmem:[%s204 + $0x4c0] sm:$0xff]
        %v452 = vld [vmem:[%s204 + $0x4c8] sm:$0xff]
        %v453 = vld [vmem:[%s204 + $0x4d0] sm:$0xff]
        %v454 = vld [vmem:[%s204 + $0x4d8] sm:$0xff]
        %v455 = vld [vmem:[%s204 + $0x4e0] sm:$0xff]
        %v456 = vld [vmem:[%s204 + $0x4e8] sm:$0xff]
        %v457 = vld [vmem:[%s204 + $0x4f0] sm:$0xff]
        %v458 = vld [vmem:[%s204 + $0x4f8] sm:$0xff]
        %v459 = vld [vmem:[%s204 + $0x500] sm:$0xff]
        %v460 = vld [vmem:[%s204 + $0x508] sm:$0xff]
        %v461 = vld [vmem:[%s204 + $0x510] sm:$0xff]
        %v462 = vld [vmem:[%s204 + $0x518] sm:$0xff]
        %v463 = vld [vmem:[%s204 + $0x520] sm:$0xff]
        %v464 = vld [vmem:[%s204 + $0x528] sm:$0xff]
        %v465 = vld [vmem:[%s204 + $0x530] sm:$0xff]
        %v466 = vld [vmem:[%s204 + $0x538] sm:$0xff]
        %v467 = vld [vmem:[%s204 + $0x540] sm:$0xff]
        %v468 = vld [vmem:[%s204 + $0x548] sm:$0xff]
        %v469 = vld [vmem:[%s204 + $0x550] sm:$0xff]
        %v470 = vld [vmem:[%s204 + $0x558] sm:$0xff]
        %v471 = vld [vmem:[%s204 + $0x560] sm:$0xff]
        %v472 = vld [vmem:[%s204 + $0x568] sm:$0xff]
        %v473 = vld [vmem:[%s204 + $0x570] sm:$0xff]
        %v474 = vld [vmem:[%s204 + $0x578] sm:$0xff]
        %v475 = vld [vmem:[%s204 + $0x580] sm:$0xff]
        %v476 = vld [vmem:[%s204 + $0x588] sm:$0xff]
        %v477 = vld [vmem:[%s204 + $0x590] sm:$0xff]
        %v478 = vld [vmem:[%s204 + $0x598] sm:$0xff]
        %v479 = vld [vmem:[%s204 + $0x5a0] sm:$0xff]
        %v480 = vld [vmem:[%s204 + $0x5a8] sm:$0xff]
        %v481 = vld [vmem:[%s204 + $0x5b0] sm:$0xff]
        %v482 = vld [vmem:[%s204 + $0x5b8] sm:$0xff]
        %v483 = vld [vmem:[%s204 + $0x5c0] sm:$0xff]
        %v484 = vld [vmem:[%s204 + $0x5c8] sm:$0xff]
        %v485 = vld [vmem:[%s204 + $0x5d0] sm:$0xff]
        %v486 = vld [vmem:[%s204 + $0x5d8] sm:$0xff]
        %v487 = vld [vmem:[%s204 + $0x5e0] sm:$0xff]
        %v488 = vld [vmem:[%s204 + $0x5e8] sm:$0xff]
        %v489 = vld [vmem:[%s204 + $0x5f0] sm:$0xff]
        %v490 = vld [vmem:[%s204 + $0x5f8] sm:$0xff]
        %v491 = vld [vmem:[%s204 + $0x600] sm:$0xff]
        %v492 = vld [vmem:[%s204 + $0x608] sm:$0xff]
        %v493 = vld [vmem:[%s204 + $0x610] sm:$0xff]
        %v494 = vld [vmem:[%s204 + $0x618] sm:$0xff]
        %v495 = vld [vmem:[%s204 + $0x620] sm:$0xff]
        %v496 = vld [vmem:[%s204 + $0x628] sm:$0xff]
        %v497 = vld [vmem:[%s204 + $0x630] sm:$0xff]
        %v498 = vld [vmem:[%s204 + $0x638] sm:$0xff]
        %v499 = vld [vmem:[%s204 + $0x640] sm:$0xff]
        %v500 = vld [vmem:[%s204 + $0x648] sm:$0xff]
        %v501 = vld [vmem:[%s204 + $0x650] sm:$0xff]
        %v502 = vld [vmem:[%s204 + $0x658] sm:$0xff]
        %v503 = vld [vmem:[%s204 + $0x660] sm:$0xff]
        %v504 = vld [vmem:[%s204 + $0x668] sm:$0xff]
        %v505 = vld [vmem:[%s204 + $0x670] sm:$0xff]
        %v506 = vld [vmem:[%s204 + $0x678] sm:$0xff]
        %v507 = vld [vmem:[%s204 + $0x680] sm:$0xff]
        %v508 = vld [vmem:[%s204 + $0x688] sm:$0xff]
        %v509 = vld [vmem:[%s204 + $0x690] sm:$0xff]
        %v510 = vld [vmem:[%s204 + $0x698] sm:$0xff]
        %v511 = vld [vmem:[%s204 + $0x6a0] sm:$0xff]
        %v512 = vld [vmem:[%s204 + $0x6a8] sm:$0xff]
        %v513 = vld [vmem:[%s204 + $0x6b0] sm:$0xff]
        %v514 = vld [vmem:[%s204 + $0x6b8] sm:$0xff]
        %v515 = vld [vmem:[%s204 + $0x6c0] sm:$0xff]
        %v516 = vld [vmem:[%s204 + $0x6c8] sm:$0xff]
        %v517 = vld [vmem:[%s204 + $0x6d0] sm:$0xff]
        %v518 = vld [vmem:[%s204 + $0x6d8] sm:$0xff]
        %v519 = vld [vmem:[%s204 + $0x6e0] sm:$0xff]
        %v520 = vld [vmem:[%s204 + $0x6e8] sm:$0xff]
        %v521 = vld [vmem:[%s204 + $0x6f0] sm:$0xff]
        %v522 = vld [vmem:[%s204 + $0x6f8] sm:$0xff]
        %v523 = vld [vmem:[%s204 + $0x700] sm:$0xff]
        %v524 = vld [vmem:[%s204 + $0x708] sm:$0xff]
        %v525 = vld [vmem:[%s204 + $0x710] sm:$0xff]
        %v526 = vld [vmem:[%s204 + $0x718] sm:$0xff]
        %v527 = vld [vmem:[%s204 + $0x720] sm:$0xff]
        %v528 = vld [vmem:[%s204 + $0x728] sm:$0xff]
        %v529 = vld [vmem:[%s204 + $0x730] sm:$0xff]
        %v530 = vld [vmem:[%s204 + $0x738] sm:$0xff]
        %v531 = vld [vmem:[%s204 + $0x740] sm:$0xff]
        %v532 = vld [vmem:[%s204 + $0x748] sm:$0xff]
        %v533 = vld [vmem:[%s204 + $0x750] sm:$0xff]
        %v534 = vld [vmem:[%s204 + $0x758] sm:$0xff]
        %v535 = vld [vmem:[%s204 + $0x760] sm:$0xff]
        %v536 = vld [vmem:[%s204 + $0x768] sm:$0xff]
        %v537 = vld [vmem:[%s204 + $0x770] sm:$0xff]
        %v538 = vld [vmem:[%s204 + $0x778] sm:$0xff]
        %v539 = vld [vmem:[%s204 + $0x780] sm:$0xff]
        %v540 = vld [vmem:[%s204 + $0x788] sm:$0xff]
        %v541 = vld [vmem:[%s204 + $0x790] sm:$0xff]
        %v542 = vld [vmem:[%s204 + $0x798] sm:$0xff]
        %v543 = vld [vmem:[%s204 + $0x7a0] sm:$0xff]
        %v544 = vld [vmem:[%s204 + $0x7a8] sm:$0xff]
        %v545 = vld [vmem:[%s204 + $0x7b0] sm:$0xff]
        %v546 = vld [vmem:[%s204 + $0x7b8] sm:$0xff]
        %v547 = vld [vmem:[%s204 + $0x7c0] sm:$0xff]
        %v548 = vld [vmem:[%s204 + $0x7c8] sm:$0xff]
        %v549 = vld [vmem:[%s204 + $0x7d0] sm:$0xff]
        %v550 = vld [vmem:[%s204 + $0x7d8] sm:$0xff]
        %v551 = vld [vmem:[%s204 + $0x7e0] sm:$0xff]
        %v552 = vld [vmem:[%s204 + $0x7e8] sm:$0xff]
        %v553 = vld [vmem:[%s204 + $0x7f0] sm:$0xff]
        %v554 = vld [vmem:[%s204 + $0x7f8] sm:$0xff]
        %v555 = vld [vmem:[%s204 + $0x800] sm:$0xff]
        %v556 = vld [vmem:[%s204 + $0x808] sm:$0xff]
        %v557 = vld [vmem:[%s204 + $0x810] sm:$0xff]
        %v558 = vld [vmem:[%s204 + $0x818] sm:$0xff]
        %v559 = vld [vmem:[%s204 + $0x820] sm:$0xff]
        %v560 = vld [vmem:[%s204 + $0x828] sm:$0xff]
        %v561 = vld [vmem:[%s204 + $0x830] sm:$0xff]
        %v562 = vld [vmem:[%s204 + $0x838] sm:$0xff]
        %v563 = vld [vmem:[%s204 + $0x840] sm:$0xff]
        %v564 = vld [vmem:[%s204 + $0x848] sm:$0xff]
        %v565 = vld [vmem:[%s204 + $0x850] sm:$0xff]
        %v566 = vld [vmem:[%s204 + $0x858] sm:$0xff]
        %v567 = vld [vmem:[%s204 + $0x860] sm:$0xff]
        %v568 = vld [vmem:[%s204 + $0x868] sm:$0xff]
        %v569 = vld [vmem:[%s204 + $0x870] sm:$0xff]
        %v570 = vld [vmem:[%s204 + $0x878] sm:$0xff]
        %v571 = vld [vmem:[%s204 + $0x880] sm:$0xff]
        %v572 = vld [vmem:[%s204 + $0x888] sm:$0xff]
        %v573 = vld [vmem:[%s204 + $0x890] sm:$0xff]
        %v574 = vld [vmem:[%s204 + $0x898] sm:$0xff]
        %v575 = vld [vmem:[%s204 + $0x8a0] sm:$0xff]
        %v576 = vld [vmem:[%s204 + $0x8a8] sm:$0xff]
        %v577 = vld [vmem:[%s204 + $0x8b0] sm:$0xff]
        %v578 = vld [vmem:[%s204 + $0x8b8] sm:$0xff]
        %v579 = vld [vmem:[%s204 + $0x8c0] sm:$0xff]
        %v580 = vld [vmem:[%s204 + $0x8c8] sm:$0xff]
        %v581 = vld [vmem:[%s204 + $0x8d0] sm:$0xff]
        %v582 = vld [vmem:[%s204 + $0x8d8] sm:$0xff]
        %v583 = vld [vmem:[%s204 + $0x8e0] sm:$0xff]
        %v584 = vld [vmem:[%s204 + $0x8e8] sm:$0xff]
        %v585 = vld [vmem:[%s204 + $0x8f0] sm:$0xff]
        %v586 = vld [vmem:[%s204 + $0x8f8] sm:$0xff]
        %v587 = vld [vmem:[%s204 + $0x900] sm:$0xff]
        %v588 = vld [vmem:[%s204 + $0x908] sm:$0xff]
        %v589 = vld [vmem:[%s204 + $0x910] sm:$0xff]
        %v590 = vld [vmem:[%s204 + $0x918] sm:$0xff]
        %v591 = vld [vmem:[%s204 + $0x920] sm:$0xff]
        %v592 = vld [vmem:[%s204 + $0x928] sm:$0xff]
        %v593 = vld [vmem:[%s204 + $0x930] sm:$0xff]
        %v594 = vld [vmem:[%s204 + $0x938] sm:$0xff]
        %v595 = vld [vmem:[%s204 + $0x940] sm:$0xff]
        %v596 = vld [vmem:[%s204 + $0x948] sm:$0xff]
        %v597 = vld [vmem:[%s204 + $0x950] sm:$0xff]
        %v598 = vld [vmem:[%s204 + $0x958] sm:$0xff]
        %v599 = vld [vmem:[%s204 + $0x960] sm:$0xff]
        %v600 = vld [vmem:[%s204 + $0x968] sm:$0xff]
        %v601 = vld [vmem:[%s204 + $0x970] sm:$0xff]
        %v602 = vld [vmem:[%s204 + $0x978] sm:$0xff]
        %v603 = vld [vmem:[%s204 + $0x980] sm:$0xff]
        %v604 = vld [vmem:[%s204 + $0x988] sm:$0xff]
        %v605 = vld [vmem:[%s204 + $0x990] sm:$0xff]
        %v606 = vld [vmem:[%s204 + $0x998] sm:$0xff]
        %v607 = vld [vmem:[%s204 + $0x9a0] sm:$0xff]
        %v608 = vld [vmem:[%s204 + $0x9a8] sm:$0xff]
        %v609 = vld [vmem:[%s204 + $0x9b0] sm:$0xff]
        %v610 = vld [vmem:[%s204 + $0x9b8] sm:$0xff]
        %v611 = vld [vmem:[%s204 + $0x9c0] sm:$0xff]
        %v612 = vld [vmem:[%s204 + $0x9c8] sm:$0xff]
        %v613 = vld [vmem:[%s204 + $0x9d0] sm:$0xff]
        %v614 = vld [vmem:[%s204 + $0x9d8] sm:$0xff]
        %v615 = vld [vmem:[%s204 + $0x9e0] sm:$0xff]
        %v616 = vld [vmem:[%s204 + $0x9e8] sm:$0xff]
        %v617 = vld [vmem:[%s204 + $0x9f0] sm:$0xff]
        %v618 = vld [vmem:[%s204 + $0x9f8] sm:$0xff]
        %v619 = vld [vmem:[%s204 + $0xa00] sm:$0xff]
        %v620 = vld [vmem:[%s204 + $0xa08] sm:$0xff]
        %v621 = vld [vmem:[%s204 + $0xa10] sm:$0xff]
        %v622 = vld [vmem:[%s204 + $0xa18] sm:$0xff]
        %v623 = vld [vmem:[%s204 + $0xa20] sm:$0xff]
        %v624 = vld [vmem:[%s204 + $0xa28] sm:$0xff]
        %v625 = vld [vmem:[%s204 + $0xa30] sm:$0xff]
        %v626 = vld [vmem:[%s204 + $0xa38] sm:$0xff]
        %v627 = vld [vmem:[%s204 + $0xa40] sm:$0xff]
        %v628 = vld [vmem:[%s204 + $0xa48] sm:$0xff]
        %v629 = vld [vmem:[%s204 + $0xa50] sm:$0xff]
        %v630 = vld [vmem:[%s204 + $0xa58] sm:$0xff]
        %v631 = vld [vmem:[%s204 + $0xa60] sm:$0xff]
        %v632 = vld [vmem:[%s204 + $0xa68] sm:$0xff]
        %v633 = vld [vmem:[%s204 + $0xa70] sm:$0xff]
        %v634 = vld [vmem:[%s204 + $0xa78] sm:$0xff]
        %v635 = vld [vmem:[%s204 + $0xa80] sm:$0xff]
        %v636 = vld [vmem:[%s204 + $0xa88] sm:$0xff]
        %v637 = vld [vmem:[%s204 + $0xa90] sm:$0xff]
        %v638 = vld [vmem:[%s204 + $0xa98] sm:$0xff]
        %v639 = vld [vmem:[%s204 + $0xaa0] sm:$0xff]
        %v640 = vld [vmem:[%s204 + $0xaa8] sm:$0xff]
        %v641 = vld [vmem:[%s204 + $0xab0] sm:$0xff]
        %v642 = vld [vmem:[%s204 + $0xab8] sm:$0xff]
        %v643 = vld [vmem:[%s204 + $0xac0] sm:$0xff]
        %v644 = vld [vmem:[%s204 + $0xac8] sm:$0xff]
        %v645 = vld [vmem:[%s204 + $0xad0] sm:$0xff]
        %v646 = vld [vmem:[%s204 + $0xad8] sm:$0xff]
        %v647 = vld [vmem:[%s204 + $0xae0] sm:$0xff]
        %v648 = vld [vmem:[%s204 + $0xae8] sm:$0xff]
        %v649 = vld [vmem:[%s204 + $0xaf0] sm:$0xff]
        %v650 = vld [vmem:[%s204 + $0xaf8] sm:$0xff]
        %v651 = vld [vmem:[%s204 + $0xb00] sm:$0xff]
        %v652 = vld [vmem:[%s204 + $0xb08] sm:$0xff]
        %v653 = vld [vmem:[%s204 + $0xb10] sm:$0xff]
        %v654 = vld [vmem:[%s204 + $0xb18] sm:$0xff]
        %v655 = vld [vmem:[%s204 + $0xb20] sm:$0xff]
        %v656 = vld [vmem:[%s204 + $0xb28] sm:$0xff]
        %v657 = vld [vmem:[%s204 + $0xb30] sm:$0xff]
        %v658 = vld [vmem:[%s204 + $0xb38] sm:$0xff]
        %v659 = vld [vmem:[%s204 + $0xb40] sm:$0xff]
        %v660 = vld [vmem:[%s204 + $0xb48] sm:$0xff]
        %v661 = vld [vmem:[%s204 + $0xb50] sm:$0xff]
        %v662 = vld [vmem:[%s204 + $0xb58] sm:$0xff]
        %v663 = vld [vmem:[%s204 + $0xb60] sm:$0xff]
        %v664 = vld [vmem:[%s204 + $0xb68] sm:$0xff]
        %v665 = vld [vmem:[%s204 + $0xb70] sm:$0xff]
        %v666 = vld [vmem:[%s204 + $0xb78] sm:$0xff]
        %v667 = vld [vmem:[%s204 + $0xb80] sm:$0xff]
        %v668 = vld [vmem:[%s204 + $0xb88] sm:$0xff]
        %v669 = vld [vmem:[%s204 + $0xb90] sm:$0xff]
        %v670 = vld [vmem:[%s204 + $0xb98] sm:$0xff]
        %v671 = vld [vmem:[%s204 + $0xba0] sm:$0xff]
        %v672 = vld [vmem:[%s204 + $0xba8] sm:$0xff]
        %v673 = vld [vmem:[%s204 + $0xbb0] sm:$0xff]
        %v674 = vld [vmem:[%s204 + $0xbb8] sm:$0xff]
        %v675 = vld [vmem:[%s204 + $0xbc0] sm:$0xff]
        %v676 = vld [vmem:[%s204 + $0xbc8] sm:$0xff]
        %v677 = vld [vmem:[%s204 + $0xbd0] sm:$0xff]
        %v678 = vld [vmem:[%s204 + $0xbd8] sm:$0xff]
        %v679 = vld [vmem:[%s204 + $0xbe0] sm:$0xff]
        %v680 = vld [vmem:[%s204 + $0xbe8] sm:$0xff]
        %v681 = vld [vmem:[%s204 + $0xbf0] sm:$0xff]
        %v682 = vld [vmem:[%s204 + $0xbf8] sm:$0xff]
        %v683 = vld [vmem:[%s204 + $0xc00] sm:$0xff]
        %v684 = vld [vmem:[%s204 + $0xc08] sm:$0xff]
        %v685 = vld [vmem:[%s204 + $0xc10] sm:$0xff]
        %v686 = vld [vmem:[%s204 + $0xc18] sm:$0xff]
        %v687 = vld [vmem:[%s204 + $0xc20] sm:$0xff]
        %v688 = vld [vmem:[%s204 + $0xc28] sm:$0xff]
        %v689 = vld [vmem:[%s204 + $0xc30] sm:$0xff]
        %v690 = vld [vmem:[%s204 + $0xc38] sm:$0xff]
        %v691 = vld [vmem:[%s204 + $0xc40] sm:$0xff]
        %v692 = vld [vmem:[%s204 + $0xc48] sm:$0xff]
        %v693 = vld [vmem:[%s204 + $0xc50] sm:$0xff]
        %v694 = vld [vmem:[%s204 + $0xc58] sm:$0xff]
        %v695 = vld [vmem:[%s204 + $0xc60] sm:$0xff]
        %v696 = vld [vmem:[%s204 + $0xc68] sm:$0xff]
        %v697 = vld [vmem:[%s204 + $0xc70] sm:$0xff]
        %v698 = vld [vmem:[%s204 + $0xc78] sm:$0xff]
        %v699 = vld [vmem:[%s204 + $0xc80] sm:$0xff]
        %v700 = vld [vmem:[%s204 + $0xc88] sm:$0xff]
        %v701 = vld [vmem:[%s204 + $0xc90] sm:$0xff]
        %v702 = vld [vmem:[%s204 + $0xc98] sm:$0xff]
        %v703 = vld [vmem:[%s204 + $0xca0] sm:$0xff]
        %v704 = vld [vmem:[%s204 + $0xca8] sm:$0xff]
        %v705 = vld [vmem:[%s204 + $0xcb0] sm:$0xff]
        %v706 = vld [vmem:[%s204 + $0xcb8] sm:$0xff]
        %v707 = vld [vmem:[%s204 + $0xcc0] sm:$0xff]
        %v708 = vld [vmem:[%s204 + $0xcc8] sm:$0xff]
        %v709 = vld [vmem:[%s204 + $0xcd0] sm:$0xff]
        %v710 = vld [vmem:[%s204 + $0xcd8] sm:$0xff]
        %v711 = vld [vmem:[%s204 + $0xce0] sm:$0xff]
        %v712 = vld [vmem:[%s204 + $0xce8] sm:$0xff]
        %v713 = vld [vmem:[%s204 + $0xcf0] sm:$0xff]
        %v714 = vld [vmem:[%s204 + $0xcf8] sm:$0xff]
        %v715 = vld [vmem:[%s204 + $0xd00] sm:$0xff]
        %v716 = vld [vmem:[%s204 + $0xd08] sm:$0xff]
        %v717 = vld [vmem:[%s204 + $0xd10] sm:$0xff]
        %v718 = vld [vmem:[%s204 + $0xd18] sm:$0xff]
        %v719 = vld [vmem:[%s204 + $0xd20] sm:$0xff]
        %v720 = vld [vmem:[%s204 + $0xd28] sm:$0xff]
        %v721 = vld [vmem:[%s204 + $0xd30] sm:$0xff]
        %v722 = vld [vmem:[%s204 + $0xd38] sm:$0xff]
        %v723 = vld [vmem:[%s204 + $0xd40] sm:$0xff]
        %v724 = vld [vmem:[%s204 + $0xd48] sm:$0xff]
        %v725 = vld [vmem:[%s204 + $0xd50] sm:$0xff]
        %v726 = vld [vmem:[%s204 + $0xd58] sm:$0xff]
        %v727 = vld [vmem:[%s204 + $0xd60] sm:$0xff]
        %v728 = vld [vmem:[%s204 + $0xd68] sm:$0xff]
        %v729 = vld [vmem:[%s204 + $0xd70] sm:$0xff]
        %v730 = vld [vmem:[%s204 + $0xd78] sm:$0xff]
        %v731 = vld [vmem:[%s204 + $0xd80] sm:$0xff]
        %v732 = vld [vmem:[%s204 + $0xd88] sm:$0xff]
        %v733 = vld [vmem:[%s204 + $0xd90] sm:$0xff]
        %v734 = vld [vmem:[%s204 + $0xd98] sm:$0xff]
        %v735 = vld [vmem:[%s204 + $0xda0] sm:$0xff]
        %v736 = vld [vmem:[%s204 + $0xda8] sm:$0xff]
        %v737 = vld [vmem:[%s204 + $0xdb0] sm:$0xff]
        %v738 = vld [vmem:[%s204 + $0xdb8] sm:$0xff]
        %v739 = vld [vmem:[%s204 + $0xdc0] sm:$0xff]
        %v740 = vld [vmem:[%s204 + $0xdc8] sm:$0xff]
        %v741 = vld [vmem:[%s204 + $0xdd0] sm:$0xff]
        %v742 = vld [vmem:[%s204 + $0xdd8] sm:$0xff]
        %v743 = vld [vmem:[%s204 + $0xde0] sm:$0xff]
        %v744 = vld [vmem:[%s204 + $0xde8] sm:$0xff]
        %v745 = vld [vmem:[%s204 + $0xdf0] sm:$0xff]
        %v746 = vld [vmem:[%s204 + $0xdf8] sm:$0xff]
        %v747 = vld [vmem:[%s204 + $0xe00] sm:$0xff]
        %v748 = vld [vmem:[%s204 + $0xe08] sm:$0xff]
        %v749 = vld [vmem:[%s204 + $0xe10] sm:$0xff]
        %v750 = vld [vmem:[%s204 + $0xe18] sm:$0xff]
        %v751 = vld [vmem:[%s204 + $0xe20] sm:$0xff]
        %v752 = vld [vmem:[%s204 + $0xe28] sm:$0xff]
        %v753 = vld [vmem:[%s204 + $0xe30] sm:$0xff]
        %v754 = vld [vmem:[%s204 + $0xe38] sm:$0xff]
        %v755 = vld [vmem:[%s204 + $0xe40] sm:$0xff]
        %v756 = vld [vmem:[%s204 + $0xe48] sm:$0xff]
        %v757 = vld [vmem:[%s204 + $0xe50] sm:$0xff]
        %v758 = vld [vmem:[%s204 + $0xe58] sm:$0xff]
        %v759 = vld [vmem:[%s204 + $0xe60] sm:$0xff]
        %v760 = vld [vmem:[%s204 + $0xe68] sm:$0xff]
        %v761 = vld [vmem:[%s204 + $0xe70] sm:$0xff]
        %v762 = vld [vmem:[%s204 + $0xe78] sm:$0xff]
        %v763 = vld [vmem:[%s204 + $0xe80] sm:$0xff]
        %v764 = vld [vmem:[%s204 + $0xe88] sm:$0xff]
        %v765 = vld [vmem:[%s204 + $0xe90] sm:$0xff]
        %v766 = vld [vmem:[%s204 + $0xe98] sm:$0xff]
        %v767 = vld [vmem:[%s204 + $0xea0] sm:$0xff]
        %v768 = vld [vmem:[%s204 + $0xea8] sm:$0xff]
        %v769 = vld [vmem:[%s204 + $0xeb0] sm:$0xff]
        %v770 = vld [vmem:[%s204 + $0xeb8] sm:$0xff]
        %v771 = vld [vmem:[%s204 + $0xec0] sm:$0xff]
        %v772 = vld [vmem:[%s204 + $0xec8] sm:$0xff]
        %v773 = vld [vmem:[%s204 + $0xed0] sm:$0xff]
        %v774 = vld [vmem:[%s204 + $0xed8] sm:$0xff]
        %v775 = vld [vmem:[%s204 + $0xee0] sm:$0xff]
        %v776 = vld [vmem:[%s204 + $0xee8] sm:$0xff]
        %v777 = vld [vmem:[%s204 + $0xef0] sm:$0xff]
        %v778 = vld [vmem:[%s204 + $0xef8] sm:$0xff]
        %v779 = vld [vmem:[%s204 + $0xf00] sm:$0xff]
        %v780 = vld [vmem:[%s204 + $0xf08] sm:$0xff]
        %v781 = vld [vmem:[%s204 + $0xf10] sm:$0xff]
        %v782 = vld [vmem:[%s204 + $0xf18] sm:$0xff]
        %v783 = vld [vmem:[%s204 + $0xf20] sm:$0xff]
        %v784 = vld [vmem:[%s204 + $0xf28] sm:$0xff]
        %v785 = vld [vmem:[%s204 + $0xf30] sm:$0xff]
        %v786 = vld [vmem:[%s204 + $0xf38] sm:$0xff]
        %v787 = vld [vmem:[%s204 + $0xf40] sm:$0xff]
        %v788 = vld [vmem:[%s204 + $0xf48] sm:$0xff]
        %v789 = vld [vmem:[%s204 + $0xf50] sm:$0xff]
        %v790 = vld [vmem:[%s204 + $0xf58] sm:$0xff]
        %v791 = vld [vmem:[%s204 + $0xf60] sm:$0xff]
        %v792 = vld [vmem:[%s204 + $0xf68] sm:$0xff]
        %v793 = vld [vmem:[%s204 + $0xf70] sm:$0xff]
        %v794 = vld [vmem:[%s204 + $0xf78] sm:$0xff]
        %v795 = vld [vmem:[%s204 + $0xf80] sm:$0xff]
        %v796 = vld [vmem:[%s204 + $0xf88] sm:$0xff]
        %v797 = vld [vmem:[%s204 + $0xf90] sm:$0xff]
        %v798 = vld [vmem:[%s204 + $0xf98] sm:$0xff]
        %v799 = vld [vmem:[%s204 + $0xfa0] sm:$0xff]
        %v800 = vld [vmem:[%s204 + $0xfa8] sm:$0xff]
        %v801 = vld [vmem:[%s204 + $0xfb0] sm:$0xff]
        %v802 = vld [vmem:[%s204 + $0xfb8] sm:$0xff]
        %v803 = vld [vmem:[%s204 + $0xfc0] sm:$0xff]
        %v804 = vld [vmem:[%s204 + $0xfc8] sm:$0xff]
        %v805 = vld [vmem:[%s204 + $0xfd0] sm:$0xff]
        %v806 = vld [vmem:[%s204 + $0xfd8] sm:$0xff]
        %v807 = vld [vmem:[%s204 + $0xfe0] sm:$0xff]
        %v808 = vld [vmem:[%s204 + $0xfe8] sm:$0xff]
        %v809 = vld [vmem:[%s204 + $0xff0] sm:$0xff]
        %v810 = vld [vmem:[%s204 + $0xff8] sm:$0xff]
        %v1323 = vunpack.c.l.b16 %v299
        %v1324 = vunpack.c.h.b16 %v299
        %v1325 = vunpack.c.l.b16 %v300
        %v1326 = vunpack.c.h.b16 %v300
        %v1327 = vunpack.c.l.b16 %v301
        %v1328 = vunpack.c.h.b16 %v301
        %v1329 = vunpack.c.l.b16 %v302
        %v1330 = vunpack.c.h.b16 %v302
        %v1331 = vunpack.c.l.b16 %v303
        %v1332 = vunpack.c.h.b16 %v303
        %v1333 = vunpack.c.l.b16 %v304
        %v1334 = vunpack.c.h.b16 %v304
        %v1335 = vunpack.c.l.b16 %v305
        %v1336 = vunpack.c.h.b16 %v305
        %v1337 = vunpack.c.l.b16 %v306
        %v1338 = vunpack.c.h.b16 %v306
        %v1339 = vunpack.c.l.b16 %v307
        %v1340 = vunpack.c.h.b16 %v307
        %v1341 = vunpack.c.l.b16 %v308
        %v1342 = vunpack.c.h.b16 %v308
        %v1343 = vunpack.c.l.b16 %v309
        %v1344 = vunpack.c.h.b16 %v309
        %v1345 = vunpack.c.l.b16 %v310
        %v1346 = vunpack.c.h.b16 %v310
        %v1347 = vunpack.c.l.b16 %v311
        %v1348 = vunpack.c.h.b16 %v311
        %v1349 = vunpack.c.l.b16 %v312
        %v1350 = vunpack.c.h.b16 %v312
        %v1351 = vunpack.c.l.b16 %v313
        %v1352 = vunpack.c.h.b16 %v313
        %v1353 = vunpack.c.l.b16 %v314
        %v1354 = vunpack.c.h.b16 %v314
        %v1355 = vunpack.c.l.b16 %v315
        %v1356 = vunpack.c.h.b16 %v315
        %v1357 = vunpack.c.l.b16 %v316
        %v1358 = vunpack.c.h.b16 %v316
        %v1359 = vunpack.c.l.b16 %v317
        %v1360 = vunpack.c.h.b16 %v317
        %v1361 = vunpack.c.l.b16 %v318
        %v1362 = vunpack.c.h.b16 %v318
        %v1363 = vunpack.c.l.b16 %v319
        %v1364 = vunpack.c.h.b16 %v319
        %v1365 = vunpack.c.l.b16 %v320
        %v1366 = vunpack.c.h.b16 %v320
        %v1367 = vunpack.c.l.b16 %v321
        %v1368 = vunpack.c.h.b16 %v321
        %v1369 = vunpack.c.l.b16 %v322
        %v1370 = vunpack.c.h.b16 %v322
        %v1371 = vunpack.c.l.b16 %v323
        %v1372 = vunpack.c.h.b16 %v323
        %v1373 = vunpack.c.l.b16 %v324
        %v1374 = vunpack.c.h.b16 %v324
        %v1375 = vunpack.c.l.b16 %v325
        %v1376 = vunpack.c.h.b16 %v325
        %v1377 = vunpack.c.l.b16 %v326
        %v1378 = vunpack.c.h.b16 %v326
        %v1379 = vunpack.c.l.b16 %v327
        %v1380 = vunpack.c.h.b16 %v327
        %v1381 = vunpack.c.l.b16 %v328
        %v1382 = vunpack.c.h.b16 %v328
        %v1383 = vunpack.c.l.b16 %v329
        %v1384 = vunpack.c.h.b16 %v329
        %v1385 = vunpack.c.l.b16 %v330
        %v1386 = vunpack.c.h.b16 %v330
        %v1387 = vunpack.c.l.b16 %v331
        %v1388 = vunpack.c.h.b16 %v331
        %v1389 = vunpack.c.l.b16 %v332
        %v1390 = vunpack.c.h.b16 %v332
        %v1391 = vunpack.c.l.b16 %v333
        %v1392 = vunpack.c.h.b16 %v333
        %v1393 = vunpack.c.l.b16 %v334
        %v1394 = vunpack.c.h.b16 %v334
        %v1395 = vunpack.c.l.b16 %v335
        %v1396 = vunpack.c.h.b16 %v335
        %v1397 = vunpack.c.l.b16 %v336
        %v1398 = vunpack.c.h.b16 %v336
        %v1399 = vunpack.c.l.b16 %v337
        %v1400 = vunpack.c.h.b16 %v337
        %v1401 = vunpack.c.l.b16 %v338
        %v1402 = vunpack.c.h.b16 %v338
        %v1403 = vunpack.c.l.b16 %v339
        %v1404 = vunpack.c.h.b16 %v339
        %v1405 = vunpack.c.l.b16 %v340
        %v1406 = vunpack.c.h.b16 %v340
        %v1407 = vunpack.c.l.b16 %v341
        %v1408 = vunpack.c.h.b16 %v341
        %v1409 = vunpack.c.l.b16 %v342
        %v1410 = vunpack.c.h.b16 %v342
        %v1411 = vunpack.c.l.b16 %v343
        %v1412 = vunpack.c.h.b16 %v343
        %v1413 = vunpack.c.l.b16 %v344
        %v1414 = vunpack.c.h.b16 %v344
        %v1415 = vunpack.c.l.b16 %v345
        %v1416 = vunpack.c.h.b16 %v345
        %v1417 = vunpack.c.l.b16 %v346
        %v1418 = vunpack.c.h.b16 %v346
        %v1419 = vunpack.c.l.b16 %v347
        %v1420 = vunpack.c.h.b16 %v347
        %v1421 = vunpack.c.l.b16 %v348
        %v1422 = vunpack.c.h.b16 %v348
        %v1423 = vunpack.c.l.b16 %v349
        %v1424 = vunpack.c.h.b16 %v349
        %v1425 = vunpack.c.l.b16 %v350
        %v1426 = vunpack.c.h.b16 %v350
        %v1427 = vunpack.c.l.b16 %v351
        %v1428 = vunpack.c.h.b16 %v351
        %v1429 = vunpack.c.l.b16 %v352
        %v1430 = vunpack.c.h.b16 %v352
        %v1431 = vunpack.c.l.b16 %v353
        %v1432 = vunpack.c.h.b16 %v353
        %v1433 = vunpack.c.l.b16 %v354
        %v1434 = vunpack.c.h.b16 %v354
        %v1435 = vunpack.c.l.b16 %v355
        %v1436 = vunpack.c.h.b16 %v355
        %v1437 = vunpack.c.l.b16 %v356
        %v1438 = vunpack.c.h.b16 %v356
        %v1439 = vunpack.c.l.b16 %v357
        %v1440 = vunpack.c.h.b16 %v357
        %v1441 = vunpack.c.l.b16 %v358
        %v1442 = vunpack.c.h.b16 %v358
        %v1443 = vunpack.c.l.b16 %v359
        %v1444 = vunpack.c.h.b16 %v359
        %v1445 = vunpack.c.l.b16 %v360
        %v1446 = vunpack.c.h.b16 %v360
        %v1447 = vunpack.c.l.b16 %v361
        %v1448 = vunpack.c.h.b16 %v361
        %v1449 = vunpack.c.l.b16 %v362
        %v1450 = vunpack.c.h.b16 %v362
        %v1451 = vunpack.c.l.b16 %v363
        %v1452 = vunpack.c.h.b16 %v363
        %v1453 = vunpack.c.l.b16 %v364
        %v1454 = vunpack.c.h.b16 %v364
        %v1455 = vunpack.c.l.b16 %v365
        %v1456 = vunpack.c.h.b16 %v365
        %v1457 = vunpack.c.l.b16 %v366
        %v1458 = vunpack.c.h.b16 %v366
        %v1459 = vunpack.c.l.b16 %v367
        %v1460 = vunpack.c.h.b16 %v367
        %v1461 = vunpack.c.l.b16 %v368
        %v1462 = vunpack.c.h.b16 %v368
        %v1463 = vunpack.c.l.b16 %v369
        %v1464 = vunpack.c.h.b16 %v369
        %v1465 = vunpack.c.l.b16 %v370
        %v1466 = vunpack.c.h.b16 %v370
        %v1467 = vunpack.c.l.b16 %v371
        %v1468 = vunpack.c.h.b16 %v371
        %v1469 = vunpack.c.l.b16 %v372
        %v1470 = vunpack.c.h.b16 %v372
        %v1471 = vunpack.c.l.b16 %v373
        %v1472 = vunpack.c.h.b16 %v373
        %v1473 = vunpack.c.l.b16 %v374
        %v1474 = vunpack.c.h.b16 %v374
        %v1475 = vunpack.c.l.b16 %v375
        %v1476 = vunpack.c.h.b16 %v375
        %v1477 = vunpack.c.l.b16 %v376
        %v1478 = vunpack.c.h.b16 %v376
        %v1479 = vunpack.c.l.b16 %v377
        %v1480 = vunpack.c.h.b16 %v377
        %v1481 = vunpack.c.l.b16 %v378
        %v1482 = vunpack.c.h.b16 %v378
        %v1483 = vunpack.c.l.b16 %v379
        %v1484 = vunpack.c.h.b16 %v379
        %v1485 = vunpack.c.l.b16 %v380
        %v1486 = vunpack.c.h.b16 %v380
        %v1487 = vunpack.c.l.b16 %v381
        %v1488 = vunpack.c.h.b16 %v381
        %v1489 = vunpack.c.l.b16 %v382
        %v1490 = vunpack.c.h.b16 %v382
        %v1491 = vunpack.c.l.b16 %v383
        %v1492 = vunpack.c.h.b16 %v383
        %v1493 = vunpack.c.l.b16 %v384
        %v1494 = vunpack.c.h.b16 %v384
        %v1495 = vunpack.c.l.b16 %v385
        %v1496 = vunpack.c.h.b16 %v385
        %v1497 = vunpack.c.l.b16 %v386
        %v1498 = vunpack.c.h.b16 %v386
        %v1499 = vunpack.c.l.b16 %v387
        %v1500 = vunpack.c.h.b16 %v387
        %v1501 = vunpack.c.l.b16 %v388
        %v1502 = vunpack.c.h.b16 %v388
        %v1503 = vunpack.c.l.b16 %v389
        %v1504 = vunpack.c.h.b16 %v389
        %v1505 = vunpack.c.l.b16 %v390
        %v1506 = vunpack.c.h.b16 %v390
        %v1507 = vunpack.c.l.b16 %v391
        %v1508 = vunpack.c.h.b16 %v391
        %v1509 = vunpack.c.l.b16 %v392
        %v1510 = vunpack.c.h.b16 %v392
        %v1511 = vunpack.c.l.b16 %v393
        %v1512 = vunpack.c.h.b16 %v393
        %v1513 = vunpack.c.l.b16 %v394
        %v1514 = vunpack.c.h.b16 %v394
        %v1515 = vunpack.c.l.b16 %v395
        %v1516 = vunpack.c.h.b16 %v395
        %v1517 = vunpack.c.l.b16 %v396
        %v1518 = vunpack.c.h.b16 %v396
        %v1519 = vunpack.c.l.b16 %v397
        %v1520 = vunpack.c.h.b16 %v397
        %v1521 = vunpack.c.l.b16 %v398
        %v1522 = vunpack.c.h.b16 %v398
        %v1523 = vunpack.c.l.b16 %v399
        %v1524 = vunpack.c.h.b16 %v399
        %v1525 = vunpack.c.l.b16 %v400
        %v1526 = vunpack.c.h.b16 %v400
        %v1527 = vunpack.c.l.b16 %v401
        %v1528 = vunpack.c.h.b16 %v401
        %v1529 = vunpack.c.l.b16 %v402
        %v1530 = vunpack.c.h.b16 %v402
        %v1531 = vunpack.c.l.b16 %v403
        %v1532 = vunpack.c.h.b16 %v403
        %v1533 = vunpack.c.l.b16 %v404
        %v1534 = vunpack.c.h.b16 %v404
        %v1535 = vunpack.c.l.b16 %v405
        %v1536 = vunpack.c.h.b16 %v405
        %v1537 = vunpack.c.l.b16 %v406
        %v1538 = vunpack.c.h.b16 %v406
        %v1539 = vunpack.c.l.b16 %v407
        %v1540 = vunpack.c.h.b16 %v407
        %v1541 = vunpack.c.l.b16 %v408
        %v1542 = vunpack.c.h.b16 %v408
        %v1543 = vunpack.c.l.b16 %v409
        %v1544 = vunpack.c.h.b16 %v409
        %v1545 = vunpack.c.l.b16 %v410
        %v1546 = vunpack.c.h.b16 %v410
        %v1547 = vunpack.c.l.b16 %v411
        %v1548 = vunpack.c.h.b16 %v411
        %v1549 = vunpack.c.l.b16 %v412
        %v1550 = vunpack.c.h.b16 %v412
        %v1551 = vunpack.c.l.b16 %v413
        %v1552 = vunpack.c.h.b16 %v413
        %v1553 = vunpack.c.l.b16 %v414
        %v1554 = vunpack.c.h.b16 %v414
        %v1555 = vunpack.c.l.b16 %v415
        %v1556 = vunpack.c.h.b16 %v415
        %v1557 = vunpack.c.l.b16 %v416
        %v1558 = vunpack.c.h.b16 %v416
        %v1559 = vunpack.c.l.b16 %v417
        %v1560 = vunpack.c.h.b16 %v417
        %v1561 = vunpack.c.l.b16 %v418
        %v1562 = vunpack.c.h.b16 %v418
        %v1563 = vunpack.c.l.b16 %v419
        %v1564 = vunpack.c.h.b16 %v419
        %v1565 = vunpack.c.l.b16 %v420
        %v1566 = vunpack.c.h.b16 %v420
        %v1567 = vunpack.c.l.b16 %v421
        %v1568 = vunpack.c.h.b16 %v421
        %v1569 = vunpack.c.l.b16 %v422
        %v1570 = vunpack.c.h.b16 %v422
        %v1571 = vunpack.c.l.b16 %v423
        %v1572 = vunpack.c.h.b16 %v423
        %v1573 = vunpack.c.l.b16 %v424
        %v1574 = vunpack.c.h.b16 %v424
        %v1575 = vunpack.c.l.b16 %v425
        %v1576 = vunpack.c.h.b16 %v425
        %v1577 = vunpack.c.l.b16 %v426
        %v1578 = vunpack.c.h.b16 %v426
        %v1579 = vunpack.c.l.b16 %v427
        %v1580 = vunpack.c.h.b16 %v427
        %v1581 = vunpack.c.l.b16 %v428
        %v1582 = vunpack.c.h.b16 %v428
        %v1583 = vunpack.c.l.b16 %v429
        %v1584 = vunpack.c.h.b16 %v429
        %v1585 = vunpack.c.l.b16 %v430
        %v1586 = vunpack.c.h.b16 %v430
        %v1587 = vunpack.c.l.b16 %v431
        %v1588 = vunpack.c.h.b16 %v431
        %v1589 = vunpack.c.l.b16 %v432
        %v1590 = vunpack.c.h.b16 %v432
        %v1591 = vunpack.c.l.b16 %v433
        %v1592 = vunpack.c.h.b16 %v433
        %v1593 = vunpack.c.l.b16 %v434
        %v1594 = vunpack.c.h.b16 %v434
        %v1595 = vunpack.c.l.b16 %v435
        %v1596 = vunpack.c.h.b16 %v435
        %v1597 = vunpack.c.l.b16 %v436
        %v1598 = vunpack.c.h.b16 %v436
        %v1599 = vunpack.c.l.b16 %v437
        %v1600 = vunpack.c.h.b16 %v437
        %v1601 = vunpack.c.l.b16 %v438
        %v1602 = vunpack.c.h.b16 %v438
        %v1603 = vunpack.c.l.b16 %v439
        %v1604 = vunpack.c.h.b16 %v439
        %v1605 = vunpack.c.l.b16 %v440
        %v1606 = vunpack.c.h.b16 %v440
        %v1607 = vunpack.c.l.b16 %v441
        %v1608 = vunpack.c.h.b16 %v441
        %v1609 = vunpack.c.l.b16 %v442
        %v1610 = vunpack.c.h.b16 %v442
        %v1611 = vunpack.c.l.b16 %v443
        %v1612 = vunpack.c.h.b16 %v443
        %v1613 = vunpack.c.l.b16 %v444
        %v1614 = vunpack.c.h.b16 %v444
        %v1615 = vunpack.c.l.b16 %v445
        %v1616 = vunpack.c.h.b16 %v445
        %v1617 = vunpack.c.l.b16 %v446
        %v1618 = vunpack.c.h.b16 %v446
        %v1619 = vunpack.c.l.b16 %v447
        %v1620 = vunpack.c.h.b16 %v447
        %v1621 = vunpack.c.l.b16 %v448
        %v1622 = vunpack.c.h.b16 %v448
        %v1623 = vunpack.c.l.b16 %v449
        %v1624 = vunpack.c.h.b16 %v449
        %v1625 = vunpack.c.l.b16 %v450
        %v1626 = vunpack.c.h.b16 %v450
        %v1627 = vunpack.c.l.b16 %v451
        %v1628 = vunpack.c.h.b16 %v451
        %v1629 = vunpack.c.l.b16 %v452
        %v1630 = vunpack.c.h.b16 %v452
        %v1631 = vunpack.c.l.b16 %v453
        %v1632 = vunpack.c.h.b16 %v453
        %v1633 = vunpack.c.l.b16 %v454
        %v1634 = vunpack.c.h.b16 %v454
        %v1635 = vunpack.c.l.b16 %v455
        %v1636 = vunpack.c.h.b16 %v455
        %v1637 = vunpack.c.l.b16 %v456
        %v1638 = vunpack.c.h.b16 %v456
        %v1639 = vunpack.c.l.b16 %v457
        %v1640 = vunpack.c.h.b16 %v457
        %v1641 = vunpack.c.l.b16 %v458
        %v1642 = vunpack.c.h.b16 %v458
        %v1643 = vunpack.c.l.b16 %v459
        %v1644 = vunpack.c.h.b16 %v459
        %v1645 = vunpack.c.l.b16 %v460
        %v1646 = vunpack.c.h.b16 %v460
        %v1647 = vunpack.c.l.b16 %v461
        %v1648 = vunpack.c.h.b16 %v461
        %v1649 = vunpack.c.l.b16 %v462
        %v1650 = vunpack.c.h.b16 %v462
        %v1651 = vunpack.c.l.b16 %v463
        %v1652 = vunpack.c.h.b16 %v463
        %v1653 = vunpack.c.l.b16 %v464
        %v1654 = vunpack.c.h.b16 %v464
        %v1655 = vunpack.c.l.b16 %v465
        %v1656 = vunpack.c.h.b16 %v465
        %v1657 = vunpack.c.l.b16 %v466
        %v1658 = vunpack.c.h.b16 %v466
        %v1659 = vunpack.c.l.b16 %v467
        %v1660 = vunpack.c.h.b16 %v467
        %v1661 = vunpack.c.l.b16 %v468
        %v1662 = vunpack.c.h.b16 %v468
        %v1663 = vunpack.c.l.b16 %v469
        %v1664 = vunpack.c.h.b16 %v469
        %v1665 = vunpack.c.l.b16 %v470
        %v1666 = vunpack.c.h.b16 %v470
        %v1667 = vunpack.c.l.b16 %v471
        %v1668 = vunpack.c.h.b16 %v471
        %v1669 = vunpack.c.l.b16 %v472
        %v1670 = vunpack.c.h.b16 %v472
        %v1671 = vunpack.c.l.b16 %v473
        %v1672 = vunpack.c.h.b16 %v473
        %v1673 = vunpack.c.l.b16 %v474
        %v1674 = vunpack.c.h.b16 %v474
        %v1675 = vunpack.c.l.b16 %v475
        %v1676 = vunpack.c.h.b16 %v475
        %v1677 = vunpack.c.l.b16 %v476
        %v1678 = vunpack.c.h.b16 %v476
        %v1679 = vunpack.c.l.b16 %v477
        %v1680 = vunpack.c.h.b16 %v477
        %v1681 = vunpack.c.l.b16 %v478
        %v1682 = vunpack.c.h.b16 %v478
        %v1683 = vunpack.c.l.b16 %v479
        %v1684 = vunpack.c.h.b16 %v479
        %v1685 = vunpack.c.l.b16 %v480
        %v1686 = vunpack.c.h.b16 %v480
        %v1687 = vunpack.c.l.b16 %v481
        %v1688 = vunpack.c.h.b16 %v481
        %v1689 = vunpack.c.l.b16 %v482
        %v1690 = vunpack.c.h.b16 %v482
        %v1691 = vunpack.c.l.b16 %v483
        %v1692 = vunpack.c.h.b16 %v483
        %v1693 = vunpack.c.l.b16 %v484
        %v1694 = vunpack.c.h.b16 %v484
        %v1695 = vunpack.c.l.b16 %v485
        %v1696 = vunpack.c.h.b16 %v485
        %v1697 = vunpack.c.l.b16 %v486
        %v1698 = vunpack.c.h.b16 %v486
        %v1699 = vunpack.c.l.b16 %v487
        %v1700 = vunpack.c.h.b16 %v487
        %v1701 = vunpack.c.l.b16 %v488
        %v1702 = vunpack.c.h.b16 %v488
        %v1703 = vunpack.c.l.b16 %v489
        %v1704 = vunpack.c.h.b16 %v489
        %v1705 = vunpack.c.l.b16 %v490
        %v1706 = vunpack.c.h.b16 %v490
        %v1707 = vunpack.c.l.b16 %v491
        %v1708 = vunpack.c.h.b16 %v491
        %v1709 = vunpack.c.l.b16 %v492
        %v1710 = vunpack.c.h.b16 %v492
        %v1711 = vunpack.c.l.b16 %v493
        %v1712 = vunpack.c.h.b16 %v493
        %v1713 = vunpack.c.l.b16 %v494
        %v1714 = vunpack.c.h.b16 %v494
        %v1715 = vunpack.c.l.b16 %v495
        %v1716 = vunpack.c.h.b16 %v495
        %v1717 = vunpack.c.l.b16 %v496
        %v1718 = vunpack.c.h.b16 %v496
        %v1719 = vunpack.c.l.b16 %v497
        %v1720 = vunpack.c.h.b16 %v497
        %v1721 = vunpack.c.l.b16 %v498
        %v1722 = vunpack.c.h.b16 %v498
        %v1723 = vunpack.c.l.b16 %v499
        %v1724 = vunpack.c.h.b16 %v499
        %v1725 = vunpack.c.l.b16 %v500
        %v1726 = vunpack.c.h.b16 %v500
        %v1727 = vunpack.c.l.b16 %v501
        %v1728 = vunpack.c.h.b16 %v501
        %v1729 = vunpack.c.l.b16 %v502
        %v1730 = vunpack.c.h.b16 %v502
        %v1731 = vunpack.c.l.b16 %v503
        %v1732 = vunpack.c.h.b16 %v503
        %v1733 = vunpack.c.l.b16 %v504
        %v1734 = vunpack.c.h.b16 %v504
        %v1735 = vunpack.c.l.b16 %v505
        %v1736 = vunpack.c.h.b16 %v505
        %v1737 = vunpack.c.l.b16 %v506
        %v1738 = vunpack.c.h.b16 %v506
        %v1739 = vunpack.c.l.b16 %v507
        %v1740 = vunpack.c.h.b16 %v507
        %v1741 = vunpack.c.l.b16 %v508
        %v1742 = vunpack.c.h.b16 %v508
        %v1743 = vunpack.c.l.b16 %v509
        %v1744 = vunpack.c.h.b16 %v509
        %v1745 = vunpack.c.l.b16 %v510
        %v1746 = vunpack.c.h.b16 %v510
        %v1747 = vunpack.c.l.b16 %v511
        %v1748 = vunpack.c.h.b16 %v511
        %v1749 = vunpack.c.l.b16 %v512
        %v1750 = vunpack.c.h.b16 %v512
        %v1751 = vunpack.c.l.b16 %v513
        %v1752 = vunpack.c.h.b16 %v513
        %v1753 = vunpack.c.l.b16 %v514
        %v1754 = vunpack.c.h.b16 %v514
        %v1755 = vunpack.c.l.b16 %v515
        %v1756 = vunpack.c.h.b16 %v515
        %v1757 = vunpack.c.l.b16 %v516
        %v1758 = vunpack.c.h.b16 %v516
        %v1759 = vunpack.c.l.b16 %v517
        %v1760 = vunpack.c.h.b16 %v517
        %v1761 = vunpack.c.l.b16 %v518
        %v1762 = vunpack.c.h.b16 %v518
        %v1763 = vunpack.c.l.b16 %v519
        %v1764 = vunpack.c.h.b16 %v519
        %v1765 = vunpack.c.l.b16 %v520
        %v1766 = vunpack.c.h.b16 %v520
        %v1767 = vunpack.c.l.b16 %v521
        %v1768 = vunpack.c.h.b16 %v521
        %v1769 = vunpack.c.l.b16 %v522
        %v1770 = vunpack.c.h.b16 %v522
        %v1771 = vunpack.c.l.b16 %v523
        %v1772 = vunpack.c.h.b16 %v523
        %v1773 = vunpack.c.l.b16 %v524
        %v1774 = vunpack.c.h.b16 %v524
        %v1775 = vunpack.c.l.b16 %v525
        %v1776 = vunpack.c.h.b16 %v525
        %v1777 = vunpack.c.l.b16 %v526
        %v1778 = vunpack.c.h.b16 %v526
        %v1779 = vunpack.c.l.b16 %v527
        %v1780 = vunpack.c.h.b16 %v527
        %v1781 = vunpack.c.l.b16 %v528
        %v1782 = vunpack.c.h.b16 %v528
        %v1783 = vunpack.c.l.b16 %v529
        %v1784 = vunpack.c.h.b16 %v529
        %v1785 = vunpack.c.l.b16 %v530
        %v1786 = vunpack.c.h.b16 %v530
        %v1787 = vunpack.c.l.b16 %v531
        %v1788 = vunpack.c.h.b16 %v531
        %v1789 = vunpack.c.l.b16 %v532
        %v1790 = vunpack.c.h.b16 %v532
        %v1791 = vunpack.c.l.b16 %v533
        %v1792 = vunpack.c.h.b16 %v533
        %v1793 = vunpack.c.l.b16 %v534
        %v1794 = vunpack.c.h.b16 %v534
        %v1795 = vunpack.c.l.b16 %v535
        %v1796 = vunpack.c.h.b16 %v535
        %v1797 = vunpack.c.l.b16 %v536
        %v1798 = vunpack.c.h.b16 %v536
        %v1799 = vunpack.c.l.b16 %v537
        %v1800 = vunpack.c.h.b16 %v537
        %v1801 = vunpack.c.l.b16 %v538
        %v1802 = vunpack.c.h.b16 %v538
        %v1803 = vunpack.c.l.b16 %v539
        %v1804 = vunpack.c.h.b16 %v539
        %v1805 = vunpack.c.l.b16 %v540
        %v1806 = vunpack.c.h.b16 %v540
        %v1807 = vunpack.c.l.b16 %v541
        %v1808 = vunpack.c.h.b16 %v541
        %v1809 = vunpack.c.l.b16 %v542
        %v1810 = vunpack.c.h.b16 %v542
        %v1811 = vunpack.c.l.b16 %v543
        %v1812 = vunpack.c.h.b16 %v543
        %v1813 = vunpack.c.l.b16 %v544
        %v1814 = vunpack.c.h.b16 %v544
        %v1815 = vunpack.c.l.b16 %v545
        %v1816 = vunpack.c.h.b16 %v545
        %v1817 = vunpack.c.l.b16 %v546
        %v1818 = vunpack.c.h.b16 %v546
        %v1819 = vunpack.c.l.b16 %v547
        %v1820 = vunpack.c.h.b16 %v547
        %v1821 = vunpack.c.l.b16 %v548
        %v1822 = vunpack.c.h.b16 %v548
        %v1823 = vunpack.c.l.b16 %v549
        %v1824 = vunpack.c.h.b16 %v549
        %v1825 = vunpack.c.l.b16 %v550
        %v1826 = vunpack.c.h.b16 %v550
        %v1827 = vunpack.c.l.b16 %v551
        %v1828 = vunpack.c.h.b16 %v551
        %v1829 = vunpack.c.l.b16 %v552
        %v1830 = vunpack.c.h.b16 %v552
        %v1831 = vunpack.c.l.b16 %v553
        %v1832 = vunpack.c.h.b16 %v553
        %v1833 = vunpack.c.l.b16 %v554
        %v1834 = vunpack.c.h.b16 %v554
        %v1835 = vunpack.c.l.b16 %v555
        %v1836 = vunpack.c.h.b16 %v555
        %v1837 = vunpack.c.l.b16 %v556
        %v1838 = vunpack.c.h.b16 %v556
        %v1839 = vunpack.c.l.b16 %v557
        %v1840 = vunpack.c.h.b16 %v557
        %v1841 = vunpack.c.l.b16 %v558
        %v1842 = vunpack.c.h.b16 %v558
        %v1843 = vunpack.c.l.b16 %v559
        %v1844 = vunpack.c.h.b16 %v559
        %v1845 = vunpack.c.l.b16 %v560
        %v1846 = vunpack.c.h.b16 %v560
        %v1847 = vunpack.c.l.b16 %v561
        %v1848 = vunpack.c.h.b16 %v561
        %v1849 = vunpack.c.l.b16 %v562
        %v1850 = vunpack.c.h.b16 %v562
        %v1851 = vunpack.c.l.b16 %v563
        %v1852 = vunpack.c.h.b16 %v563
        %v1853 = vunpack.c.l.b16 %v564
        %v1854 = vunpack.c.h.b16 %v564
        %v1855 = vunpack.c.l.b16 %v565
        %v1856 = vunpack.c.h.b16 %v565
        %v1857 = vunpack.c.l.b16 %v566
        %v1858 = vunpack.c.h.b16 %v566
        %v1859 = vunpack.c.l.b16 %v567
        %v1860 = vunpack.c.h.b16 %v567
        %v1861 = vunpack.c.l.b16 %v568
        %v1862 = vunpack.c.h.b16 %v568
        %v1863 = vunpack.c.l.b16 %v569
        %v1864 = vunpack.c.h.b16 %v569
        %v1865 = vunpack.c.l.b16 %v570
        %v1866 = vunpack.c.h.b16 %v570
        %v1867 = vunpack.c.l.b16 %v571
        %v1868 = vunpack.c.h.b16 %v571
        %v1869 = vunpack.c.l.b16 %v572
        %v1870 = vunpack.c.h.b16 %v572
        %v1871 = vunpack.c.l.b16 %v573
        %v1872 = vunpack.c.h.b16 %v573
        %v1873 = vunpack.c.l.b16 %v574
        %v1874 = vunpack.c.h.b16 %v574
        %v1875 = vunpack.c.l.b16 %v575
        %v1876 = vunpack.c.h.b16 %v575
        %v1877 = vunpack.c.l.b16 %v576
        %v1878 = vunpack.c.h.b16 %v576
        %v1879 = vunpack.c.l.b16 %v577
        %v1880 = vunpack.c.h.b16 %v577
        %v1881 = vunpack.c.l.b16 %v578
        %v1882 = vunpack.c.h.b16 %v578
        %v1883 = vunpack.c.l.b16 %v579
        %v1884 = vunpack.c.h.b16 %v579
        %v1885 = vunpack.c.l.b16 %v580
        %v1886 = vunpack.c.h.b16 %v580
        %v1887 = vunpack.c.l.b16 %v581
        %v1888 = vunpack.c.h.b16 %v581
        %v1889 = vunpack.c.l.b16 %v582
        %v1890 = vunpack.c.h.b16 %v582
        %v1891 = vunpack.c.l.b16 %v583
        %v1892 = vunpack.c.h.b16 %v583
        %v1893 = vunpack.c.l.b16 %v584
        %v1894 = vunpack.c.h.b16 %v584
        %v1895 = vunpack.c.l.b16 %v585
        %v1896 = vunpack.c.h.b16 %v585
        %v1897 = vunpack.c.l.b16 %v586
        %v1898 = vunpack.c.h.b16 %v586
        %v1899 = vunpack.c.l.b16 %v587
        %v1900 = vunpack.c.h.b16 %v587
        %v1901 = vunpack.c.l.b16 %v588
        %v1902 = vunpack.c.h.b16 %v588
        %v1903 = vunpack.c.l.b16 %v589
        %v1904 = vunpack.c.h.b16 %v589
        %v1905 = vunpack.c.l.b16 %v590
        %v1906 = vunpack.c.h.b16 %v590
        %v1907 = vunpack.c.l.b16 %v591
        %v1908 = vunpack.c.h.b16 %v591
        %v1909 = vunpack.c.l.b16 %v592
        %v1910 = vunpack.c.h.b16 %v592
        %v1911 = vunpack.c.l.b16 %v593
        %v1912 = vunpack.c.h.b16 %v593
        %v1913 = vunpack.c.l.b16 %v594
        %v1914 = vunpack.c.h.b16 %v594
        %v1915 = vunpack.c.l.b16 %v595
        %v1916 = vunpack.c.h.b16 %v595
        %v1917 = vunpack.c.l.b16 %v596
        %v1918 = vunpack.c.h.b16 %v596
        %v1919 = vunpack.c.l.b16 %v597
        %v1920 = vunpack.c.h.b16 %v597
        %v1921 = vunpack.c.l.b16 %v598
        %v1922 = vunpack.c.h.b16 %v598
        %v1923 = vunpack.c.l.b16 %v599
        %v1924 = vunpack.c.h.b16 %v599
        %v1925 = vunpack.c.l.b16 %v600
        %v1926 = vunpack.c.h.b16 %v600
        %v1927 = vunpack.c.l.b16 %v601
        %v1928 = vunpack.c.h.b16 %v601
        %v1929 = vunpack.c.l.b16 %v602
        %v1930 = vunpack.c.h.b16 %v602
        %v1931 = vunpack.c.l.b16 %v603
        %v1932 = vunpack.c.h.b16 %v603
        %v1933 = vunpack.c.l.b16 %v604
        %v1934 = vunpack.c.h.b16 %v604
        %v1935 = vunpack.c.l.b16 %v605
        %v1936 = vunpack.c.h.b16 %v605
        %v1937 = vunpack.c.l.b16 %v606
        %v1938 = vunpack.c.h.b16 %v606
        %v1939 = vunpack.c.l.b16 %v607
        %v1940 = vunpack.c.h.b16 %v607
        %v1941 = vunpack.c.l.b16 %v608
        %v1942 = vunpack.c.h.b16 %v608
        %v1943 = vunpack.c.l.b16 %v609
        %v1944 = vunpack.c.h.b16 %v609
        %v1945 = vunpack.c.l.b16 %v610
        %v1946 = vunpack.c.h.b16 %v610
        %v1947 = vunpack.c.l.b16 %v611
        %v1948 = vunpack.c.h.b16 %v611
        %v1949 = vunpack.c.l.b16 %v612
        %v1950 = vunpack.c.h.b16 %v612
        %v1951 = vunpack.c.l.b16 %v613
        %v1952 = vunpack.c.h.b16 %v613
        %v1953 = vunpack.c.l.b16 %v614
        %v1954 = vunpack.c.h.b16 %v614
        %v1955 = vunpack.c.l.b16 %v615
        %v1956 = vunpack.c.h.b16 %v615
        %v1957 = vunpack.c.l.b16 %v616
        %v1958 = vunpack.c.h.b16 %v616
        %v1959 = vunpack.c.l.b16 %v617
        %v1960 = vunpack.c.h.b16 %v617
        %v1961 = vunpack.c.l.b16 %v618
        %v1962 = vunpack.c.h.b16 %v618
        %v1963 = vunpack.c.l.b16 %v619
        %v1964 = vunpack.c.h.b16 %v619
        %v1965 = vunpack.c.l.b16 %v620
        %v1966 = vunpack.c.h.b16 %v620
        %v1967 = vunpack.c.l.b16 %v621
        %v1968 = vunpack.c.h.b16 %v621
        %v1969 = vunpack.c.l.b16 %v622
        %v1970 = vunpack.c.h.b16 %v622
        %v1971 = vunpack.c.l.b16 %v623
        %v1972 = vunpack.c.h.b16 %v623
        %v1973 = vunpack.c.l.b16 %v624
        %v1974 = vunpack.c.h.b16 %v624
        %v1975 = vunpack.c.l.b16 %v625
        %v1976 = vunpack.c.h.b16 %v625
        %v1977 = vunpack.c.l.b16 %v626
        %v1978 = vunpack.c.h.b16 %v626
        %v1979 = vunpack.c.l.b16 %v627
        %v1980 = vunpack.c.h.b16 %v627
        %v1981 = vunpack.c.l.b16 %v628
        %v1982 = vunpack.c.h.b16 %v628
        %v1983 = vunpack.c.l.b16 %v629
        %v1984 = vunpack.c.h.b16 %v629
        %v1985 = vunpack.c.l.b16 %v630
        %v1986 = vunpack.c.h.b16 %v630
        %v1987 = vunpack.c.l.b16 %v631
        %v1988 = vunpack.c.h.b16 %v631
        %v1989 = vunpack.c.l.b16 %v632
        %v1990 = vunpack.c.h.b16 %v632
        %v1991 = vunpack.c.l.b16 %v633
        %v1992 = vunpack.c.h.b16 %v633
        %v1993 = vunpack.c.l.b16 %v634
        %v1994 = vunpack.c.h.b16 %v634
        %v1995 = vunpack.c.l.b16 %v635
        %v1996 = vunpack.c.h.b16 %v635
        %v1997 = vunpack.c.l.b16 %v636
        %v1998 = vunpack.c.h.b16 %v636
        %v1999 = vunpack.c.l.b16 %v637
        %v2000 = vunpack.c.h.b16 %v637
        %v2001 = vunpack.c.l.b16 %v638
        %v2002 = vunpack.c.h.b16 %v638
        %v2003 = vunpack.c.l.b16 %v639
        %v2004 = vunpack.c.h.b16 %v639
        %v2005 = vunpack.c.l.b16 %v640
        %v2006 = vunpack.c.h.b16 %v640
        %v2007 = vunpack.c.l.b16 %v641
        %v2008 = vunpack.c.h.b16 %v641
        %v2009 = vunpack.c.l.b16 %v642
        %v2010 = vunpack.c.h.b16 %v642
        %v2011 = vunpack.c.l.b16 %v643
        %v2012 = vunpack.c.h.b16 %v643
        %v2013 = vunpack.c.l.b16 %v644
        %v2014 = vunpack.c.h.b16 %v644
        %v2015 = vunpack.c.l.b16 %v645
        %v2016 = vunpack.c.h.b16 %v645
        %v2017 = vunpack.c.l.b16 %v646
        %v2018 = vunpack.c.h.b16 %v646
        %v2019 = vunpack.c.l.b16 %v647
        %v2020 = vunpack.c.h.b16 %v647
        %v2021 = vunpack.c.l.b16 %v648
        %v2022 = vunpack.c.h.b16 %v648
        %v2023 = vunpack.c.l.b16 %v649
        %v2024 = vunpack.c.h.b16 %v649
        %v2025 = vunpack.c.l.b16 %v650
        %v2026 = vunpack.c.h.b16 %v650
        %v2027 = vunpack.c.l.b16 %v651
        %v2028 = vunpack.c.h.b16 %v651
        %v2029 = vunpack.c.l.b16 %v652
        %v2030 = vunpack.c.h.b16 %v652
        %v2031 = vunpack.c.l.b16 %v653
        %v2032 = vunpack.c.h.b16 %v653
        %v2033 = vunpack.c.l.b16 %v654
        %v2034 = vunpack.c.h.b16 %v654
        %v2035 = vunpack.c.l.b16 %v655
        %v2036 = vunpack.c.h.b16 %v655
        %v2037 = vunpack.c.l.b16 %v656
        %v2038 = vunpack.c.h.b16 %v656
        %v2039 = vunpack.c.l.b16 %v657
        %v2040 = vunpack.c.h.b16 %v657
        %v2041 = vunpack.c.l.b16 %v658
        %v2042 = vunpack.c.h.b16 %v658
        %v2043 = vunpack.c.l.b16 %v659
        %v2044 = vunpack.c.h.b16 %v659
        %v2045 = vunpack.c.l.b16 %v660
        %v2046 = vunpack.c.h.b16 %v660
        %v2047 = vunpack.c.l.b16 %v661
        %v2048 = vunpack.c.h.b16 %v661
        %v2049 = vunpack.c.l.b16 %v662
        %v2050 = vunpack.c.h.b16 %v662
        %v2051 = vunpack.c.l.b16 %v663
        %v2052 = vunpack.c.h.b16 %v663
        %v2053 = vunpack.c.l.b16 %v664
        %v2054 = vunpack.c.h.b16 %v664
        %v2055 = vunpack.c.l.b16 %v665
        %v2056 = vunpack.c.h.b16 %v665
        %v2057 = vunpack.c.l.b16 %v666
        %v2058 = vunpack.c.h.b16 %v666
        %v2059 = vunpack.c.l.b16 %v667
        %v2060 = vunpack.c.h.b16 %v667
        %v2061 = vunpack.c.l.b16 %v668
        %v2062 = vunpack.c.h.b16 %v668
        %v2063 = vunpack.c.l.b16 %v669
        %v2064 = vunpack.c.h.b16 %v669
        %v2065 = vunpack.c.l.b16 %v670
        %v2066 = vunpack.c.h.b16 %v670
        %v2067 = vunpack.c.l.b16 %v671
        %v2068 = vunpack.c.h.b16 %v671
        %v2069 = vunpack.c.l.b16 %v672
        %v2070 = vunpack.c.h.b16 %v672
        %v2071 = vunpack.c.l.b16 %v673
        %v2072 = vunpack.c.h.b16 %v673
        %v2073 = vunpack.c.l.b16 %v674
        %v2074 = vunpack.c.h.b16 %v674
        %v2075 = vunpack.c.l.b16 %v675
        %v2076 = vunpack.c.h.b16 %v675
        %v2077 = vunpack.c.l.b16 %v676
        %v2078 = vunpack.c.h.b16 %v676
        %v2079 = vunpack.c.l.b16 %v677
        %v2080 = vunpack.c.h.b16 %v677
        %v2081 = vunpack.c.l.b16 %v678
        %v2082 = vunpack.c.h.b16 %v678
        %v2083 = vunpack.c.l.b16 %v679
        %v2084 = vunpack.c.h.b16 %v679
        %v2085 = vunpack.c.l.b16 %v680
        %v2086 = vunpack.c.h.b16 %v680
        %v2087 = vunpack.c.l.b16 %v681
        %v2088 = vunpack.c.h.b16 %v681
        %v2089 = vunpack.c.l.b16 %v682
        %v2090 = vunpack.c.h.b16 %v682
        %v2091 = vunpack.c.l.b16 %v683
        %v2092 = vunpack.c.h.b16 %v683
        %v2093 = vunpack.c.l.b16 %v684
        %v2094 = vunpack.c.h.b16 %v684
        %v2095 = vunpack.c.l.b16 %v685
        %v2096 = vunpack.c.h.b16 %v685
        %v2097 = vunpack.c.l.b16 %v686
        %v2098 = vunpack.c.h.b16 %v686
        %v2099 = vunpack.c.l.b16 %v687
        %v2100 = vunpack.c.h.b16 %v687
        %v2101 = vunpack.c.l.b16 %v688
        %v2102 = vunpack.c.h.b16 %v688
        %v2103 = vunpack.c.l.b16 %v689
        %v2104 = vunpack.c.h.b16 %v689
        %v2105 = vunpack.c.l.b16 %v690
        %v2106 = vunpack.c.h.b16 %v690
        %v2107 = vunpack.c.l.b16 %v691
        %v2108 = vunpack.c.h.b16 %v691
        %v2109 = vunpack.c.l.b16 %v692
        %v2110 = vunpack.c.h.b16 %v692
        %v2111 = vunpack.c.l.b16 %v693
        %v2112 = vunpack.c.h.b16 %v693
        %v2113 = vunpack.c.l.b16 %v694
        %v2114 = vunpack.c.h.b16 %v694
        %v2115 = vunpack.c.l.b16 %v695
        %v2116 = vunpack.c.h.b16 %v695
        %v2117 = vunpack.c.l.b16 %v696
        %v2118 = vunpack.c.h.b16 %v696
        %v2119 = vunpack.c.l.b16 %v697
        %v2120 = vunpack.c.h.b16 %v697
        %v2121 = vunpack.c.l.b16 %v698
        %v2122 = vunpack.c.h.b16 %v698
        %v2123 = vunpack.c.l.b16 %v699
        %v2124 = vunpack.c.h.b16 %v699
        %v2125 = vunpack.c.l.b16 %v700
        %v2126 = vunpack.c.h.b16 %v700
        %v2127 = vunpack.c.l.b16 %v701
        %v2128 = vunpack.c.h.b16 %v701
        %v2129 = vunpack.c.l.b16 %v702
        %v2130 = vunpack.c.h.b16 %v702
        %v2131 = vunpack.c.l.b16 %v703
        %v2132 = vunpack.c.h.b16 %v703
        %v2133 = vunpack.c.l.b16 %v704
        %v2134 = vunpack.c.h.b16 %v704
        %v2135 = vunpack.c.l.b16 %v705
        %v2136 = vunpack.c.h.b16 %v705
        %v2137 = vunpack.c.l.b16 %v706
        %v2138 = vunpack.c.h.b16 %v706
        %v2139 = vunpack.c.l.b16 %v707
        %v2140 = vunpack.c.h.b16 %v707
        %v2141 = vunpack.c.l.b16 %v708
        %v2142 = vunpack.c.h.b16 %v708
        %v2143 = vunpack.c.l.b16 %v709
        %v2144 = vunpack.c.h.b16 %v709
        %v2145 = vunpack.c.l.b16 %v710
        %v2146 = vunpack.c.h.b16 %v710
        %v2147 = vunpack.c.l.b16 %v711
        %v2148 = vunpack.c.h.b16 %v711
        %v2149 = vunpack.c.l.b16 %v712
        %v2150 = vunpack.c.h.b16 %v712
        %v2151 = vunpack.c.l.b16 %v713
        %v2152 = vunpack.c.h.b16 %v713
        %v2153 = vunpack.c.l.b16 %v714
        %v2154 = vunpack.c.h.b16 %v714
        %v2155 = vunpack.c.l.b16 %v715
        %v2156 = vunpack.c.h.b16 %v715
        %v2157 = vunpack.c.l.b16 %v716
        %v2158 = vunpack.c.h.b16 %v716
        %v2159 = vunpack.c.l.b16 %v717
        %v2160 = vunpack.c.h.b16 %v717
        %v2161 = vunpack.c.l.b16 %v718
        %v2162 = vunpack.c.h.b16 %v718
        %v2163 = vunpack.c.l.b16 %v719
        %v2164 = vunpack.c.h.b16 %v719
        %v2165 = vunpack.c.l.b16 %v720
        %v2166 = vunpack.c.h.b16 %v720
        %v2167 = vunpack.c.l.b16 %v721
        %v2168 = vunpack.c.h.b16 %v721
        %v2169 = vunpack.c.l.b16 %v722
        %v2170 = vunpack.c.h.b16 %v722
        %v2171 = vunpack.c.l.b16 %v723
        %v2172 = vunpack.c.h.b16 %v723
        %v2173 = vunpack.c.l.b16 %v724
        %v2174 = vunpack.c.h.b16 %v724
        %v2175 = vunpack.c.l.b16 %v725
        %v2176 = vunpack.c.h.b16 %v725
        %v2177 = vunpack.c.l.b16 %v726
        %v2178 = vunpack.c.h.b16 %v726
        %v2179 = vunpack.c.l.b16 %v727
        %v2180 = vunpack.c.h.b16 %v727
        %v2181 = vunpack.c.l.b16 %v728
        %v2182 = vunpack.c.h.b16 %v728
        %v2183 = vunpack.c.l.b16 %v729
        %v2184 = vunpack.c.h.b16 %v729
        %v2185 = vunpack.c.l.b16 %v730
        %v2186 = vunpack.c.h.b16 %v730
        %v2187 = vunpack.c.l.b16 %v731
        %v2188 = vunpack.c.h.b16 %v731
        %v2189 = vunpack.c.l.b16 %v732
        %v2190 = vunpack.c.h.b16 %v732
        %v2191 = vunpack.c.l.b16 %v733
        %v2192 = vunpack.c.h.b16 %v733
        %v2193 = vunpack.c.l.b16 %v734
        %v2194 = vunpack.c.h.b16 %v734
        %v2195 = vunpack.c.l.b16 %v735
        %v2196 = vunpack.c.h.b16 %v735
        %v2197 = vunpack.c.l.b16 %v736
        %v2198 = vunpack.c.h.b16 %v736
        %v2199 = vunpack.c.l.b16 %v737
        %v2200 = vunpack.c.h.b16 %v737
        %v2201 = vunpack.c.l.b16 %v738
        %v2202 = vunpack.c.h.b16 %v738
        %v2203 = vunpack.c.l.b16 %v739
        %v2204 = vunpack.c.h.b16 %v739
        %v2205 = vunpack.c.l.b16 %v740
        %v2206 = vunpack.c.h.b16 %v740
        %v2207 = vunpack.c.l.b16 %v741
        %v2208 = vunpack.c.h.b16 %v741
        %v2209 = vunpack.c.l.b16 %v742
        %v2210 = vunpack.c.h.b16 %v742
        %v2211 = vunpack.c.l.b16 %v743
        %v2212 = vunpack.c.h.b16 %v743
        %v2213 = vunpack.c.l.b16 %v744
        %v2214 = vunpack.c.h.b16 %v744
        %v2215 = vunpack.c.l.b16 %v745
        %v2216 = vunpack.c.h.b16 %v745
        %v2217 = vunpack.c.l.b16 %v746
        %v2218 = vunpack.c.h.b16 %v746
        %v2219 = vunpack.c.l.b16 %v747
        %v2220 = vunpack.c.h.b16 %v747
        %v2221 = vunpack.c.l.b16 %v748
        %v2222 = vunpack.c.h.b16 %v748
        %v2223 = vunpack.c.l.b16 %v749
        %v2224 = vunpack.c.h.b16 %v749
        %v2225 = vunpack.c.l.b16 %v750
        %v2226 = vunpack.c.h.b16 %v750
        %v2227 = vunpack.c.l.b16 %v751
        %v2228 = vunpack.c.h.b16 %v751
        %v2229 = vunpack.c.l.b16 %v752
        %v2230 = vunpack.c.h.b16 %v752
        %v2231 = vunpack.c.l.b16 %v753
        %v2232 = vunpack.c.h.b16 %v753
        %v2233 = vunpack.c.l.b16 %v754
        %v2234 = vunpack.c.h.b16 %v754
        %v2235 = vunpack.c.l.b16 %v755
        %v2236 = vunpack.c.h.b16 %v755
        %v2237 = vunpack.c.l.b16 %v756
        %v2238 = vunpack.c.h.b16 %v756
        %v2239 = vunpack.c.l.b16 %v757
        %v2240 = vunpack.c.h.b16 %v757
        %v2241 = vunpack.c.l.b16 %v758
        %v2242 = vunpack.c.h.b16 %v758
        %v2243 = vunpack.c.l.b16 %v759
        %v2244 = vunpack.c.h.b16 %v759
        %v2245 = vunpack.c.l.b16 %v760
        %v2246 = vunpack.c.h.b16 %v760
        %v2247 = vunpack.c.l.b16 %v761
        %v2248 = vunpack.c.h.b16 %v761
        %v2249 = vunpack.c.l.b16 %v762
        %v2250 = vunpack.c.h.b16 %v762
        %v2251 = vunpack.c.l.b16 %v763
        %v2252 = vunpack.c.h.b16 %v763
        %v2253 = vunpack.c.l.b16 %v764
        %v2254 = vunpack.c.h.b16 %v764
        %v2255 = vunpack.c.l.b16 %v765
        %v2256 = vunpack.c.h.b16 %v765
        %v2257 = vunpack.c.l.b16 %v766
        %v2258 = vunpack.c.h.b16 %v766
        %v2259 = vunpack.c.l.b16 %v767
        %v2260 = vunpack.c.h.b16 %v767
        %v2261 = vunpack.c.l.b16 %v768
        %v2262 = vunpack.c.h.b16 %v768
        %v2263 = vunpack.c.l.b16 %v769
        %v2264 = vunpack.c.h.b16 %v769
        %v2265 = vunpack.c.l.b16 %v770
        %v2266 = vunpack.c.h.b16 %v770
        %v2267 = vunpack.c.l.b16 %v771
        %v2268 = vunpack.c.h.b16 %v771
        %v2269 = vunpack.c.l.b16 %v772
        %v2270 = vunpack.c.h.b16 %v772
        %v2271 = vunpack.c.l.b16 %v773
        %v2272 = vunpack.c.h.b16 %v773
        %v2273 = vunpack.c.l.b16 %v774
        %v2274 = vunpack.c.h.b16 %v774
        %v2275 = vunpack.c.l.b16 %v775
        %v2276 = vunpack.c.h.b16 %v775
        %v2277 = vunpack.c.l.b16 %v776
        %v2278 = vunpack.c.h.b16 %v776
        %v2279 = vunpack.c.l.b16 %v777
        %v2280 = vunpack.c.h.b16 %v777
        %v2281 = vunpack.c.l.b16 %v778
        %v2282 = vunpack.c.h.b16 %v778
        %v2283 = vunpack.c.l.b16 %v779
        %v2284 = vunpack.c.h.b16 %v779
        %v2285 = vunpack.c.l.b16 %v780
        %v2286 = vunpack.c.h.b16 %v780
        %v2287 = vunpack.c.l.b16 %v781
        %v2288 = vunpack.c.h.b16 %v781
        %v2289 = vunpack.c.l.b16 %v782
        %v2290 = vunpack.c.h.b16 %v782
        %v2291 = vunpack.c.l.b16 %v783
        %v2292 = vunpack.c.h.b16 %v783
        %v2293 = vunpack.c.l.b16 %v784
        %v2294 = vunpack.c.h.b16 %v784
        %v2295 = vunpack.c.l.b16 %v785
        %v2296 = vunpack.c.h.b16 %v785
        %v2297 = vunpack.c.l.b16 %v786
        %v2298 = vunpack.c.h.b16 %v786
        %v2299 = vunpack.c.l.b16 %v787
        %v2300 = vunpack.c.h.b16 %v787
        %v2301 = vunpack.c.l.b16 %v788
        %v2302 = vunpack.c.h.b16 %v788
        %v2303 = vunpack.c.l.b16 %v789
        %v2304 = vunpack.c.h.b16 %v789
        %v2305 = vunpack.c.l.b16 %v790
        %v2306 = vunpack.c.h.b16 %v790
        %v2307 = vunpack.c.l.b16 %v791
        %v2308 = vunpack.c.h.b16 %v791
        %v2309 = vunpack.c.l.b16 %v792
        %v2310 = vunpack.c.h.b16 %v792
        %v2311 = vunpack.c.l.b16 %v793
        %v2312 = vunpack.c.h.b16 %v793
        %v2313 = vunpack.c.l.b16 %v794
        %v2314 = vunpack.c.h.b16 %v794
        %v2315 = vunpack.c.l.b16 %v795
        %v2316 = vunpack.c.h.b16 %v795
        %v2317 = vunpack.c.l.b16 %v796
        %v2318 = vunpack.c.h.b16 %v796
        %v2319 = vunpack.c.l.b16 %v797
        %v2320 = vunpack.c.h.b16 %v797
        %v2321 = vunpack.c.l.b16 %v798
        %v2322 = vunpack.c.h.b16 %v798
        %v2323 = vunpack.c.l.b16 %v799
        %v2324 = vunpack.c.h.b16 %v799
        %v2325 = vunpack.c.l.b16 %v800
        %v2326 = vunpack.c.h.b16 %v800
        %v2327 = vunpack.c.l.b16 %v801
        %v2328 = vunpack.c.h.b16 %v801
        %v2329 = vunpack.c.l.b16 %v802
        %v2330 = vunpack.c.h.b16 %v802
        %v2331 = vunpack.c.l.b16 %v803
        %v2332 = vunpack.c.h.b16 %v803
        %v2333 = vunpack.c.l.b16 %v804
        %v2334 = vunpack.c.h.b16 %v804
        %v2335 = vunpack.c.l.b16 %v805
        %v2336 = vunpack.c.h.b16 %v805
        %v2337 = vunpack.c.l.b16 %v806
        %v2338 = vunpack.c.h.b16 %v806
        %v2339 = vunpack.c.l.b16 %v807
        %v2340 = vunpack.c.h.b16 %v807
        %v2341 = vunpack.c.l.b16 %v808
        %v2342 = vunpack.c.h.b16 %v808
        %v2343 = vunpack.c.l.b16 %v809
        %v2344 = vunpack.c.h.b16 %v809
        %v2345 = vunpack.c.l.b16 %v810
        %v2346 = vunpack.c.h.b16 %v810
        %v2347 = vpack.c.b16 %v1327, %v1323
        %v2348 = vpack.c.b16 %v1328, %v1324
        %v2349 = vpack.c.b16 %v1329, %v1325
        %v2350 = vpack.c.b16 %v1330, %v1326
        %v2351 = vpack.c.b16 %v1335, %v1331
        %v2352 = vpack.c.b16 %v1336, %v1332
        %v2353 = vpack.c.b16 %v1337, %v1333
        %v2354 = vpack.c.b16 %v1338, %v1334
        %v2355 = vpack.c.b16 %v1343, %v1339
        %v2356 = vpack.c.b16 %v1344, %v1340
        %v2357 = vpack.c.b16 %v1345, %v1341
        %v2358 = vpack.c.b16 %v1346, %v1342
        %v2359 = vpack.c.b16 %v1351, %v1347
        %v2360 = vpack.c.b16 %v1352, %v1348
        %v2361 = vpack.c.b16 %v1353, %v1349
        %v2362 = vpack.c.b16 %v1354, %v1350
        %v2363 = vpack.c.b16 %v1359, %v1355
        %v2364 = vpack.c.b16 %v1360, %v1356
        %v2365 = vpack.c.b16 %v1361, %v1357
        %v2366 = vpack.c.b16 %v1362, %v1358
        %v2367 = vpack.c.b16 %v1367, %v1363
        %v2368 = vpack.c.b16 %v1368, %v1364
        %v2369 = vpack.c.b16 %v1369, %v1365
        %v2370 = vpack.c.b16 %v1370, %v1366
        %v2371 = vpack.c.b16 %v1375, %v1371
        %v2372 = vpack.c.b16 %v1376, %v1372
        %v2373 = vpack.c.b16 %v1377, %v1373
        %v2374 = vpack.c.b16 %v1378, %v1374
        %v2375 = vpack.c.b16 %v1383, %v1379
        %v2376 = vpack.c.b16 %v1384, %v1380
        %v2377 = vpack.c.b16 %v1385, %v1381
        %v2378 = vpack.c.b16 %v1386, %v1382
        %v2379 = vpack.c.b16 %v1391, %v1387
        %v2380 = vpack.c.b16 %v1392, %v1388
        %v2381 = vpack.c.b16 %v1393, %v1389
        %v2382 = vpack.c.b16 %v1394, %v1390
        %v2383 = vpack.c.b16 %v1399, %v1395
        %v2384 = vpack.c.b16 %v1400, %v1396
        %v2385 = vpack.c.b16 %v1401, %v1397
        %v2386 = vpack.c.b16 %v1402, %v1398
        %v2387 = vpack.c.b16 %v1407, %v1403
        %v2388 = vpack.c.b16 %v1408, %v1404
        %v2389 = vpack.c.b16 %v1409, %v1405
        %v2390 = vpack.c.b16 %v1410, %v1406
        %v2391 = vpack.c.b16 %v1415, %v1411
        %v2392 = vpack.c.b16 %v1416, %v1412
        %v2393 = vpack.c.b16 %v1417, %v1413
        %v2394 = vpack.c.b16 %v1418, %v1414
        %v2395 = vpack.c.b16 %v1423, %v1419
        %v2396 = vpack.c.b16 %v1424, %v1420
        %v2397 = vpack.c.b16 %v1425, %v1421
        %v2398 = vpack.c.b16 %v1426, %v1422
        %v2399 = vpack.c.b16 %v1431, %v1427
        %v2400 = vpack.c.b16 %v1432, %v1428
        %v2401 = vpack.c.b16 %v1433, %v1429
        %v2402 = vpack.c.b16 %v1434, %v1430
        %v2403 = vpack.c.b16 %v1439, %v1435
        %v2404 = vpack.c.b16 %v1440, %v1436
        %v2405 = vpack.c.b16 %v1441, %v1437
        %v2406 = vpack.c.b16 %v1442, %v1438
        %v2407 = vpack.c.b16 %v1447, %v1443
        %v2408 = vpack.c.b16 %v1448, %v1444
        %v2409 = vpack.c.b16 %v1449, %v1445
        %v2410 = vpack.c.b16 %v1450, %v1446
        %v2411 = vpack.c.b16 %v1455, %v1451
        %v2412 = vpack.c.b16 %v1456, %v1452
        %v2413 = vpack.c.b16 %v1457, %v1453
        %v2414 = vpack.c.b16 %v1458, %v1454
        %v2415 = vpack.c.b16 %v1463, %v1459
        %v2416 = vpack.c.b16 %v1464, %v1460
        %v2417 = vpack.c.b16 %v1465, %v1461
        %v2418 = vpack.c.b16 %v1466, %v1462
        %v2419 = vpack.c.b16 %v1471, %v1467
        %v2420 = vpack.c.b16 %v1472, %v1468
        %v2421 = vpack.c.b16 %v1473, %v1469
        %v2422 = vpack.c.b16 %v1474, %v1470
        %v2423 = vpack.c.b16 %v1479, %v1475
        %v2424 = vpack.c.b16 %v1480, %v1476
        %v2425 = vpack.c.b16 %v1481, %v1477
        %v2426 = vpack.c.b16 %v1482, %v1478
        %v2427 = vpack.c.b16 %v1487, %v1483
        %v2428 = vpack.c.b16 %v1488, %v1484
        %v2429 = vpack.c.b16 %v1489, %v1485
        %v2430 = vpack.c.b16 %v1490, %v1486
        %v2431 = vpack.c.b16 %v1495, %v1491
        %v2432 = vpack.c.b16 %v1496, %v1492
        %v2433 = vpack.c.b16 %v1497, %v1493
        %v2434 = vpack.c.b16 %v1498, %v1494
        %v2435 = vpack.c.b16 %v1503, %v1499
        %v2436 = vpack.c.b16 %v1504, %v1500
        %v2437 = vpack.c.b16 %v1505, %v1501
        %v2438 = vpack.c.b16 %v1506, %v1502
        %v2439 = vpack.c.b16 %v1511, %v1507
        %v2440 = vpack.c.b16 %v1512, %v1508
        %v2441 = vpack.c.b16 %v1513, %v1509
        %v2442 = vpack.c.b16 %v1514, %v1510
        %v2443 = vpack.c.b16 %v1519, %v1515
        %v2444 = vpack.c.b16 %v1520, %v1516
        %v2445 = vpack.c.b16 %v1521, %v1517
        %v2446 = vpack.c.b16 %v1522, %v1518
        %v2447 = vpack.c.b16 %v1527, %v1523
        %v2448 = vpack.c.b16 %v1528, %v1524
        %v2449 = vpack.c.b16 %v1529, %v1525
        %v2450 = vpack.c.b16 %v1530, %v1526
        %v2451 = vpack.c.b16 %v1535, %v1531
        %v2452 = vpack.c.b16 %v1536, %v1532
        %v2453 = vpack.c.b16 %v1537, %v1533
        %v2454 = vpack.c.b16 %v1538, %v1534
        %v2455 = vpack.c.b16 %v1543, %v1539
        %v2456 = vpack.c.b16 %v1544, %v1540
        %v2457 = vpack.c.b16 %v1545, %v1541
        %v2458 = vpack.c.b16 %v1546, %v1542
        %v2459 = vpack.c.b16 %v1551, %v1547
        %v2460 = vpack.c.b16 %v1552, %v1548
        %v2461 = vpack.c.b16 %v1553, %v1549
        %v2462 = vpack.c.b16 %v1554, %v1550
        %v2463 = vpack.c.b16 %v1559, %v1555
        %v2464 = vpack.c.b16 %v1560, %v1556
        %v2465 = vpack.c.b16 %v1561, %v1557
        %v2466 = vpack.c.b16 %v1562, %v1558
        %v2467 = vpack.c.b16 %v1567, %v1563
        %v2468 = vpack.c.b16 %v1568, %v1564
        %v2469 = vpack.c.b16 %v1569, %v1565
        %v2470 = vpack.c.b16 %v1570, %v1566
        %v2471 = vpack.c.b16 %v1575, %v1571
        %v2472 = vpack.c.b16 %v1576, %v1572
        %v2473 = vpack.c.b16 %v1577, %v1573
        %v2474 = vpack.c.b16 %v1578, %v1574
        %v2475 = vpack.c.b16 %v1583, %v1579
        %v2476 = vpack.c.b16 %v1584, %v1580
        %v2477 = vpack.c.b16 %v1585, %v1581
        %v2478 = vpack.c.b16 %v1586, %v1582
        %v2479 = vpack.c.b16 %v1591, %v1587
        %v2480 = vpack.c.b16 %v1592, %v1588
        %v2481 = vpack.c.b16 %v1593, %v1589
        %v2482 = vpack.c.b16 %v1594, %v1590
        %v2483 = vpack.c.b16 %v1599, %v1595
        %v2484 = vpack.c.b16 %v1600, %v1596
        %v2485 = vpack.c.b16 %v1601, %v1597
        %v2486 = vpack.c.b16 %v1602, %v1598
        %v2487 = vpack.c.b16 %v1607, %v1603
        %v2488 = vpack.c.b16 %v1608, %v1604
        %v2489 = vpack.c.b16 %v1609, %v1605
        %v2490 = vpack.c.b16 %v1610, %v1606
        %v2491 = vpack.c.b16 %v1615, %v1611
        %v2492 = vpack.c.b16 %v1616, %v1612
        %v2493 = vpack.c.b16 %v1617, %v1613
        %v2494 = vpack.c.b16 %v1618, %v1614
        %v2495 = vpack.c.b16 %v1623, %v1619
        %v2496 = vpack.c.b16 %v1624, %v1620
        %v2497 = vpack.c.b16 %v1625, %v1621
        %v2498 = vpack.c.b16 %v1626, %v1622
        %v2499 = vpack.c.b16 %v1631, %v1627
        %v2500 = vpack.c.b16 %v1632, %v1628
        %v2501 = vpack.c.b16 %v1633, %v1629
        %v2502 = vpack.c.b16 %v1634, %v1630
        %v2503 = vpack.c.b16 %v1639, %v1635
        %v2504 = vpack.c.b16 %v1640, %v1636
        %v2505 = vpack.c.b16 %v1641, %v1637
        %v2506 = vpack.c.b16 %v1642, %v1638
        %v2507 = vpack.c.b16 %v1647, %v1643
        %v2508 = vpack.c.b16 %v1648, %v1644
        %v2509 = vpack.c.b16 %v1649, %v1645
        %v2510 = vpack.c.b16 %v1650, %v1646
        %v2511 = vpack.c.b16 %v1655, %v1651
        %v2512 = vpack.c.b16 %v1656, %v1652
        %v2513 = vpack.c.b16 %v1657, %v1653
        %v2514 = vpack.c.b16 %v1658, %v1654
        %v2515 = vpack.c.b16 %v1663, %v1659
        %v2516 = vpack.c.b16 %v1664, %v1660
        %v2517 = vpack.c.b16 %v1665, %v1661
        %v2518 = vpack.c.b16 %v1666, %v1662
        %v2519 = vpack.c.b16 %v1671, %v1667
        %v2520 = vpack.c.b16 %v1672, %v1668
        %v2521 = vpack.c.b16 %v1673, %v1669
        %v2522 = vpack.c.b16 %v1674, %v1670
        %v2523 = vpack.c.b16 %v1679, %v1675
        %v2524 = vpack.c.b16 %v1680, %v1676
        %v2525 = vpack.c.b16 %v1681, %v1677
        %v2526 = vpack.c.b16 %v1682, %v1678
        %v2527 = vpack.c.b16 %v1687, %v1683
        %v2528 = vpack.c.b16 %v1688, %v1684
        %v2529 = vpack.c.b16 %v1689, %v1685
        %v2530 = vpack.c.b16 %v1690, %v1686
        %v2531 = vpack.c.b16 %v1695, %v1691
        %v2532 = vpack.c.b16 %v1696, %v1692
        %v2533 = vpack.c.b16 %v1697, %v1693
        %v2534 = vpack.c.b16 %v1698, %v1694
        %v2535 = vpack.c.b16 %v1703, %v1699
        %v2536 = vpack.c.b16 %v1704, %v1700
        %v2537 = vpack.c.b16 %v1705, %v1701
        %v2538 = vpack.c.b16 %v1706, %v1702
        %v2539 = vpack.c.b16 %v1711, %v1707
        %v2540 = vpack.c.b16 %v1712, %v1708
        %v2541 = vpack.c.b16 %v1713, %v1709
        %v2542 = vpack.c.b16 %v1714, %v1710
        %v2543 = vpack.c.b16 %v1719, %v1715
        %v2544 = vpack.c.b16 %v1720, %v1716
        %v2545 = vpack.c.b16 %v1721, %v1717
        %v2546 = vpack.c.b16 %v1722, %v1718
        %v2547 = vpack.c.b16 %v1727, %v1723
        %v2548 = vpack.c.b16 %v1728, %v1724
        %v2549 = vpack.c.b16 %v1729, %v1725
        %v2550 = vpack.c.b16 %v1730, %v1726
        %v2551 = vpack.c.b16 %v1735, %v1731
        %v2552 = vpack.c.b16 %v1736, %v1732
        %v2553 = vpack.c.b16 %v1737, %v1733
        %v2554 = vpack.c.b16 %v1738, %v1734
        %v2555 = vpack.c.b16 %v1743, %v1739
        %v2556 = vpack.c.b16 %v1744, %v1740
        %v2557 = vpack.c.b16 %v1745, %v1741
        %v2558 = vpack.c.b16 %v1746, %v1742
        %v2559 = vpack.c.b16 %v1751, %v1747
        %v2560 = vpack.c.b16 %v1752, %v1748
        %v2561 = vpack.c.b16 %v1753, %v1749
        %v2562 = vpack.c.b16 %v1754, %v1750
        %v2563 = vpack.c.b16 %v1759, %v1755
        %v2564 = vpack.c.b16 %v1760, %v1756
        %v2565 = vpack.c.b16 %v1761, %v1757
        %v2566 = vpack.c.b16 %v1762, %v1758
        %v2567 = vpack.c.b16 %v1767, %v1763
        %v2568 = vpack.c.b16 %v1768, %v1764
        %v2569 = vpack.c.b16 %v1769, %v1765
        %v2570 = vpack.c.b16 %v1770, %v1766
        %v2571 = vpack.c.b16 %v1775, %v1771
        %v2572 = vpack.c.b16 %v1776, %v1772
        %v2573 = vpack.c.b16 %v1777, %v1773
        %v2574 = vpack.c.b16 %v1778, %v1774
        %v2575 = vpack.c.b16 %v1783, %v1779
        %v2576 = vpack.c.b16 %v1784, %v1780
        %v2577 = vpack.c.b16 %v1785, %v1781
        %v2578 = vpack.c.b16 %v1786, %v1782
        %v2579 = vpack.c.b16 %v1791, %v1787
        %v2580 = vpack.c.b16 %v1792, %v1788
        %v2581 = vpack.c.b16 %v1793, %v1789
        %v2582 = vpack.c.b16 %v1794, %v1790
        %v2583 = vpack.c.b16 %v1799, %v1795
        %v2584 = vpack.c.b16 %v1800, %v1796
        %v2585 = vpack.c.b16 %v1801, %v1797
        %v2586 = vpack.c.b16 %v1802, %v1798
        %v2587 = vpack.c.b16 %v1807, %v1803
        %v2588 = vpack.c.b16 %v1808, %v1804
        %v2589 = vpack.c.b16 %v1809, %v1805
        %v2590 = vpack.c.b16 %v1810, %v1806
        %v2591 = vpack.c.b16 %v1815, %v1811
        %v2592 = vpack.c.b16 %v1816, %v1812
        %v2593 = vpack.c.b16 %v1817, %v1813
        %v2594 = vpack.c.b16 %v1818, %v1814
        %v2595 = vpack.c.b16 %v1823, %v1819
        %v2596 = vpack.c.b16 %v1824, %v1820
        %v2597 = vpack.c.b16 %v1825, %v1821
        %v2598 = vpack.c.b16 %v1826, %v1822
        %v2599 = vpack.c.b16 %v1831, %v1827
        %v2600 = vpack.c.b16 %v1832, %v1828
        %v2601 = vpack.c.b16 %v1833, %v1829
        %v2602 = vpack.c.b16 %v1834, %v1830
        %v2603 = vpack.c.b16 %v1839, %v1835
        %v2604 = vpack.c.b16 %v1840, %v1836
        %v2605 = vpack.c.b16 %v1841, %v1837
        %v2606 = vpack.c.b16 %v1842, %v1838
        %v2607 = vpack.c.b16 %v1847, %v1843
        %v2608 = vpack.c.b16 %v1848, %v1844
        %v2609 = vpack.c.b16 %v1849, %v1845
        %v2610 = vpack.c.b16 %v1850, %v1846
        %v2611 = vpack.c.b16 %v1855, %v1851
        %v2612 = vpack.c.b16 %v1856, %v1852
        %v2613 = vpack.c.b16 %v1857, %v1853
        %v2614 = vpack.c.b16 %v1858, %v1854
        %v2615 = vpack.c.b16 %v1863, %v1859
        %v2616 = vpack.c.b16 %v1864, %v1860
        %v2617 = vpack.c.b16 %v1865, %v1861
        %v2618 = vpack.c.b16 %v1866, %v1862
        %v2619 = vpack.c.b16 %v1871, %v1867
        %v2620 = vpack.c.b16 %v1872, %v1868
        %v2621 = vpack.c.b16 %v1873, %v1869
        %v2622 = vpack.c.b16 %v1874, %v1870
        %v2623 = vpack.c.b16 %v1879, %v1875
        %v2624 = vpack.c.b16 %v1880, %v1876
        %v2625 = vpack.c.b16 %v1881, %v1877
        %v2626 = vpack.c.b16 %v1882, %v1878
        %v2627 = vpack.c.b16 %v1887, %v1883
        %v2628 = vpack.c.b16 %v1888, %v1884
        %v2629 = vpack.c.b16 %v1889, %v1885
        %v2630 = vpack.c.b16 %v1890, %v1886
        %v2631 = vpack.c.b16 %v1895, %v1891
        %v2632 = vpack.c.b16 %v1896, %v1892
        %v2633 = vpack.c.b16 %v1897, %v1893
        %v2634 = vpack.c.b16 %v1898, %v1894
        %v2635 = vpack.c.b16 %v1903, %v1899
        %v2636 = vpack.c.b16 %v1904, %v1900
        %v2637 = vpack.c.b16 %v1905, %v1901
        %v2638 = vpack.c.b16 %v1906, %v1902
        %v2639 = vpack.c.b16 %v1911, %v1907
        %v2640 = vpack.c.b16 %v1912, %v1908
        %v2641 = vpack.c.b16 %v1913, %v1909
        %v2642 = vpack.c.b16 %v1914, %v1910
        %v2643 = vpack.c.b16 %v1919, %v1915
        %v2644 = vpack.c.b16 %v1920, %v1916
        %v2645 = vpack.c.b16 %v1921, %v1917
        %v2646 = vpack.c.b16 %v1922, %v1918
        %v2647 = vpack.c.b16 %v1927, %v1923
        %v2648 = vpack.c.b16 %v1928, %v1924
        %v2649 = vpack.c.b16 %v1929, %v1925
        %v2650 = vpack.c.b16 %v1930, %v1926
        %v2651 = vpack.c.b16 %v1935, %v1931
        %v2652 = vpack.c.b16 %v1936, %v1932
        %v2653 = vpack.c.b16 %v1937, %v1933
        %v2654 = vpack.c.b16 %v1938, %v1934
        %v2655 = vpack.c.b16 %v1943, %v1939
        %v2656 = vpack.c.b16 %v1944, %v1940
        %v2657 = vpack.c.b16 %v1945, %v1941
        %v2658 = vpack.c.b16 %v1946, %v1942
        %v2659 = vpack.c.b16 %v1951, %v1947
        %v2660 = vpack.c.b16 %v1952, %v1948
        %v2661 = vpack.c.b16 %v1953, %v1949
        %v2662 = vpack.c.b16 %v1954, %v1950
        %v2663 = vpack.c.b16 %v1959, %v1955
        %v2664 = vpack.c.b16 %v1960, %v1956
        %v2665 = vpack.c.b16 %v1961, %v1957
        %v2666 = vpack.c.b16 %v1962, %v1958
        %v2667 = vpack.c.b16 %v1967, %v1963
        %v2668 = vpack.c.b16 %v1968, %v1964
        %v2669 = vpack.c.b16 %v1969, %v1965
        %v2670 = vpack.c.b16 %v1970, %v1966
        %v2671 = vpack.c.b16 %v1975, %v1971
        %v2672 = vpack.c.b16 %v1976, %v1972
        %v2673 = vpack.c.b16 %v1977, %v1973
        %v2674 = vpack.c.b16 %v1978, %v1974
        %v2675 = vpack.c.b16 %v1983, %v1979
        %v2676 = vpack.c.b16 %v1984, %v1980
        %v2677 = vpack.c.b16 %v1985, %v1981
        %v2678 = vpack.c.b16 %v1986, %v1982
        %v2679 = vpack.c.b16 %v1991, %v1987
        %v2680 = vpack.c.b16 %v1992, %v1988
        %v2681 = vpack.c.b16 %v1993, %v1989
        %v2682 = vpack.c.b16 %v1994, %v1990
        %v2683 = vpack.c.b16 %v1999, %v1995
        %v2684 = vpack.c.b16 %v2000, %v1996
        %v2685 = vpack.c.b16 %v2001, %v1997
        %v2686 = vpack.c.b16 %v2002, %v1998
        %v2687 = vpack.c.b16 %v2007, %v2003
        %v2688 = vpack.c.b16 %v2008, %v2004
        %v2689 = vpack.c.b16 %v2009, %v2005
        %v2690 = vpack.c.b16 %v2010, %v2006
        %v2691 = vpack.c.b16 %v2015, %v2011
        %v2692 = vpack.c.b16 %v2016, %v2012
        %v2693 = vpack.c.b16 %v2017, %v2013
        %v2694 = vpack.c.b16 %v2018, %v2014
        %v2695 = vpack.c.b16 %v2023, %v2019
        %v2696 = vpack.c.b16 %v2024, %v2020
        %v2697 = vpack.c.b16 %v2025, %v2021
        %v2698 = vpack.c.b16 %v2026, %v2022
        %v2699 = vpack.c.b16 %v2031, %v2027
        %v2700 = vpack.c.b16 %v2032, %v2028
        %v2701 = vpack.c.b16 %v2033, %v2029
        %v2702 = vpack.c.b16 %v2034, %v2030
        %v2703 = vpack.c.b16 %v2039, %v2035
        %v2704 = vpack.c.b16 %v2040, %v2036
        %v2705 = vpack.c.b16 %v2041, %v2037
        %v2706 = vpack.c.b16 %v2042, %v2038
        %v2707 = vpack.c.b16 %v2047, %v2043
        %v2708 = vpack.c.b16 %v2048, %v2044
        %v2709 = vpack.c.b16 %v2049, %v2045
        %v2710 = vpack.c.b16 %v2050, %v2046
        %v2711 = vpack.c.b16 %v2055, %v2051
        %v2712 = vpack.c.b16 %v2056, %v2052
        %v2713 = vpack.c.b16 %v2057, %v2053
        %v2714 = vpack.c.b16 %v2058, %v2054
        %v2715 = vpack.c.b16 %v2063, %v2059
        %v2716 = vpack.c.b16 %v2064, %v2060
        %v2717 = vpack.c.b16 %v2065, %v2061
        %v2718 = vpack.c.b16 %v2066, %v2062
        %v2719 = vpack.c.b16 %v2071, %v2067
        %v2720 = vpack.c.b16 %v2072, %v2068
        %v2721 = vpack.c.b16 %v2073, %v2069
        %v2722 = vpack.c.b16 %v2074, %v2070
        %v2723 = vpack.c.b16 %v2079, %v2075
        %v2724 = vpack.c.b16 %v2080, %v2076
        %v2725 = vpack.c.b16 %v2081, %v2077
        %v2726 = vpack.c.b16 %v2082, %v2078
        %v2727 = vpack.c.b16 %v2087, %v2083
        %v2728 = vpack.c.b16 %v2088, %v2084
        %v2729 = vpack.c.b16 %v2089, %v2085
        %v2730 = vpack.c.b16 %v2090, %v2086
        %v2731 = vpack.c.b16 %v2095, %v2091
        %v2732 = vpack.c.b16 %v2096, %v2092
        %v2733 = vpack.c.b16 %v2097, %v2093
        %v2734 = vpack.c.b16 %v2098, %v2094
        %v2735 = vpack.c.b16 %v2103, %v2099
        %v2736 = vpack.c.b16 %v2104, %v2100
        %v2737 = vpack.c.b16 %v2105, %v2101
        %v2738 = vpack.c.b16 %v2106, %v2102
        %v2739 = vpack.c.b16 %v2111, %v2107
        %v2740 = vpack.c.b16 %v2112, %v2108
        %v2741 = vpack.c.b16 %v2113, %v2109
        %v2742 = vpack.c.b16 %v2114, %v2110
        %v2743 = vpack.c.b16 %v2119, %v2115
        %v2744 = vpack.c.b16 %v2120, %v2116
        %v2745 = vpack.c.b16 %v2121, %v2117
        %v2746 = vpack.c.b16 %v2122, %v2118
        %v2747 = vpack.c.b16 %v2127, %v2123
        %v2748 = vpack.c.b16 %v2128, %v2124
        %v2749 = vpack.c.b16 %v2129, %v2125
        %v2750 = vpack.c.b16 %v2130, %v2126
        %v2751 = vpack.c.b16 %v2135, %v2131
        %v2752 = vpack.c.b16 %v2136, %v2132
        %v2753 = vpack.c.b16 %v2137, %v2133
        %v2754 = vpack.c.b16 %v2138, %v2134
        %v2755 = vpack.c.b16 %v2143, %v2139
        %v2756 = vpack.c.b16 %v2144, %v2140
        %v2757 = vpack.c.b16 %v2145, %v2141
        %v2758 = vpack.c.b16 %v2146, %v2142
        %v2759 = vpack.c.b16 %v2151, %v2147
        %v2760 = vpack.c.b16 %v2152, %v2148
        %v2761 = vpack.c.b16 %v2153, %v2149
        %v2762 = vpack.c.b16 %v2154, %v2150
        %v2763 = vpack.c.b16 %v2159, %v2155
        %v2764 = vpack.c.b16 %v2160, %v2156
        %v2765 = vpack.c.b16 %v2161, %v2157
        %v2766 = vpack.c.b16 %v2162, %v2158
        %v2767 = vpack.c.b16 %v2167, %v2163
        %v2768 = vpack.c.b16 %v2168, %v2164
        %v2769 = vpack.c.b16 %v2169, %v2165
        %v2770 = vpack.c.b16 %v2170, %v2166
        %v2771 = vpack.c.b16 %v2175, %v2171
        %v2772 = vpack.c.b16 %v2176, %v2172
        %v2773 = vpack.c.b16 %v2177, %v2173
        %v2774 = vpack.c.b16 %v2178, %v2174
        %v2775 = vpack.c.b16 %v2183, %v2179
        %v2776 = vpack.c.b16 %v2184, %v2180
        %v2777 = vpack.c.b16 %v2185, %v2181
        %v2778 = vpack.c.b16 %v2186, %v2182
        %v2779 = vpack.c.b16 %v2191, %v2187
        %v2780 = vpack.c.b16 %v2192, %v2188
        %v2781 = vpack.c.b16 %v2193, %v2189
        %v2782 = vpack.c.b16 %v2194, %v2190
        %v2783 = vpack.c.b16 %v2199, %v2195
        %v2784 = vpack.c.b16 %v2200, %v2196
        %v2785 = vpack.c.b16 %v2201, %v2197
        %v2786 = vpack.c.b16 %v2202, %v2198
        %v2787 = vpack.c.b16 %v2207, %v2203
        %v2788 = vpack.c.b16 %v2208, %v2204
        %v2789 = vpack.c.b16 %v2209, %v2205
        %v2790 = vpack.c.b16 %v2210, %v2206
        %v2791 = vpack.c.b16 %v2215, %v2211
        %v2792 = vpack.c.b16 %v2216, %v2212
        %v2793 = vpack.c.b16 %v2217, %v2213
        %v2794 = vpack.c.b16 %v2218, %v2214
        %v2795 = vpack.c.b16 %v2223, %v2219
        %v2796 = vpack.c.b16 %v2224, %v2220
        %v2797 = vpack.c.b16 %v2225, %v2221
        %v2798 = vpack.c.b16 %v2226, %v2222
        %v2799 = vpack.c.b16 %v2231, %v2227
        %v2800 = vpack.c.b16 %v2232, %v2228
        %v2801 = vpack.c.b16 %v2233, %v2229
        %v2802 = vpack.c.b16 %v2234, %v2230
        %v2803 = vpack.c.b16 %v2239, %v2235
        %v2804 = vpack.c.b16 %v2240, %v2236
        %v2805 = vpack.c.b16 %v2241, %v2237
        %v2806 = vpack.c.b16 %v2242, %v2238
        %v2807 = vpack.c.b16 %v2247, %v2243
        %v2808 = vpack.c.b16 %v2248, %v2244
        %v2809 = vpack.c.b16 %v2249, %v2245
        %v2810 = vpack.c.b16 %v2250, %v2246
        %v2811 = vpack.c.b16 %v2255, %v2251
        %v2812 = vpack.c.b16 %v2256, %v2252
        %v2813 = vpack.c.b16 %v2257, %v2253
        %v2814 = vpack.c.b16 %v2258, %v2254
        %v2815 = vpack.c.b16 %v2263, %v2259
        %v2816 = vpack.c.b16 %v2264, %v2260
        %v2817 = vpack.c.b16 %v2265, %v2261
        %v2818 = vpack.c.b16 %v2266, %v2262
        %v2819 = vpack.c.b16 %v2271, %v2267
        %v2820 = vpack.c.b16 %v2272, %v2268
        %v2821 = vpack.c.b16 %v2273, %v2269
        %v2822 = vpack.c.b16 %v2274, %v2270
        %v2823 = vpack.c.b16 %v2279, %v2275
        %v2824 = vpack.c.b16 %v2280, %v2276
        %v2825 = vpack.c.b16 %v2281, %v2277
        %v2826 = vpack.c.b16 %v2282, %v2278
        %v2827 = vpack.c.b16 %v2287, %v2283
        %v2828 = vpack.c.b16 %v2288, %v2284
        %v2829 = vpack.c.b16 %v2289, %v2285
        %v2830 = vpack.c.b16 %v2290, %v2286
        %v2831 = vpack.c.b16 %v2295, %v2291
        %v2832 = vpack.c.b16 %v2296, %v2292
        %v2833 = vpack.c.b16 %v2297, %v2293
        %v2834 = vpack.c.b16 %v2298, %v2294
        %v2835 = vpack.c.b16 %v2303, %v2299
        %v2836 = vpack.c.b16 %v2304, %v2300
        %v2837 = vpack.c.b16 %v2305, %v2301
        %v2838 = vpack.c.b16 %v2306, %v2302
        %v2839 = vpack.c.b16 %v2311, %v2307
        %v2840 = vpack.c.b16 %v2312, %v2308
        %v2841 = vpack.c.b16 %v2313, %v2309
        %v2842 = vpack.c.b16 %v2314, %v2310
        %v2843 = vpack.c.b16 %v2319, %v2315
        %v2844 = vpack.c.b16 %v2320, %v2316
        %v2845 = vpack.c.b16 %v2321, %v2317
        %v2846 = vpack.c.b16 %v2322, %v2318
        %v2847 = vpack.c.b16 %v2327, %v2323
        %v2848 = vpack.c.b16 %v2328, %v2324
        %v2849 = vpack.c.b16 %v2329, %v2325
        %v2850 = vpack.c.b16 %v2330, %v2326
        %v2851 = vpack.c.b16 %v2335, %v2331
        %v2852 = vpack.c.b16 %v2336, %v2332
        %v2853 = vpack.c.b16 %v2337, %v2333
        %v2854 = vpack.c.b16 %v2338, %v2334
        %v2855 = vpack.c.b16 %v2343, %v2339
        %v2856 = vpack.c.b16 %v2344, %v2340
        %v2857 = vpack.c.b16 %v2345, %v2341
        %v2858 = vpack.c.b16 %v2346, %v2342
        %3371 = vmatprep.subr.bf16.mxu0 %v2348
        %3372 = vmatpush1.bf16.msra.mxu0 %v2347
        %3373 = vmatprep.subr.bf16.mxu0 %v2352
        %3374 = vmatpush1.bf16.msra.mxu0 %v2351
        %3375 = vmatprep.subr.bf16.mxu0 %v2356
        %3376 = vmatpush1.bf16.msra.mxu0 %v2355
        %3377 = vmatprep.subr.bf16.mxu0 %v2360
        %3378 = vmatpush1.bf16.msra.mxu0 %v2359
        %3379 = vmatprep.subr.bf16.mxu0 %v2364
        %3380 = vmatpush1.bf16.msra.mxu0 %v2363
        %3381 = vmatprep.subr.bf16.mxu0 %v2368
        %3382 = vmatpush1.bf16.msra.mxu0 %v2367
        %3383 = vmatprep.subr.bf16.mxu0 %v2372
        %3384 = vmatpush1.bf16.msra.mxu0 %v2371
        %3385 = vmatprep.subr.bf16.mxu0 %v2376
        %3386 = vmatpush1.bf16.msra.mxu0 %v2375
        %3387 = vmatprep.subr.bf16.mxu0 %v2380
        %3388 = vmatpush1.bf16.msra.mxu0 %v2379
        %3389 = vmatprep.subr.bf16.mxu0 %v2384
        %3390 = vmatpush1.bf16.msra.mxu0 %v2383
        %3391 = vmatprep.subr.bf16.mxu0 %v2388
        %3392 = vmatpush1.bf16.msra.mxu0 %v2387
        %3393 = vmatprep.subr.bf16.mxu0 %v2392
        %3394 = vmatpush1.bf16.msra.mxu0 %v2391
        %3395 = vmatprep.subr.bf16.mxu0 %v2396
        %3396 = vmatpush1.bf16.msra.mxu0 %v2395
        %3397 = vmatprep.subr.bf16.mxu0 %v2400
        %3398 = vmatpush1.bf16.msra.mxu0 %v2399
        %3399 = vmatprep.subr.bf16.mxu0 %v2404
        %3400 = vmatpush1.bf16.msra.mxu0 %v2403
        %3401 = vmatprep.subr.bf16.mxu0 %v2408
        %3402 = vmatpush1.bf16.msra.mxu0 %v2407
        %3403 = vmatprep.mubr.bf16.mxu0 %v280
        %3404 = vmatmul.mubr.bf16.gmra.mrb[0].mxu0 %v279
        %v3405 = vpop.f32.mrb[0].mxu0
        %v3406 = vadd.f32 0.0, %v3405
        %v3407 = vpop.f32.mrb[0].mxu0
        %v3408 = vadd.f32 0.0, %v3407
        %v3409 = vpop.f32.mrb[0].mxu0
        %v3410 = vpop.f32.mrb[0].mxu0
        %3411 = vdwg.mxu0
        %3412 = vmatprep.subr.bf16.mxu0 %v2412
        %3413 = vmatpush1.bf16.msra.mxu0 %v2411
        %3414 = vmatprep.subr.bf16.mxu0 %v2416
        %3415 = vmatpush1.bf16.msra.mxu0 %v2415
        %3416 = vmatprep.subr.bf16.mxu0 %v2420
        %3417 = vmatpush1.bf16.msra.mxu0 %v2419
        %3418 = vmatprep.subr.bf16.mxu0 %v2424
        %3419 = vmatpush1.bf16.msra.mxu0 %v2423
        %3420 = vmatprep.subr.bf16.mxu0 %v2428
        %3421 = vmatpush1.bf16.msra.mxu0 %v2427
        %3422 = vmatprep.subr.bf16.mxu0 %v2432
        %3423 = vmatpush1.bf16.msra.mxu0 %v2431
        %3424 = vmatprep.subr.bf16.mxu0 %v2436
        %3425 = vmatpush1.bf16.msra.mxu0 %v2435
        %3426 = vmatprep.subr.bf16.mxu0 %v2440
        %3427 = vmatpush1.bf16.msra.mxu0 %v2439
        %3428 = vmatprep.subr.bf16.mxu0 %v2444
        %3429 = vmatpush1.bf16.msra.mxu0 %v2443
        %3430 = vmatprep.subr.bf16.mxu0 %v2448
        %3431 = vmatpush1.bf16.msra.mxu0 %v2447
        %3432 = vmatprep.subr.bf16.mxu0 %v2452
        %3433 = vmatpush1.bf16.msra.mxu0 %v2451
        %3434 = vmatprep.subr.bf16.mxu0 %v2456
        %3435 = vmatpush1.bf16.msra.mxu0 %v2455
        %3436 = vmatprep.subr.bf16.mxu0 %v2460
        %3437 = vmatpush1.bf16.msra.mxu0 %v2459
        %3438 = vmatprep.subr.bf16.mxu0 %v2464
        %3439 = vmatpush1.bf16.msra.mxu0 %v2463
        %3440 = vmatprep.subr.bf16.mxu0 %v2468
        %3441 = vmatpush1.bf16.msra.mxu0 %v2467
        %3442 = vmatprep.subr.bf16.mxu0 %v2472
        %3443 = vmatpush1.bf16.msra.mxu0 %v2471
        %3444 = vmatprep.mubr.bf16.mxu0 %v282
        %3445 = vmatmul.mubr.bf16.gmra.mrb[0].mxu0 %v281
        %v3446 = vpop.f32.mrb[0].mxu0
        %v3447 = vadd.f32 %v3406, %v3446
        %v3448 = vpop.f32.mrb[0].mxu0
        %v3449 = vadd.f32 %v3408, %v3448
        %v3450 = vpop.f32.mrb[0].mxu0
        %v3451 = vpop.f32.mrb[0].mxu0
        %3452 = vdwg.mxu0
        %3453 = vmatprep.subr.bf16.mxu0 %v2476
        %3454 = vmatpush1.bf16.msra.mxu0 %v2475
        %3455 = vmatprep.subr.bf16.mxu0 %v2480
        %3456 = vmatpush1.bf16.msra.mxu0 %v2479
        %3457 = vmatprep.subr.bf16.mxu0 %v2484
        %3458 = vmatpush1.bf16.msra.mxu0 %v2483
        %3459 = vmatprep.subr.bf16.mxu0 %v2488
        %3460 = vmatpush1.bf16.msra.mxu0 %v2487
        %3461 = vmatprep.subr.bf16.mxu0 %v2492
        %3462 = vmatpush1.bf16.msra.mxu0 %v2491
        %3463 = vmatprep.subr.bf16.mxu0 %v2496
        %3464 = vmatpush1.bf16.msra.mxu0 %v2495
        %3465 = vmatprep.subr.bf16.mxu0 %v2500
        %3466 = vmatpush1.bf16.msra.mxu0 %v2499
        %3467 = vmatprep.subr.bf16.mxu0 %v2504
        %3468 = vmatpush1.bf16.msra.mxu0 %v2503
        %3469 = vmatprep.subr.bf16.mxu0 %v2508
        %3470 = vmatpush1.bf16.msra.mxu0 %v2507
        %3471 = vmatprep.subr.bf16.mxu0 %v2512
        %3472 = vmatpush1.bf16.msra.mxu0 %v2511
        %3473 = vmatprep.subr.bf16.mxu0 %v2516
        %3474 = vmatpush1.bf16.msra.mxu0 %v2515
        %3475 = vmatprep.subr.bf16.mxu0 %v2520
        %3476 = vmatpush1.bf16.msra.mxu0 %v2519
        %3477 = vmatprep.subr.bf16.mxu0 %v2524
        %3478 = vmatpush1.bf16.msra.mxu0 %v2523
        %3479 = vmatprep.subr.bf16.mxu0 %v2528
        %3480 = vmatpush1.bf16.msra.mxu0 %v2527
        %3481 = vmatprep.subr.bf16.mxu0 %v2532
        %3482 = vmatpush1.bf16.msra.mxu0 %v2531
        %3483 = vmatprep.subr.bf16.mxu0 %v2536
        %3484 = vmatpush1.bf16.msra.mxu0 %v2535
        %3485 = vmatprep.mubr.bf16.mxu0 %v284
        %3486 = vmatmul.mubr.bf16.gmra.mrb[0].mxu0 %v283
        %v3487 = vpop.f32.mrb[0].mxu0
        %v3488 = vadd.f32 %v3447, %v3487
        %v3489 = vpop.f32.mrb[0].mxu0
        %v3490 = vadd.f32 %v3449, %v3489
        %v3491 = vpop.f32.mrb[0].mxu0
        %v3492 = vpop.f32.mrb[0].mxu0
        %3493 = vdwg.mxu0
        %3494 = vmatprep.subr.bf16.mxu0 %v2540
        %3495 = vmatpush1.bf16.msra.mxu0 %v2539
        %3496 = vmatprep.subr.bf16.mxu0 %v2544
        %3497 = vmatpush1.bf16.msra.mxu0 %v2543
        %3498 = vmatprep.subr.bf16.mxu0 %v2548
        %3499 = vmatpush1.bf16.msra.mxu0 %v2547
        %3500 = vmatprep.subr.bf16.mxu0 %v2552
        %3501 = vmatpush1.bf16.msra.mxu0 %v2551
        %3502 = vmatprep.subr.bf16.mxu0 %v2556
        %3503 = vmatpush1.bf16.msra.mxu0 %v2555
        %3504 = vmatprep.subr.bf16.mxu0 %v2560
        %3505 = vmatpush1.bf16.msra.mxu0 %v2559
        %3506 = vmatprep.subr.bf16.mxu0 %v2564
        %3507 = vmatpush1.bf16.msra.mxu0 %v2563
        %3508 = vmatprep.subr.bf16.mxu0 %v2568
        %3509 = vmatpush1.bf16.msra.mxu0 %v2567
        %3510 = vmatprep.subr.bf16.mxu0 %v2572
        %3511 = vmatpush1.bf16.msra.mxu0 %v2571
        %3512 = vmatprep.subr.bf16.mxu0 %v2576
        %3513 = vmatpush1.bf16.msra.mxu0 %v2575
        %3514 = vmatprep.subr.bf16.mxu0 %v2580
        %3515 = vmatpush1.bf16.msra.mxu0 %v2579
        %3516 = vmatprep.subr.bf16.mxu0 %v2584
        %3517 = vmatpush1.bf16.msra.mxu0 %v2583
        %3518 = vmatprep.subr.bf16.mxu0 %v2588
        %3519 = vmatpush1.bf16.msra.mxu0 %v2587
        %3520 = vmatprep.subr.bf16.mxu0 %v2592
        %3521 = vmatpush1.bf16.msra.mxu0 %v2591
        %3522 = vmatprep.subr.bf16.mxu0 %v2596
        %3523 = vmatpush1.bf16.msra.mxu0 %v2595
        %3524 = vmatprep.subr.bf16.mxu0 %v2600
        %3525 = vmatpush1.bf16.msra.mxu0 %v2599
        %3526 = vmatprep.mubr.bf16.mxu0 %v286
        %3527 = vmatmul.mubr.bf16.gmra.mrb[0].mxu0 %v285
        %v3528 = vpop.f32.mrb[0].mxu0
        %v3529 = vadd.f32 %v3488, %v3528
        %v3530 = vpop.f32.mrb[0].mxu0
        %v3531 = vadd.f32 %v3490, %v3530
        %v3532 = vpop.f32.mrb[0].mxu0
        %v3533 = vpop.f32.mrb[0].mxu0
        %3534 = vdwg.mxu0
        %3535 = vmatprep.subr.bf16.mxu0 %v2604
        %3536 = vmatpush1.bf16.msra.mxu0 %v2603
        %3537 = vmatprep.subr.bf16.mxu0 %v2608
        %3538 = vmatpush1.bf16.msra.mxu0 %v2607
        %3539 = vmatprep.subr.bf16.mxu0 %v2612
        %3540 = vmatpush1.bf16.msra.mxu0 %v2611
        %3541 = vmatprep.subr.bf16.mxu0 %v2616
        %3542 = vmatpush1.bf16.msra.mxu0 %v2615
        %3543 = vmatprep.subr.bf16.mxu0 %v2620
        %3544 = vmatpush1.bf16.msra.mxu0 %v2619
        %3545 = vmatprep.subr.bf16.mxu0 %v2624
        %3546 = vmatpush1.bf16.msra.mxu0 %v2623
        %3547 = vmatprep.subr.bf16.mxu0 %v2628
        %3548 = vmatpush1.bf16.msra.mxu0 %v2627
        %3549 = vmatprep.subr.bf16.mxu0 %v2632
        %3550 = vmatpush1.bf16.msra.mxu0 %v2631
        %3551 = vmatprep.subr.bf16.mxu0 %v2636
        %3552 = vmatpush1.bf16.msra.mxu0 %v2635
        %3553 = vmatprep.subr.bf16.mxu0 %v2640
        %3554 = vmatpush1.bf16.msra.mxu0 %v2639
        %3555 = vmatprep.subr.bf16.mxu0 %v2644
        %3556 = vmatpush1.bf16.msra.mxu0 %v2643
        %3557 = vmatprep.subr.bf16.mxu0 %v2648
        %3558 = vmatpush1.bf16.msra.mxu0 %v2647
        %3559 = vmatprep.subr.bf16.mxu0 %v2652
        %3560 = vmatpush1.bf16.msra.mxu0 %v2651
        %3561 = vmatprep.subr.bf16.mxu0 %v2656
        %3562 = vmatpush1.bf16.msra.mxu0 %v2655
        %3563 = vmatprep.subr.bf16.mxu0 %v2660
        %3564 = vmatpush1.bf16.msra.mxu0 %v2659
        %3565 = vmatprep.subr.bf16.mxu0 %v2664
        %3566 = vmatpush1.bf16.msra.mxu0 %v2663
        %3567 = vmatprep.mubr.bf16.mxu0 %v288
        %3568 = vmatmul.mubr.bf16.gmra.mrb[0].mxu0 %v287
        %v3569 = vpop.f32.mrb[0].mxu0
        %v3570 = vadd.f32 %v3529, %v3569
        %v3571 = vpop.f32.mrb[0].mxu0
        %v3572 = vadd.f32 %v3531, %v3571
        %v3573 = vpop.f32.mrb[0].mxu0
        %v3574 = vpop.f32.mrb[0].mxu0
        %3575 = vdwg.mxu0
        %3576 = vmatprep.subr.bf16.mxu0 %v2668
        %3577 = vmatpush1.bf16.msra.mxu0 %v2667
        %3578 = vmatprep.subr.bf16.mxu0 %v2672
        %3579 = vmatpush1.bf16.msra.mxu0 %v2671
        %3580 = vmatprep.subr.bf16.mxu0 %v2676
        %3581 = vmatpush1.bf16.msra.mxu0 %v2675
        %3582 = vmatprep.subr.bf16.mxu0 %v2680
        %3583 = vmatpush1.bf16.msra.mxu0 %v2679
        %3584 = vmatprep.subr.bf16.mxu0 %v2684
        %3585 = vmatpush1.bf16.msra.mxu0 %v2683
        %3586 = vmatprep.subr.bf16.mxu0 %v2688
        %3587 = vmatpush1.bf16.msra.mxu0 %v2687
        %3588 = vmatprep.subr.bf16.mxu0 %v2692
        %3589 = vmatpush1.bf16.msra.mxu0 %v2691
        %3590 = vmatprep.subr.bf16.mxu0 %v2696
        %3591 = vmatpush1.bf16.msra.mxu0 %v2695
        %3592 = vmatprep.subr.bf16.mxu0 %v2700
        %3593 = vmatpush1.bf16.msra.mxu0 %v2699
        %3594 = vmatprep.subr.bf16.mxu0 %v2704
        %3595 = vmatpush1.bf16.msra.mxu0 %v2703
        %3596 = vmatprep.subr.bf16.mxu0 %v2708
        %3597 = vmatpush1.bf16.msra.mxu0 %v2707
        %3598 = vmatprep.subr.bf16.mxu0 %v2712
        %3599 = vmatpush1.bf16.msra.mxu0 %v2711
        %3600 = vmatprep.subr.bf16.mxu0 %v2716
        %3601 = vmatpush1.bf16.msra.mxu0 %v2715
        %3602 = vmatprep.subr.bf16.mxu0 %v2720
        %3603 = vmatpush1.bf16.msra.mxu0 %v2719
        %3604 = vmatprep.subr.bf16.mxu0 %v2724
        %3605 = vmatpush1.bf16.msra.mxu0 %v2723
        %3606 = vmatprep.subr.bf16.mxu0 %v2728
        %3607 = vmatpush1.bf16.msra.mxu0 %v2727
        %3608 = vmatprep.mubr.bf16.mxu0 %v290
        %3609 = vmatmul.mubr.bf16.gmra.mrb[0].mxu0 %v289
        %v3610 = vpop.f32.mrb[0].mxu0
        %v3611 = vadd.f32 %v3570, %v3610
        %v3612 = vpop.f32.mrb[0].mxu0
        %v3613 = vadd.f32 %v3572, %v3612
        %v3614 = vpop.f32.mrb[0].mxu0
        %v3615 = vpop.f32.mrb[0].mxu0
        %3616 = vdwg.mxu0
        %3617 = vmatprep.subr.bf16.mxu0 %v2732
        %3618 = vmatpush1.bf16.msra.mxu0 %v2731
        %3619 = vmatprep.subr.bf16.mxu0 %v2736
        %3620 = vmatpush1.bf16.msra.mxu0 %v2735
        %3621 = vmatprep.subr.bf16.mxu0 %v2740
        %3622 = vmatpush1.bf16.msra.mxu0 %v2739
        %3623 = vmatprep.subr.bf16.mxu0 %v2744
        %3624 = vmatpush1.bf16.msra.mxu0 %v2743
        %3625 = vmatprep.subr.bf16.mxu0 %v2748
        %3626 = vmatpush1.bf16.msra.mxu0 %v2747
        %3627 = vmatprep.subr.bf16.mxu0 %v2752
        %3628 = vmatpush1.bf16.msra.mxu0 %v2751
        %3629 = vmatprep.subr.bf16.mxu0 %v2756
        %3630 = vmatpush1.bf16.msra.mxu0 %v2755
        %3631 = vmatprep.subr.bf16.mxu0 %v2760
        %3632 = vmatpush1.bf16.msra.mxu0 %v2759
        %3633 = vmatprep.subr.bf16.mxu0 %v2764
        %3634 = vmatpush1.bf16.msra.mxu0 %v2763
        %3635 = vmatprep.subr.bf16.mxu0 %v2768
        %3636 = vmatpush1.bf16.msra.mxu0 %v2767
        %3637 = vmatprep.subr.bf16.mxu0 %v2772
        %3638 = vmatpush1.bf16.msra.mxu0 %v2771
        %3639 = vmatprep.subr.bf16.mxu0 %v2776
        %3640 = vmatpush1.bf16.msra.mxu0 %v2775
        %3641 = vmatprep.subr.bf16.mxu0 %v2780
        %3642 = vmatpush1.bf16.msra.mxu0 %v2779
        %3643 = vmatprep.subr.bf16.mxu0 %v2784
        %3644 = vmatpush1.bf16.msra.mxu0 %v2783
        %3645 = vmatprep.subr.bf16.mxu0 %v2788
        %3646 = vmatpush1.bf16.msra.mxu0 %v2787
        %3647 = vmatprep.subr.bf16.mxu0 %v2792
        %3648 = vmatpush1.bf16.msra.mxu0 %v2791
        %3649 = vmatprep.mubr.bf16.mxu0 %v292
        %3650 = vmatmul.mubr.bf16.gmra.mrb[0].mxu0 %v291
        %v3651 = vpop.f32.mrb[0].mxu0
        %v3652 = vadd.f32 %v3611, %v3651
        %v3653 = vpop.f32.mrb[0].mxu0
        %v3654 = vadd.f32 %v3613, %v3653
        %v3655 = vpop.f32.mrb[0].mxu0
        %v3656 = vpop.f32.mrb[0].mxu0
        %3657 = vdwg.mxu0
        %3658 = vmatprep.subr.bf16.mxu0 %v2796
        %3659 = vmatpush1.bf16.msra.mxu0 %v2795
        %3660 = vmatprep.subr.bf16.mxu0 %v2800
        %3661 = vmatpush1.bf16.msra.mxu0 %v2799
        %3662 = vmatprep.subr.bf16.mxu0 %v2804
        %3663 = vmatpush1.bf16.msra.mxu0 %v2803
        %3664 = vmatprep.subr.bf16.mxu0 %v2808
        %3665 = vmatpush1.bf16.msra.mxu0 %v2807
        %3666 = vmatprep.subr.bf16.mxu0 %v2812
        %3667 = vmatpush1.bf16.msra.mxu0 %v2811
        %3668 = vmatprep.subr.bf16.mxu0 %v2816
        %3669 = vmatpush1.bf16.msra.mxu0 %v2815
        %3670 = vmatprep.subr.bf16.mxu0 %v2820
        %3671 = vmatpush1.bf16.msra.mxu0 %v2819
        %3672 = vmatprep.subr.bf16.mxu0 %v2824
        %3673 = vmatpush1.bf16.msra.mxu0 %v2823
        %3674 = vmatprep.subr.bf16.mxu0 %v2828
        %3675 = vmatpush1.bf16.msra.mxu0 %v2827
        %3676 = vmatprep.subr.bf16.mxu0 %v2832
        %3677 = vmatpush1.bf16.msra.mxu0 %v2831
        %3678 = vmatprep.subr.bf16.mxu0 %v2836
        %3679 = vmatpush1.bf16.msra.mxu0 %v2835
        %3680 = vmatprep.subr.bf16.mxu0 %v2840
        %3681 = vmatpush1.bf16.msra.mxu0 %v2839
        %3682 = vmatprep.subr.bf16.mxu0 %v2844
        %3683 = vmatpush1.bf16.msra.mxu0 %v2843
        %3684 = vmatprep.subr.bf16.mxu0 %v2848
        %3685 = vmatpush1.bf16.msra.mxu0 %v2847
        %3686 = vmatprep.subr.bf16.mxu0 %v2852
        %3687 = vmatpush1.bf16.msra.mxu0 %v2851
        %3688 = vmatprep.subr.bf16.mxu0 %v2856
        %3689 = vmatpush1.bf16.msra.mxu0 %v2855
        %3690 = vmatprep.mubr.bf16.mxu0 %v294
        %3691 = vmatmul.mubr.bf16.gmra.mrb[0].mxu0 %v293
        %v3692 = vpop.f32.mrb[0].mxu0
        %v3693 = vadd.f32 %v3652, %v3692
        %v3694 = vpop.f32.mrb[0].mxu0
        %v3695 = vadd.f32 %v3654, %v3694
        %v3696 = vpop.f32.mrb[0].mxu0
        %v3697 = vpop.f32.mrb[0].mxu0
        %3698 = vdwg.mxu0
        %3699 = vmatprep.subr.bf16.mxu0 %v2350
        %3700 = vmatpush1.bf16.msra.mxu0 %v2349
        %3701 = vmatprep.subr.bf16.mxu0 %v2354
        %3702 = vmatpush1.bf16.msra.mxu0 %v2353
        %3703 = vmatprep.subr.bf16.mxu0 %v2358
        %3704 = vmatpush1.bf16.msra.mxu0 %v2357
        %3705 = vmatprep.subr.bf16.mxu0 %v2362
        %3706 = vmatpush1.bf16.msra.mxu0 %v2361
        %3707 = vmatprep.subr.bf16.mxu0 %v2366
        %3708 = vmatpush1.bf16.msra.mxu0 %v2365
        %3709 = vmatprep.subr.bf16.mxu0 %v2370
        %3710 = vmatpush1.bf16.msra.mxu0 %v2369
        %3711 = vmatprep.subr.bf16.mxu0 %v2374
        %3712 = vmatpush1.bf16.msra.mxu0 %v2373
        %3713 = vmatprep.subr.bf16.mxu0 %v2378
        %3714 = vmatpush1.bf16.msra.mxu0 %v2377
        %3715 = vmatprep.subr.bf16.mxu0 %v2382
        %3716 = vmatpush1.bf16.msra.mxu0 %v2381
        %3717 = vmatprep.subr.bf16.mxu0 %v2386
        %3718 = vmatpush1.bf16.msra.mxu0 %v2385
        %3719 = vmatprep.subr.bf16.mxu0 %v2390
        %3720 = vmatpush1.bf16.msra.mxu0 %v2389
        %3721 = vmatprep.subr.bf16.mxu0 %v2394
        %3722 = vmatpush1.bf16.msra.mxu0 %v2393
        %3723 = vmatprep.subr.bf16.mxu0 %v2398
        %3724 = vmatpush1.bf16.msra.mxu0 %v2397
        %3725 = vmatprep.subr.bf16.mxu0 %v2402
        %3726 = vmatpush1.bf16.msra.mxu0 %v2401
        %3727 = vmatprep.subr.bf16.mxu0 %v2406
        %3728 = vmatpush1.bf16.msra.mxu0 %v2405
        %3729 = vmatprep.subr.bf16.mxu0 %v2410
        %3730 = vmatpush1.bf16.msra.mxu0 %v2409
        %3731 = vmatprep.mubr.bf16.mxu0 %v280
        %3732 = vmatmul.mubr.bf16.gmra.mrb[0].mxu0 %v279
        %v3733 = vpop.f32.mrb[0].mxu0
        %v3734 = vadd.f32 0.0, %v3733
        %v3735 = vpop.f32.mrb[0].mxu0
        %v3736 = vadd.f32 0.0, %v3735
        %v3737 = vpop.f32.mrb[0].mxu0
        %v3738 = vpop.f32.mrb[0].mxu0
        %3739 = vdwg.mxu0
        %3740 = vmatprep.subr.bf16.mxu0 %v2414
        %3741 = vmatpush1.bf16.msra.mxu0 %v2413
        %3742 = vmatprep.subr.bf16.mxu0 %v2418
        %3743 = vmatpush1.bf16.msra.mxu0 %v2417
        %3744 = vmatprep.subr.bf16.mxu0 %v2422
        %3745 = vmatpush1.bf16.msra.mxu0 %v2421
        %3746 = vmatprep.subr.bf16.mxu0 %v2426
        %3747 = vmatpush1.bf16.msra.mxu0 %v2425
        %3748 = vmatprep.subr.bf16.mxu0 %v2430
        %3749 = vmatpush1.bf16.msra.mxu0 %v2429
        %3750 = vmatprep.subr.bf16.mxu0 %v2434
        %3751 = vmatpush1.bf16.msra.mxu0 %v2433
        %3752 = vmatprep.subr.bf16.mxu0 %v2438
        %3753 = vmatpush1.bf16.msra.mxu0 %v2437
        %3754 = vmatprep.subr.bf16.mxu0 %v2442
        %3755 = vmatpush1.bf16.msra.mxu0 %v2441
        %3756 = vmatprep.subr.bf16.mxu0 %v2446
        %3757 = vmatpush1.bf16.msra.mxu0 %v2445
        %3758 = vmatprep.subr.bf16.mxu0 %v2450
        %3759 = vmatpush1.bf16.msra.mxu0 %v2449
        %3760 = vmatprep.subr.bf16.mxu0 %v2454
        %3761 = vmatpush1.bf16.msra.mxu0 %v2453
        %3762 = vmatprep.subr.bf16.mxu0 %v2458
        %3763 = vmatpush1.bf16.msra.mxu0 %v2457
        %3764 = vmatprep.subr.bf16.mxu0 %v2462
        %3765 = vmatpush1.bf16.msra.mxu0 %v2461
        %3766 = vmatprep.subr.bf16.mxu0 %v2466
        %3767 = vmatpush1.bf16.msra.mxu0 %v2465
        %3768 = vmatprep.subr.bf16.mxu0 %v2470
        %3769 = vmatpush1.bf16.msra.mxu0 %v2469
        %3770 = vmatprep.subr.bf16.mxu0 %v2474
        %3771 = vmatpush1.bf16.msra.mxu0 %v2473
        %3772 = vmatprep.mubr.bf16.mxu0 %v282
        %3773 = vmatmul.mubr.bf16.gmra.mrb[0].mxu0 %v281
        %v3774 = vpop.f32.mrb[0].mxu0
        %v3775 = vadd.f32 %v3734, %v3774
        %v3776 = vpop.f32.mrb[0].mxu0
        %v3777 = vadd.f32 %v3736, %v3776
        %v3778 = vpop.f32.mrb[0].mxu0
        %v3779 = vpop.f32.mrb[0].mxu0
        %3780 = vdwg.mxu0
        %3781 = vmatprep.subr.bf16.mxu0 %v2478
        %3782 = vmatpush1.bf16.msra.mxu0 %v2477
        %3783 = vmatprep.subr.bf16.mxu0 %v2482
        %3784 = vmatpush1.bf16.msra.mxu0 %v2481
        %3785 = vmatprep.subr.bf16.mxu0 %v2486
        %3786 = vmatpush1.bf16.msra.mxu0 %v2485
        %3787 = vmatprep.subr.bf16.mxu0 %v2490
        %3788 = vmatpush1.bf16.msra.mxu0 %v2489
        %3789 = vmatprep.subr.bf16.mxu0 %v2494
        %3790 = vmatpush1.bf16.msra.mxu0 %v2493
        %3791 = vmatprep.subr.bf16.mxu0 %v2498
        %3792 = vmatpush1.bf16.msra.mxu0 %v2497
        %3793 = vmatprep.subr.bf16.mxu0 %v2502
        %3794 = vmatpush1.bf16.msra.mxu0 %v2501
        %3795 = vmatprep.subr.bf16.mxu0 %v2506
        %3796 = vmatpush1.bf16.msra.mxu0 %v2505
        %3797 = vmatprep.subr.bf16.mxu0 %v2510
        %3798 = vmatpush1.bf16.msra.mxu0 %v2509
        %3799 = vmatprep.subr.bf16.mxu0 %v2514
        %3800 = vmatpush1.bf16.msra.mxu0 %v2513
        %3801 = vmatprep.subr.bf16.mxu0 %v2518
        %3802 = vmatpush1.bf16.msra.mxu0 %v2517
        %3803 = vmatprep.subr.bf16.mxu0 %v2522
        %3804 = vmatpush1.bf16.msra.mxu0 %v2521
        %3805 = vmatprep.subr.bf16.mxu0 %v2526
        %3806 = vmatpush1.bf16.msra.mxu0 %v2525
        %3807 = vmatprep.subr.bf16.mxu0 %v2530
        %3808 = vmatpush1.bf16.msra.mxu0 %v2529
        %3809 = vmatprep.subr.bf16.mxu0 %v2534
        %3810 = vmatpush1.bf16.msra.mxu0 %v2533
        %3811 = vmatprep.subr.bf16.mxu0 %v2538
        %3812 = vmatpush1.bf16.msra.mxu0 %v2537
        %3813 = vmatprep.mubr.bf16.mxu0 %v284
        %3814 = vmatmul.mubr.bf16.gmra.mrb[0].mxu0 %v283
        %v3815 = vpop.f32.mrb[0].mxu0
        %v3816 = vadd.f32 %v3775, %v3815
        %v3817 = vpop.f32.mrb[0].mxu0
        %v3818 = vadd.f32 %v3777, %v3817
        %v3819 = vpop.f32.mrb[0].mxu0
        %v3820 = vpop.f32.mrb[0].mxu0
        %3821 = vdwg.mxu0
        %3822 = vmatprep.subr.bf16.mxu0 %v2542
        %3823 = vmatpush1.bf16.msra.mxu0 %v2541
        %3824 = vmatprep.subr.bf16.mxu0 %v2546
        %3825 = vmatpush1.bf16.msra.mxu0 %v2545
        %3826 = vmatprep.subr.bf16.mxu0 %v2550
        %3827 = vmatpush1.bf16.msra.mxu0 %v2549
        %3828 = vmatprep.subr.bf16.mxu0 %v2554
        %3829 = vmatpush1.bf16.msra.mxu0 %v2553
        %3830 = vmatprep.subr.bf16.mxu0 %v2558
        %3831 = vmatpush1.bf16.msra.mxu0 %v2557
        %3832 = vmatprep.subr.bf16.mxu0 %v2562
        %3833 = vmatpush1.bf16.msra.mxu0 %v2561
        %3834 = vmatprep.subr.bf16.mxu0 %v2566
        %3835 = vmatpush1.bf16.msra.mxu0 %v2565
        %3836 = vmatprep.subr.bf16.mxu0 %v2570
        %3837 = vmatpush1.bf16.msra.mxu0 %v2569
        %3838 = vmatprep.subr.bf16.mxu0 %v2574
        %3839 = vmatpush1.bf16.msra.mxu0 %v2573
        %3840 = vmatprep.subr.bf16.mxu0 %v2578
        %3841 = vmatpush1.bf16.msra.mxu0 %v2577
        %3842 = vmatprep.subr.bf16.mxu0 %v2582
        %3843 = vmatpush1.bf16.msra.mxu0 %v2581
        %3844 = vmatprep.subr.bf16.mxu0 %v2586
        %3845 = vmatpush1.bf16.msra.mxu0 %v2585
        %3846 = vmatprep.subr.bf16.mxu0 %v2590
        %3847 = vmatpush1.bf16.msra.mxu0 %v2589
        %3848 = vmatprep.subr.bf16.mxu0 %v2594
        %3849 = vmatpush1.bf16.msra.mxu0 %v2593
        %3850 = vmatprep.subr.bf16.mxu0 %v2598
        %3851 = vmatpush1.bf16.msra.mxu0 %v2597
        %3852 = vmatprep.subr.bf16.mxu0 %v2602
        %3853 = vmatpush1.bf16.msra.mxu0 %v2601
        %3854 = vmatprep.mubr.bf16.mxu0 %v286
        %3855 = vmatmul.mubr.bf16.gmra.mrb[0].mxu0 %v285
        %v3856 = vpop.f32.mrb[0].mxu0
        %v3857 = vadd.f32 %v3816, %v3856
        %v3858 = vpop.f32.mrb[0].mxu0
        %v3859 = vadd.f32 %v3818, %v3858
        %v3860 = vpop.f32.mrb[0].mxu0
        %v3861 = vpop.f32.mrb[0].mxu0
        %3862 = vdwg.mxu0
        %3863 = vmatprep.subr.bf16.mxu0 %v2606
        %3864 = vmatpush1.bf16.msra.mxu0 %v2605
        %3865 = vmatprep.subr.bf16.mxu0 %v2610
        %3866 = vmatpush1.bf16.msra.mxu0 %v2609
        %3867 = vmatprep.subr.bf16.mxu0 %v2614
        %3868 = vmatpush1.bf16.msra.mxu0 %v2613
        %3869 = vmatprep.subr.bf16.mxu0 %v2618
        %3870 = vmatpush1.bf16.msra.mxu0 %v2617
        %3871 = vmatprep.subr.bf16.mxu0 %v2622
        %3872 = vmatpush1.bf16.msra.mxu0 %v2621
        %3873 = vmatprep.subr.bf16.mxu0 %v2626
        %3874 = vmatpush1.bf16.msra.mxu0 %v2625
        %3875 = vmatprep.subr.bf16.mxu0 %v2630
        %3876 = vmatpush1.bf16.msra.mxu0 %v2629
        %3877 = vmatprep.subr.bf16.mxu0 %v2634
        %3878 = vmatpush1.bf16.msra.mxu0 %v2633
        %3879 = vmatprep.subr.bf16.mxu0 %v2638
        %3880 = vmatpush1.bf16.msra.mxu0 %v2637
        %3881 = vmatprep.subr.bf16.mxu0 %v2642
        %3882 = vmatpush1.bf16.msra.mxu0 %v2641
        %3883 = vmatprep.subr.bf16.mxu0 %v2646
        %3884 = vmatpush1.bf16.msra.mxu0 %v2645
        %3885 = vmatprep.subr.bf16.mxu0 %v2650
        %3886 = vmatpush1.bf16.msra.mxu0 %v2649
        %3887 = vmatprep.subr.bf16.mxu0 %v2654
        %3888 = vmatpush1.bf16.msra.mxu0 %v2653
        %3889 = vmatprep.subr.bf16.mxu0 %v2658
        %3890 = vmatpush1.bf16.msra.mxu0 %v2657
        %3891 = vmatprep.subr.bf16.mxu0 %v2662
        %3892 = vmatpush1.bf16.msra.mxu0 %v2661
        %3893 = vmatprep.subr.bf16.mxu0 %v2666
        %3894 = vmatpush1.bf16.msra.mxu0 %v2665
        %3895 = vmatprep.mubr.bf16.mxu0 %v288
        %3896 = vmatmul.mubr.bf16.gmra.mrb[0].mxu0 %v287
        %v3897 = vpop.f32.mrb[0].mxu0
        %v3898 = vadd.f32 %v3857, %v3897
        %v3899 = vpop.f32.mrb[0].mxu0
        %v3900 = vadd.f32 %v3859, %v3899
        %v3901 = vpop.f32.mrb[0].mxu0
        %v3902 = vpop.f32.mrb[0].mxu0
        %3903 = vdwg.mxu0
        %3904 = vmatprep.subr.bf16.mxu0 %v2670
        %3905 = vmatpush1.bf16.msra.mxu0 %v2669
        %3906 = vmatprep.subr.bf16.mxu0 %v2674
        %3907 = vmatpush1.bf16.msra.mxu0 %v2673
        %3908 = vmatprep.subr.bf16.mxu0 %v2678
        %3909 = vmatpush1.bf16.msra.mxu0 %v2677
        %3910 = vmatprep.subr.bf16.mxu0 %v2682
        %3911 = vmatpush1.bf16.msra.mxu0 %v2681
        %3912 = vmatprep.subr.bf16.mxu0 %v2686
        %3913 = vmatpush1.bf16.msra.mxu0 %v2685
        %3914 = vmatprep.subr.bf16.mxu0 %v2690
        %3915 = vmatpush1.bf16.msra.mxu0 %v2689
        %3916 = vmatprep.subr.bf16.mxu0 %v2694
        %3917 = vmatpush1.bf16.msra.mxu0 %v2693
        %3918 = vmatprep.subr.bf16.mxu0 %v2698
        %3919 = vmatpush1.bf16.msra.mxu0 %v2697
        %3920 = vmatprep.subr.bf16.mxu0 %v2702
        %3921 = vmatpush1.bf16.msra.mxu0 %v2701
        %3922 = vmatprep.subr.bf16.mxu0 %v2706
        %3923 = vmatpush1.bf16.msra.mxu0 %v2705
        %3924 = vmatprep.subr.bf16.mxu0 %v2710
        %3925 = vmatpush1.bf16.msra.mxu0 %v2709
        %3926 = vmatprep.subr.bf16.mxu0 %v2714
        %3927 = vmatpush1.bf16.msra.mxu0 %v2713
        %3928 = vmatprep.subr.bf16.mxu0 %v2718
        %3929 = vmatpush1.bf16.msra.mxu0 %v2717
        %3930 = vmatprep.subr.bf16.mxu0 %v2722
        %3931 = vmatpush1.bf16.msra.mxu0 %v2721
        %3932 = vmatprep.subr.bf16.mxu0 %v2726
        %3933 = vmatpush1.bf16.msra.mxu0 %v2725
        %3934 = vmatprep.subr.bf16.mxu0 %v2730
        %3935 = vmatpush1.bf16.msra.mxu0 %v2729
        %3936 = vmatprep.mubr.bf16.mxu0 %v290
        %3937 = vmatmul.mubr.bf16.gmra.mrb[0].mxu0 %v289
        %v3938 = vpop.f32.mrb[0].mxu0
        %v3939 = vadd.f32 %v3898, %v3938
        %v3940 = vpop.f32.mrb[0].mxu0
        %v3941 = vadd.f32 %v3900, %v3940
        %v3942 = vpop.f32.mrb[0].mxu0
        %v3943 = vpop.f32.mrb[0].mxu0
        %3944 = vdwg.mxu0
        %3945 = vmatprep.subr.bf16.mxu0 %v2734
        %3946 = vmatpush1.bf16.msra.mxu0 %v2733
        %3947 = vmatprep.subr.bf16.mxu0 %v2738
        %3948 = vmatpush1.bf16.msra.mxu0 %v2737
        %3949 = vmatprep.subr.bf16.mxu0 %v2742
        %3950 = vmatpush1.bf16.msra.mxu0 %v2741
        %3951 = vmatprep.subr.bf16.mxu0 %v2746
        %3952 = vmatpush1.bf16.msra.mxu0 %v2745
        %3953 = vmatprep.subr.bf16.mxu0 %v2750
        %3954 = vmatpush1.bf16.msra.mxu0 %v2749
        %3955 = vmatprep.subr.bf16.mxu0 %v2754
        %3956 = vmatpush1.bf16.msra.mxu0 %v2753
        %3957 = vmatprep.subr.bf16.mxu0 %v2758
        %3958 = vmatpush1.bf16.msra.mxu0 %v2757
        %3959 = vmatprep.subr.bf16.mxu0 %v2762
        %3960 = vmatpush1.bf16.msra.mxu0 %v2761
        %3961 = vmatprep.subr.bf16.mxu0 %v2766
        %3962 = vmatpush1.bf16.msra.mxu0 %v2765
        %3963 = vmatprep.subr.bf16.mxu0 %v2770
        %3964 = vmatpush1.bf16.msra.mxu0 %v2769
        %3965 = vmatprep.subr.bf16.mxu0 %v2774
        %3966 = vmatpush1.bf16.msra.mxu0 %v2773
        %3967 = vmatprep.subr.bf16.mxu0 %v2778
        %3968 = vmatpush1.bf16.msra.mxu0 %v2777
        %3969 = vmatprep.subr.bf16.mxu0 %v2782
        %3970 = vmatpush1.bf16.msra.mxu0 %v2781
        %3971 = vmatprep.subr.bf16.mxu0 %v2786
        %3972 = vmatpush1.bf16.msra.mxu0 %v2785
        %3973 = vmatprep.subr.bf16.mxu0 %v2790
        %3974 = vmatpush1.bf16.msra.mxu0 %v2789
        %3975 = vmatprep.subr.bf16.mxu0 %v2794
        %3976 = vmatpush1.bf16.msra.mxu0 %v2793
        %3977 = vmatprep.mubr.bf16.mxu0 %v292
        %3978 = vmatmul.mubr.bf16.gmra.mrb[0].mxu0 %v291
        %v3979 = vpop.f32.mrb[0].mxu0
        %v3980 = vadd.f32 %v3939, %v3979
        %v3981 = vpop.f32.mrb[0].mxu0
        %v3982 = vadd.f32 %v3941, %v3981
        %v3983 = vpop.f32.mrb[0].mxu0
        %v3984 = vpop.f32.mrb[0].mxu0
        %3985 = vdwg.mxu0
        %3986 = vmatprep.subr.bf16.mxu0 %v2798
        %3987 = vmatpush1.bf16.msra.mxu0 %v2797
        %3988 = vmatprep.subr.bf16.mxu0 %v2802
        %3989 = vmatpush1.bf16.msra.mxu0 %v2801
        %3990 = vmatprep.subr.bf16.mxu0 %v2806
        %3991 = vmatpush1.bf16.msra.mxu0 %v2805
        %3992 = vmatprep.subr.bf16.mxu0 %v2810
        %3993 = vmatpush1.bf16.msra.mxu0 %v2809
        %3994 = vmatprep.subr.bf16.mxu0 %v2814
        %3995 = vmatpush1.bf16.msra.mxu0 %v2813
        %3996 = vmatprep.subr.bf16.mxu0 %v2818
        %3997 = vmatpush1.bf16.msra.mxu0 %v2817
        %3998 = vmatprep.subr.bf16.mxu0 %v2822
        %3999 = vmatpush1.bf16.msra.mxu0 %v2821
        %4000 = vmatprep.subr.bf16.mxu0 %v2826
        %4001 = vmatpush1.bf16.msra.mxu0 %v2825
        %4002 = vmatprep.subr.bf16.mxu0 %v2830
        %4003 = vmatpush1.bf16.msra.mxu0 %v2829
        %4004 = vmatprep.subr.bf16.mxu0 %v2834
        %4005 = vmatpush1.bf16.msra.mxu0 %v2833
        %4006 = vmatprep.subr.bf16.mxu0 %v2838
        %4007 = vmatpush1.bf16.msra.mxu0 %v2837
        %4008 = vmatprep.subr.bf16.mxu0 %v2842
        %4009 = vmatpush1.bf16.msra.mxu0 %v2841
        %4010 = vmatprep.subr.bf16.mxu0 %v2846
        %4011 = vmatpush1.bf16.msra.mxu0 %v2845
        %4012 = vmatprep.subr.bf16.mxu0 %v2850
        %4013 = vmatpush1.bf16.msra.mxu0 %v2849
        %4014 = vmatprep.subr.bf16.mxu0 %v2854
        %4015 = vmatpush1.bf16.msra.mxu0 %v2853
        %4016 = vmatprep.subr.bf16.mxu0 %v2858
        %4017 = vmatpush1.bf16.msra.mxu0 %v2857
        %4018 = vmatprep.mubr.bf16.mxu0 %v294
        %4019 = vmatmul.mubr.bf16.gmra.mrb[0].mxu0 %v293
        %v4020 = vpop.f32.mrb[0].mxu0
        %v4021 = vadd.f32 %v3980, %v4020
        %v4022 = vpop.f32.mrb[0].mxu0
        %v4023 = vadd.f32 %v3982, %v4022
        %v4024 = vpop.f32.mrb[0].mxu0
        %v4025 = vpop.f32.mrb[0].mxu0
        %4026 = vdwg.mxu0
        %v4027 = vadd.f32 %v295, %v3693
        %v4028 = vadd.f32 %v296, %v3695
        %v4029 = vadd.f32 %v297, %v4021
        %v4030 = vadd.f32 %v298, %v4023
        %4031 = vst [vmem:[%s248] sm:$0xff] %v4027
        %4032 = vst [vmem:[%s248 + $0x8] sm:$0xff] %v4028
        %4033 = vst [vmem:[%s248 + $0x10] sm:$0xff] %v4029
        %4034 = vst [vmem:[%s248 + $0x18] sm:$0xff] %v4030
        // Predicated region
        $region45: #{discriminator_forward.6} parent=31 // pred_check
          %p4035 = pneg %p250
        $region46: #{discriminator_forward.6} parent=31 // pred_check_branch
          %4037 = sbr.rel (%p4035) target = $region48
        $region47: #{discriminator_forward.6} parent=31 // pred_region
          %v4038 = vld [vmem:[%s248] sm:$0xff]
          %v4039 = vld [vmem:[%s248 + $0x8] sm:$0xff]
          %v4040 = vld [vmem:[%s248 + $0x10] sm:$0xff]
          %v4041 = vld [vmem:[%s248 + $0x18] sm:$0xff]
          %v4042 = vld [vmem:[%s213] sm:$0xf]
          %v4044 = vlaneseq
          %v4045 = vshrl.u32 %v4044, 7
          %v4046 = vsub.s32 0, %v4045
          %v4047 = vrot.slane %v4042, %v4046
          %v4048 = vlaneseq
          %v4049 = vshrl.u32 %v4048, 7
          %v4050 = vsub.s32 1, %v4049
          %v4051 = vrot.slane %v4042, %v4050
          %v4052 = vlaneseq
          %v4053 = vshrl.u32 %v4052, 7
          %v4054 = vsub.s32 2, %v4053
          %v4055 = vrot.slane %v4042, %v4054
          %v4056 = vlaneseq
          %v4057 = vshrl.u32 %v4056, 7
          %v4058 = vsub.s32 3, %v4057
          %v4059 = vrot.slane %v4042, %v4058
          %v4064 = vadd.f32 %v4038, %v4047
          %v4065 = vadd.f32 %v4039, %v4051
          %v4066 = vadd.f32 %v4040, %v4055
          %v4067 = vadd.f32 %v4041, %v4059
          %4068 = vst [vmem:[%s248] sm:$0xff] %v4064
          %4069 = vst [vmem:[%s248 + $0x8] sm:$0xff] %v4065
          %4070 = vst [vmem:[%s248 + $0x10] sm:$0xff] %v4066
          %4071 = vst [vmem:[%s248 + $0x18] sm:$0xff] %v4067
        $region48: #{discriminator_forward.6} parent=31 // pred_fallthru
          _
        %s4072 = smul.u32 4, %s24
        %p4073 = scmp.lt.s32.totalorder %s4072, 7
        %s4074 = scalar_select %p4073, %s4072, 7
        %s4075 = smul.addr %s4074, 8
        %s4076 = scalar_lea.vmem %s3, %s4075
        // Predicated region
        $region49: #{discriminator_forward.6} parent=31 // pred_check
          %p4077 = pneg %p125
        $region50: #{discriminator_forward.6} parent=31 // pred_check_branch
          %4079 = sbr.rel (%p4077) target = $region52
        $region51: #{discriminator_forward.6} parent=31 // pred_region
          %s4080 = smul.u32 4, %s24
        $region52: #{discriminator_forward.6} parent=31 // pred_fallthru
          _
      $region32: #{discriminator_forward.6} parent=5 // pred_fallthru
        _
      %p4081 = scmp.le.s32.totalorder 2, %s15
      // Predicated region
      $region53: #{discriminator_forward.6} parent=5 // pred_check
        %p4082 = pneg %p4081
      $region54: #{discriminator_forward.6} parent=5 // pred_check_branch
        %4084 = sbr.rel (%p4082) target = $region56
      $region55: #{discriminator_forward.6} parent=5 // pred_region
        %s4085 = ssub.s32 %s15, 2
        // Predicated region
        $region57: #{discriminator_forward.6} parent=55 // pred_check
          %p4086 = pneg %p131
        $region58: #{discriminator_forward.6} parent=55 // pred_check_branch
          %4088 = sbr.rel (%p4086) target = $region60
        $region59: #{discriminator_forward.6} parent=55 // pred_region
          %s4089 = smul.u32 4, %s26
          %p4090 = scmp.lt.s32.totalorder %s4089, 7
          %s4091 = scalar_select %p4090, %s4089, 7
          %s4092 = smul.addr %s4091, 8
          %s4093 = scalar_lea.vmem %s3, %s4092
        $region60: #{discriminator_forward.6} parent=55 // pred_fallthru
          _
      $region56: #{discriminator_forward.6} parent=5 // pred_fallthru
        _
    $region6: #{discriminator_forward.6} parent=1 // loop_footer
      %s19 = sadd.s32 1, %s15
    $region7: #{discriminator_forward.6} parent=1 // loop_footer_branch
      %14 = sbr.rel target = $region3
    $region8: #{discriminator_forward.6} parent=1 // loop_exit
      _
    %4094 = vsyncpa [#allocation3], 1
    %s4095 = scalar_lea.sflag [#allocation3], 1
    %4096 = vsyncpa %s4095, 1
    %4097 = vsyncpa [#allocation5], 1
    %s4098 = scalar_lea.sflag [#allocation5], 1
    %4099 = vsyncpa %s4098, 1

// kernel: discriminator_forward.9
$region0: #{discriminator_forward.9}
  #allocation0 [shape = 'u32[]', space=smem, size = 0x4, offset = 0x4, fixed_abs, tag = 'smem constant byte address 0x4 - core index']
  #allocation1 [shape = 'u32[144,128]{1,0:T(1,128)}', space=vmem, size = 0x12000, scoped, tag = 'internal scratch']
  #allocation2 [shape = 'f32[1,1]{1,0:T(1,128)S(1)}', space=vmem, size = 0x200, scoped, tag = 'scoped memory for discriminator_forward.9']
  %s0 = inlined_call_operand.vmem [shape: f32[8,256], index: 0, kind: input, shape index: {}]
  %s1 = inlined_call_operand.vmem [shape: bf16[256,1], index: 1, kind: input, shape index: {}]
  %s2 = inlined_call_operand.<no memory space> [shape: f32[1,1], index: 2, kind: input, shape index: {}]
  %s3 = inlined_call_operand.vmem [shape: f32[8,1], index: 3, kind: output, shape index: {}]
  %s4 = sld [smem:[#allocation0]]
  $region30: #{discriminator_forward.9} parent=0
    _
  %s6 = ssub.s32 1, %s4
  %s7 = scalar_select 0, %s6, %s4
  %v8 = vstv %s2
  %9 = vst [vmem:[#allocation2] sm:$0x1] %v8
  // Predicated region
  $region2: #{discriminator_forward.9} parent=0 // pred_check
    _
  $region3: #{discriminator_forward.9} parent=0 // pred_check_branch
    %11 = sbr.rel (0) target = $region5
  $region4: #{discriminator_forward.9} parent=0 // pred_region
    _
  $region5: #{discriminator_forward.9} parent=0 // pred_fallthru
    _
  // Predicated region
  $region6: #{discriminator_forward.9} parent=0 // pred_check
    _
  $region7: #{discriminator_forward.9} parent=0 // pred_check_branch
    %13 = sbr.rel (0) target = $region9
  $region8: #{discriminator_forward.9} parent=0 // pred_region
    _
  $region9: #{discriminator_forward.9} parent=0 // pred_fallthru
    _
  // Predicated region
  $region10: #{discriminator_forward.9} parent=0 // pred_check
    _
  $region11: #{discriminator_forward.9} parent=0 // pred_check_branch
    %15 = sbr.rel (0) target = $region13
  $region12: #{discriminator_forward.9} parent=0 // pred_region
    _
  $region13: #{discriminator_forward.9} parent=0 // pred_fallthru
    _
  %p17 = scmp.eq.s32.totalorder 0, 0
  // Predicated region
  $region14: #{discriminator_forward.9} parent=0 // pred_check
    %p18 = pneg %p17
  $region15: #{discriminator_forward.9} parent=0 // pred_check_branch
    %20 = sbr.rel (%p18) target = $region17
  $region16: #{discriminator_forward.9} parent=0 // pred_region
    %vm21 = vcmask 7168
    %22 = vst.msk [vmem:[%s3] sm:$0xff] %vm21, 0.0
  $region17: #{discriminator_forward.9} parent=0 // pred_fallthru
    _
  %s23 = smul.u32 0, 256
  %s24 = sshra.s32 %s23, 7
  %s25 = sand.u32 %s23, 127
  %s26 = smul.addr %s24, 8
  %s27 = scalar_lea.vmem %s0, %s26
  %v28 = vld [vmem:[%s27] sm:$0xff]
  %v29 = vld [vmem:[%s27 + $0x8] sm:$0xff]
  %v30 = vpack.c.bf16 %v28, %v28
  %v31 = vpack.c.bf16 %v29, %v29
  %v32 = vld [vmem:[%s3] sm:$0xff]
  %v33 = vld [vmem:[%s1] sm:$0xf]
  %v34 = vld [vmem:[%s1 + $0x4] sm:$0xf]
  %v35 = vld [vmem:[%s1 + $0x8] sm:$0xf]
  %v36 = vld [vmem:[%s1 + $0xc] sm:$0xf]
  %v37 = vld [vmem:[%s1 + $0x10] sm:$0xf]
  %v38 = vld [vmem:[%s1 + $0x14] sm:$0xf]
  %v39 = vld [vmem:[%s1 + $0x18] sm:$0xf]
  %v40 = vld [vmem:[%s1 + $0x1c] sm:$0xf]
  %v41 = vld [vmem:[%s1 + $0x20] sm:$0xf]
  %v42 = vld [vmem:[%s1 + $0x24] sm:$0xf]
  %v43 = vld [vmem:[%s1 + $0x28] sm:$0xf]
  %v44 = vld [vmem:[%s1 + $0x2c] sm:$0xf]
  %v45 = vld [vmem:[%s1 + $0x30] sm:$0xf]
  %v46 = vld [vmem:[%s1 + $0x34] sm:$0xf]
  %v47 = vld [vmem:[%s1 + $0x38] sm:$0xf]
  %v48 = vld [vmem:[%s1 + $0x3c] sm:$0xf]
  %v49 = vld [vmem:[%s1 + $0x40] sm:$0xf]
  %v50 = vld [vmem:[%s1 + $0x44] sm:$0xf]
  %v51 = vld [vmem:[%s1 + $0x48] sm:$0xf]
  %v52 = vld [vmem:[%s1 + $0x4c] sm:$0xf]
  %v53 = vld [vmem:[%s1 + $0x50] sm:$0xf]
  %v54 = vld [vmem:[%s1 + $0x54] sm:$0xf]
  %v55 = vld [vmem:[%s1 + $0x58] sm:$0xf]
  %v56 = vld [vmem:[%s1 + $0x5c] sm:$0xf]
  %v57 = vld [vmem:[%s1 + $0x60] sm:$0xf]
  %v58 = vld [vmem:[%s1 + $0x64] sm:$0xf]
  %v59 = vld [vmem:[%s1 + $0x68] sm:$0xf]
  %v60 = vld [vmem:[%s1 + $0x6c] sm:$0xf]
  %v61 = vld [vmem:[%s1 + $0x70] sm:$0xf]
  %v62 = vld [vmem:[%s1 + $0x74] sm:$0xf]
  %v63 = vld [vmem:[%s1 + $0x78] sm:$0xf]
  %v64 = vld [vmem:[%s1 + $0x7c] sm:$0xf]
  %v97 = vunpack.c.l.b16 %v33
  %v98 = vunpack.c.l.b16 %v34
  %v99 = vunpack.c.l.b16 %v35
  %v100 = vunpack.c.l.b16 %v36
  %v101 = vunpack.c.l.b16 %v37
  %v102 = vunpack.c.l.b16 %v38
  %v103 = vunpack.c.l.b16 %v39
  %v104 = vunpack.c.l.b16 %v40
  %v105 = vunpack.c.l.b16 %v41
  %v106 = vunpack.c.l.b16 %v42
  %v107 = vunpack.c.l.b16 %v43
  %v108 = vunpack.c.l.b16 %v44
  %v109 = vunpack.c.l.b16 %v45
  %v110 = vunpack.c.l.b16 %v46
  %v111 = vunpack.c.l.b16 %v47
  %v112 = vunpack.c.l.b16 %v48
  %v113 = vunpack.c.l.b16 %v49
  %v114 = vunpack.c.l.b16 %v50
  %v115 = vunpack.c.l.b16 %v51
  %v116 = vunpack.c.l.b16 %v52
  %v117 = vunpack.c.l.b16 %v53
  %v118 = vunpack.c.l.b16 %v54
  %v119 = vunpack.c.l.b16 %v55
  %v120 = vunpack.c.l.b16 %v56
  %v121 = vunpack.c.l.b16 %v57
  %v122 = vunpack.c.l.b16 %v58
  %v123 = vunpack.c.l.b16 %v59
  %v124 = vunpack.c.l.b16 %v60
  %v125 = vunpack.c.l.b16 %v61
  %v126 = vunpack.c.l.b16 %v62
  %v127 = vunpack.c.l.b16 %v63
  %v128 = vunpack.c.l.b16 %v64
  %v129 = vpack.c.b16 %v98, %v97
  %v130 = vpack.c.b16 %v100, %v99
  %v131 = vpack.c.b16 %v102, %v101
  %v132 = vpack.c.b16 %v104, %v103
  %v133 = vpack.c.b16 %v106, %v105
  %v134 = vpack.c.b16 %v108, %v107
  %v135 = vpack.c.b16 %v110, %v109
  %v136 = vpack.c.b16 %v112, %v111
  %v137 = vpack.c.b16 %v114, %v113
  %v138 = vpack.c.b16 %v116, %v115
  %v139 = vpack.c.b16 %v118, %v117
  %v140 = vpack.c.b16 %v120, %v119
  %v141 = vpack.c.b16 %v122, %v121
  %v142 = vpack.c.b16 %v124, %v123
  %v143 = vpack.c.b16 %v126, %v125
  %v144 = vpack.c.b16 %v128, %v127
  %161 = vmatprep.subr.bf16.mxu0 0
  %162 = vmatpush1.bf16.msra.mxu0 %v129
  %163 = vmatprep.subr.bf16.mxu0 0
  %164 = vmatpush1.bf16.msra.mxu0 %v130
  %165 = vmatprep.subr.bf16.mxu0 0
  %166 = vmatpush1.bf16.msra.mxu0 %v131
  %167 = vmatprep.subr.bf16.mxu0 0
  %168 = vmatpush1.bf16.msra.mxu0 %v132
  %169 = vmatprep.subr.bf16.mxu0 0
  %170 = vmatpush1.bf16.msra.mxu0 %v133
  %171 = vmatprep.subr.bf16.mxu0 0
  %172 = vmatpush1.bf16.msra.mxu0 %v134
  %173 = vmatprep.subr.bf16.mxu0 0
  %174 = vmatpush1.bf16.msra.mxu0 %v135
  %175 = vmatprep.subr.bf16.mxu0 0
  %176 = vmatpush1.bf16.msra.mxu0 %v136
  %177 = vmatprep.subr.bf16.mxu0 0
  %178 = vmatpush1.bf16.msra.mxu0 %v137
  %179 = vmatprep.subr.bf16.mxu0 0
  %180 = vmatpush1.bf16.msra.mxu0 %v138
  %181 = vmatprep.subr.bf16.mxu0 0
  %182 = vmatpush1.bf16.msra.mxu0 %v139
  %183 = vmatprep.subr.bf16.mxu0 0
  %184 = vmatpush1.bf16.msra.mxu0 %v140
  %185 = vmatprep.subr.bf16.mxu0 0
  %186 = vmatpush1.bf16.msra.mxu0 %v141
  %187 = vmatprep.subr.bf16.mxu0 0
  %188 = vmatpush1.bf16.msra.mxu0 %v142
  %189 = vmatprep.subr.bf16.mxu0 0
  %190 = vmatpush1.bf16.msra.mxu0 %v143
  %191 = vmatprep.subr.bf16.mxu0 0
  %192 = vmatpush1.bf16.msra.mxu0 %v144
  %193 = vmatprep.mubr.bf16.mxu0 %v31
  %194 = vmatmul.mubr.bf16.gmra.mrb[0].mxu0 %v30
  %v195 = vpop.f32.mrb[0].mxu0
  %v196 = vadd.f32 0.0, %v195
  %v197 = vpop.f32.mrb[0].mxu0
  %v198 = vpop.f32.mrb[0].mxu0
  %v199 = vpop.f32.mrb[0].mxu0
  %200 = vdwg.mxu0
  %v201 = vadd.f32 %v32, %v196
  %vm202 = vcmask 7168
  %203 = vst.msk [vmem:[%s3] sm:$0xff] %vm202, %v201
  // Predicated region
  $region18: #{discriminator_forward.9} parent=0 // pred_check
    %p204 = pneg %p17
  $region19: #{discriminator_forward.9} parent=0 // pred_check_branch
    %206 = sbr.rel (%p204) target = $region21
  $region20: #{discriminator_forward.9} parent=0 // pred_region
    %v207 = vld [vmem:[%s3] sm:$0xff]
    %v208 = vld [vmem:[#allocation2] sm:$0x1]
    %v210 = vlaneseq
    %v211 = vshrl.u32 %v210, 7
    %v212 = vsub.s32 0, %v211
    %v213 = vrot.slane %v208, %v212
    %v215 = vadd.f32 %v207, %v213
    %216 = vst.msk [vmem:[%s3] sm:$0xff] %vm202, %v215
  $region21: #{discriminator_forward.9} parent=0 // pred_fallthru
    _
  // Predicated region
  $region22: #{discriminator_forward.9} parent=0 // pred_check
    _
  $region23: #{discriminator_forward.9} parent=0 // pred_check_branch
    %218 = sbr.rel (0) target = $region25
  $region24: #{discriminator_forward.9} parent=0 // pred_region
    _
  $region25: #{discriminator_forward.9} parent=0 // pred_fallthru
    _
  // Predicated region
  $region26: #{discriminator_forward.9} parent=0 // pred_check
    _
  $region27: #{discriminator_forward.9} parent=0 // pred_check_branch
    %220 = sbr.rel (0) target = $region29
  $region28: #{discriminator_forward.9} parent=0 // pred_region
    _
  $region29: #{discriminator_forward.9} parent=0 // pred_fallthru
    _

</llo_original>
